<compile_context>
chip_gen: v7x
topology: tpu7x:2x2x1
jax: 0.10.0
libtpu: 0.0.40
codegen_flags: <defaults>
</compile_context>

<pallas_src>
import jax
import jax.numpy as jnp
from jax import lax
from jax.experimental import pallas as pl
from jax.experimental.pallas import tpu as pltpu

BF16 = jnp.bfloat16
LANES = 128
XHALO = 8   # halo rows each side of the gated-input buffer (>=3, sublane-aligned)


# --------------------------------------------------------------------------
# Pallas kernel: full Attention forward for one chunk of Bt batch lanes.
# --------------------------------------------------------------------------
def attention_kernel(xT_ref,
                     wd1_ref, bd1_ref, wd2_ref, bd2_ref, wd3_ref, bd3_ref,
                     we1_ref, be1_ref, we2_ref, be2_ref, we3_ref, be3_ref,
                     o_ref,
                     x0_ref, f1_ref, f2_ref):
    T, Bt = xT_ref.shape          # time, batch lanes (Bt == 128)
    C = be1_ref.shape[0]          # expansion out_channel

    # ---- conv_du: WN-Conv7 -> ReLU -> WN-Conv5 -> ReLU -> WN-Conv3 -> Sigmoid
    # Center-tap matmuls with batch in lanes (N=Bt), f32 accumulation.
    xb = xT_ref[...]                                               # (T, Bt) f32
    h1 = jnp.maximum(
        jnp.dot(wd1_ref[...], xb.astype(BF16),
                preferred_element_type=jnp.float32) + bd1_ref[...], 0.0)
    h2 = jnp.maximum(
        jnp.dot(wd2_ref[...], h1.astype(BF16),
                preferred_element_type=jnp.float32) + bd2_ref[...], 0.0)
    z = jax.nn.sigmoid(
        jnp.dot(wd3_ref[...], h2.astype(BF16),
                preferred_element_type=jnp.float32) + bd3_ref[...])
    xm = xb * z                                                    # (T, Bt) f32

    # ---- zero the time-halo regions of the padded feature buffers.
    # Done every step (megacore-safe; see header).  All offsets static/aligned.
    x0_ref[pl.ds(0, XHALO), :] = jnp.zeros((XHALO, Bt), jnp.float32)
    x0_ref[pl.ds(XHALO + T, XHALO), :] = jnp.zeros((XHALO, Bt), jnp.float32)
    f1_ref[pl.ds(0, 2 * C), :] = jnp.zeros((2 * C, Bt), BF16)
    f1_ref[pl.ds((T + 2) * C, 2 * C), :] = jnp.zeros((2 * C, Bt), BF16)
    f2_ref[pl.ds(0, C), :] = jnp.zeros((C, Bt), BF16)
    f2_ref[pl.ds((T + 1) * C, C), :] = jnp.zeros((C, Bt), BF16)

    # gated input -> interior of the padded buffer (aligned (T, Bt) store)
    x0_ref[pl.ds(XHALO, T), :] = xm

    we1 = we1_ref[...]; be1 = be1_ref[...]     # (C, 8) bf16 (col 7 = 0), (C,1)
    we2 = we2_ref[...]; be2 = be2_ref[...]     # (C, 5C) bf16, (C,1)
    we3 = we3_ref[...]; be3 = be3_ref[...]     # (C, 3C) bf16, (C,1)

    # ---- expansion conv1: Conv1d(1 -> C, k=7, pad=3)
    # Output time t reads input times t-3..t+4 = 8 consecutive rows of x0
    # (8th row weighted by the zero column of we1), one (C,8)@(8,Bt) matmul.
    for t in range(T):
        win = x0_ref[pl.ds(XHALO - 3 + t, 8), :].astype(BF16)      # (8, Bt)
        out1 = jnp.dot(we1, win, preferred_element_type=jnp.float32) + be1
        f1_ref[pl.ds((2 + t) * C, C), :] = out1.astype(BF16)

    # ---- expansion conv2: Conv1d(C -> C, k=5, pad=2)
    # Taps for output time t are the 5*C consecutive rows starting at t*C
    # (row = (time, channel), time-major) -> one (C,5C)@(5C,Bt) matmul.
    for t in range(T):
        win = f1_ref[pl.ds(t * C, 5 * C), :]                       # (5C, Bt) bf16
        out2 = jnp.dot(we2, win, preferred_element_type=jnp.float32) + be2
        f2_ref[pl.ds((1 + t) * C, C), :] = out2.astype(BF16)

    # ---- expansion conv3: Conv1d(C -> C, k=3, pad=1) + final ReLU
    for t in range(T):
        win = f2_ref[pl.ds(t * C, 3 * C), :]                       # (3C, Bt) bf16
        out3 = jnp.dot(we3, win, preferred_element_type=jnp.float32) + be3
        o_ref[pl.ds(t * C, C), :] = jnp.maximum(out3, 0.0)


# --------------------------------------------------------------------------
# Wrapper: grid over batch-lane chunks, lane-dense native output layout.
# --------------------------------------------------------------------------
def attention_forward(x, p, *, batch_tile=128):
    """Returns the Attention output in kernel-native (T, C, B) layout."""
    B, c_in, T = x.shape
    assert c_in == 1, "Attention.expansion requires input channel dim == 1"
    C = p["we1p"].shape[0]
    Bt = min(batch_tile, B)
    # TODO(synk): ragged batches (B % 128 != 0) are not handled (hard assert).
    assert Bt % LANES == 0 and B % Bt == 0, "batch must tile into 128-lane chunks"
    num_chunks = B // Bt

    # time-major input (small wrapper relayout of x only; the big output stays
    # in kernel-native layout -- see attention_output_to_bct for compat).
    xT = jnp.transpose(x.reshape(B, T), (1, 0))                    # (T, B)

    cst2 = lambda i: (0, 0)
    in_specs = [
        pl.BlockSpec((T, Bt), lambda i: (0, i)),                   # x chunk
        pl.BlockSpec((2 * T, T), cst2), pl.BlockSpec((2 * T, 1), cst2),   # wd1,bd1
        pl.BlockSpec((2 * T, 2 * T), cst2), pl.BlockSpec((2 * T, 1), cst2),  # wd2,bd2
        pl.BlockSpec((T, 2 * T), cst2), pl.BlockSpec((T, 1), cst2),       # wd3,bd3
        pl.BlockSpec((C, 8), cst2), pl.BlockSpec((C, 1), cst2),           # we1,be1
        pl.BlockSpec((C, 5 * C), cst2), pl.BlockSpec((C, 1), cst2),       # we2,be2
        pl.BlockSpec((C, 3 * C), cst2), pl.BlockSpec((C, 1), cst2),       # we3,be3
    ]
    out_specs = pl.BlockSpec((T * C, Bt), lambda i: (0, i))

    # Tight, explicit VMEM budget: double-buffered blocks + scratch + slack.
    blk_bytes = (T * Bt * 4
                 + (2 * T * T + 4 * T * T + 2 * T * T) * 2 + 5 * T * 4
                 + (8 * C + 5 * C * C + 3 * C * C) * 2 + 3 * C * 4
                 + T * C * Bt * 4)
    scratch_bytes = ((T + 2 * XHALO) * Bt * 4
                     + ((T + 4) * C + (T + 2) * C) * Bt * 2)
    vmem_limit = int(2 * blk_bytes + scratch_bytes) + (4 << 20)

    out_flat = pl.pallas_call(
        attention_kernel,
        out_shape=jax.ShapeDtypeStruct((T * C, B), jnp.float32),
        grid_spec=pltpu.PrefetchScalarGridSpec(
            num_scalar_prefetch=0,
            grid=(num_chunks,),
            in_specs=in_specs,
            out_specs=out_specs,
            scratch_shapes=[
                pltpu.VMEM((T + 2 * XHALO, Bt), jnp.float32),   # padded gated input
                pltpu.VMEM(((T + 4) * C, Bt), BF16),            # padded conv1 output
                pltpu.VMEM(((T + 2) * C, Bt), BF16),            # padded conv2 output
            ]),
        compiler_params=pltpu.CompilerParams(
            dimension_semantics=("parallel",),
            vmem_limit_bytes=vmem_limit),
    )(xT, p["wd1"], p["bd1"], p["wd2"], p["bd2"], p["wd3"], p["bd3"],
      p["we1p"], p["be1"], p["we2f"], p["be2"], p["we3f"], p["be3"])

    # leading-dim split only -> metadata reshape, no data movement
    return out_flat.reshape(T, C, B)


def attention_output_to_bct(y_tcb):
    """Compatibility helper for consumers that need PyTorch's (B, C, T)."""
    return jnp.transpose(y_tcb, (2, 1, 0))


# --------------------------------------------------------------------------
# Deterministic parameter init (weight_norm reparam applied in JAX glue).
# Effective weights are rounded to bf16 once so the kernel (bf16 MXU operands)
# and the f32 reference use bit-identical weights.
# --------------------------------------------------------------------------
def init_params(key, time=32, out_channel=16):
    T, C = time, out_channel
    ks = jax.random.split(key, 12)

    def nrm(k, shape, scale=0.1):
        return scale * jax.random.normal(k, shape, dtype=jnp.float32)

    v1 = nrm(ks[0], (2 * T, T, 7));      b1 = nrm(ks[1], (2 * T,))
    v2 = nrm(ks[2], (2 * T, 2 * T, 5));  b2 = nrm(ks[3], (2 * T,))
    v3 = nrm(ks[4], (T, 2 * T, 3));      b3 = nrm(ks[5], (T,))

    def wnorm(v):
        n = jnp.sqrt(jnp.sum(v * v, axis=(1, 2), keepdims=True))
        g = n[:, 0, 0]                   # PyTorch weight_norm init: g = ||v||
        return g[:, None, None] * v / n  # effective conv weight

    def bf16_round(w):
        return w.astype(BF16).astype(jnp.float32)

    wd1_full = bf16_round(wnorm(v1))
    wd2_full = bf16_round(wnorm(v2))
    wd3_full = bf16_round(wnorm(v3))

    we1_full = bf16_round(nrm(ks[6], (C, 1, 7)));   be1 = nrm(ks[7], (C,))
    we2_full = bf16_round(nrm(ks[8], (C, C, 5)));   be2 = nrm(ks[9], (C,))
    we3_full = bf16_round(nrm(ks[10], (C, C, 3)));  be3 = nrm(ks[11], (C,))

    # kernel-ready forms
    we1p = jnp.concatenate([we1_full[:, 0, :], jnp.zeros((C, 1), jnp.float32)],
                           axis=1)                                  # (C, 8)
    we2f = jnp.transpose(we2_full, (0, 2, 1)).reshape(C, 5 * C)     # [c, j*C + i]
    we3f = jnp.transpose(we3_full, (0, 2, 1)).reshape(C, 3 * C)

    return dict(
        # full kernels / raw biases (used by the pure-JAX reference)
        wd1_full=wd1_full, wd2_full=wd2_full, wd3_full=wd3_full,
        we1_full=we1_full, we2_full=we2_full, we3_full=we3_full,
        bd1_v=b1, bd2_v=b2, bd3_v=b3, be1_v=be1, be2_v=be2, be3_v=be3,
        # kernel-ready: bf16 matmul operands, f32 column-vector biases
        wd1=wd1_full[:, :, 3].astype(BF16), bd1=b1[:, None],
        wd2=wd2_full[:, :, 2].astype(BF16), bd2=b2[:, None],
        wd3=wd3_full[:, :, 1].astype(BF16), bd3=b3[:, None],
        we1p=we1p.astype(BF16), be1=be1[:, None],
        we2f=we2f.astype(BF16), be2=be2[:, None],
        we3f=we3f.astype(BF16), be3=be3[:, None],
    )


# --------------------------------------------------------------------------
# Pure-JAX reference (mirrors the PyTorch forward exactly, f32 math).
# --------------------------------------------------------------------------
def _conv1d(x, w, b, pad):
    y = lax.conv_general_dilated(x, w, window_strides=(1,),
                                 padding=[(pad, pad)],
                                 dimension_numbers=('NCH', 'OIH', 'NCH'),
                                 precision=lax.Precision.HIGHEST)
    return y + b[None, :, None]


def ref_forward(x, p):
    xp = jnp.transpose(x, (0, 2, 1))                        # (B, T, 1)
    h = jax.nn.relu(_conv1d(xp, p["wd1_full"], p["bd1_v"], 3))
    h = jax.nn.relu(_conv1d(h, p["wd2_full"], p["bd2_v"], 2))
    z = jax.nn.sigmoid(_conv1d(h, p["wd3_full"], p["bd3_v"], 1))
    xm = jnp.transpose(xp * z, (0, 2, 1))                   # (B, 1, T)
    e = _conv1d(xm, p["we1_full"], p["be1_v"], 3)
    e = _conv1d(e, p["we2_full"], p["be2_v"], 2)
    e = _conv1d(e, p["we3_full"], p["be3_v"], 1)
    return jax.nn.relu(e)                                   # (B, C, T)


if __name__ == "__main__":
    # Test shapes: batch 256 (two 128-lane chunks -> 2 parallel grid steps),
    # time 32, out_channel 16.  Still a tiny problem (~32 KB of input).
    B, T, C = 256, 32, 16
    key = jax.random.PRNGKey(0)
    kx, kp = jax.random.split(key)
    x = jax.random.normal(kx, (B, 1, T), dtype=jnp.float32)
    params = init_params(kp, time=T, out_channel=C)

    out_tcb = jax.block_until_ready(attention_forward(x, params, batch_tile=128))
    ref_bct = jax.block_until_ready(ref_forward(x, params))
    ref_tcb = jnp.transpose(ref_bct, (2, 1, 0))             # compare in native layout

    assert out_tcb.shape == (T, C, B)
    err = jnp.max(jnp.abs(out_tcb - ref_tcb))
    # tolerance reflects bf16 MXU operands / bf16 feature scratch (f32 accum)
    # vs. the f32 reference
    assert jnp.allclose(out_tcb, ref_tcb, atol=2e-2, rtol=2e-2), f"max err {err}"
    print("KERNEL_OK")
</pallas_src>

<mosaic_0001>
module attributes {stable_mosaic.version = 11 : i64} {
  func.func @attention_kernel(%arg0: i32, %arg1: memref<32x128xf32, #tpu.memory_space<vmem>>, %arg2: memref<64x32xbf16, #tpu.memory_space<vmem>>, %arg3: memref<64x1xf32, #tpu.memory_space<vmem>>, %arg4: memref<64x64xbf16, #tpu.memory_space<vmem>>, %arg5: memref<64x1xf32, #tpu.memory_space<vmem>>, %arg6: memref<32x64xbf16, #tpu.memory_space<vmem>>, %arg7: memref<32x1xf32, #tpu.memory_space<vmem>>, %arg8: memref<16x8xbf16, #tpu.memory_space<vmem>>, %arg9: memref<16x1xf32, #tpu.memory_space<vmem>>, %arg10: memref<16x80xbf16, #tpu.memory_space<vmem>>, %arg11: memref<16x1xf32, #tpu.memory_space<vmem>>, %arg12: memref<16x48xbf16, #tpu.memory_space<vmem>>, %arg13: memref<16x1xf32, #tpu.memory_space<vmem>>, %arg14: memref<512x128xf32, #tpu.memory_space<vmem>>, %arg15: memref<48x128xf32, #tpu.memory_space<vmem>>, %arg16: memref<576x128xbf16, #tpu.memory_space<vmem>>, %arg17: memref<544x128xbf16, #tpu.memory_space<vmem>>) attributes {dimension_semantics = [#tpu.dimension_semantics<parallel>], iteration_bounds = array<i64: 2>, scalar_prefetch = 0 : i64, scratch_operands = 3 : i64, tpu.core_type = #tpu.core_type<tc>, window_params = [{transform_indices = @transform_0, window_bounds = array<i64: 32, 128>}, {pipeline_mode = #tpu.pipeline_mode<synchronous>, transform_indices = @transform_1, window_bounds = array<i64: 64, 32>}, {pipeline_mode = #tpu.pipeline_mode<synchronous>, transform_indices = @transform_2, window_bounds = array<i64: 64, 1>}, {pipeline_mode = #tpu.pipeline_mode<synchronous>, transform_indices = @transform_3, window_bounds = array<i64: 64, 64>}, {pipeline_mode = #tpu.pipeline_mode<synchronous>, transform_indices = @transform_4, window_bounds = array<i64: 64, 1>}, {pipeline_mode = #tpu.pipeline_mode<synchronous>, transform_indices = @transform_5, window_bounds = array<i64: 32, 64>}, {pipeline_mode = #tpu.pipeline_mode<synchronous>, transform_indices = @transform_6, window_bounds = array<i64: 32, 1>}, {pipeline_mode = #tpu.pipeline_mode<synchronous>, transform_indices = @transform_7, window_bounds = array<i64: 16, 8>}, {pipeline_mode = #tpu.pipeline_mode<synchronous>, transform_indices = @transform_8, window_bounds = array<i64: 16, 1>}, {pipeline_mode = #tpu.pipeline_mode<synchronous>, transform_indices = @transform_9, window_bounds = array<i64: 16, 80>}, {pipeline_mode = #tpu.pipeline_mode<synchronous>, transform_indices = @transform_10, window_bounds = array<i64: 16, 1>}, {pipeline_mode = #tpu.pipeline_mode<synchronous>, transform_indices = @transform_11, window_bounds = array<i64: 16, 48>}, {pipeline_mode = #tpu.pipeline_mode<synchronous>, transform_indices = @transform_12, window_bounds = array<i64: 16, 1>}, {transform_indices = @transform_13, window_bounds = array<i64: 512, 128>}]} {
    %c0 = arith.constant 0 : index
    %c0_0 = arith.constant 0 : index
    %0 = vector.load %arg1[%c0, %c0_0] : memref<32x128xf32, #tpu.memory_space<vmem>>, vector<32x128xf32>
    %c0_1 = arith.constant 0 : index
    %c0_2 = arith.constant 0 : index
    %1 = vector.load %arg2[%c0_1, %c0_2] : memref<64x32xbf16, #tpu.memory_space<vmem>>, vector<64x32xbf16>
    %2 = arith.truncf %0 : vector<32x128xf32> to vector<32x128xbf16>
    %cst = arith.constant dense<0.000000e+00> : vector<64x128xf32>
    %3 = tpu.matmul %1, %2, %cst {dimension_numbers = #tpu.dot_dimension_numbers<[1], [0], [0], [1], [0, 0, 1, 1], [], []>} : vector<64x32xbf16>, vector<32x128xbf16>, vector<64x128xf32> -> vector<64x128xf32>
    %c0_3 = arith.constant 0 : index
    %c0_4 = arith.constant 0 : index
    %4 = vector.load %arg3[%c0_3, %c0_4] : memref<64x1xf32, #tpu.memory_space<vmem>>, vector<64x1xf32>
    %5 = vector.broadcast %4 : vector<64x1xf32> to vector<64x128xf32>
    %6 = arith.addf %3, %5 : vector<64x128xf32>
    %cst_5 = arith.constant 0.000000e+00 : f32
    %7 = vector.broadcast %cst_5 : f32 to vector<64x128xf32>
    %8 = arith.maximumf %6, %7 : vector<64x128xf32>
    %c0_6 = arith.constant 0 : index
    %c0_7 = arith.constant 0 : index
    %9 = vector.load %arg4[%c0_6, %c0_7] : memref<64x64xbf16, #tpu.memory_space<vmem>>, vector<64x64xbf16>
    %10 = arith.truncf %8 : vector<64x128xf32> to vector<64x128xbf16>
    %cst_8 = arith.constant dense<0.000000e+00> : vector<64x128xf32>
    %11 = tpu.matmul %9, %10, %cst_8 {dimension_numbers = #tpu.dot_dimension_numbers<[1], [0], [0], [1], [0, 0, 1, 1], [], []>} : vector<64x64xbf16>, vector<64x128xbf16>, vector<64x128xf32> -> vector<64x128xf32>
    %c0_9 = arith.constant 0 : index
    %c0_10 = arith.constant 0 : index
    %12 = vector.load %arg5[%c0_9, %c0_10] : memref<64x1xf32, #tpu.memory_space<vmem>>, vector<64x1xf32>
    %13 = vector.broadcast %12 : vector<64x1xf32> to vector<64x128xf32>
    %14 = arith.addf %11, %13 : vector<64x128xf32>
    %cst_11 = arith.constant 0.000000e+00 : f32
    %15 = vector.broadcast %cst_11 : f32 to vector<64x128xf32>
    %16 = arith.maximumf %14, %15 : vector<64x128xf32>
    %c0_12 = arith.constant 0 : index
    %c0_13 = arith.constant 0 : index
    %17 = vector.load %arg6[%c0_12, %c0_13] : memref<32x64xbf16, #tpu.memory_space<vmem>>, vector<32x64xbf16>
    %18 = arith.truncf %16 : vector<64x128xf32> to vector<64x128xbf16>
    %cst_14 = arith.constant dense<0.000000e+00> : vector<32x128xf32>
    %19 = tpu.matmul %17, %18, %cst_14 {dimension_numbers = #tpu.dot_dimension_numbers<[1], [0], [0], [1], [0, 0, 1, 1], [], []>} : vector<32x64xbf16>, vector<64x128xbf16>, vector<32x128xf32> -> vector<32x128xf32>
    %c0_15 = arith.constant 0 : index
    %c0_16 = arith.constant 0 : index
    %20 = vector.load %arg7[%c0_15, %c0_16] : memref<32x1xf32, #tpu.memory_space<vmem>>, vector<32x1xf32>
    %21 = vector.broadcast %20 : vector<32x1xf32> to vector<32x128xf32>
    %22 = arith.addf %19, %21 : vector<32x128xf32>
    %23 = arith.negf %22 : vector<32x128xf32>
    %24 = math.exp %23 : vector<32x128xf32>
    %cst_17 = arith.constant 1.000000e+00 : f32
    %25 = vector.broadcast %cst_17 : f32 to vector<32x128xf32>
    %26 = arith.addf %25, %24 : vector<32x128xf32>
    %27 = arith.divf %25, %26 : vector<32x128xf32>
    %28 = arith.mulf %0, %27 : vector<32x128xf32>
    %cst_18 = arith.constant 0.000000e+00 : f32
    %29 = vector.broadcast %cst_18 : f32 to vector<8x128xf32>
    %c0_19 = arith.constant 0 : index
    %c0_20 = arith.constant 0 : index
    %30 = vector.load %arg15[%c0_19, %c0_20] : memref<48x128xf32, #tpu.memory_space<vmem>>, vector<8x128xf32>
    tpu.vector_store %arg15[%c0_19, %c0_20], %29 {strides = array<i32>} : memref<48x128xf32, #tpu.memory_space<vmem>>, vector<8x128xf32>,
    %cst_21 = arith.constant 0.000000e+00 : f32
    %31 = vector.broadcast %cst_21 : f32 to vector<8x128xf32>
    %c40 = arith.constant 40 : index
    %c0_22 = arith.constant 0 : index
    %32 = vector.load %arg15[%c40, %c0_22] : memref<48x128xf32, #tpu.memory_space<vmem>>, vector<8x128xf32>
    tpu.vector_store %arg15[%c40, %c0_22], %31 {strides = array<i32>} : memref<48x128xf32, #tpu.memory_space<vmem>>, vector<8x128xf32>,
    %cst_23 = arith.constant 0.000000e+00 : bf16
    %33 = vector.broadcast %cst_23 : bf16 to vector<32x128xbf16>
    %c0_24 = arith.constant 0 : index
    %c0_25 = arith.constant 0 : index
    %34 = vector.load %arg16[%c0_24, %c0_25] : memref<576x128xbf16, #tpu.memory_space<vmem>>, vector<32x128xbf16>
    tpu.vector_store %arg16[%c0_24, %c0_25], %33 {strides = array<i32>} : memref<576x128xbf16, #tpu.memory_space<vmem>>, vector<32x128xbf16>,
    %cst_26 = arith.constant 0.000000e+00 : bf16
    %35 = vector.broadcast %cst_26 : bf16 to vector<32x128xbf16>
    %c544 = arith.constant 544 : index
    %c0_27 = arith.constant 0 : index
    %36 = vector.load %arg16[%c544, %c0_27] : memref<576x128xbf16, #tpu.memory_space<vmem>>, vector<32x128xbf16>
    tpu.vector_store %arg16[%c544, %c0_27], %35 {strides = array<i32>} : memref<576x128xbf16, #tpu.memory_space<vmem>>, vector<32x128xbf16>,
    %cst_28 = arith.constant 0.000000e+00 : bf16
    %37 = vector.broadcast %cst_28 : bf16 to vector<16x128xbf16>
    %c0_29 = arith.constant 0 : index
    %c0_30 = arith.constant 0 : index
    %38 = vector.load %arg17[%c0_29, %c0_30] : memref<544x128xbf16, #tpu.memory_space<vmem>>, vector<16x128xbf16>
    tpu.vector_store %arg17[%c0_29, %c0_30], %37 {strides = array<i32>} : memref<544x128xbf16, #tpu.memory_space<vmem>>, vector<16x128xbf16>,
    %cst_31 = arith.constant 0.000000e+00 : bf16
    %39 = vector.broadcast %cst_31 : bf16 to vector<16x128xbf16>
    %c528 = arith.constant 528 : index
    %c0_32 = arith.constant 0 : index
    %40 = vector.load %arg17[%c528, %c0_32] : memref<544x128xbf16, #tpu.memory_space<vmem>>, vector<16x128xbf16>
    tpu.vector_store %arg17[%c528, %c0_32], %39 {strides = array<i32>} : memref<544x128xbf16, #tpu.memory_space<vmem>>, vector<16x128xbf16>,
    %c8 = arith.constant 8 : index
    %c0_33 = arith.constant 0 : index
    %41 = vector.load %arg15[%c8, %c0_33] : memref<48x128xf32, #tpu.memory_space<vmem>>, vector<32x128xf32>
    tpu.vector_store %arg15[%c8, %c0_33], %28 {strides = array<i32>} : memref<48x128xf32, #tpu.memory_space<vmem>>, vector<32x128xf32>,
    %c0_34 = arith.constant 0 : index
    %c0_35 = arith.constant 0 : index
    %42 = vector.load %arg8[%c0_34, %c0_35] : memref<16x8xbf16, #tpu.memory_space<vmem>>, vector<16x8xbf16>
    %c0_36 = arith.constant 0 : index
    %c0_37 = arith.constant 0 : index
    %43 = vector.load %arg9[%c0_36, %c0_37] : memref<16x1xf32, #tpu.memory_space<vmem>>, vector<16x1xf32>
    %c0_38 = arith.constant 0 : index
    %c0_39 = arith.constant 0 : index
    %44 = vector.load %arg10[%c0_38, %c0_39] : memref<16x80xbf16, #tpu.memory_space<vmem>>, vector<16x80xbf16>
    %c0_40 = arith.constant 0 : index
    %c0_41 = arith.constant 0 : index
    %45 = vector.load %arg11[%c0_40, %c0_41] : memref<16x1xf32, #tpu.memory_space<vmem>>, vector<16x1xf32>
    %c0_42 = arith.constant 0 : index
    %c0_43 = arith.constant 0 : index
    %46 = vector.load %arg12[%c0_42, %c0_43] : memref<16x48xbf16, #tpu.memory_space<vmem>>, vector<16x48xbf16>
    %c0_44 = arith.constant 0 : index
    %c0_45 = arith.constant 0 : index
    %47 = vector.load %arg13[%c0_44, %c0_45] : memref<16x1xf32, #tpu.memory_space<vmem>>, vector<16x1xf32>
    %c5 = arith.constant 5 : index
    %c0_46 = arith.constant 0 : index
    %48 = vector.load %arg15[%c5, %c0_46] : memref<48x128xf32, #tpu.memory_space<vmem>>, vector<8x128xf32>
    %49 = arith.truncf %48 : vector<8x128xf32> to vector<8x128xbf16>
    %cst_47 = arith.constant dense<0.000000e+00> : vector<16x128xf32>
    %50 = tpu.matmul %42, %49, %cst_47 {dimension_numbers = #tpu.dot_dimension_numbers<[1], [0], [0], [1], [0, 0, 1, 1], [], []>} : vector<16x8xbf16>, vector<8x128xbf16>, vector<16x128xf32> -> vector<16x128xf32>
    %51 = vector.broadcast %43 : vector<16x1xf32> to vector<16x128xf32>
    %52 = arith.addf %50, %51 : vector<16x128xf32>
    %53 = arith.truncf %52 : vector<16x128xf32> to vector<16x128xbf16>
    %c32 = arith.constant 32 : index
    %c0_48 = arith.constant 0 : index
    %54 = vector.load %arg16[%c32, %c0_48] : memref<576x128xbf16, #tpu.memory_space<vmem>>, vector<16x128xbf16>
    tpu.vector_store %arg16[%c32, %c0_48], %53 {strides = array<i32>} : memref<576x128xbf16, #tpu.memory_space<vmem>>, vector<16x128xbf16>,
    %c6 = arith.constant 6 : index
    %c0_49 = arith.constant 0 : index
    %55 = vector.load %arg15[%c6, %c0_49] : memref<48x128xf32, #tpu.memory_space<vmem>>, vector<8x128xf32>
    %56 = arith.truncf %55 : vector<8x128xf32> to vector<8x128xbf16>
    %cst_50 = arith.constant dense<0.000000e+00> : vector<16x128xf32>
    %57 = tpu.matmul %42, %56, %cst_50 {dimension_numbers = #tpu.dot_dimension_numbers<[1], [0], [0], [1], [0, 0, 1, 1], [], []>} : vector<16x8xbf16>, vector<8x128xbf16>, vector<16x128xf32> -> vector<16x128xf32>
    %58 = vector.broadcast %43 : vector<16x1xf32> to vector<16x128xf32>
    %59 = arith.addf %57, %58 : vector<16x128xf32>
    %60 = arith.truncf %59 : vector<16x128xf32> to vector<16x128xbf16>
    %c48 = arith.constant 48 : index
    %c0_51 = arith.constant 0 : index
    %61 = vector.load %arg16[%c48, %c0_51] : memref<576x128xbf16, #tpu.memory_space<vmem>>, vector<16x128xbf16>
    tpu.vector_store %arg16[%c48, %c0_51], %60 {strides = array<i32>} : memref<576x128xbf16, #tpu.memory_space<vmem>>, vector<16x128xbf16>,
    %c7 = arith.constant 7 : index
    %c0_52 = arith.constant 0 : index
    %62 = vector.load %arg15[%c7, %c0_52] : memref<48x128xf32, #tpu.memory_space<vmem>>, vector<8x128xf32>
    %63 = arith.truncf %62 : vector<8x128xf32> to vector<8x128xbf16>
    %cst_53 = arith.constant dense<0.000000e+00> : vector<16x128xf32>
    %64 = tpu.matmul %42, %63, %cst_53 {dimension_numbers = #tpu.dot_dimension_numbers<[1], [0], [0], [1], [0, 0, 1, 1], [], []>} : vector<16x8xbf16>, vector<8x128xbf16>, vector<16x128xf32> -> vector<16x128xf32>
    %65 = vector.broadcast %43 : vector<16x1xf32> to vector<16x128xf32>
    %66 = arith.addf %64, %65 : vector<16x128xf32>
    %67 = arith.truncf %66 : vector<16x128xf32> to vector<16x128xbf16>
    %c64 = arith.constant 64 : index
    %c0_54 = arith.constant 0 : index
    %68 = vector.load %arg16[%c64, %c0_54] : memref<576x128xbf16, #tpu.memory_space<vmem>>, vector<16x128xbf16>
    tpu.vector_store %arg16[%c64, %c0_54], %67 {strides = array<i32>} : memref<576x128xbf16, #tpu.memory_space<vmem>>, vector<16x128xbf16>,
    %c8_55 = arith.constant 8 : index
    %c0_56 = arith.constant 0 : index
    %69 = vector.load %arg15[%c8_55, %c0_56] : memref<48x128xf32, #tpu.memory_space<vmem>>, vector<8x128xf32>
    %70 = arith.truncf %69 : vector<8x128xf32> to vector<8x128xbf16>
    %cst_57 = arith.constant dense<0.000000e+00> : vector<16x128xf32>
    %71 = tpu.matmul %42, %70, %cst_57 {dimension_numbers = #tpu.dot_dimension_numbers<[1], [0], [0], [1], [0, 0, 1, 1], [], []>} : vector<16x8xbf16>, vector<8x128xbf16>, vector<16x128xf32> -> vector<16x128xf32>
    %72 = vector.broadcast %43 : vector<16x1xf32> to vector<16x128xf32>
    %73 = arith.addf %71, %72 : vector<16x128xf32>
    %74 = arith.truncf %73 : vector<16x128xf32> to vector<16x128xbf16>
    %c80 = arith.constant 80 : index
    %c0_58 = arith.constant 0 : index
    %75 = vector.load %arg16[%c80, %c0_58] : memref<576x128xbf16, #tpu.memory_space<vmem>>, vector<16x128xbf16>
    tpu.vector_store %arg16[%c80, %c0_58], %74 {strides = array<i32>} : memref<576x128xbf16, #tpu.memory_space<vmem>>, vector<16x128xbf16>,
    %c9 = arith.constant 9 : index
    %c0_59 = arith.constant 0 : index
    %76 = vector.load %arg15[%c9, %c0_59] : memref<48x128xf32, #tpu.memory_space<vmem>>, vector<8x128xf32>
    %77 = arith.truncf %76 : vector<8x128xf32> to vector<8x128xbf16>
    %cst_60 = arith.constant dense<0.000000e+00> : vector<16x128xf32>
    %78 = tpu.matmul %42, %77, %cst_60 {dimension_numbers = #tpu.dot_dimension_numbers<[1], [0], [0], [1], [0, 0, 1, 1], [], []>} : vector<16x8xbf16>, vector<8x128xbf16>, vector<16x128xf32> -> vector<16x128xf32>
    %79 = vector.broadcast %43 : vector<16x1xf32> to vector<16x128xf32>
    %80 = arith.addf %78, %79 : vector<16x128xf32>
    %81 = arith.truncf %80 : vector<16x128xf32> to vector<16x128xbf16>
    %c96 = arith.constant 96 : index
    %c0_61 = arith.constant 0 : index
    %82 = vector.load %arg16[%c96, %c0_61] : memref<576x128xbf16, #tpu.memory_space<vmem>>, vector<16x128xbf16>
    tpu.vector_store %arg16[%c96, %c0_61], %81 {strides = array<i32>} : memref<576x128xbf16, #tpu.memory_space<vmem>>, vector<16x128xbf16>,
    %c10 = arith.constant 10 : index
    %c0_62 = arith.constant 0 : index
    %83 = vector.load %arg15[%c10, %c0_62] : memref<48x128xf32, #tpu.memory_space<vmem>>, vector<8x128xf32>
    %84 = arith.truncf %83 : vector<8x128xf32> to vector<8x128xbf16>
    %cst_63 = arith.constant dense<0.000000e+00> : vector<16x128xf32>
    %85 = tpu.matmul %42, %84, %cst_63 {dimension_numbers = #tpu.dot_dimension_numbers<[1], [0], [0], [1], [0, 0, 1, 1], [], []>} : vector<16x8xbf16>, vector<8x128xbf16>, vector<16x128xf32> -> vector<16x128xf32>
    %86 = vector.broadcast %43 : vector<16x1xf32> to vector<16x128xf32>
    %87 = arith.addf %85, %86 : vector<16x128xf32>
    %88 = arith.truncf %87 : vector<16x128xf32> to vector<16x128xbf16>
    %c112 = arith.constant 112 : index
    %c0_64 = arith.constant 0 : index
    %89 = vector.load %arg16[%c112, %c0_64] : memref<576x128xbf16, #tpu.memory_space<vmem>>, vector<16x128xbf16>
    tpu.vector_store %arg16[%c112, %c0_64], %88 {strides = array<i32>} : memref<576x128xbf16, #tpu.memory_space<vmem>>, vector<16x128xbf16>,
    %c11 = arith.constant 11 : index
    %c0_65 = arith.constant 0 : index
    %90 = vector.load %arg15[%c11, %c0_65] : memref<48x128xf32, #tpu.memory_space<vmem>>, vector<8x128xf32>
    %91 = arith.truncf %90 : vector<8x128xf32> to vector<8x128xbf16>
    %cst_66 = arith.constant dense<0.000000e+00> : vector<16x128xf32>
    %92 = tpu.matmul %42, %91, %cst_66 {dimension_numbers = #tpu.dot_dimension_numbers<[1], [0], [0], [1], [0, 0, 1, 1], [], []>} : vector<16x8xbf16>, vector<8x128xbf16>, vector<16x128xf32> -> vector<16x128xf32>
    %93 = vector.broadcast %43 : vector<16x1xf32> to vector<16x128xf32>
    %94 = arith.addf %92, %93 : vector<16x128xf32>
    %95 = arith.truncf %94 : vector<16x128xf32> to vector<16x128xbf16>
    %c128 = arith.constant 128 : index
    %c0_67 = arith.constant 0 : index
    %96 = vector.load %arg16[%c128, %c0_67] : memref<576x128xbf16, #tpu.memory_space<vmem>>, vector<16x128xbf16>
    tpu.vector_store %arg16[%c128, %c0_67], %95 {strides = array<i32>} : memref<576x128xbf16, #tpu.memory_space<vmem>>, vector<16x128xbf16>,
    %c12 = arith.constant 12 : index
    %c0_68 = arith.constant 0 : index
    %97 = vector.load %arg15[%c12, %c0_68] : memref<48x128xf32, #tpu.memory_space<vmem>>, vector<8x128xf32>
    %98 = arith.truncf %97 : vector<8x128xf32> to vector<8x128xbf16>
    %cst_69 = arith.constant dense<0.000000e+00> : vector<16x128xf32>
    %99 = tpu.matmul %42, %98, %cst_69 {dimension_numbers = #tpu.dot_dimension_numbers<[1], [0], [0], [1], [0, 0, 1, 1], [], []>} : vector<16x8xbf16>, vector<8x128xbf16>, vector<16x128xf32> -> vector<16x128xf32>
    %100 = vector.broadcast %43 : vector<16x1xf32> to vector<16x128xf32>
    %101 = arith.addf %99, %100 : vector<16x128xf32>
    %102 = arith.truncf %101 : vector<16x128xf32> to vector<16x128xbf16>
    %c144 = arith.constant 144 : index
    %c0_70 = arith.constant 0 : index
    %103 = vector.load %arg16[%c144, %c0_70] : memref<576x128xbf16, #tpu.memory_space<vmem>>, vector<16x128xbf16>
    tpu.vector_store %arg16[%c144, %c0_70], %102 {strides = array<i32>} : memref<576x128xbf16, #tpu.memory_space<vmem>>, vector<16x128xbf16>,
    %c13 = arith.constant 13 : index
    %c0_71 = arith.constant 0 : index
    %104 = vector.load %arg15[%c13, %c0_71] : memref<48x128xf32, #tpu.memory_space<vmem>>, vector<8x128xf32>
    %105 = arith.truncf %104 : vector<8x128xf32> to vector<8x128xbf16>
    %cst_72 = arith.constant dense<0.000000e+00> : vector<16x128xf32>
    %106 = tpu.matmul %42, %105, %cst_72 {dimension_numbers = #tpu.dot_dimension_numbers<[1], [0], [0], [1], [0, 0, 1, 1], [], []>} : vector<16x8xbf16>, vector<8x128xbf16>, vector<16x128xf32> -> vector<16x128xf32>
    %107 = vector.broadcast %43 : vector<16x1xf32> to vector<16x128xf32>
    %108 = arith.addf %106, %107 : vector<16x128xf32>
    %109 = arith.truncf %108 : vector<16x128xf32> to vector<16x128xbf16>
    %c160 = arith.constant 160 : index
    %c0_73 = arith.constant 0 : index
    %110 = vector.load %arg16[%c160, %c0_73] : memref<576x128xbf16, #tpu.memory_space<vmem>>, vector<16x128xbf16>
    tpu.vector_store %arg16[%c160, %c0_73], %109 {strides = array<i32>} : memref<576x128xbf16, #tpu.memory_space<vmem>>, vector<16x128xbf16>,
    %c14 = arith.constant 14 : index
    %c0_74 = arith.constant 0 : index
    %111 = vector.load %arg15[%c14, %c0_74] : memref<48x128xf32, #tpu.memory_space<vmem>>, vector<8x128xf32>
    %112 = arith.truncf %111 : vector<8x128xf32> to vector<8x128xbf16>
    %cst_75 = arith.constant dense<0.000000e+00> : vector<16x128xf32>
    %113 = tpu.matmul %42, %112, %cst_75 {dimension_numbers = #tpu.dot_dimension_numbers<[1], [0], [0], [1], [0, 0, 1, 1], [], []>} : vector<16x8xbf16>, vector<8x128xbf16>, vector<16x128xf32> -> vector<16x128xf32>
    %114 = vector.broadcast %43 : vector<16x1xf32> to vector<16x128xf32>
    %115 = arith.addf %113, %114 : vector<16x128xf32>
    %116 = arith.truncf %115 : vector<16x128xf32> to vector<16x128xbf16>
    %c176 = arith.constant 176 : index
    %c0_76 = arith.constant 0 : index
    %117 = vector.load %arg16[%c176, %c0_76] : memref<576x128xbf16, #tpu.memory_space<vmem>>, vector<16x128xbf16>
    tpu.vector_store %arg16[%c176, %c0_76], %116 {strides = array<i32>} : memref<576x128xbf16, #tpu.memory_space<vmem>>, vector<16x128xbf16>,
    %c15 = arith.constant 15 : index
    %c0_77 = arith.constant 0 : index
    %118 = vector.load %arg15[%c15, %c0_77] : memref<48x128xf32, #tpu.memory_space<vmem>>, vector<8x128xf32>
    %119 = arith.truncf %118 : vector<8x128xf32> to vector<8x128xbf16>
    %cst_78 = arith.constant dense<0.000000e+00> : vector<16x128xf32>
    %120 = tpu.matmul %42, %119, %cst_78 {dimension_numbers = #tpu.dot_dimension_numbers<[1], [0], [0], [1], [0, 0, 1, 1], [], []>} : vector<16x8xbf16>, vector<8x128xbf16>, vector<16x128xf32> -> vector<16x128xf32>
    %121 = vector.broadcast %43 : vector<16x1xf32> to vector<16x128xf32>
    %122 = arith.addf %120, %121 : vector<16x128xf32>
    %123 = arith.truncf %122 : vector<16x128xf32> to vector<16x128xbf16>
    %c192 = arith.constant 192 : index
    %c0_79 = arith.constant 0 : index
    %124 = vector.load %arg16[%c192, %c0_79] : memref<576x128xbf16, #tpu.memory_space<vmem>>, vector<16x128xbf16>
    tpu.vector_store %arg16[%c192, %c0_79], %123 {strides = array<i32>} : memref<576x128xbf16, #tpu.memory_space<vmem>>, vector<16x128xbf16>,
    %c16 = arith.constant 16 : index
    %c0_80 = arith.constant 0 : index
    %125 = vector.load %arg15[%c16, %c0_80] : memref<48x128xf32, #tpu.memory_space<vmem>>, vector<8x128xf32>
    %126 = arith.truncf %125 : vector<8x128xf32> to vector<8x128xbf16>
    %cst_81 = arith.constant dense<0.000000e+00> : vector<16x128xf32>
    %127 = tpu.matmul %42, %126, %cst_81 {dimension_numbers = #tpu.dot_dimension_numbers<[1], [0], [0], [1], [0, 0, 1, 1], [], []>} : vector<16x8xbf16>, vector<8x128xbf16>, vector<16x128xf32> -> vector<16x128xf32>
    %128 = vector.broadcast %43 : vector<16x1xf32> to vector<16x128xf32>
    %129 = arith.addf %127, %128 : vector<16x128xf32>
    %130 = arith.truncf %129 : vector<16x128xf32> to vector<16x128xbf16>
    %c208 = arith.constant 208 : index
    %c0_82 = arith.constant 0 : index
    %131 = vector.load %arg16[%c208, %c0_82] : memref<576x128xbf16, #tpu.memory_space<vmem>>, vector<16x128xbf16>
    tpu.vector_store %arg16[%c208, %c0_82], %130 {strides = array<i32>} : memref<576x128xbf16, #tpu.memory_space<vmem>>, vector<16x128xbf16>,
    %c17 = arith.constant 17 : index
    %c0_83 = arith.constant 0 : index
    %132 = vector.load %arg15[%c17, %c0_83] : memref<48x128xf32, #tpu.memory_space<vmem>>, vector<8x128xf32>
    %133 = arith.truncf %132 : vector<8x128xf32> to vector<8x128xbf16>
    %cst_84 = arith.constant dense<0.000000e+00> : vector<16x128xf32>
    %134 = tpu.matmul %42, %133, %cst_84 {dimension_numbers = #tpu.dot_dimension_numbers<[1], [0], [0], [1], [0, 0, 1, 1], [], []>} : vector<16x8xbf16>, vector<8x128xbf16>, vector<16x128xf32> -> vector<16x128xf32>
    %135 = vector.broadcast %43 : vector<16x1xf32> to vector<16x128xf32>
    %136 = arith.addf %134, %135 : vector<16x128xf32>
    %137 = arith.truncf %136 : vector<16x128xf32> to vector<16x128xbf16>
    %c224 = arith.constant 224 : index
    %c0_85 = arith.constant 0 : index
    %138 = vector.load %arg16[%c224, %c0_85] : memref<576x128xbf16, #tpu.memory_space<vmem>>, vector<16x128xbf16>
    tpu.vector_store %arg16[%c224, %c0_85], %137 {strides = array<i32>} : memref<576x128xbf16, #tpu.memory_space<vmem>>, vector<16x128xbf16>,
    %c18 = arith.constant 18 : index
    %c0_86 = arith.constant 0 : index
    %139 = vector.load %arg15[%c18, %c0_86] : memref<48x128xf32, #tpu.memory_space<vmem>>, vector<8x128xf32>
    %140 = arith.truncf %139 : vector<8x128xf32> to vector<8x128xbf16>
    %cst_87 = arith.constant dense<0.000000e+00> : vector<16x128xf32>
    %141 = tpu.matmul %42, %140, %cst_87 {dimension_numbers = #tpu.dot_dimension_numbers<[1], [0], [0], [1], [0, 0, 1, 1], [], []>} : vector<16x8xbf16>, vector<8x128xbf16>, vector<16x128xf32> -> vector<16x128xf32>
    %142 = vector.broadcast %43 : vector<16x1xf32> to vector<16x128xf32>
    %143 = arith.addf %141, %142 : vector<16x128xf32>
    %144 = arith.truncf %143 : vector<16x128xf32> to vector<16x128xbf16>
    %c240 = arith.constant 240 : index
    %c0_88 = arith.constant 0 : index
    %145 = vector.load %arg16[%c240, %c0_88] : memref<576x128xbf16, #tpu.memory_space<vmem>>, vector<16x128xbf16>
    tpu.vector_store %arg16[%c240, %c0_88], %144 {strides = array<i32>} : memref<576x128xbf16, #tpu.memory_space<vmem>>, vector<16x128xbf16>,
    %c19 = arith.constant 19 : index
    %c0_89 = arith.constant 0 : index
    %146 = vector.load %arg15[%c19, %c0_89] : memref<48x128xf32, #tpu.memory_space<vmem>>, vector<8x128xf32>
    %147 = arith.truncf %146 : vector<8x128xf32> to vector<8x128xbf16>
    %cst_90 = arith.constant dense<0.000000e+00> : vector<16x128xf32>
    %148 = tpu.matmul %42, %147, %cst_90 {dimension_numbers = #tpu.dot_dimension_numbers<[1], [0], [0], [1], [0, 0, 1, 1], [], []>} : vector<16x8xbf16>, vector<8x128xbf16>, vector<16x128xf32> -> vector<16x128xf32>
    %149 = vector.broadcast %43 : vector<16x1xf32> to vector<16x128xf32>
    %150 = arith.addf %148, %149 : vector<16x128xf32>
    %151 = arith.truncf %150 : vector<16x128xf32> to vector<16x128xbf16>
    %c256 = arith.constant 256 : index
    %c0_91 = arith.constant 0 : index
    %152 = vector.load %arg16[%c256, %c0_91] : memref<576x128xbf16, #tpu.memory_space<vmem>>, vector<16x128xbf16>
    tpu.vector_store %arg16[%c256, %c0_91], %151 {strides = array<i32>} : memref<576x128xbf16, #tpu.memory_space<vmem>>, vector<16x128xbf16>,
    %c20 = arith.constant 20 : index
    %c0_92 = arith.constant 0 : index
    %153 = vector.load %arg15[%c20, %c0_92] : memref<48x128xf32, #tpu.memory_space<vmem>>, vector<8x128xf32>
    %154 = arith.truncf %153 : vector<8x128xf32> to vector<8x128xbf16>
    %cst_93 = arith.constant dense<0.000000e+00> : vector<16x128xf32>
    %155 = tpu.matmul %42, %154, %cst_93 {dimension_numbers = #tpu.dot_dimension_numbers<[1], [0], [0], [1], [0, 0, 1, 1], [], []>} : vector<16x8xbf16>, vector<8x128xbf16>, vector<16x128xf32> -> vector<16x128xf32>
    %156 = vector.broadcast %43 : vector<16x1xf32> to vector<16x128xf32>
    %157 = arith.addf %155, %156 : vector<16x128xf32>
    %158 = arith.truncf %157 : vector<16x128xf32> to vector<16x128xbf16>
    %c272 = arith.constant 272 : index
    %c0_94 = arith.constant 0 : index
    %159 = vector.load %arg16[%c272, %c0_94] : memref<576x128xbf16, #tpu.memory_space<vmem>>, vector<16x128xbf16>
    tpu.vector_store %arg16[%c272, %c0_94], %158 {strides = array<i32>} : memref<576x128xbf16, #tpu.memory_space<vmem>>, vector<16x128xbf16>,
    %c21 = arith.constant 21 : index
    %c0_95 = arith.constant 0 : index
    %160 = vector.load %arg15[%c21, %c0_95] : memref<48x128xf32, #tpu.memory_space<vmem>>, vector<8x128xf32>
    %161 = arith.truncf %160 : vector<8x128xf32> to vector<8x128xbf16>
    %cst_96 = arith.constant dense<0.000000e+00> : vector<16x128xf32>
    %162 = tpu.matmul %42, %161, %cst_96 {dimension_numbers = #tpu.dot_dimension_numbers<[1], [0], [0], [1], [0, 0, 1, 1], [], []>} : vector<16x8xbf16>, vector<8x128xbf16>, vector<16x128xf32> -> vector<16x128xf32>
    %163 = vector.broadcast %43 : vector<16x1xf32> to vector<16x128xf32>
    %164 = arith.addf %162, %163 : vector<16x128xf32>
    %165 = arith.truncf %164 : vector<16x128xf32> to vector<16x128xbf16>
    %c288 = arith.constant 288 : index
    %c0_97 = arith.constant 0 : index
    %166 = vector.load %arg16[%c288, %c0_97] : memref<576x128xbf16, #tpu.memory_space<vmem>>, vector<16x128xbf16>
    tpu.vector_store %arg16[%c288, %c0_97], %165 {strides = array<i32>} : memref<576x128xbf16, #tpu.memory_space<vmem>>, vector<16x128xbf16>,
    %c22 = arith.constant 22 : index
    %c0_98 = arith.constant 0 : index
    %167 = vector.load %arg15[%c22, %c0_98] : memref<48x128xf32, #tpu.memory_space<vmem>>, vector<8x128xf32>
    %168 = arith.truncf %167 : vector<8x128xf32> to vector<8x128xbf16>
    %cst_99 = arith.constant dense<0.000000e+00> : vector<16x128xf32>
    %169 = tpu.matmul %42, %168, %cst_99 {dimension_numbers = #tpu.dot_dimension_numbers<[1], [0], [0], [1], [0, 0, 1, 1], [], []>} : vector<16x8xbf16>, vector<8x128xbf16>, vector<16x128xf32> -> vector<16x128xf32>
    %170 = vector.broadcast %43 : vector<16x1xf32> to vector<16x128xf32>
    %171 = arith.addf %169, %170 : vector<16x128xf32>
    %172 = arith.truncf %171 : vector<16x128xf32> to vector<16x128xbf16>
    %c304 = arith.constant 304 : index
    %c0_100 = arith.constant 0 : index
    %173 = vector.load %arg16[%c304, %c0_100] : memref<576x128xbf16, #tpu.memory_space<vmem>>, vector<16x128xbf16>
    tpu.vector_store %arg16[%c304, %c0_100], %172 {strides = array<i32>} : memref<576x128xbf16, #tpu.memory_space<vmem>>, vector<16x128xbf16>,
    %c23 = arith.constant 23 : index
    %c0_101 = arith.constant 0 : index
    %174 = vector.load %arg15[%c23, %c0_101] : memref<48x128xf32, #tpu.memory_space<vmem>>, vector<8x128xf32>
    %175 = arith.truncf %174 : vector<8x128xf32> to vector<8x128xbf16>
    %cst_102 = arith.constant dense<0.000000e+00> : vector<16x128xf32>
    %176 = tpu.matmul %42, %175, %cst_102 {dimension_numbers = #tpu.dot_dimension_numbers<[1], [0], [0], [1], [0, 0, 1, 1], [], []>} : vector<16x8xbf16>, vector<8x128xbf16>, vector<16x128xf32> -> vector<16x128xf32>
    %177 = vector.broadcast %43 : vector<16x1xf32> to vector<16x128xf32>
    %178 = arith.addf %176, %177 : vector<16x128xf32>
    %179 = arith.truncf %178 : vector<16x128xf32> to vector<16x128xbf16>
    %c320 = arith.constant 320 : index
    %c0_103 = arith.constant 0 : index
    %180 = vector.load %arg16[%c320, %c0_103] : memref<576x128xbf16, #tpu.memory_space<vmem>>, vector<16x128xbf16>
    tpu.vector_store %arg16[%c320, %c0_103], %179 {strides = array<i32>} : memref<576x128xbf16, #tpu.memory_space<vmem>>, vector<16x128xbf16>,
    %c24 = arith.constant 24 : index
    %c0_104 = arith.constant 0 : index
    %181 = vector.load %arg15[%c24, %c0_104] : memref<48x128xf32, #tpu.memory_space<vmem>>, vector<8x128xf32>
    %182 = arith.truncf %181 : vector<8x128xf32> to vector<8x128xbf16>
    %cst_105 = arith.constant dense<0.000000e+00> : vector<16x128xf32>
    %183 = tpu.matmul %42, %182, %cst_105 {dimension_numbers = #tpu.dot_dimension_numbers<[1], [0], [0], [1], [0, 0, 1, 1], [], []>} : vector<16x8xbf16>, vector<8x128xbf16>, vector<16x128xf32> -> vector<16x128xf32>
    %184 = vector.broadcast %43 : vector<16x1xf32> to vector<16x128xf32>
    %185 = arith.addf %183, %184 : vector<16x128xf32>
    %186 = arith.truncf %185 : vector<16x128xf32> to vector<16x128xbf16>
    %c336 = arith.constant 336 : index
    %c0_106 = arith.constant 0 : index
    %187 = vector.load %arg16[%c336, %c0_106] : memref<576x128xbf16, #tpu.memory_space<vmem>>, vector<16x128xbf16>
    tpu.vector_store %arg16[%c336, %c0_106], %186 {strides = array<i32>} : memref<576x128xbf16, #tpu.memory_space<vmem>>, vector<16x128xbf16>,
    %c25 = arith.constant 25 : index
    %c0_107 = arith.constant 0 : index
    %188 = vector.load %arg15[%c25, %c0_107] : memref<48x128xf32, #tpu.memory_space<vmem>>, vector<8x128xf32>
    %189 = arith.truncf %188 : vector<8x128xf32> to vector<8x128xbf16>
    %cst_108 = arith.constant dense<0.000000e+00> : vector<16x128xf32>
    %190 = tpu.matmul %42, %189, %cst_108 {dimension_numbers = #tpu.dot_dimension_numbers<[1], [0], [0], [1], [0, 0, 1, 1], [], []>} : vector<16x8xbf16>, vector<8x128xbf16>, vector<16x128xf32> -> vector<16x128xf32>
    %191 = vector.broadcast %43 : vector<16x1xf32> to vector<16x128xf32>
    %192 = arith.addf %190, %191 : vector<16x128xf32>
    %193 = arith.truncf %192 : vector<16x128xf32> to vector<16x128xbf16>
    %c352 = arith.constant 352 : index
    %c0_109 = arith.constant 0 : index
    %194 = vector.load %arg16[%c352, %c0_109] : memref<576x128xbf16, #tpu.memory_space<vmem>>, vector<16x128xbf16>
    tpu.vector_store %arg16[%c352, %c0_109], %193 {strides = array<i32>} : memref<576x128xbf16, #tpu.memory_space<vmem>>, vector<16x128xbf16>,
    %c26 = arith.constant 26 : index
    %c0_110 = arith.constant 0 : index
    %195 = vector.load %arg15[%c26, %c0_110] : memref<48x128xf32, #tpu.memory_space<vmem>>, vector<8x128xf32>
    %196 = arith.truncf %195 : vector<8x128xf32> to vector<8x128xbf16>
    %cst_111 = arith.constant dense<0.000000e+00> : vector<16x128xf32>
    %197 = tpu.matmul %42, %196, %cst_111 {dimension_numbers = #tpu.dot_dimension_numbers<[1], [0], [0], [1], [0, 0, 1, 1], [], []>} : vector<16x8xbf16>, vector<8x128xbf16>, vector<16x128xf32> -> vector<16x128xf32>
    %198 = vector.broadcast %43 : vector<16x1xf32> to vector<16x128xf32>
    %199 = arith.addf %197, %198 : vector<16x128xf32>
    %200 = arith.truncf %199 : vector<16x128xf32> to vector<16x128xbf16>
    %c368 = arith.constant 368 : index
    %c0_112 = arith.constant 0 : index
    %201 = vector.load %arg16[%c368, %c0_112] : memref<576x128xbf16, #tpu.memory_space<vmem>>, vector<16x128xbf16>
    tpu.vector_store %arg16[%c368, %c0_112], %200 {strides = array<i32>} : memref<576x128xbf16, #tpu.memory_space<vmem>>, vector<16x128xbf16>,
    %c27 = arith.constant 27 : index
    %c0_113 = arith.constant 0 : index
    %202 = vector.load %arg15[%c27, %c0_113] : memref<48x128xf32, #tpu.memory_space<vmem>>, vector<8x128xf32>
    %203 = arith.truncf %202 : vector<8x128xf32> to vector<8x128xbf16>
    %cst_114 = arith.constant dense<0.000000e+00> : vector<16x128xf32>
    %204 = tpu.matmul %42, %203, %cst_114 {dimension_numbers = #tpu.dot_dimension_numbers<[1], [0], [0], [1], [0, 0, 1, 1], [], []>} : vector<16x8xbf16>, vector<8x128xbf16>, vector<16x128xf32> -> vector<16x128xf32>
    %205 = vector.broadcast %43 : vector<16x1xf32> to vector<16x128xf32>
    %206 = arith.addf %204, %205 : vector<16x128xf32>
    %207 = arith.truncf %206 : vector<16x128xf32> to vector<16x128xbf16>
    %c384 = arith.constant 384 : index
    %c0_115 = arith.constant 0 : index
    %208 = vector.load %arg16[%c384, %c0_115] : memref<576x128xbf16, #tpu.memory_space<vmem>>, vector<16x128xbf16>
    tpu.vector_store %arg16[%c384, %c0_115], %207 {strides = array<i32>} : memref<576x128xbf16, #tpu.memory_space<vmem>>, vector<16x128xbf16>,
    %c28 = arith.constant 28 : index
    %c0_116 = arith.constant 0 : index
    %209 = vector.load %arg15[%c28, %c0_116] : memref<48x128xf32, #tpu.memory_space<vmem>>, vector<8x128xf32>
    %210 = arith.truncf %209 : vector<8x128xf32> to vector<8x128xbf16>
    %cst_117 = arith.constant dense<0.000000e+00> : vector<16x128xf32>
    %211 = tpu.matmul %42, %210, %cst_117 {dimension_numbers = #tpu.dot_dimension_numbers<[1], [0], [0], [1], [0, 0, 1, 1], [], []>} : vector<16x8xbf16>, vector<8x128xbf16>, vector<16x128xf32> -> vector<16x128xf32>
    %212 = vector.broadcast %43 : vector<16x1xf32> to vector<16x128xf32>
    %213 = arith.addf %211, %212 : vector<16x128xf32>
    %214 = arith.truncf %213 : vector<16x128xf32> to vector<16x128xbf16>
    %c400 = arith.constant 400 : index
    %c0_118 = arith.constant 0 : index
    %215 = vector.load %arg16[%c400, %c0_118] : memref<576x128xbf16, #tpu.memory_space<vmem>>, vector<16x128xbf16>
    tpu.vector_store %arg16[%c400, %c0_118], %214 {strides = array<i32>} : memref<576x128xbf16, #tpu.memory_space<vmem>>, vector<16x128xbf16>,
    %c29 = arith.constant 29 : index
    %c0_119 = arith.constant 0 : index
    %216 = vector.load %arg15[%c29, %c0_119] : memref<48x128xf32, #tpu.memory_space<vmem>>, vector<8x128xf32>
    %217 = arith.truncf %216 : vector<8x128xf32> to vector<8x128xbf16>
    %cst_120 = arith.constant dense<0.000000e+00> : vector<16x128xf32>
    %218 = tpu.matmul %42, %217, %cst_120 {dimension_numbers = #tpu.dot_dimension_numbers<[1], [0], [0], [1], [0, 0, 1, 1], [], []>} : vector<16x8xbf16>, vector<8x128xbf16>, vector<16x128xf32> -> vector<16x128xf32>
    %219 = vector.broadcast %43 : vector<16x1xf32> to vector<16x128xf32>
    %220 = arith.addf %218, %219 : vector<16x128xf32>
    %221 = arith.truncf %220 : vector<16x128xf32> to vector<16x128xbf16>
    %c416 = arith.constant 416 : index
    %c0_121 = arith.constant 0 : index
    %222 = vector.load %arg16[%c416, %c0_121] : memref<576x128xbf16, #tpu.memory_space<vmem>>, vector<16x128xbf16>
    tpu.vector_store %arg16[%c416, %c0_121], %221 {strides = array<i32>} : memref<576x128xbf16, #tpu.memory_space<vmem>>, vector<16x128xbf16>,
    %c30 = arith.constant 30 : index
    %c0_122 = arith.constant 0 : index
    %223 = vector.load %arg15[%c30, %c0_122] : memref<48x128xf32, #tpu.memory_space<vmem>>, vector<8x128xf32>
    %224 = arith.truncf %223 : vector<8x128xf32> to vector<8x128xbf16>
    %cst_123 = arith.constant dense<0.000000e+00> : vector<16x128xf32>
    %225 = tpu.matmul %42, %224, %cst_123 {dimension_numbers = #tpu.dot_dimension_numbers<[1], [0], [0], [1], [0, 0, 1, 1], [], []>} : vector<16x8xbf16>, vector<8x128xbf16>, vector<16x128xf32> -> vector<16x128xf32>
    %226 = vector.broadcast %43 : vector<16x1xf32> to vector<16x128xf32>
    %227 = arith.addf %225, %226 : vector<16x128xf32>
    %228 = arith.truncf %227 : vector<16x128xf32> to vector<16x128xbf16>
    %c432 = arith.constant 432 : index
    %c0_124 = arith.constant 0 : index
    %229 = vector.load %arg16[%c432, %c0_124] : memref<576x128xbf16, #tpu.memory_space<vmem>>, vector<16x128xbf16>
    tpu.vector_store %arg16[%c432, %c0_124], %228 {strides = array<i32>} : memref<576x128xbf16, #tpu.memory_space<vmem>>, vector<16x128xbf16>,
    %c31 = arith.constant 31 : index
    %c0_125 = arith.constant 0 : index
    %230 = vector.load %arg15[%c31, %c0_125] : memref<48x128xf32, #tpu.memory_space<vmem>>, vector<8x128xf32>
    %231 = arith.truncf %230 : vector<8x128xf32> to vector<8x128xbf16>
    %cst_126 = arith.constant dense<0.000000e+00> : vector<16x128xf32>
    %232 = tpu.matmul %42, %231, %cst_126 {dimension_numbers = #tpu.dot_dimension_numbers<[1], [0], [0], [1], [0, 0, 1, 1], [], []>} : vector<16x8xbf16>, vector<8x128xbf16>, vector<16x128xf32> -> vector<16x128xf32>
    %233 = vector.broadcast %43 : vector<16x1xf32> to vector<16x128xf32>
    %234 = arith.addf %232, %233 : vector<16x128xf32>
    %235 = arith.truncf %234 : vector<16x128xf32> to vector<16x128xbf16>
    %c448 = arith.constant 448 : index
    %c0_127 = arith.constant 0 : index
    %236 = vector.load %arg16[%c448, %c0_127] : memref<576x128xbf16, #tpu.memory_space<vmem>>, vector<16x128xbf16>
    tpu.vector_store %arg16[%c448, %c0_127], %235 {strides = array<i32>} : memref<576x128xbf16, #tpu.memory_space<vmem>>, vector<16x128xbf16>,
    %c32_128 = arith.constant 32 : index
    %c0_129 = arith.constant 0 : index
    %237 = vector.load %arg15[%c32_128, %c0_129] : memref<48x128xf32, #tpu.memory_space<vmem>>, vector<8x128xf32>
    %238 = arith.truncf %237 : vector<8x128xf32> to vector<8x128xbf16>
    %cst_130 = arith.constant dense<0.000000e+00> : vector<16x128xf32>
    %239 = tpu.matmul %42, %238, %cst_130 {dimension_numbers = #tpu.dot_dimension_numbers<[1], [0], [0], [1], [0, 0, 1, 1], [], []>} : vector<16x8xbf16>, vector<8x128xbf16>, vector<16x128xf32> -> vector<16x128xf32>
    %240 = vector.broadcast %43 : vector<16x1xf32> to vector<16x128xf32>
    %241 = arith.addf %239, %240 : vector<16x128xf32>
    %242 = arith.truncf %241 : vector<16x128xf32> to vector<16x128xbf16>
    %c464 = arith.constant 464 : index
    %c0_131 = arith.constant 0 : index
    %243 = vector.load %arg16[%c464, %c0_131] : memref<576x128xbf16, #tpu.memory_space<vmem>>, vector<16x128xbf16>
    tpu.vector_store %arg16[%c464, %c0_131], %242 {strides = array<i32>} : memref<576x128xbf16, #tpu.memory_space<vmem>>, vector<16x128xbf16>,
    %c33 = arith.constant 33 : index
    %c0_132 = arith.constant 0 : index
    %244 = vector.load %arg15[%c33, %c0_132] : memref<48x128xf32, #tpu.memory_space<vmem>>, vector<8x128xf32>
    %245 = arith.truncf %244 : vector<8x128xf32> to vector<8x128xbf16>
    %cst_133 = arith.constant dense<0.000000e+00> : vector<16x128xf32>
    %246 = tpu.matmul %42, %245, %cst_133 {dimension_numbers = #tpu.dot_dimension_numbers<[1], [0], [0], [1], [0, 0, 1, 1], [], []>} : vector<16x8xbf16>, vector<8x128xbf16>, vector<16x128xf32> -> vector<16x128xf32>
    %247 = vector.broadcast %43 : vector<16x1xf32> to vector<16x128xf32>
    %248 = arith.addf %246, %247 : vector<16x128xf32>
    %249 = arith.truncf %248 : vector<16x128xf32> to vector<16x128xbf16>
    %c480 = arith.constant 480 : index
    %c0_134 = arith.constant 0 : index
    %250 = vector.load %arg16[%c480, %c0_134] : memref<576x128xbf16, #tpu.memory_space<vmem>>, vector<16x128xbf16>
    tpu.vector_store %arg16[%c480, %c0_134], %249 {strides = array<i32>} : memref<576x128xbf16, #tpu.memory_space<vmem>>, vector<16x128xbf16>,
    %c34 = arith.constant 34 : index
    %c0_135 = arith.constant 0 : index
    %251 = vector.load %arg15[%c34, %c0_135] : memref<48x128xf32, #tpu.memory_space<vmem>>, vector<8x128xf32>
    %252 = arith.truncf %251 : vector<8x128xf32> to vector<8x128xbf16>
    %cst_136 = arith.constant dense<0.000000e+00> : vector<16x128xf32>
    %253 = tpu.matmul %42, %252, %cst_136 {dimension_numbers = #tpu.dot_dimension_numbers<[1], [0], [0], [1], [0, 0, 1, 1], [], []>} : vector<16x8xbf16>, vector<8x128xbf16>, vector<16x128xf32> -> vector<16x128xf32>
    %254 = vector.broadcast %43 : vector<16x1xf32> to vector<16x128xf32>
    %255 = arith.addf %253, %254 : vector<16x128xf32>
    %256 = arith.truncf %255 : vector<16x128xf32> to vector<16x128xbf16>
    %c496 = arith.constant 496 : index
    %c0_137 = arith.constant 0 : index
    %257 = vector.load %arg16[%c496, %c0_137] : memref<576x128xbf16, #tpu.memory_space<vmem>>, vector<16x128xbf16>
    tpu.vector_store %arg16[%c496, %c0_137], %256 {strides = array<i32>} : memref<576x128xbf16, #tpu.memory_space<vmem>>, vector<16x128xbf16>,
    %c35 = arith.constant 35 : index
    %c0_138 = arith.constant 0 : index
    %258 = vector.load %arg15[%c35, %c0_138] : memref<48x128xf32, #tpu.memory_space<vmem>>, vector<8x128xf32>
    %259 = arith.truncf %258 : vector<8x128xf32> to vector<8x128xbf16>
    %cst_139 = arith.constant dense<0.000000e+00> : vector<16x128xf32>
    %260 = tpu.matmul %42, %259, %cst_139 {dimension_numbers = #tpu.dot_dimension_numbers<[1], [0], [0], [1], [0, 0, 1, 1], [], []>} : vector<16x8xbf16>, vector<8x128xbf16>, vector<16x128xf32> -> vector<16x128xf32>
    %261 = vector.broadcast %43 : vector<16x1xf32> to vector<16x128xf32>
    %262 = arith.addf %260, %261 : vector<16x128xf32>
    %263 = arith.truncf %262 : vector<16x128xf32> to vector<16x128xbf16>
    %c512 = arith.constant 512 : index
    %c0_140 = arith.constant 0 : index
    %264 = vector.load %arg16[%c512, %c0_140] : memref<576x128xbf16, #tpu.memory_space<vmem>>, vector<16x128xbf16>
    tpu.vector_store %arg16[%c512, %c0_140], %263 {strides = array<i32>} : memref<576x128xbf16, #tpu.memory_space<vmem>>, vector<16x128xbf16>,
    %c36 = arith.constant 36 : index
    %c0_141 = arith.constant 0 : index
    %265 = vector.load %arg15[%c36, %c0_141] : memref<48x128xf32, #tpu.memory_space<vmem>>, vector<8x128xf32>
    %266 = arith.truncf %265 : vector<8x128xf32> to vector<8x128xbf16>
    %cst_142 = arith.constant dense<0.000000e+00> : vector<16x128xf32>
    %267 = tpu.matmul %42, %266, %cst_142 {dimension_numbers = #tpu.dot_dimension_numbers<[1], [0], [0], [1], [0, 0, 1, 1], [], []>} : vector<16x8xbf16>, vector<8x128xbf16>, vector<16x128xf32> -> vector<16x128xf32>
    %268 = vector.broadcast %43 : vector<16x1xf32> to vector<16x128xf32>
    %269 = arith.addf %267, %268 : vector<16x128xf32>
    %270 = arith.truncf %269 : vector<16x128xf32> to vector<16x128xbf16>
    %c528_143 = arith.constant 528 : index
    %c0_144 = arith.constant 0 : index
    %271 = vector.load %arg16[%c528_143, %c0_144] : memref<576x128xbf16, #tpu.memory_space<vmem>>, vector<16x128xbf16>
    tpu.vector_store %arg16[%c528_143, %c0_144], %270 {strides = array<i32>} : memref<576x128xbf16, #tpu.memory_space<vmem>>, vector<16x128xbf16>,
    %c0_145 = arith.constant 0 : index
    %c0_146 = arith.constant 0 : index
    %272 = vector.load %arg16[%c0_145, %c0_146] : memref<576x128xbf16, #tpu.memory_space<vmem>>, vector<80x128xbf16>
    %cst_147 = arith.constant dense<0.000000e+00> : vector<16x128xf32>
    %273 = tpu.matmul %44, %272, %cst_147 {dimension_numbers = #tpu.dot_dimension_numbers<[1], [0], [0], [1], [0, 0, 1, 1], [], []>} : vector<16x80xbf16>, vector<80x128xbf16>, vector<16x128xf32> -> vector<16x128xf32>
    %274 = vector.broadcast %45 : vector<16x1xf32> to vector<16x128xf32>
    %275 = arith.addf %273, %274 : vector<16x128xf32>
    %276 = arith.truncf %275 : vector<16x128xf32> to vector<16x128xbf16>
    %c16_148 = arith.constant 16 : index
    %c0_149 = arith.constant 0 : index
    %277 = vector.load %arg17[%c16_148, %c0_149] : memref<544x128xbf16, #tpu.memory_space<vmem>>, vector<16x128xbf16>
    tpu.vector_store %arg17[%c16_148, %c0_149], %276 {strides = array<i32>} : memref<544x128xbf16, #tpu.memory_space<vmem>>, vector<16x128xbf16>,
    %c16_150 = arith.constant 16 : index
    %c0_151 = arith.constant 0 : index
    %278 = vector.load %arg16[%c16_150, %c0_151] : memref<576x128xbf16, #tpu.memory_space<vmem>>, vector<80x128xbf16>
    %cst_152 = arith.constant dense<0.000000e+00> : vector<16x128xf32>
    %279 = tpu.matmul %44, %278, %cst_152 {dimension_numbers = #tpu.dot_dimension_numbers<[1], [0], [0], [1], [0, 0, 1, 1], [], []>} : vector<16x80xbf16>, vector<80x128xbf16>, vector<16x128xf32> -> vector<16x128xf32>
    %280 = vector.broadcast %45 : vector<16x1xf32> to vector<16x128xf32>
    %281 = arith.addf %279, %280 : vector<16x128xf32>
    %282 = arith.truncf %281 : vector<16x128xf32> to vector<16x128xbf16>
    %c32_153 = arith.constant 32 : index
    %c0_154 = arith.constant 0 : index
    %283 = vector.load %arg17[%c32_153, %c0_154] : memref<544x128xbf16, #tpu.memory_space<vmem>>, vector<16x128xbf16>
    tpu.vector_store %arg17[%c32_153, %c0_154], %282 {strides = array<i32>} : memref<544x128xbf16, #tpu.memory_space<vmem>>, vector<16x128xbf16>,
    %c32_155 = arith.constant 32 : index
    %c0_156 = arith.constant 0 : index
    %284 = vector.load %arg16[%c32_155, %c0_156] : memref<576x128xbf16, #tpu.memory_space<vmem>>, vector<80x128xbf16>
    %cst_157 = arith.constant dense<0.000000e+00> : vector<16x128xf32>
    %285 = tpu.matmul %44, %284, %cst_157 {dimension_numbers = #tpu.dot_dimension_numbers<[1], [0], [0], [1], [0, 0, 1, 1], [], []>} : vector<16x80xbf16>, vector<80x128xbf16>, vector<16x128xf32> -> vector<16x128xf32>
    %286 = vector.broadcast %45 : vector<16x1xf32> to vector<16x128xf32>
    %287 = arith.addf %285, %286 : vector<16x128xf32>
    %288 = arith.truncf %287 : vector<16x128xf32> to vector<16x128xbf16>
    %c48_158 = arith.constant 48 : index
    %c0_159 = arith.constant 0 : index
    %289 = vector.load %arg17[%c48_158, %c0_159] : memref<544x128xbf16, #tpu.memory_space<vmem>>, vector<16x128xbf16>
    tpu.vector_store %arg17[%c48_158, %c0_159], %288 {strides = array<i32>} : memref<544x128xbf16, #tpu.memory_space<vmem>>, vector<16x128xbf16>,
    %c48_160 = arith.constant 48 : index
    %c0_161 = arith.constant 0 : index
    %290 = vector.load %arg16[%c48_160, %c0_161] : memref<576x128xbf16, #tpu.memory_space<vmem>>, vector<80x128xbf16>
    %cst_162 = arith.constant dense<0.000000e+00> : vector<16x128xf32>
    %291 = tpu.matmul %44, %290, %cst_162 {dimension_numbers = #tpu.dot_dimension_numbers<[1], [0], [0], [1], [0, 0, 1, 1], [], []>} : vector<16x80xbf16>, vector<80x128xbf16>, vector<16x128xf32> -> vector<16x128xf32>
    %292 = vector.broadcast %45 : vector<16x1xf32> to vector<16x128xf32>
    %293 = arith.addf %291, %292 : vector<16x128xf32>
    %294 = arith.truncf %293 : vector<16x128xf32> to vector<16x128xbf16>
    %c64_163 = arith.constant 64 : index
    %c0_164 = arith.constant 0 : index
    %295 = vector.load %arg17[%c64_163, %c0_164] : memref<544x128xbf16, #tpu.memory_space<vmem>>, vector<16x128xbf16>
    tpu.vector_store %arg17[%c64_163, %c0_164], %294 {strides = array<i32>} : memref<544x128xbf16, #tpu.memory_space<vmem>>, vector<16x128xbf16>,
    %c64_165 = arith.constant 64 : index
    %c0_166 = arith.constant 0 : index
    %296 = vector.load %arg16[%c64_165, %c0_166] : memref<576x128xbf16, #tpu.memory_space<vmem>>, vector<80x128xbf16>
    %cst_167 = arith.constant dense<0.000000e+00> : vector<16x128xf32>
    %297 = tpu.matmul %44, %296, %cst_167 {dimension_numbers = #tpu.dot_dimension_numbers<[1], [0], [0], [1], [0, 0, 1, 1], [], []>} : vector<16x80xbf16>, vector<80x128xbf16>, vector<16x128xf32> -> vector<16x128xf32>
    %298 = vector.broadcast %45 : vector<16x1xf32> to vector<16x128xf32>
    %299 = arith.addf %297, %298 : vector<16x128xf32>
    %300 = arith.truncf %299 : vector<16x128xf32> to vector<16x128xbf16>
    %c80_168 = arith.constant 80 : index
    %c0_169 = arith.constant 0 : index
    %301 = vector.load %arg17[%c80_168, %c0_169] : memref<544x128xbf16, #tpu.memory_space<vmem>>, vector<16x128xbf16>
    tpu.vector_store %arg17[%c80_168, %c0_169], %300 {strides = array<i32>} : memref<544x128xbf16, #tpu.memory_space<vmem>>, vector<16x128xbf16>,
    %c80_170 = arith.constant 80 : index
    %c0_171 = arith.constant 0 : index
    %302 = vector.load %arg16[%c80_170, %c0_171] : memref<576x128xbf16, #tpu.memory_space<vmem>>, vector<80x128xbf16>
    %cst_172 = arith.constant dense<0.000000e+00> : vector<16x128xf32>
    %303 = tpu.matmul %44, %302, %cst_172 {dimension_numbers = #tpu.dot_dimension_numbers<[1], [0], [0], [1], [0, 0, 1, 1], [], []>} : vector<16x80xbf16>, vector<80x128xbf16>, vector<16x128xf32> -> vector<16x128xf32>
    %304 = vector.broadcast %45 : vector<16x1xf32> to vector<16x128xf32>
    %305 = arith.addf %303, %304 : vector<16x128xf32>
    %306 = arith.truncf %305 : vector<16x128xf32> to vector<16x128xbf16>
    %c96_173 = arith.constant 96 : index
    %c0_174 = arith.constant 0 : index
    %307 = vector.load %arg17[%c96_173, %c0_174] : memref<544x128xbf16, #tpu.memory_space<vmem>>, vector<16x128xbf16>
    tpu.vector_store %arg17[%c96_173, %c0_174], %306 {strides = array<i32>} : memref<544x128xbf16, #tpu.memory_space<vmem>>, vector<16x128xbf16>,
    %c96_175 = arith.constant 96 : index
    %c0_176 = arith.constant 0 : index
    %308 = vector.load %arg16[%c96_175, %c0_176] : memref<576x128xbf16, #tpu.memory_space<vmem>>, vector<80x128xbf16>
    %cst_177 = arith.constant dense<0.000000e+00> : vector<16x128xf32>
    %309 = tpu.matmul %44, %308, %cst_177 {dimension_numbers = #tpu.dot_dimension_numbers<[1], [0], [0], [1], [0, 0, 1, 1], [], []>} : vector<16x80xbf16>, vector<80x128xbf16>, vector<16x128xf32> -> vector<16x128xf32>
    %310 = vector.broadcast %45 : vector<16x1xf32> to vector<16x128xf32>
    %311 = arith.addf %309, %310 : vector<16x128xf32>
    %312 = arith.truncf %311 : vector<16x128xf32> to vector<16x128xbf16>
    %c112_178 = arith.constant 112 : index
    %c0_179 = arith.constant 0 : index
    %313 = vector.load %arg17[%c112_178, %c0_179] : memref<544x128xbf16, #tpu.memory_space<vmem>>, vector<16x128xbf16>
    tpu.vector_store %arg17[%c112_178, %c0_179], %312 {strides = array<i32>} : memref<544x128xbf16, #tpu.memory_space<vmem>>, vector<16x128xbf16>,
    %c112_180 = arith.constant 112 : index
    %c0_181 = arith.constant 0 : index
    %314 = vector.load %arg16[%c112_180, %c0_181] : memref<576x128xbf16, #tpu.memory_space<vmem>>, vector<80x128xbf16>
    %cst_182 = arith.constant dense<0.000000e+00> : vector<16x128xf32>
    %315 = tpu.matmul %44, %314, %cst_182 {dimension_numbers = #tpu.dot_dimension_numbers<[1], [0], [0], [1], [0, 0, 1, 1], [], []>} : vector<16x80xbf16>, vector<80x128xbf16>, vector<16x128xf32> -> vector<16x128xf32>
    %316 = vector.broadcast %45 : vector<16x1xf32> to vector<16x128xf32>
    %317 = arith.addf %315, %316 : vector<16x128xf32>
    %318 = arith.truncf %317 : vector<16x128xf32> to vector<16x128xbf16>
    %c128_183 = arith.constant 128 : index
    %c0_184 = arith.constant 0 : index
    %319 = vector.load %arg17[%c128_183, %c0_184] : memref<544x128xbf16, #tpu.memory_space<vmem>>, vector<16x128xbf16>
    tpu.vector_store %arg17[%c128_183, %c0_184], %318 {strides = array<i32>} : memref<544x128xbf16, #tpu.memory_space<vmem>>, vector<16x128xbf16>,
    %c128_185 = arith.constant 128 : index
    %c0_186 = arith.constant 0 : index
    %320 = vector.load %arg16[%c128_185, %c0_186] : memref<576x128xbf16, #tpu.memory_space<vmem>>, vector<80x128xbf16>
    %cst_187 = arith.constant dense<0.000000e+00> : vector<16x128xf32>
    %321 = tpu.matmul %44, %320, %cst_187 {dimension_numbers = #tpu.dot_dimension_numbers<[1], [0], [0], [1], [0, 0, 1, 1], [], []>} : vector<16x80xbf16>, vector<80x128xbf16>, vector<16x128xf32> -> vector<16x128xf32>
    %322 = vector.broadcast %45 : vector<16x1xf32> to vector<16x128xf32>
    %323 = arith.addf %321, %322 : vector<16x128xf32>
    %324 = arith.truncf %323 : vector<16x128xf32> to vector<16x128xbf16>
    %c144_188 = arith.constant 144 : index
    %c0_189 = arith.constant 0 : index
    %325 = vector.load %arg17[%c144_188, %c0_189] : memref<544x128xbf16, #tpu.memory_space<vmem>>, vector<16x128xbf16>
    tpu.vector_store %arg17[%c144_188, %c0_189], %324 {strides = array<i32>} : memref<544x128xbf16, #tpu.memory_space<vmem>>, vector<16x128xbf16>,
    %c144_190 = arith.constant 144 : index
    %c0_191 = arith.constant 0 : index
    %326 = vector.load %arg16[%c144_190, %c0_191] : memref<576x128xbf16, #tpu.memory_space<vmem>>, vector<80x128xbf16>
    %cst_192 = arith.constant dense<0.000000e+00> : vector<16x128xf32>
    %327 = tpu.matmul %44, %326, %cst_192 {dimension_numbers = #tpu.dot_dimension_numbers<[1], [0], [0], [1], [0, 0, 1, 1], [], []>} : vector<16x80xbf16>, vector<80x128xbf16>, vector<16x128xf32> -> vector<16x128xf32>
    %328 = vector.broadcast %45 : vector<16x1xf32> to vector<16x128xf32>
    %329 = arith.addf %327, %328 : vector<16x128xf32>
    %330 = arith.truncf %329 : vector<16x128xf32> to vector<16x128xbf16>
    %c160_193 = arith.constant 160 : index
    %c0_194 = arith.constant 0 : index
    %331 = vector.load %arg17[%c160_193, %c0_194] : memref<544x128xbf16, #tpu.memory_space<vmem>>, vector<16x128xbf16>
    tpu.vector_store %arg17[%c160_193, %c0_194], %330 {strides = array<i32>} : memref<544x128xbf16, #tpu.memory_space<vmem>>, vector<16x128xbf16>,
    %c160_195 = arith.constant 160 : index
    %c0_196 = arith.constant 0 : index
    %332 = vector.load %arg16[%c160_195, %c0_196] : memref<576x128xbf16, #tpu.memory_space<vmem>>, vector<80x128xbf16>
    %cst_197 = arith.constant dense<0.000000e+00> : vector<16x128xf32>
    %333 = tpu.matmul %44, %332, %cst_197 {dimension_numbers = #tpu.dot_dimension_numbers<[1], [0], [0], [1], [0, 0, 1, 1], [], []>} : vector<16x80xbf16>, vector<80x128xbf16>, vector<16x128xf32> -> vector<16x128xf32>
    %334 = vector.broadcast %45 : vector<16x1xf32> to vector<16x128xf32>
    %335 = arith.addf %333, %334 : vector<16x128xf32>
    %336 = arith.truncf %335 : vector<16x128xf32> to vector<16x128xbf16>
    %c176_198 = arith.constant 176 : index
    %c0_199 = arith.constant 0 : index
    %337 = vector.load %arg17[%c176_198, %c0_199] : memref<544x128xbf16, #tpu.memory_space<vmem>>, vector<16x128xbf16>
    tpu.vector_store %arg17[%c176_198, %c0_199], %336 {strides = array<i32>} : memref<544x128xbf16, #tpu.memory_space<vmem>>, vector<16x128xbf16>,
    %c176_200 = arith.constant 176 : index
    %c0_201 = arith.constant 0 : index
    %338 = vector.load %arg16[%c176_200, %c0_201] : memref<576x128xbf16, #tpu.memory_space<vmem>>, vector<80x128xbf16>
    %cst_202 = arith.constant dense<0.000000e+00> : vector<16x128xf32>
    %339 = tpu.matmul %44, %338, %cst_202 {dimension_numbers = #tpu.dot_dimension_numbers<[1], [0], [0], [1], [0, 0, 1, 1], [], []>} : vector<16x80xbf16>, vector<80x128xbf16>, vector<16x128xf32> -> vector<16x128xf32>
    %340 = vector.broadcast %45 : vector<16x1xf32> to vector<16x128xf32>
    %341 = arith.addf %339, %340 : vector<16x128xf32>
    %342 = arith.truncf %341 : vector<16x128xf32> to vector<16x128xbf16>
    %c192_203 = arith.constant 192 : index
    %c0_204 = arith.constant 0 : index
    %343 = vector.load %arg17[%c192_203, %c0_204] : memref<544x128xbf16, #tpu.memory_space<vmem>>, vector<16x128xbf16>
    tpu.vector_store %arg17[%c192_203, %c0_204], %342 {strides = array<i32>} : memref<544x128xbf16, #tpu.memory_space<vmem>>, vector<16x128xbf16>,
    %c192_205 = arith.constant 192 : index
    %c0_206 = arith.constant 0 : index
    %344 = vector.load %arg16[%c192_205, %c0_206] : memref<576x128xbf16, #tpu.memory_space<vmem>>, vector<80x128xbf16>
    %cst_207 = arith.constant dense<0.000000e+00> : vector<16x128xf32>
    %345 = tpu.matmul %44, %344, %cst_207 {dimension_numbers = #tpu.dot_dimension_numbers<[1], [0], [0], [1], [0, 0, 1, 1], [], []>} : vector<16x80xbf16>, vector<80x128xbf16>, vector<16x128xf32> -> vector<16x128xf32>
    %346 = vector.broadcast %45 : vector<16x1xf32> to vector<16x128xf32>
    %347 = arith.addf %345, %346 : vector<16x128xf32>
    %348 = arith.truncf %347 : vector<16x128xf32> to vector<16x128xbf16>
    %c208_208 = arith.constant 208 : index
    %c0_209 = arith.constant 0 : index
    %349 = vector.load %arg17[%c208_208, %c0_209] : memref<544x128xbf16, #tpu.memory_space<vmem>>, vector<16x128xbf16>
    tpu.vector_store %arg17[%c208_208, %c0_209], %348 {strides = array<i32>} : memref<544x128xbf16, #tpu.memory_space<vmem>>, vector<16x128xbf16>,
    %c208_210 = arith.constant 208 : index
    %c0_211 = arith.constant 0 : index
    %350 = vector.load %arg16[%c208_210, %c0_211] : memref<576x128xbf16, #tpu.memory_space<vmem>>, vector<80x128xbf16>
    %cst_212 = arith.constant dense<0.000000e+00> : vector<16x128xf32>
    %351 = tpu.matmul %44, %350, %cst_212 {dimension_numbers = #tpu.dot_dimension_numbers<[1], [0], [0], [1], [0, 0, 1, 1], [], []>} : vector<16x80xbf16>, vector<80x128xbf16>, vector<16x128xf32> -> vector<16x128xf32>
    %352 = vector.broadcast %45 : vector<16x1xf32> to vector<16x128xf32>
    %353 = arith.addf %351, %352 : vector<16x128xf32>
    %354 = arith.truncf %353 : vector<16x128xf32> to vector<16x128xbf16>
    %c224_213 = arith.constant 224 : index
    %c0_214 = arith.constant 0 : index
    %355 = vector.load %arg17[%c224_213, %c0_214] : memref<544x128xbf16, #tpu.memory_space<vmem>>, vector<16x128xbf16>
    tpu.vector_store %arg17[%c224_213, %c0_214], %354 {strides = array<i32>} : memref<544x128xbf16, #tpu.memory_space<vmem>>, vector<16x128xbf16>,
    %c224_215 = arith.constant 224 : index
    %c0_216 = arith.constant 0 : index
    %356 = vector.load %arg16[%c224_215, %c0_216] : memref<576x128xbf16, #tpu.memory_space<vmem>>, vector<80x128xbf16>
    %cst_217 = arith.constant dense<0.000000e+00> : vector<16x128xf32>
    %357 = tpu.matmul %44, %356, %cst_217 {dimension_numbers = #tpu.dot_dimension_numbers<[1], [0], [0], [1], [0, 0, 1, 1], [], []>} : vector<16x80xbf16>, vector<80x128xbf16>, vector<16x128xf32> -> vector<16x128xf32>
    %358 = vector.broadcast %45 : vector<16x1xf32> to vector<16x128xf32>
    %359 = arith.addf %357, %358 : vector<16x128xf32>
    %360 = arith.truncf %359 : vector<16x128xf32> to vector<16x128xbf16>
    %c240_218 = arith.constant 240 : index
    %c0_219 = arith.constant 0 : index
    %361 = vector.load %arg17[%c240_218, %c0_219] : memref<544x128xbf16, #tpu.memory_space<vmem>>, vector<16x128xbf16>
    tpu.vector_store %arg17[%c240_218, %c0_219], %360 {strides = array<i32>} : memref<544x128xbf16, #tpu.memory_space<vmem>>, vector<16x128xbf16>,
    %c240_220 = arith.constant 240 : index
    %c0_221 = arith.constant 0 : index
    %362 = vector.load %arg16[%c240_220, %c0_221] : memref<576x128xbf16, #tpu.memory_space<vmem>>, vector<80x128xbf16>
    %cst_222 = arith.constant dense<0.000000e+00> : vector<16x128xf32>
    %363 = tpu.matmul %44, %362, %cst_222 {dimension_numbers = #tpu.dot_dimension_numbers<[1], [0], [0], [1], [0, 0, 1, 1], [], []>} : vector<16x80xbf16>, vector<80x128xbf16>, vector<16x128xf32> -> vector<16x128xf32>
    %364 = vector.broadcast %45 : vector<16x1xf32> to vector<16x128xf32>
    %365 = arith.addf %363, %364 : vector<16x128xf32>
    %366 = arith.truncf %365 : vector<16x128xf32> to vector<16x128xbf16>
    %c256_223 = arith.constant 256 : index
    %c0_224 = arith.constant 0 : index
    %367 = vector.load %arg17[%c256_223, %c0_224] : memref<544x128xbf16, #tpu.memory_space<vmem>>, vector<16x128xbf16>
    tpu.vector_store %arg17[%c256_223, %c0_224], %366 {strides = array<i32>} : memref<544x128xbf16, #tpu.memory_space<vmem>>, vector<16x128xbf16>,
    %c256_225 = arith.constant 256 : index
    %c0_226 = arith.constant 0 : index
    %368 = vector.load %arg16[%c256_225, %c0_226] : memref<576x128xbf16, #tpu.memory_space<vmem>>, vector<80x128xbf16>
    %cst_227 = arith.constant dense<0.000000e+00> : vector<16x128xf32>
    %369 = tpu.matmul %44, %368, %cst_227 {dimension_numbers = #tpu.dot_dimension_numbers<[1], [0], [0], [1], [0, 0, 1, 1], [], []>} : vector<16x80xbf16>, vector<80x128xbf16>, vector<16x128xf32> -> vector<16x128xf32>
    %370 = vector.broadcast %45 : vector<16x1xf32> to vector<16x128xf32>
    %371 = arith.addf %369, %370 : vector<16x128xf32>
    %372 = arith.truncf %371 : vector<16x128xf32> to vector<16x128xbf16>
    %c272_228 = arith.constant 272 : index
    %c0_229 = arith.constant 0 : index
    %373 = vector.load %arg17[%c272_228, %c0_229] : memref<544x128xbf16, #tpu.memory_space<vmem>>, vector<16x128xbf16>
    tpu.vector_store %arg17[%c272_228, %c0_229], %372 {strides = array<i32>} : memref<544x128xbf16, #tpu.memory_space<vmem>>, vector<16x128xbf16>,
    %c272_230 = arith.constant 272 : index
    %c0_231 = arith.constant 0 : index
    %374 = vector.load %arg16[%c272_230, %c0_231] : memref<576x128xbf16, #tpu.memory_space<vmem>>, vector<80x128xbf16>
    %cst_232 = arith.constant dense<0.000000e+00> : vector<16x128xf32>
    %375 = tpu.matmul %44, %374, %cst_232 {dimension_numbers = #tpu.dot_dimension_numbers<[1], [0], [0], [1], [0, 0, 1, 1], [], []>} : vector<16x80xbf16>, vector<80x128xbf16>, vector<16x128xf32> -> vector<16x128xf32>
    %376 = vector.broadcast %45 : vector<16x1xf32> to vector<16x128xf32>
    %377 = arith.addf %375, %376 : vector<16x128xf32>
    %378 = arith.truncf %377 : vector<16x128xf32> to vector<16x128xbf16>
    %c288_233 = arith.constant 288 : index
    %c0_234 = arith.constant 0 : index
    %379 = vector.load %arg17[%c288_233, %c0_234] : memref<544x128xbf16, #tpu.memory_space<vmem>>, vector<16x128xbf16>
    tpu.vector_store %arg17[%c288_233, %c0_234], %378 {strides = array<i32>} : memref<544x128xbf16, #tpu.memory_space<vmem>>, vector<16x128xbf16>,
    %c288_235 = arith.constant 288 : index
    %c0_236 = arith.constant 0 : index
    %380 = vector.load %arg16[%c288_235, %c0_236] : memref<576x128xbf16, #tpu.memory_space<vmem>>, vector<80x128xbf16>
    %cst_237 = arith.constant dense<0.000000e+00> : vector<16x128xf32>
    %381 = tpu.matmul %44, %380, %cst_237 {dimension_numbers = #tpu.dot_dimension_numbers<[1], [0], [0], [1], [0, 0, 1, 1], [], []>} : vector<16x80xbf16>, vector<80x128xbf16>, vector<16x128xf32> -> vector<16x128xf32>
    %382 = vector.broadcast %45 : vector<16x1xf32> to vector<16x128xf32>
    %383 = arith.addf %381, %382 : vector<16x128xf32>
    %384 = arith.truncf %383 : vector<16x128xf32> to vector<16x128xbf16>
    %c304_238 = arith.constant 304 : index
    %c0_239 = arith.constant 0 : index
    %385 = vector.load %arg17[%c304_238, %c0_239] : memref<544x128xbf16, #tpu.memory_space<vmem>>, vector<16x128xbf16>
    tpu.vector_store %arg17[%c304_238, %c0_239], %384 {strides = array<i32>} : memref<544x128xbf16, #tpu.memory_space<vmem>>, vector<16x128xbf16>,
    %c304_240 = arith.constant 304 : index
    %c0_241 = arith.constant 0 : index
    %386 = vector.load %arg16[%c304_240, %c0_241] : memref<576x128xbf16, #tpu.memory_space<vmem>>, vector<80x128xbf16>
    %cst_242 = arith.constant dense<0.000000e+00> : vector<16x128xf32>
    %387 = tpu.matmul %44, %386, %cst_242 {dimension_numbers = #tpu.dot_dimension_numbers<[1], [0], [0], [1], [0, 0, 1, 1], [], []>} : vector<16x80xbf16>, vector<80x128xbf16>, vector<16x128xf32> -> vector<16x128xf32>
    %388 = vector.broadcast %45 : vector<16x1xf32> to vector<16x128xf32>
    %389 = arith.addf %387, %388 : vector<16x128xf32>
    %390 = arith.truncf %389 : vector<16x128xf32> to vector<16x128xbf16>
    %c320_243 = arith.constant 320 : index
    %c0_244 = arith.constant 0 : index
    %391 = vector.load %arg17[%c320_243, %c0_244] : memref<544x128xbf16, #tpu.memory_space<vmem>>, vector<16x128xbf16>
    tpu.vector_store %arg17[%c320_243, %c0_244], %390 {strides = array<i32>} : memref<544x128xbf16, #tpu.memory_space<vmem>>, vector<16x128xbf16>,
    %c320_245 = arith.constant 320 : index
    %c0_246 = arith.constant 0 : index
    %392 = vector.load %arg16[%c320_245, %c0_246] : memref<576x128xbf16, #tpu.memory_space<vmem>>, vector<80x128xbf16>
    %cst_247 = arith.constant dense<0.000000e+00> : vector<16x128xf32>
    %393 = tpu.matmul %44, %392, %cst_247 {dimension_numbers = #tpu.dot_dimension_numbers<[1], [0], [0], [1], [0, 0, 1, 1], [], []>} : vector<16x80xbf16>, vector<80x128xbf16>, vector<16x128xf32> -> vector<16x128xf32>
    %394 = vector.broadcast %45 : vector<16x1xf32> to vector<16x128xf32>
    %395 = arith.addf %393, %394 : vector<16x128xf32>
    %396 = arith.truncf %395 : vector<16x128xf32> to vector<16x128xbf16>
    %c336_248 = arith.constant 336 : index
    %c0_249 = arith.constant 0 : index
    %397 = vector.load %arg17[%c336_248, %c0_249] : memref<544x128xbf16, #tpu.memory_space<vmem>>, vector<16x128xbf16>
    tpu.vector_store %arg17[%c336_248, %c0_249], %396 {strides = array<i32>} : memref<544x128xbf16, #tpu.memory_space<vmem>>, vector<16x128xbf16>,
    %c336_250 = arith.constant 336 : index
    %c0_251 = arith.constant 0 : index
    %398 = vector.load %arg16[%c336_250, %c0_251] : memref<576x128xbf16, #tpu.memory_space<vmem>>, vector<80x128xbf16>
    %cst_252 = arith.constant dense<0.000000e+00> : vector<16x128xf32>
    %399 = tpu.matmul %44, %398, %cst_252 {dimension_numbers = #tpu.dot_dimension_numbers<[1], [0], [0], [1], [0, 0, 1, 1], [], []>} : vector<16x80xbf16>, vector<80x128xbf16>, vector<16x128xf32> -> vector<16x128xf32>
    %400 = vector.broadcast %45 : vector<16x1xf32> to vector<16x128xf32>
    %401 = arith.addf %399, %400 : vector<16x128xf32>
    %402 = arith.truncf %401 : vector<16x128xf32> to vector<16x128xbf16>
    %c352_253 = arith.constant 352 : index
    %c0_254 = arith.constant 0 : index
    %403 = vector.load %arg17[%c352_253, %c0_254] : memref<544x128xbf16, #tpu.memory_space<vmem>>, vector<16x128xbf16>
    tpu.vector_store %arg17[%c352_253, %c0_254], %402 {strides = array<i32>} : memref<544x128xbf16, #tpu.memory_space<vmem>>, vector<16x128xbf16>,
    %c352_255 = arith.constant 352 : index
    %c0_256 = arith.constant 0 : index
    %404 = vector.load %arg16[%c352_255, %c0_256] : memref<576x128xbf16, #tpu.memory_space<vmem>>, vector<80x128xbf16>
    %cst_257 = arith.constant dense<0.000000e+00> : vector<16x128xf32>
    %405 = tpu.matmul %44, %404, %cst_257 {dimension_numbers = #tpu.dot_dimension_numbers<[1], [0], [0], [1], [0, 0, 1, 1], [], []>} : vector<16x80xbf16>, vector<80x128xbf16>, vector<16x128xf32> -> vector<16x128xf32>
    %406 = vector.broadcast %45 : vector<16x1xf32> to vector<16x128xf32>
    %407 = arith.addf %405, %406 : vector<16x128xf32>
    %408 = arith.truncf %407 : vector<16x128xf32> to vector<16x128xbf16>
    %c368_258 = arith.constant 368 : index
    %c0_259 = arith.constant 0 : index
    %409 = vector.load %arg17[%c368_258, %c0_259] : memref<544x128xbf16, #tpu.memory_space<vmem>>, vector<16x128xbf16>
    tpu.vector_store %arg17[%c368_258, %c0_259], %408 {strides = array<i32>} : memref<544x128xbf16, #tpu.memory_space<vmem>>, vector<16x128xbf16>,
    %c368_260 = arith.constant 368 : index
    %c0_261 = arith.constant 0 : index
    %410 = vector.load %arg16[%c368_260, %c0_261] : memref<576x128xbf16, #tpu.memory_space<vmem>>, vector<80x128xbf16>
    %cst_262 = arith.constant dense<0.000000e+00> : vector<16x128xf32>
    %411 = tpu.matmul %44, %410, %cst_262 {dimension_numbers = #tpu.dot_dimension_numbers<[1], [0], [0], [1], [0, 0, 1, 1], [], []>} : vector<16x80xbf16>, vector<80x128xbf16>, vector<16x128xf32> -> vector<16x128xf32>
    %412 = vector.broadcast %45 : vector<16x1xf32> to vector<16x128xf32>
    %413 = arith.addf %411, %412 : vector<16x128xf32>
    %414 = arith.truncf %413 : vector<16x128xf32> to vector<16x128xbf16>
    %c384_263 = arith.constant 384 : index
    %c0_264 = arith.constant 0 : index
    %415 = vector.load %arg17[%c384_263, %c0_264] : memref<544x128xbf16, #tpu.memory_space<vmem>>, vector<16x128xbf16>
    tpu.vector_store %arg17[%c384_263, %c0_264], %414 {strides = array<i32>} : memref<544x128xbf16, #tpu.memory_space<vmem>>, vector<16x128xbf16>,
    %c384_265 = arith.constant 384 : index
    %c0_266 = arith.constant 0 : index
    %416 = vector.load %arg16[%c384_265, %c0_266] : memref<576x128xbf16, #tpu.memory_space<vmem>>, vector<80x128xbf16>
    %cst_267 = arith.constant dense<0.000000e+00> : vector<16x128xf32>
    %417 = tpu.matmul %44, %416, %cst_267 {dimension_numbers = #tpu.dot_dimension_numbers<[1], [0], [0], [1], [0, 0, 1, 1], [], []>} : vector<16x80xbf16>, vector<80x128xbf16>, vector<16x128xf32> -> vector<16x128xf32>
    %418 = vector.broadcast %45 : vector<16x1xf32> to vector<16x128xf32>
    %419 = arith.addf %417, %418 : vector<16x128xf32>
    %420 = arith.truncf %419 : vector<16x128xf32> to vector<16x128xbf16>
    %c400_268 = arith.constant 400 : index
    %c0_269 = arith.constant 0 : index
    %421 = vector.load %arg17[%c400_268, %c0_269] : memref<544x128xbf16, #tpu.memory_space<vmem>>, vector<16x128xbf16>
    tpu.vector_store %arg17[%c400_268, %c0_269], %420 {strides = array<i32>} : memref<544x128xbf16, #tpu.memory_space<vmem>>, vector<16x128xbf16>,
    %c400_270 = arith.constant 400 : index
    %c0_271 = arith.constant 0 : index
    %422 = vector.load %arg16[%c400_270, %c0_271] : memref<576x128xbf16, #tpu.memory_space<vmem>>, vector<80x128xbf16>
    %cst_272 = arith.constant dense<0.000000e+00> : vector<16x128xf32>
    %423 = tpu.matmul %44, %422, %cst_272 {dimension_numbers = #tpu.dot_dimension_numbers<[1], [0], [0], [1], [0, 0, 1, 1], [], []>} : vector<16x80xbf16>, vector<80x128xbf16>, vector<16x128xf32> -> vector<16x128xf32>
    %424 = vector.broadcast %45 : vector<16x1xf32> to vector<16x128xf32>
    %425 = arith.addf %423, %424 : vector<16x128xf32>
    %426 = arith.truncf %425 : vector<16x128xf32> to vector<16x128xbf16>
    %c416_273 = arith.constant 416 : index
    %c0_274 = arith.constant 0 : index
    %427 = vector.load %arg17[%c416_273, %c0_274] : memref<544x128xbf16, #tpu.memory_space<vmem>>, vector<16x128xbf16>
    tpu.vector_store %arg17[%c416_273, %c0_274], %426 {strides = array<i32>} : memref<544x128xbf16, #tpu.memory_space<vmem>>, vector<16x128xbf16>,
    %c416_275 = arith.constant 416 : index
    %c0_276 = arith.constant 0 : index
    %428 = vector.load %arg16[%c416_275, %c0_276] : memref<576x128xbf16, #tpu.memory_space<vmem>>, vector<80x128xbf16>
    %cst_277 = arith.constant dense<0.000000e+00> : vector<16x128xf32>
    %429 = tpu.matmul %44, %428, %cst_277 {dimension_numbers = #tpu.dot_dimension_numbers<[1], [0], [0], [1], [0, 0, 1, 1], [], []>} : vector<16x80xbf16>, vector<80x128xbf16>, vector<16x128xf32> -> vector<16x128xf32>
    %430 = vector.broadcast %45 : vector<16x1xf32> to vector<16x128xf32>
    %431 = arith.addf %429, %430 : vector<16x128xf32>
    %432 = arith.truncf %431 : vector<16x128xf32> to vector<16x128xbf16>
    %c432_278 = arith.constant 432 : index
    %c0_279 = arith.constant 0 : index
    %433 = vector.load %arg17[%c432_278, %c0_279] : memref<544x128xbf16, #tpu.memory_space<vmem>>, vector<16x128xbf16>
    tpu.vector_store %arg17[%c432_278, %c0_279], %432 {strides = array<i32>} : memref<544x128xbf16, #tpu.memory_space<vmem>>, vector<16x128xbf16>,
    %c432_280 = arith.constant 432 : index
    %c0_281 = arith.constant 0 : index
    %434 = vector.load %arg16[%c432_280, %c0_281] : memref<576x128xbf16, #tpu.memory_space<vmem>>, vector<80x128xbf16>
    %cst_282 = arith.constant dense<0.000000e+00> : vector<16x128xf32>
    %435 = tpu.matmul %44, %434, %cst_282 {dimension_numbers = #tpu.dot_dimension_numbers<[1], [0], [0], [1], [0, 0, 1, 1], [], []>} : vector<16x80xbf16>, vector<80x128xbf16>, vector<16x128xf32> -> vector<16x128xf32>
    %436 = vector.broadcast %45 : vector<16x1xf32> to vector<16x128xf32>
    %437 = arith.addf %435, %436 : vector<16x128xf32>
    %438 = arith.truncf %437 : vector<16x128xf32> to vector<16x128xbf16>
    %c448_283 = arith.constant 448 : index
    %c0_284 = arith.constant 0 : index
    %439 = vector.load %arg17[%c448_283, %c0_284] : memref<544x128xbf16, #tpu.memory_space<vmem>>, vector<16x128xbf16>
    tpu.vector_store %arg17[%c448_283, %c0_284], %438 {strides = array<i32>} : memref<544x128xbf16, #tpu.memory_space<vmem>>, vector<16x128xbf16>,
    %c448_285 = arith.constant 448 : index
    %c0_286 = arith.constant 0 : index
    %440 = vector.load %arg16[%c448_285, %c0_286] : memref<576x128xbf16, #tpu.memory_space<vmem>>, vector<80x128xbf16>
    %cst_287 = arith.constant dense<0.000000e+00> : vector<16x128xf32>
    %441 = tpu.matmul %44, %440, %cst_287 {dimension_numbers = #tpu.dot_dimension_numbers<[1], [0], [0], [1], [0, 0, 1, 1], [], []>} : vector<16x80xbf16>, vector<80x128xbf16>, vector<16x128xf32> -> vector<16x128xf32>
    %442 = vector.broadcast %45 : vector<16x1xf32> to vector<16x128xf32>
    %443 = arith.addf %441, %442 : vector<16x128xf32>
    %444 = arith.truncf %443 : vector<16x128xf32> to vector<16x128xbf16>
    %c464_288 = arith.constant 464 : index
    %c0_289 = arith.constant 0 : index
    %445 = vector.load %arg17[%c464_288, %c0_289] : memref<544x128xbf16, #tpu.memory_space<vmem>>, vector<16x128xbf16>
    tpu.vector_store %arg17[%c464_288, %c0_289], %444 {strides = array<i32>} : memref<544x128xbf16, #tpu.memory_space<vmem>>, vector<16x128xbf16>,
    %c464_290 = arith.constant 464 : index
    %c0_291 = arith.constant 0 : index
    %446 = vector.load %arg16[%c464_290, %c0_291] : memref<576x128xbf16, #tpu.memory_space<vmem>>, vector<80x128xbf16>
    %cst_292 = arith.constant dense<0.000000e+00> : vector<16x128xf32>
    %447 = tpu.matmul %44, %446, %cst_292 {dimension_numbers = #tpu.dot_dimension_numbers<[1], [0], [0], [1], [0, 0, 1, 1], [], []>} : vector<16x80xbf16>, vector<80x128xbf16>, vector<16x128xf32> -> vector<16x128xf32>
    %448 = vector.broadcast %45 : vector<16x1xf32> to vector<16x128xf32>
    %449 = arith.addf %447, %448 : vector<16x128xf32>
    %450 = arith.truncf %449 : vector<16x128xf32> to vector<16x128xbf16>
    %c480_293 = arith.constant 480 : index
    %c0_294 = arith.constant 0 : index
    %451 = vector.load %arg17[%c480_293, %c0_294] : memref<544x128xbf16, #tpu.memory_space<vmem>>, vector<16x128xbf16>
    tpu.vector_store %arg17[%c480_293, %c0_294], %450 {strides = array<i32>} : memref<544x128xbf16, #tpu.memory_space<vmem>>, vector<16x128xbf16>,
    %c480_295 = arith.constant 480 : index
    %c0_296 = arith.constant 0 : index
    %452 = vector.load %arg16[%c480_295, %c0_296] : memref<576x128xbf16, #tpu.memory_space<vmem>>, vector<80x128xbf16>
    %cst_297 = arith.constant dense<0.000000e+00> : vector<16x128xf32>
    %453 = tpu.matmul %44, %452, %cst_297 {dimension_numbers = #tpu.dot_dimension_numbers<[1], [0], [0], [1], [0, 0, 1, 1], [], []>} : vector<16x80xbf16>, vector<80x128xbf16>, vector<16x128xf32> -> vector<16x128xf32>
    %454 = vector.broadcast %45 : vector<16x1xf32> to vector<16x128xf32>
    %455 = arith.addf %453, %454 : vector<16x128xf32>
    %456 = arith.truncf %455 : vector<16x128xf32> to vector<16x128xbf16>
    %c496_298 = arith.constant 496 : index
    %c0_299 = arith.constant 0 : index
    %457 = vector.load %arg17[%c496_298, %c0_299] : memref<544x128xbf16, #tpu.memory_space<vmem>>, vector<16x128xbf16>
    tpu.vector_store %arg17[%c496_298, %c0_299], %456 {strides = array<i32>} : memref<544x128xbf16, #tpu.memory_space<vmem>>, vector<16x128xbf16>,
    %c496_300 = arith.constant 496 : index
    %c0_301 = arith.constant 0 : index
    %458 = vector.load %arg16[%c496_300, %c0_301] : memref<576x128xbf16, #tpu.memory_space<vmem>>, vector<80x128xbf16>
    %cst_302 = arith.constant dense<0.000000e+00> : vector<16x128xf32>
    %459 = tpu.matmul %44, %458, %cst_302 {dimension_numbers = #tpu.dot_dimension_numbers<[1], [0], [0], [1], [0, 0, 1, 1], [], []>} : vector<16x80xbf16>, vector<80x128xbf16>, vector<16x128xf32> -> vector<16x128xf32>
    %460 = vector.broadcast %45 : vector<16x1xf32> to vector<16x128xf32>
    %461 = arith.addf %459, %460 : vector<16x128xf32>
    %462 = arith.truncf %461 : vector<16x128xf32> to vector<16x128xbf16>
    %c512_303 = arith.constant 512 : index
    %c0_304 = arith.constant 0 : index
    %463 = vector.load %arg17[%c512_303, %c0_304] : memref<544x128xbf16, #tpu.memory_space<vmem>>, vector<16x128xbf16>
    tpu.vector_store %arg17[%c512_303, %c0_304], %462 {strides = array<i32>} : memref<544x128xbf16, #tpu.memory_space<vmem>>, vector<16x128xbf16>,
    %c0_305 = arith.constant 0 : index
    %c0_306 = arith.constant 0 : index
    %464 = vector.load %arg17[%c0_305, %c0_306] : memref<544x128xbf16, #tpu.memory_space<vmem>>, vector<48x128xbf16>
    %cst_307 = arith.constant dense<0.000000e+00> : vector<16x128xf32>
    %465 = tpu.matmul %46, %464, %cst_307 {dimension_numbers = #tpu.dot_dimension_numbers<[1], [0], [0], [1], [0, 0, 1, 1], [], []>} : vector<16x48xbf16>, vector<48x128xbf16>, vector<16x128xf32> -> vector<16x128xf32>
    %466 = vector.broadcast %47 : vector<16x1xf32> to vector<16x128xf32>
    %467 = arith.addf %465, %466 : vector<16x128xf32>
    %cst_308 = arith.constant 0.000000e+00 : f32
    %468 = vector.broadcast %cst_308 : f32 to vector<16x128xf32>
    %469 = arith.maximumf %467, %468 : vector<16x128xf32>
    %c0_309 = arith.constant 0 : index
    %c0_310 = arith.constant 0 : index
    %470 = vector.load %arg14[%c0_309, %c0_310] : memref<512x128xf32, #tpu.memory_space<vmem>>, vector<16x128xf32>
    tpu.vector_store %arg14[%c0_309, %c0_310], %469 {strides = array<i32>} : memref<512x128xf32, #tpu.memory_space<vmem>>, vector<16x128xf32>,
    %c16_311 = arith.constant 16 : index
    %c0_312 = arith.constant 0 : index
    %471 = vector.load %arg17[%c16_311, %c0_312] : memref<544x128xbf16, #tpu.memory_space<vmem>>, vector<48x128xbf16>
    %cst_313 = arith.constant dense<0.000000e+00> : vector<16x128xf32>
    %472 = tpu.matmul %46, %471, %cst_313 {dimension_numbers = #tpu.dot_dimension_numbers<[1], [0], [0], [1], [0, 0, 1, 1], [], []>} : vector<16x48xbf16>, vector<48x128xbf16>, vector<16x128xf32> -> vector<16x128xf32>
    %473 = vector.broadcast %47 : vector<16x1xf32> to vector<16x128xf32>
    %474 = arith.addf %472, %473 : vector<16x128xf32>
    %cst_314 = arith.constant 0.000000e+00 : f32
    %475 = vector.broadcast %cst_314 : f32 to vector<16x128xf32>
    %476 = arith.maximumf %474, %475 : vector<16x128xf32>
    %c16_315 = arith.constant 16 : index
    %c0_316 = arith.constant 0 : index
    %477 = vector.load %arg14[%c16_315, %c0_316] : memref<512x128xf32, #tpu.memory_space<vmem>>, vector<16x128xf32>
    tpu.vector_store %arg14[%c16_315, %c0_316], %476 {strides = array<i32>} : memref<512x128xf32, #tpu.memory_space<vmem>>, vector<16x128xf32>,
    %c32_317 = arith.constant 32 : index
    %c0_318 = arith.constant 0 : index
    %478 = vector.load %arg17[%c32_317, %c0_318] : memref<544x128xbf16, #tpu.memory_space<vmem>>, vector<48x128xbf16>
    %cst_319 = arith.constant dense<0.000000e+00> : vector<16x128xf32>
    %479 = tpu.matmul %46, %478, %cst_319 {dimension_numbers = #tpu.dot_dimension_numbers<[1], [0], [0], [1], [0, 0, 1, 1], [], []>} : vector<16x48xbf16>, vector<48x128xbf16>, vector<16x128xf32> -> vector<16x128xf32>
    %480 = vector.broadcast %47 : vector<16x1xf32> to vector<16x128xf32>
    %481 = arith.addf %479, %480 : vector<16x128xf32>
    %cst_320 = arith.constant 0.000000e+00 : f32
    %482 = vector.broadcast %cst_320 : f32 to vector<16x128xf32>
    %483 = arith.maximumf %481, %482 : vector<16x128xf32>
    %c32_321 = arith.constant 32 : index
    %c0_322 = arith.constant 0 : index
    %484 = vector.load %arg14[%c32_321, %c0_322] : memref<512x128xf32, #tpu.memory_space<vmem>>, vector<16x128xf32>
    tpu.vector_store %arg14[%c32_321, %c0_322], %483 {strides = array<i32>} : memref<512x128xf32, #tpu.memory_space<vmem>>, vector<16x128xf32>,
    %c48_323 = arith.constant 48 : index
    %c0_324 = arith.constant 0 : index
    %485 = vector.load %arg17[%c48_323, %c0_324] : memref<544x128xbf16, #tpu.memory_space<vmem>>, vector<48x128xbf16>
    %cst_325 = arith.constant dense<0.000000e+00> : vector<16x128xf32>
    %486 = tpu.matmul %46, %485, %cst_325 {dimension_numbers = #tpu.dot_dimension_numbers<[1], [0], [0], [1], [0, 0, 1, 1], [], []>} : vector<16x48xbf16>, vector<48x128xbf16>, vector<16x128xf32> -> vector<16x128xf32>
    %487 = vector.broadcast %47 : vector<16x1xf32> to vector<16x128xf32>
    %488 = arith.addf %486, %487 : vector<16x128xf32>
    %cst_326 = arith.constant 0.000000e+00 : f32
    %489 = vector.broadcast %cst_326 : f32 to vector<16x128xf32>
    %490 = arith.maximumf %488, %489 : vector<16x128xf32>
    %c48_327 = arith.constant 48 : index
    %c0_328 = arith.constant 0 : index
    %491 = vector.load %arg14[%c48_327, %c0_328] : memref<512x128xf32, #tpu.memory_space<vmem>>, vector<16x128xf32>
    tpu.vector_store %arg14[%c48_327, %c0_328], %490 {strides = array<i32>} : memref<512x128xf32, #tpu.memory_space<vmem>>, vector<16x128xf32>,
    %c64_329 = arith.constant 64 : index
    %c0_330 = arith.constant 0 : index
    %492 = vector.load %arg17[%c64_329, %c0_330] : memref<544x128xbf16, #tpu.memory_space<vmem>>, vector<48x128xbf16>
    %cst_331 = arith.constant dense<0.000000e+00> : vector<16x128xf32>
    %493 = tpu.matmul %46, %492, %cst_331 {dimension_numbers = #tpu.dot_dimension_numbers<[1], [0], [0], [1], [0, 0, 1, 1], [], []>} : vector<16x48xbf16>, vector<48x128xbf16>, vector<16x128xf32> -> vector<16x128xf32>
    %494 = vector.broadcast %47 : vector<16x1xf32> to vector<16x128xf32>
    %495 = arith.addf %493, %494 : vector<16x128xf32>
    %cst_332 = arith.constant 0.000000e+00 : f32
    %496 = vector.broadcast %cst_332 : f32 to vector<16x128xf32>
    %497 = arith.maximumf %495, %496 : vector<16x128xf32>
    %c64_333 = arith.constant 64 : index
    %c0_334 = arith.constant 0 : index
    %498 = vector.load %arg14[%c64_333, %c0_334] : memref<512x128xf32, #tpu.memory_space<vmem>>, vector<16x128xf32>
    tpu.vector_store %arg14[%c64_333, %c0_334], %497 {strides = array<i32>} : memref<512x128xf32, #tpu.memory_space<vmem>>, vector<16x128xf32>,
    %c80_335 = arith.constant 80 : index
    %c0_336 = arith.constant 0 : index
    %499 = vector.load %arg17[%c80_335, %c0_336] : memref<544x128xbf16, #tpu.memory_space<vmem>>, vector<48x128xbf16>
    %cst_337 = arith.constant dense<0.000000e+00> : vector<16x128xf32>
    %500 = tpu.matmul %46, %499, %cst_337 {dimension_numbers = #tpu.dot_dimension_numbers<[1], [0], [0], [1], [0, 0, 1, 1], [], []>} : vector<16x48xbf16>, vector<48x128xbf16>, vector<16x128xf32> -> vector<16x128xf32>
    %501 = vector.broadcast %47 : vector<16x1xf32> to vector<16x128xf32>
    %502 = arith.addf %500, %501 : vector<16x128xf32>
    %cst_338 = arith.constant 0.000000e+00 : f32
    %503 = vector.broadcast %cst_338 : f32 to vector<16x128xf32>
    %504 = arith.maximumf %502, %503 : vector<16x128xf32>
    %c80_339 = arith.constant 80 : index
    %c0_340 = arith.constant 0 : index
    %505 = vector.load %arg14[%c80_339, %c0_340] : memref<512x128xf32, #tpu.memory_space<vmem>>, vector<16x128xf32>
    tpu.vector_store %arg14[%c80_339, %c0_340], %504 {strides = array<i32>} : memref<512x128xf32, #tpu.memory_space<vmem>>, vector<16x128xf32>,
    %c96_341 = arith.constant 96 : index
    %c0_342 = arith.constant 0 : index
    %506 = vector.load %arg17[%c96_341, %c0_342] : memref<544x128xbf16, #tpu.memory_space<vmem>>, vector<48x128xbf16>
    %cst_343 = arith.constant dense<0.000000e+00> : vector<16x128xf32>
    %507 = tpu.matmul %46, %506, %cst_343 {dimension_numbers = #tpu.dot_dimension_numbers<[1], [0], [0], [1], [0, 0, 1, 1], [], []>} : vector<16x48xbf16>, vector<48x128xbf16>, vector<16x128xf32> -> vector<16x128xf32>
    %508 = vector.broadcast %47 : vector<16x1xf32> to vector<16x128xf32>
    %509 = arith.addf %507, %508 : vector<16x128xf32>
    %cst_344 = arith.constant 0.000000e+00 : f32
    %510 = vector.broadcast %cst_344 : f32 to vector<16x128xf32>
    %511 = arith.maximumf %509, %510 : vector<16x128xf32>
    %c96_345 = arith.constant 96 : index
    %c0_346 = arith.constant 0 : index
    %512 = vector.load %arg14[%c96_345, %c0_346] : memref<512x128xf32, #tpu.memory_space<vmem>>, vector<16x128xf32>
    tpu.vector_store %arg14[%c96_345, %c0_346], %511 {strides = array<i32>} : memref<512x128xf32, #tpu.memory_space<vmem>>, vector<16x128xf32>,
    %c112_347 = arith.constant 112 : index
    %c0_348 = arith.constant 0 : index
    %513 = vector.load %arg17[%c112_347, %c0_348] : memref<544x128xbf16, #tpu.memory_space<vmem>>, vector<48x128xbf16>
    %cst_349 = arith.constant dense<0.000000e+00> : vector<16x128xf32>
    %514 = tpu.matmul %46, %513, %cst_349 {dimension_numbers = #tpu.dot_dimension_numbers<[1], [0], [0], [1], [0, 0, 1, 1], [], []>} : vector<16x48xbf16>, vector<48x128xbf16>, vector<16x128xf32> -> vector<16x128xf32>
    %515 = vector.broadcast %47 : vector<16x1xf32> to vector<16x128xf32>
    %516 = arith.addf %514, %515 : vector<16x128xf32>
    %cst_350 = arith.constant 0.000000e+00 : f32
    %517 = vector.broadcast %cst_350 : f32 to vector<16x128xf32>
    %518 = arith.maximumf %516, %517 : vector<16x128xf32>
    %c112_351 = arith.constant 112 : index
    %c0_352 = arith.constant 0 : index
    %519 = vector.load %arg14[%c112_351, %c0_352] : memref<512x128xf32, #tpu.memory_space<vmem>>, vector<16x128xf32>
    tpu.vector_store %arg14[%c112_351, %c0_352], %518 {strides = array<i32>} : memref<512x128xf32, #tpu.memory_space<vmem>>, vector<16x128xf32>,
    %c128_353 = arith.constant 128 : index
    %c0_354 = arith.constant 0 : index
    %520 = vector.load %arg17[%c128_353, %c0_354] : memref<544x128xbf16, #tpu.memory_space<vmem>>, vector<48x128xbf16>
    %cst_355 = arith.constant dense<0.000000e+00> : vector<16x128xf32>
    %521 = tpu.matmul %46, %520, %cst_355 {dimension_numbers = #tpu.dot_dimension_numbers<[1], [0], [0], [1], [0, 0, 1, 1], [], []>} : vector<16x48xbf16>, vector<48x128xbf16>, vector<16x128xf32> -> vector<16x128xf32>
    %522 = vector.broadcast %47 : vector<16x1xf32> to vector<16x128xf32>
    %523 = arith.addf %521, %522 : vector<16x128xf32>
    %cst_356 = arith.constant 0.000000e+00 : f32
    %524 = vector.broadcast %cst_356 : f32 to vector<16x128xf32>
    %525 = arith.maximumf %523, %524 : vector<16x128xf32>
    %c128_357 = arith.constant 128 : index
    %c0_358 = arith.constant 0 : index
    %526 = vector.load %arg14[%c128_357, %c0_358] : memref<512x128xf32, #tpu.memory_space<vmem>>, vector<16x128xf32>
    tpu.vector_store %arg14[%c128_357, %c0_358], %525 {strides = array<i32>} : memref<512x128xf32, #tpu.memory_space<vmem>>, vector<16x128xf32>,
    %c144_359 = arith.constant 144 : index
    %c0_360 = arith.constant 0 : index
    %527 = vector.load %arg17[%c144_359, %c0_360] : memref<544x128xbf16, #tpu.memory_space<vmem>>, vector<48x128xbf16>
    %cst_361 = arith.constant dense<0.000000e+00> : vector<16x128xf32>
    %528 = tpu.matmul %46, %527, %cst_361 {dimension_numbers = #tpu.dot_dimension_numbers<[1], [0], [0], [1], [0, 0, 1, 1], [], []>} : vector<16x48xbf16>, vector<48x128xbf16>, vector<16x128xf32> -> vector<16x128xf32>
    %529 = vector.broadcast %47 : vector<16x1xf32> to vector<16x128xf32>
    %530 = arith.addf %528, %529 : vector<16x128xf32>
    %cst_362 = arith.constant 0.000000e+00 : f32
    %531 = vector.broadcast %cst_362 : f32 to vector<16x128xf32>
    %532 = arith.maximumf %530, %531 : vector<16x128xf32>
    %c144_363 = arith.constant 144 : index
    %c0_364 = arith.constant 0 : index
    %533 = vector.load %arg14[%c144_363, %c0_364] : memref<512x128xf32, #tpu.memory_space<vmem>>, vector<16x128xf32>
    tpu.vector_store %arg14[%c144_363, %c0_364], %532 {strides = array<i32>} : memref<512x128xf32, #tpu.memory_space<vmem>>, vector<16x128xf32>,
    %c160_365 = arith.constant 160 : index
    %c0_366 = arith.constant 0 : index
    %534 = vector.load %arg17[%c160_365, %c0_366] : memref<544x128xbf16, #tpu.memory_space<vmem>>, vector<48x128xbf16>
    %cst_367 = arith.constant dense<0.000000e+00> : vector<16x128xf32>
    %535 = tpu.matmul %46, %534, %cst_367 {dimension_numbers = #tpu.dot_dimension_numbers<[1], [0], [0], [1], [0, 0, 1, 1], [], []>} : vector<16x48xbf16>, vector<48x128xbf16>, vector<16x128xf32> -> vector<16x128xf32>
    %536 = vector.broadcast %47 : vector<16x1xf32> to vector<16x128xf32>
    %537 = arith.addf %535, %536 : vector<16x128xf32>
    %cst_368 = arith.constant 0.000000e+00 : f32
    %538 = vector.broadcast %cst_368 : f32 to vector<16x128xf32>
    %539 = arith.maximumf %537, %538 : vector<16x128xf32>
    %c160_369 = arith.constant 160 : index
    %c0_370 = arith.constant 0 : index
    %540 = vector.load %arg14[%c160_369, %c0_370] : memref<512x128xf32, #tpu.memory_space<vmem>>, vector<16x128xf32>
    tpu.vector_store %arg14[%c160_369, %c0_370], %539 {strides = array<i32>} : memref<512x128xf32, #tpu.memory_space<vmem>>, vector<16x128xf32>,
    %c176_371 = arith.constant 176 : index
    %c0_372 = arith.constant 0 : index
    %541 = vector.load %arg17[%c176_371, %c0_372] : memref<544x128xbf16, #tpu.memory_space<vmem>>, vector<48x128xbf16>
    %cst_373 = arith.constant dense<0.000000e+00> : vector<16x128xf32>
    %542 = tpu.matmul %46, %541, %cst_373 {dimension_numbers = #tpu.dot_dimension_numbers<[1], [0], [0], [1], [0, 0, 1, 1], [], []>} : vector<16x48xbf16>, vector<48x128xbf16>, vector<16x128xf32> -> vector<16x128xf32>
    %543 = vector.broadcast %47 : vector<16x1xf32> to vector<16x128xf32>
    %544 = arith.addf %542, %543 : vector<16x128xf32>
    %cst_374 = arith.constant 0.000000e+00 : f32
    %545 = vector.broadcast %cst_374 : f32 to vector<16x128xf32>
    %546 = arith.maximumf %544, %545 : vector<16x128xf32>
    %c176_375 = arith.constant 176 : index
    %c0_376 = arith.constant 0 : index
    %547 = vector.load %arg14[%c176_375, %c0_376] : memref<512x128xf32, #tpu.memory_space<vmem>>, vector<16x128xf32>
    tpu.vector_store %arg14[%c176_375, %c0_376], %546 {strides = array<i32>} : memref<512x128xf32, #tpu.memory_space<vmem>>, vector<16x128xf32>,
    %c192_377 = arith.constant 192 : index
    %c0_378 = arith.constant 0 : index
    %548 = vector.load %arg17[%c192_377, %c0_378] : memref<544x128xbf16, #tpu.memory_space<vmem>>, vector<48x128xbf16>
    %cst_379 = arith.constant dense<0.000000e+00> : vector<16x128xf32>
    %549 = tpu.matmul %46, %548, %cst_379 {dimension_numbers = #tpu.dot_dimension_numbers<[1], [0], [0], [1], [0, 0, 1, 1], [], []>} : vector<16x48xbf16>, vector<48x128xbf16>, vector<16x128xf32> -> vector<16x128xf32>
    %550 = vector.broadcast %47 : vector<16x1xf32> to vector<16x128xf32>
    %551 = arith.addf %549, %550 : vector<16x128xf32>
    %cst_380 = arith.constant 0.000000e+00 : f32
    %552 = vector.broadcast %cst_380 : f32 to vector<16x128xf32>
    %553 = arith.maximumf %551, %552 : vector<16x128xf32>
    %c192_381 = arith.constant 192 : index
    %c0_382 = arith.constant 0 : index
    %554 = vector.load %arg14[%c192_381, %c0_382] : memref<512x128xf32, #tpu.memory_space<vmem>>, vector<16x128xf32>
    tpu.vector_store %arg14[%c192_381, %c0_382], %553 {strides = array<i32>} : memref<512x128xf32, #tpu.memory_space<vmem>>, vector<16x128xf32>,
    %c208_383 = arith.constant 208 : index
    %c0_384 = arith.constant 0 : index
    %555 = vector.load %arg17[%c208_383, %c0_384] : memref<544x128xbf16, #tpu.memory_space<vmem>>, vector<48x128xbf16>
    %cst_385 = arith.constant dense<0.000000e+00> : vector<16x128xf32>
    %556 = tpu.matmul %46, %555, %cst_385 {dimension_numbers = #tpu.dot_dimension_numbers<[1], [0], [0], [1], [0, 0, 1, 1], [], []>} : vector<16x48xbf16>, vector<48x128xbf16>, vector<16x128xf32> -> vector<16x128xf32>
    %557 = vector.broadcast %47 : vector<16x1xf32> to vector<16x128xf32>
    %558 = arith.addf %556, %557 : vector<16x128xf32>
    %cst_386 = arith.constant 0.000000e+00 : f32
    %559 = vector.broadcast %cst_386 : f32 to vector<16x128xf32>
    %560 = arith.maximumf %558, %559 : vector<16x128xf32>
    %c208_387 = arith.constant 208 : index
    %c0_388 = arith.constant 0 : index
    %561 = vector.load %arg14[%c208_387, %c0_388] : memref<512x128xf32, #tpu.memory_space<vmem>>, vector<16x128xf32>
    tpu.vector_store %arg14[%c208_387, %c0_388], %560 {strides = array<i32>} : memref<512x128xf32, #tpu.memory_space<vmem>>, vector<16x128xf32>,
    %c224_389 = arith.constant 224 : index
    %c0_390 = arith.constant 0 : index
    %562 = vector.load %arg17[%c224_389, %c0_390] : memref<544x128xbf16, #tpu.memory_space<vmem>>, vector<48x128xbf16>
    %cst_391 = arith.constant dense<0.000000e+00> : vector<16x128xf32>
    %563 = tpu.matmul %46, %562, %cst_391 {dimension_numbers = #tpu.dot_dimension_numbers<[1], [0], [0], [1], [0, 0, 1, 1], [], []>} : vector<16x48xbf16>, vector<48x128xbf16>, vector<16x128xf32> -> vector<16x128xf32>
    %564 = vector.broadcast %47 : vector<16x1xf32> to vector<16x128xf32>
    %565 = arith.addf %563, %564 : vector<16x128xf32>
    %cst_392 = arith.constant 0.000000e+00 : f32
    %566 = vector.broadcast %cst_392 : f32 to vector<16x128xf32>
    %567 = arith.maximumf %565, %566 : vector<16x128xf32>
    %c224_393 = arith.constant 224 : index
    %c0_394 = arith.constant 0 : index
    %568 = vector.load %arg14[%c224_393, %c0_394] : memref<512x128xf32, #tpu.memory_space<vmem>>, vector<16x128xf32>
    tpu.vector_store %arg14[%c224_393, %c0_394], %567 {strides = array<i32>} : memref<512x128xf32, #tpu.memory_space<vmem>>, vector<16x128xf32>,
    %c240_395 = arith.constant 240 : index
    %c0_396 = arith.constant 0 : index
    %569 = vector.load %arg17[%c240_395, %c0_396] : memref<544x128xbf16, #tpu.memory_space<vmem>>, vector<48x128xbf16>
    %cst_397 = arith.constant dense<0.000000e+00> : vector<16x128xf32>
    %570 = tpu.matmul %46, %569, %cst_397 {dimension_numbers = #tpu.dot_dimension_numbers<[1], [0], [0], [1], [0, 0, 1, 1], [], []>} : vector<16x48xbf16>, vector<48x128xbf16>, vector<16x128xf32> -> vector<16x128xf32>
    %571 = vector.broadcast %47 : vector<16x1xf32> to vector<16x128xf32>
    %572 = arith.addf %570, %571 : vector<16x128xf32>
    %cst_398 = arith.constant 0.000000e+00 : f32
    %573 = vector.broadcast %cst_398 : f32 to vector<16x128xf32>
    %574 = arith.maximumf %572, %573 : vector<16x128xf32>
    %c240_399 = arith.constant 240 : index
    %c0_400 = arith.constant 0 : index
    %575 = vector.load %arg14[%c240_399, %c0_400] : memref<512x128xf32, #tpu.memory_space<vmem>>, vector<16x128xf32>
    tpu.vector_store %arg14[%c240_399, %c0_400], %574 {strides = array<i32>} : memref<512x128xf32, #tpu.memory_space<vmem>>, vector<16x128xf32>,
    %c256_401 = arith.constant 256 : index
    %c0_402 = arith.constant 0 : index
    %576 = vector.load %arg17[%c256_401, %c0_402] : memref<544x128xbf16, #tpu.memory_space<vmem>>, vector<48x128xbf16>
    %cst_403 = arith.constant dense<0.000000e+00> : vector<16x128xf32>
    %577 = tpu.matmul %46, %576, %cst_403 {dimension_numbers = #tpu.dot_dimension_numbers<[1], [0], [0], [1], [0, 0, 1, 1], [], []>} : vector<16x48xbf16>, vector<48x128xbf16>, vector<16x128xf32> -> vector<16x128xf32>
    %578 = vector.broadcast %47 : vector<16x1xf32> to vector<16x128xf32>
    %579 = arith.addf %577, %578 : vector<16x128xf32>
    %cst_404 = arith.constant 0.000000e+00 : f32
    %580 = vector.broadcast %cst_404 : f32 to vector<16x128xf32>
    %581 = arith.maximumf %579, %580 : vector<16x128xf32>
    %c256_405 = arith.constant 256 : index
    %c0_406 = arith.constant 0 : index
    %582 = vector.load %arg14[%c256_405, %c0_406] : memref<512x128xf32, #tpu.memory_space<vmem>>, vector<16x128xf32>
    tpu.vector_store %arg14[%c256_405, %c0_406], %581 {strides = array<i32>} : memref<512x128xf32, #tpu.memory_space<vmem>>, vector<16x128xf32>,
    %c272_407 = arith.constant 272 : index
    %c0_408 = arith.constant 0 : index
    %583 = vector.load %arg17[%c272_407, %c0_408] : memref<544x128xbf16, #tpu.memory_space<vmem>>, vector<48x128xbf16>
    %cst_409 = arith.constant dense<0.000000e+00> : vector<16x128xf32>
    %584 = tpu.matmul %46, %583, %cst_409 {dimension_numbers = #tpu.dot_dimension_numbers<[1], [0], [0], [1], [0, 0, 1, 1], [], []>} : vector<16x48xbf16>, vector<48x128xbf16>, vector<16x128xf32> -> vector<16x128xf32>
    %585 = vector.broadcast %47 : vector<16x1xf32> to vector<16x128xf32>
    %586 = arith.addf %584, %585 : vector<16x128xf32>
    %cst_410 = arith.constant 0.000000e+00 : f32
    %587 = vector.broadcast %cst_410 : f32 to vector<16x128xf32>
    %588 = arith.maximumf %586, %587 : vector<16x128xf32>
    %c272_411 = arith.constant 272 : index
    %c0_412 = arith.constant 0 : index
    %589 = vector.load %arg14[%c272_411, %c0_412] : memref<512x128xf32, #tpu.memory_space<vmem>>, vector<16x128xf32>
    tpu.vector_store %arg14[%c272_411, %c0_412], %588 {strides = array<i32>} : memref<512x128xf32, #tpu.memory_space<vmem>>, vector<16x128xf32>,
    %c288_413 = arith.constant 288 : index
    %c0_414 = arith.constant 0 : index
    %590 = vector.load %arg17[%c288_413, %c0_414] : memref<544x128xbf16, #tpu.memory_space<vmem>>, vector<48x128xbf16>
    %cst_415 = arith.constant dense<0.000000e+00> : vector<16x128xf32>
    %591 = tpu.matmul %46, %590, %cst_415 {dimension_numbers = #tpu.dot_dimension_numbers<[1], [0], [0], [1], [0, 0, 1, 1], [], []>} : vector<16x48xbf16>, vector<48x128xbf16>, vector<16x128xf32> -> vector<16x128xf32>
    %592 = vector.broadcast %47 : vector<16x1xf32> to vector<16x128xf32>
    %593 = arith.addf %591, %592 : vector<16x128xf32>
    %cst_416 = arith.constant 0.000000e+00 : f32
    %594 = vector.broadcast %cst_416 : f32 to vector<16x128xf32>
    %595 = arith.maximumf %593, %594 : vector<16x128xf32>
    %c288_417 = arith.constant 288 : index
    %c0_418 = arith.constant 0 : index
    %596 = vector.load %arg14[%c288_417, %c0_418] : memref<512x128xf32, #tpu.memory_space<vmem>>, vector<16x128xf32>
    tpu.vector_store %arg14[%c288_417, %c0_418], %595 {strides = array<i32>} : memref<512x128xf32, #tpu.memory_space<vmem>>, vector<16x128xf32>,
    %c304_419 = arith.constant 304 : index
    %c0_420 = arith.constant 0 : index
    %597 = vector.load %arg17[%c304_419, %c0_420] : memref<544x128xbf16, #tpu.memory_space<vmem>>, vector<48x128xbf16>
    %cst_421 = arith.constant dense<0.000000e+00> : vector<16x128xf32>
    %598 = tpu.matmul %46, %597, %cst_421 {dimension_numbers = #tpu.dot_dimension_numbers<[1], [0], [0], [1], [0, 0, 1, 1], [], []>} : vector<16x48xbf16>, vector<48x128xbf16>, vector<16x128xf32> -> vector<16x128xf32>
    %599 = vector.broadcast %47 : vector<16x1xf32> to vector<16x128xf32>
    %600 = arith.addf %598, %599 : vector<16x128xf32>
    %cst_422 = arith.constant 0.000000e+00 : f32
    %601 = vector.broadcast %cst_422 : f32 to vector<16x128xf32>
    %602 = arith.maximumf %600, %601 : vector<16x128xf32>
    %c304_423 = arith.constant 304 : index
    %c0_424 = arith.constant 0 : index
    %603 = vector.load %arg14[%c304_423, %c0_424] : memref<512x128xf32, #tpu.memory_space<vmem>>, vector<16x128xf32>
    tpu.vector_store %arg14[%c304_423, %c0_424], %602 {strides = array<i32>} : memref<512x128xf32, #tpu.memory_space<vmem>>, vector<16x128xf32>,
    %c320_425 = arith.constant 320 : index
    %c0_426 = arith.constant 0 : index
    %604 = vector.load %arg17[%c320_425, %c0_426] : memref<544x128xbf16, #tpu.memory_space<vmem>>, vector<48x128xbf16>
    %cst_427 = arith.constant dense<0.000000e+00> : vector<16x128xf32>
    %605 = tpu.matmul %46, %604, %cst_427 {dimension_numbers = #tpu.dot_dimension_numbers<[1], [0], [0], [1], [0, 0, 1, 1], [], []>} : vector<16x48xbf16>, vector<48x128xbf16>, vector<16x128xf32> -> vector<16x128xf32>
    %606 = vector.broadcast %47 : vector<16x1xf32> to vector<16x128xf32>
    %607 = arith.addf %605, %606 : vector<16x128xf32>
    %cst_428 = arith.constant 0.000000e+00 : f32
    %608 = vector.broadcast %cst_428 : f32 to vector<16x128xf32>
    %609 = arith.maximumf %607, %608 : vector<16x128xf32>
    %c320_429 = arith.constant 320 : index
    %c0_430 = arith.constant 0 : index
    %610 = vector.load %arg14[%c320_429, %c0_430] : memref<512x128xf32, #tpu.memory_space<vmem>>, vector<16x128xf32>
    tpu.vector_store %arg14[%c320_429, %c0_430], %609 {strides = array<i32>} : memref<512x128xf32, #tpu.memory_space<vmem>>, vector<16x128xf32>,
    %c336_431 = arith.constant 336 : index
    %c0_432 = arith.constant 0 : index
    %611 = vector.load %arg17[%c336_431, %c0_432] : memref<544x128xbf16, #tpu.memory_space<vmem>>, vector<48x128xbf16>
    %cst_433 = arith.constant dense<0.000000e+00> : vector<16x128xf32>
    %612 = tpu.matmul %46, %611, %cst_433 {dimension_numbers = #tpu.dot_dimension_numbers<[1], [0], [0], [1], [0, 0, 1, 1], [], []>} : vector<16x48xbf16>, vector<48x128xbf16>, vector<16x128xf32> -> vector<16x128xf32>
    %613 = vector.broadcast %47 : vector<16x1xf32> to vector<16x128xf32>
    %614 = arith.addf %612, %613 : vector<16x128xf32>
    %cst_434 = arith.constant 0.000000e+00 : f32
    %615 = vector.broadcast %cst_434 : f32 to vector<16x128xf32>
    %616 = arith.maximumf %614, %615 : vector<16x128xf32>
    %c336_435 = arith.constant 336 : index
    %c0_436 = arith.constant 0 : index
    %617 = vector.load %arg14[%c336_435, %c0_436] : memref<512x128xf32, #tpu.memory_space<vmem>>, vector<16x128xf32>
    tpu.vector_store %arg14[%c336_435, %c0_436], %616 {strides = array<i32>} : memref<512x128xf32, #tpu.memory_space<vmem>>, vector<16x128xf32>,
    %c352_437 = arith.constant 352 : index
    %c0_438 = arith.constant 0 : index
    %618 = vector.load %arg17[%c352_437, %c0_438] : memref<544x128xbf16, #tpu.memory_space<vmem>>, vector<48x128xbf16>
    %cst_439 = arith.constant dense<0.000000e+00> : vector<16x128xf32>
    %619 = tpu.matmul %46, %618, %cst_439 {dimension_numbers = #tpu.dot_dimension_numbers<[1], [0], [0], [1], [0, 0, 1, 1], [], []>} : vector<16x48xbf16>, vector<48x128xbf16>, vector<16x128xf32> -> vector<16x128xf32>
    %620 = vector.broadcast %47 : vector<16x1xf32> to vector<16x128xf32>
    %621 = arith.addf %619, %620 : vector<16x128xf32>
    %cst_440 = arith.constant 0.000000e+00 : f32
    %622 = vector.broadcast %cst_440 : f32 to vector<16x128xf32>
    %623 = arith.maximumf %621, %622 : vector<16x128xf32>
    %c352_441 = arith.constant 352 : index
    %c0_442 = arith.constant 0 : index
    %624 = vector.load %arg14[%c352_441, %c0_442] : memref<512x128xf32, #tpu.memory_space<vmem>>, vector<16x128xf32>
    tpu.vector_store %arg14[%c352_441, %c0_442], %623 {strides = array<i32>} : memref<512x128xf32, #tpu.memory_space<vmem>>, vector<16x128xf32>,
    %c368_443 = arith.constant 368 : index
    %c0_444 = arith.constant 0 : index
    %625 = vector.load %arg17[%c368_443, %c0_444] : memref<544x128xbf16, #tpu.memory_space<vmem>>, vector<48x128xbf16>
    %cst_445 = arith.constant dense<0.000000e+00> : vector<16x128xf32>
    %626 = tpu.matmul %46, %625, %cst_445 {dimension_numbers = #tpu.dot_dimension_numbers<[1], [0], [0], [1], [0, 0, 1, 1], [], []>} : vector<16x48xbf16>, vector<48x128xbf16>, vector<16x128xf32> -> vector<16x128xf32>
    %627 = vector.broadcast %47 : vector<16x1xf32> to vector<16x128xf32>
    %628 = arith.addf %626, %627 : vector<16x128xf32>
    %cst_446 = arith.constant 0.000000e+00 : f32
    %629 = vector.broadcast %cst_446 : f32 to vector<16x128xf32>
    %630 = arith.maximumf %628, %629 : vector<16x128xf32>
    %c368_447 = arith.constant 368 : index
    %c0_448 = arith.constant 0 : index
    %631 = vector.load %arg14[%c368_447, %c0_448] : memref<512x128xf32, #tpu.memory_space<vmem>>, vector<16x128xf32>
    tpu.vector_store %arg14[%c368_447, %c0_448], %630 {strides = array<i32>} : memref<512x128xf32, #tpu.memory_space<vmem>>, vector<16x128xf32>,
    %c384_449 = arith.constant 384 : index
    %c0_450 = arith.constant 0 : index
    %632 = vector.load %arg17[%c384_449, %c0_450] : memref<544x128xbf16, #tpu.memory_space<vmem>>, vector<48x128xbf16>
    %cst_451 = arith.constant dense<0.000000e+00> : vector<16x128xf32>
    %633 = tpu.matmul %46, %632, %cst_451 {dimension_numbers = #tpu.dot_dimension_numbers<[1], [0], [0], [1], [0, 0, 1, 1], [], []>} : vector<16x48xbf16>, vector<48x128xbf16>, vector<16x128xf32> -> vector<16x128xf32>
    %634 = vector.broadcast %47 : vector<16x1xf32> to vector<16x128xf32>
    %635 = arith.addf %633, %634 : vector<16x128xf32>
    %cst_452 = arith.constant 0.000000e+00 : f32
    %636 = vector.broadcast %cst_452 : f32 to vector<16x128xf32>
    %637 = arith.maximumf %635, %636 : vector<16x128xf32>
    %c384_453 = arith.constant 384 : index
    %c0_454 = arith.constant 0 : index
    %638 = vector.load %arg14[%c384_453, %c0_454] : memref<512x128xf32, #tpu.memory_space<vmem>>, vector<16x128xf32>
    tpu.vector_store %arg14[%c384_453, %c0_454], %637 {strides = array<i32>} : memref<512x128xf32, #tpu.memory_space<vmem>>, vector<16x128xf32>,
    %c400_455 = arith.constant 400 : index
    %c0_456 = arith.constant 0 : index
    %639 = vector.load %arg17[%c400_455, %c0_456] : memref<544x128xbf16, #tpu.memory_space<vmem>>, vector<48x128xbf16>
    %cst_457 = arith.constant dense<0.000000e+00> : vector<16x128xf32>
    %640 = tpu.matmul %46, %639, %cst_457 {dimension_numbers = #tpu.dot_dimension_numbers<[1], [0], [0], [1], [0, 0, 1, 1], [], []>} : vector<16x48xbf16>, vector<48x128xbf16>, vector<16x128xf32> -> vector<16x128xf32>
    %641 = vector.broadcast %47 : vector<16x1xf32> to vector<16x128xf32>
    %642 = arith.addf %640, %641 : vector<16x128xf32>
    %cst_458 = arith.constant 0.000000e+00 : f32
    %643 = vector.broadcast %cst_458 : f32 to vector<16x128xf32>
    %644 = arith.maximumf %642, %643 : vector<16x128xf32>
    %c400_459 = arith.constant 400 : index
    %c0_460 = arith.constant 0 : index
    %645 = vector.load %arg14[%c400_459, %c0_460] : memref<512x128xf32, #tpu.memory_space<vmem>>, vector<16x128xf32>
    tpu.vector_store %arg14[%c400_459, %c0_460], %644 {strides = array<i32>} : memref<512x128xf32, #tpu.memory_space<vmem>>, vector<16x128xf32>,
    %c416_461 = arith.constant 416 : index
    %c0_462 = arith.constant 0 : index
    %646 = vector.load %arg17[%c416_461, %c0_462] : memref<544x128xbf16, #tpu.memory_space<vmem>>, vector<48x128xbf16>
    %cst_463 = arith.constant dense<0.000000e+00> : vector<16x128xf32>
    %647 = tpu.matmul %46, %646, %cst_463 {dimension_numbers = #tpu.dot_dimension_numbers<[1], [0], [0], [1], [0, 0, 1, 1], [], []>} : vector<16x48xbf16>, vector<48x128xbf16>, vector<16x128xf32> -> vector<16x128xf32>
    %648 = vector.broadcast %47 : vector<16x1xf32> to vector<16x128xf32>
    %649 = arith.addf %647, %648 : vector<16x128xf32>
    %cst_464 = arith.constant 0.000000e+00 : f32
    %650 = vector.broadcast %cst_464 : f32 to vector<16x128xf32>
    %651 = arith.maximumf %649, %650 : vector<16x128xf32>
    %c416_465 = arith.constant 416 : index
    %c0_466 = arith.constant 0 : index
    %652 = vector.load %arg14[%c416_465, %c0_466] : memref<512x128xf32, #tpu.memory_space<vmem>>, vector<16x128xf32>
    tpu.vector_store %arg14[%c416_465, %c0_466], %651 {strides = array<i32>} : memref<512x128xf32, #tpu.memory_space<vmem>>, vector<16x128xf32>,
    %c432_467 = arith.constant 432 : index
    %c0_468 = arith.constant 0 : index
    %653 = vector.load %arg17[%c432_467, %c0_468] : memref<544x128xbf16, #tpu.memory_space<vmem>>, vector<48x128xbf16>
    %cst_469 = arith.constant dense<0.000000e+00> : vector<16x128xf32>
    %654 = tpu.matmul %46, %653, %cst_469 {dimension_numbers = #tpu.dot_dimension_numbers<[1], [0], [0], [1], [0, 0, 1, 1], [], []>} : vector<16x48xbf16>, vector<48x128xbf16>, vector<16x128xf32> -> vector<16x128xf32>
    %655 = vector.broadcast %47 : vector<16x1xf32> to vector<16x128xf32>
    %656 = arith.addf %654, %655 : vector<16x128xf32>
    %cst_470 = arith.constant 0.000000e+00 : f32
    %657 = vector.broadcast %cst_470 : f32 to vector<16x128xf32>
    %658 = arith.maximumf %656, %657 : vector<16x128xf32>
    %c432_471 = arith.constant 432 : index
    %c0_472 = arith.constant 0 : index
    %659 = vector.load %arg14[%c432_471, %c0_472] : memref<512x128xf32, #tpu.memory_space<vmem>>, vector<16x128xf32>
    tpu.vector_store %arg14[%c432_471, %c0_472], %658 {strides = array<i32>} : memref<512x128xf32, #tpu.memory_space<vmem>>, vector<16x128xf32>,
    %c448_473 = arith.constant 448 : index
    %c0_474 = arith.constant 0 : index
    %660 = vector.load %arg17[%c448_473, %c0_474] : memref<544x128xbf16, #tpu.memory_space<vmem>>, vector<48x128xbf16>
    %cst_475 = arith.constant dense<0.000000e+00> : vector<16x128xf32>
    %661 = tpu.matmul %46, %660, %cst_475 {dimension_numbers = #tpu.dot_dimension_numbers<[1], [0], [0], [1], [0, 0, 1, 1], [], []>} : vector<16x48xbf16>, vector<48x128xbf16>, vector<16x128xf32> -> vector<16x128xf32>
    %662 = vector.broadcast %47 : vector<16x1xf32> to vector<16x128xf32>
    %663 = arith.addf %661, %662 : vector<16x128xf32>
    %cst_476 = arith.constant 0.000000e+00 : f32
    %664 = vector.broadcast %cst_476 : f32 to vector<16x128xf32>
    %665 = arith.maximumf %663, %664 : vector<16x128xf32>
    %c448_477 = arith.constant 448 : index
    %c0_478 = arith.constant 0 : index
    %666 = vector.load %arg14[%c448_477, %c0_478] : memref<512x128xf32, #tpu.memory_space<vmem>>, vector<16x128xf32>
    tpu.vector_store %arg14[%c448_477, %c0_478], %665 {strides = array<i32>} : memref<512x128xf32, #tpu.memory_space<vmem>>, vector<16x128xf32>,
    %c464_479 = arith.constant 464 : index
    %c0_480 = arith.constant 0 : index
    %667 = vector.load %arg17[%c464_479, %c0_480] : memref<544x128xbf16, #tpu.memory_space<vmem>>, vector<48x128xbf16>
    %cst_481 = arith.constant dense<0.000000e+00> : vector<16x128xf32>
    %668 = tpu.matmul %46, %667, %cst_481 {dimension_numbers = #tpu.dot_dimension_numbers<[1], [0], [0], [1], [0, 0, 1, 1], [], []>} : vector<16x48xbf16>, vector<48x128xbf16>, vector<16x128xf32> -> vector<16x128xf32>
    %669 = vector.broadcast %47 : vector<16x1xf32> to vector<16x128xf32>
    %670 = arith.addf %668, %669 : vector<16x128xf32>
    %cst_482 = arith.constant 0.000000e+00 : f32
    %671 = vector.broadcast %cst_482 : f32 to vector<16x128xf32>
    %672 = arith.maximumf %670, %671 : vector<16x128xf32>
    %c464_483 = arith.constant 464 : index
    %c0_484 = arith.constant 0 : index
    %673 = vector.load %arg14[%c464_483, %c0_484] : memref<512x128xf32, #tpu.memory_space<vmem>>, vector<16x128xf32>
    tpu.vector_store %arg14[%c464_483, %c0_484], %672 {strides = array<i32>} : memref<512x128xf32, #tpu.memory_space<vmem>>, vector<16x128xf32>,
    %c480_485 = arith.constant 480 : index
    %c0_486 = arith.constant 0 : index
    %674 = vector.load %arg17[%c480_485, %c0_486] : memref<544x128xbf16, #tpu.memory_space<vmem>>, vector<48x128xbf16>
    %cst_487 = arith.constant dense<0.000000e+00> : vector<16x128xf32>
    %675 = tpu.matmul %46, %674, %cst_487 {dimension_numbers = #tpu.dot_dimension_numbers<[1], [0], [0], [1], [0, 0, 1, 1], [], []>} : vector<16x48xbf16>, vector<48x128xbf16>, vector<16x128xf32> -> vector<16x128xf32>
    %676 = vector.broadcast %47 : vector<16x1xf32> to vector<16x128xf32>
    %677 = arith.addf %675, %676 : vector<16x128xf32>
    %cst_488 = arith.constant 0.000000e+00 : f32
    %678 = vector.broadcast %cst_488 : f32 to vector<16x128xf32>
    %679 = arith.maximumf %677, %678 : vector<16x128xf32>
    %c480_489 = arith.constant 480 : index
    %c0_490 = arith.constant 0 : index
    %680 = vector.load %arg14[%c480_489, %c0_490] : memref<512x128xf32, #tpu.memory_space<vmem>>, vector<16x128xf32>
    tpu.vector_store %arg14[%c480_489, %c0_490], %679 {strides = array<i32>} : memref<512x128xf32, #tpu.memory_space<vmem>>, vector<16x128xf32>,
    %c496_491 = arith.constant 496 : index
    %c0_492 = arith.constant 0 : index
    %681 = vector.load %arg17[%c496_491, %c0_492] : memref<544x128xbf16, #tpu.memory_space<vmem>>, vector<48x128xbf16>
    %cst_493 = arith.constant dense<0.000000e+00> : vector<16x128xf32>
    %682 = tpu.matmul %46, %681, %cst_493 {dimension_numbers = #tpu.dot_dimension_numbers<[1], [0], [0], [1], [0, 0, 1, 1], [], []>} : vector<16x48xbf16>, vector<48x128xbf16>, vector<16x128xf32> -> vector<16x128xf32>
    %683 = vector.broadcast %47 : vector<16x1xf32> to vector<16x128xf32>
    %684 = arith.addf %682, %683 : vector<16x128xf32>
    %cst_494 = arith.constant 0.000000e+00 : f32
    %685 = vector.broadcast %cst_494 : f32 to vector<16x128xf32>
    %686 = arith.maximumf %684, %685 : vector<16x128xf32>
    %c496_495 = arith.constant 496 : index
    %c0_496 = arith.constant 0 : index
    %687 = vector.load %arg14[%c496_495, %c0_496] : memref<512x128xf32, #tpu.memory_space<vmem>>, vector<16x128xf32>
    tpu.vector_store %arg14[%c496_495, %c0_496], %686 {strides = array<i32>} : memref<512x128xf32, #tpu.memory_space<vmem>>, vector<16x128xf32>,
    return
  }
  func.func @transform_0(%arg0: i32) -> (i32, i32) {
    %c0_i32 = arith.constant 0 : i32
    %c0_i32_0 = arith.constant 0 : i32
    return %c0_i32, %arg0 : i32, i32
  }
  func.func @transform_1(%arg0: i32) -> (i32, i32) {
    %c0_i32 = arith.constant 0 : i32
    %c0_i32_0 = arith.constant 0 : i32
    %c0_i32_1 = arith.constant 0 : i32
    return %c0_i32, %c0_i32_0 : i32, i32
  }
  func.func @transform_2(%arg0: i32) -> (i32, i32) {
    %c0_i32 = arith.constant 0 : i32
    %c0_i32_0 = arith.constant 0 : i32
    %c0_i32_1 = arith.constant 0 : i32
    return %c0_i32, %c0_i32_0 : i32, i32
  }
  func.func @transform_3(%arg0: i32) -> (i32, i32) {
    %c0_i32 = arith.constant 0 : i32
    %c0_i32_0 = arith.constant 0 : i32
    %c0_i32_1 = arith.constant 0 : i32
    return %c0_i32, %c0_i32_0 : i32, i32
  }
  func.func @transform_4(%arg0: i32) -> (i32, i32) {
    %c0_i32 = arith.constant 0 : i32
    %c0_i32_0 = arith.constant 0 : i32
    %c0_i32_1 = arith.constant 0 : i32
    return %c0_i32, %c0_i32_0 : i32, i32
  }
  func.func @transform_5(%arg0: i32) -> (i32, i32) {
    %c0_i32 = arith.constant 0 : i32
    %c0_i32_0 = arith.constant 0 : i32
    %c0_i32_1 = arith.constant 0 : i32
    return %c0_i32, %c0_i32_0 : i32, i32
  }
  func.func @transform_6(%arg0: i32) -> (i32, i32) {
    %c0_i32 = arith.constant 0 : i32
    %c0_i32_0 = arith.constant 0 : i32
    %c0_i32_1 = arith.constant 0 : i32
    return %c0_i32, %c0_i32_0 : i32, i32
  }
  func.func @transform_7(%arg0: i32) -> (i32, i32) {
    %c0_i32 = arith.constant 0 : i32
    %c0_i32_0 = arith.constant 0 : i32
    %c0_i32_1 = arith.constant 0 : i32
    return %c0_i32, %c0_i32_0 : i32, i32
  }
  func.func @transform_8(%arg0: i32) -> (i32, i32) {
    %c0_i32 = arith.constant 0 : i32
    %c0_i32_0 = arith.constant 0 : i32
    %c0_i32_1 = arith.constant 0 : i32
    return %c0_i32, %c0_i32_0 : i32, i32
  }
  func.func @transform_9(%arg0: i32) -> (i32, i32) {
    %c0_i32 = arith.constant 0 : i32
    %c0_i32_0 = arith.constant 0 : i32
    %c0_i32_1 = arith.constant 0 : i32
    return %c0_i32, %c0_i32_0 : i32, i32
  }
  func.func @transform_10(%arg0: i32) -> (i32, i32) {
    %c0_i32 = arith.constant 0 : i32
    %c0_i32_0 = arith.constant 0 : i32
    %c0_i32_1 = arith.constant 0 : i32
    return %c0_i32, %c0_i32_0 : i32, i32
  }
  func.func @transform_11(%arg0: i32) -> (i32, i32) {
    %c0_i32 = arith.constant 0 : i32
    %c0_i32_0 = arith.constant 0 : i32
    %c0_i32_1 = arith.constant 0 : i32
    return %c0_i32, %c0_i32_0 : i32, i32
  }
  func.func @transform_12(%arg0: i32) -> (i32, i32) {
    %c0_i32 = arith.constant 0 : i32
    %c0_i32_0 = arith.constant 0 : i32
    %c0_i32_1 = arith.constant 0 : i32
    return %c0_i32, %c0_i32_0 : i32, i32
  }
  func.func @transform_13(%arg0: i32) -> (i32, i32) {
    %c0_i32 = arith.constant 0 : i32
    %c0_i32_0 = arith.constant 0 : i32
    return %c0_i32, %arg0 : i32, i32
  }
}

</mosaic_0001>

<llo_original>
// kernel: tpu_custom_call.1
$region0: #{tpu_custom_call.1}
  #allocation0 [shape = 'u32[]', space=smem, size = 0x4, offset = 0x4, fixed_abs, tag = 'smem constant byte address 0x4 - core index']
  #allocation1 [shape = 'u32[144,128]{1,0:T(1,128)}', space=vmem, size = 0x12000, scoped, tag = 'internal scratch']
  #allocation2 [shape = 'f32[48,128]{1,0:T(8,128)}', space=vmem, size = 0x6000, scoped, tag = 'scratch operand']
  #allocation3 [shape = 'bf16[576,128]{1,0:T(16,128)(2,1)}', space=vmem, size = 0x24000, scoped, tag = 'scratch operand']
  #allocation4 [shape = 'bf16[544,128]{1,0:T(16,128)(2,1)}', space=vmem, size = 0x22000, scoped, tag = 'scratch operand']
  %s0 = inlined_call_operand.vmem [shape: f32[32,256], index: 0, kind: input, shape index: {}]
  %s1 = inlined_call_operand.vmem [shape: bf16[64,32], index: 1, kind: input, shape index: {}]
  %s2 = inlined_call_operand.vmem [shape: f32[64,1], index: 2, kind: input, shape index: {}]
  %s3 = inlined_call_operand.vmem [shape: bf16[64,64], index: 3, kind: input, shape index: {}]
  %s4 = inlined_call_operand.vmem [shape: f32[64,1], index: 4, kind: input, shape index: {}]
  %s5 = inlined_call_operand.vmem [shape: bf16[32,64], index: 5, kind: input, shape index: {}]
  %s6 = inlined_call_operand.vmem [shape: f32[32,1], index: 6, kind: input, shape index: {}]
  %s7 = inlined_call_operand.vmem [shape: bf16[16,8], index: 7, kind: input, shape index: {}]
  %s8 = inlined_call_operand.vmem [shape: f32[16,1], index: 8, kind: input, shape index: {}]
  %s9 = inlined_call_operand.vmem [shape: bf16[16,80], index: 9, kind: input, shape index: {}]
  %s10 = inlined_call_operand.vmem [shape: f32[16,1], index: 10, kind: input, shape index: {}]
  %s11 = inlined_call_operand.vmem [shape: bf16[16,48], index: 11, kind: input, shape index: {}]
  %s12 = inlined_call_operand.vmem [shape: f32[16,1], index: 12, kind: input, shape index: {}]
  %s13 = inlined_call_operand.hbm [shape: f32[512,256], index: 13, kind: output, shape index: {}]
  %s14 = sld [smem:[#allocation0]]
  $region123: #{tpu_custom_call.1} parent=0
    _
  %s16 = ssub.s32 1, %s14
  %s17 = scalar_select 0, %s16, %s14
  $region1: #{tpu_custom_call.1} parent=0
    #allocation5 [shape = 'u8[32768]{0}', space=vmem, size = 0x8000, scoped, tag = 'input window, operand 0']
    #allocation6 [shape = 'u8[524288]{0}', space=vmem, size = 0x80000, scoped, tag = 'output window, operand 0']
    #allocation7 [shape = 's32[2]{0}', space=sflag, size = 0x8, scoped, tag = 'scoped memory for tpu_custom_call.1']
    %18 = vsyncpa [#allocation7], 0
    %s19 = scalar_lea.sflag [#allocation7], 1
    %20 = vsyncpa %s19, 0
    loop: start=0, step=1, limit=4
    $region2: #{tpu_custom_call.1} parent=1 // loop_pre_header
      _
    $region3: #{tpu_custom_call.1} parent=1 // loop_header
      %s22 = sphi 0, %s26
      %p23 = scmp.ge.s32.totalorder %s22, 4
      %s32 = sphi 0, %s34
      %s35 = sphi 0, %s32
      %s36 = sphi 0, %s35
      %s52 = sphi 0, %s36
      %s56 = sphi 0, %s56
      %s58 = sphi 0, %s56
      %s59 = sphi 0, %s58
      %s73 = sphi 0, %s59
      %s77 = sphi 0, %s77
      %s79 = sphi 0, %s77
      %s80 = sphi 0, %s79
      %s94 = sphi 0, %s80
      %s98 = sphi 0, %s98
      %s100 = sphi 0, %s98
      %s101 = sphi 0, %s100
      %s115 = sphi 0, %s101
      %s119 = sphi 0, %s119
      %s121 = sphi 0, %s119
      %s122 = sphi 0, %s121
      %s136 = sphi 0, %s122
      %s140 = sphi 0, %s140
      %s142 = sphi 0, %s140
      %s143 = sphi 0, %s142
      %s157 = sphi 0, %s143
      %s161 = sphi 0, %s161
      %s163 = sphi 0, %s161
      %s164 = sphi 0, %s163
      %s178 = sphi 0, %s164
      %s182 = sphi 0, %s182
      %s184 = sphi 0, %s182
      %s185 = sphi 0, %s184
      %s199 = sphi 0, %s185
      %s203 = sphi 0, %s203
      %s205 = sphi 0, %s203
      %s206 = sphi 0, %s205
      %s220 = sphi 0, %s206
      %s224 = sphi 0, %s224
      %s226 = sphi 0, %s224
      %s227 = sphi 0, %s226
      %s241 = sphi 0, %s227
      %s245 = sphi 0, %s245
      %s247 = sphi 0, %s245
      %s248 = sphi 0, %s247
      %s262 = sphi 0, %s248
      %s266 = sphi 0, %s266
      %s268 = sphi 0, %s266
      %s269 = sphi 0, %s268
      %s283 = sphi 0, %s269
      %s287 = sphi 0, %s287
      %s289 = sphi 0, %s287
      %s290 = sphi 0, %s289
      %s304 = sphi 0, %s290
      %s310 = sphi 0, %s312
      %s313 = sphi 0, %s310
      %s314 = sphi 0, %s313
      %s330 = sphi 0, %s314
    $region4: #{tpu_custom_call.1} parent=1 // loop_header_branch
      %25 = sbr.rel (%p23) target = $region8
    $region5: #{tpu_custom_call.1} parent=1 // loop_body
      %s27 = ssub.s32 %s22, 1
      %s28 = ssub.s32 %s22, 2
      %s29 = sadd.s32 %s22, 1
      %s30 = ssub.s32 %s22, %s29
      %p31 = scmp.eq.s32.totalorder %s30, 0
      %s33 = sadd.s32 %s32, 1
      %s34 = scalar_select %p31, %s32, %s33
      %p37 = pneg %p31
      %p38 = scmp.eq.s32.totalorder %s22, 1
      %p39 = por %p37, %p38
      %p40 = scmp.ne.s32.totalorder %s32, %s35
      %p41 = scmp.eq.s32.totalorder %s22, 0
      %p42 = por %p40, %p41
      %p43 = scmp.ne.s32.totalorder %s32, %s35
      %p44 = scmp.eq.s32.totalorder %s27, 1
      %p45 = por %p43, %p44
      %p46 = scmp.ne.s32.totalorder %s35, %s36
      %p47 = scmp.eq.s32.totalorder %s27, 0
      %p48 = por %p46, %p47
      %p49 = scmp.ne.s32.totalorder %s35, %s36
      %p50 = scmp.eq.s32.totalorder %s28, 1
      %p51 = por %p49, %p50
      %p53 = scmp.ne.s32.totalorder %s36, %s52
      %p54 = scmp.eq.s32.totalorder %s28, 0
      %p55 = por %p53, %p54
      %s57 = sadd.s32 %s56, 1
      %p60 = scmp.eq.s32.totalorder %s22, 1
      %p61 = scmp.ne.s32.totalorder %s56, %s58
      %p62 = scmp.eq.s32.totalorder %s22, 0
      %p63 = por %p61, %p62
      %p64 = scmp.ne.s32.totalorder %s56, %s58
      %p65 = scmp.eq.s32.totalorder %s27, 1
      %p66 = por %p64, %p65
      %p67 = scmp.ne.s32.totalorder %s58, %s59
      %p68 = scmp.eq.s32.totalorder %s27, 0
      %p69 = por %p67, %p68
      %p70 = scmp.ne.s32.totalorder %s58, %s59
      %p71 = scmp.eq.s32.totalorder %s28, 1
      %p72 = por %p70, %p71
      %p74 = scmp.ne.s32.totalorder %s59, %s73
      %p75 = scmp.eq.s32.totalorder %s28, 0
      %p76 = por %p74, %p75
      %s78 = sadd.s32 %s77, 1
      %p81 = scmp.eq.s32.totalorder %s22, 1
      %p82 = scmp.ne.s32.totalorder %s77, %s79
      %p83 = scmp.eq.s32.totalorder %s22, 0
      %p84 = por %p82, %p83
      %p85 = scmp.ne.s32.totalorder %s77, %s79
      %p86 = scmp.eq.s32.totalorder %s27, 1
      %p87 = por %p85, %p86
      %p88 = scmp.ne.s32.totalorder %s79, %s80
      %p89 = scmp.eq.s32.totalorder %s27, 0
      %p90 = por %p88, %p89
      %p91 = scmp.ne.s32.totalorder %s79, %s80
      %p92 = scmp.eq.s32.totalorder %s28, 1
      %p93 = por %p91, %p92
      %p95 = scmp.ne.s32.totalorder %s80, %s94
      %p96 = scmp.eq.s32.totalorder %s28, 0
      %p97 = por %p95, %p96
      %s99 = sadd.s32 %s98, 1
      %p102 = scmp.eq.s32.totalorder %s22, 1
      %p103 = scmp.ne.s32.totalorder %s98, %s100
      %p104 = scmp.eq.s32.totalorder %s22, 0
      %p105 = por %p103, %p104
      %p106 = scmp.ne.s32.totalorder %s98, %s100
      %p107 = scmp.eq.s32.totalorder %s27, 1
      %p108 = por %p106, %p107
      %p109 = scmp.ne.s32.totalorder %s100, %s101
      %p110 = scmp.eq.s32.totalorder %s27, 0
      %p111 = por %p109, %p110
      %p112 = scmp.ne.s32.totalorder %s100, %s101
      %p113 = scmp.eq.s32.totalorder %s28, 1
      %p114 = por %p112, %p113
      %p116 = scmp.ne.s32.totalorder %s101, %s115
      %p117 = scmp.eq.s32.totalorder %s28, 0
      %p118 = por %p116, %p117
      %s120 = sadd.s32 %s119, 1
      %p123 = scmp.eq.s32.totalorder %s22, 1
      %p124 = scmp.ne.s32.totalorder %s119, %s121
      %p125 = scmp.eq.s32.totalorder %s22, 0
      %p126 = por %p124, %p125
      %p127 = scmp.ne.s32.totalorder %s119, %s121
      %p128 = scmp.eq.s32.totalorder %s27, 1
      %p129 = por %p127, %p128
      %p130 = scmp.ne.s32.totalorder %s121, %s122
      %p131 = scmp.eq.s32.totalorder %s27, 0
      %p132 = por %p130, %p131
      %p133 = scmp.ne.s32.totalorder %s121, %s122
      %p134 = scmp.eq.s32.totalorder %s28, 1
      %p135 = por %p133, %p134
      %p137 = scmp.ne.s32.totalorder %s122, %s136
      %p138 = scmp.eq.s32.totalorder %s28, 0
      %p139 = por %p137, %p138
      %s141 = sadd.s32 %s140, 1
      %p144 = scmp.eq.s32.totalorder %s22, 1
      %p145 = scmp.ne.s32.totalorder %s140, %s142
      %p146 = scmp.eq.s32.totalorder %s22, 0
      %p147 = por %p145, %p146
      %p148 = scmp.ne.s32.totalorder %s140, %s142
      %p149 = scmp.eq.s32.totalorder %s27, 1
      %p150 = por %p148, %p149
      %p151 = scmp.ne.s32.totalorder %s142, %s143
      %p152 = scmp.eq.s32.totalorder %s27, 0
      %p153 = por %p151, %p152
      %p154 = scmp.ne.s32.totalorder %s142, %s143
      %p155 = scmp.eq.s32.totalorder %s28, 1
      %p156 = por %p154, %p155
      %p158 = scmp.ne.s32.totalorder %s143, %s157
      %p159 = scmp.eq.s32.totalorder %s28, 0
      %p160 = por %p158, %p159
      %s162 = sadd.s32 %s161, 1
      %p165 = scmp.eq.s32.totalorder %s22, 1
      %p166 = scmp.ne.s32.totalorder %s161, %s163
      %p167 = scmp.eq.s32.totalorder %s22, 0
      %p168 = por %p166, %p167
      %p169 = scmp.ne.s32.totalorder %s161, %s163
      %p170 = scmp.eq.s32.totalorder %s27, 1
      %p171 = por %p169, %p170
      %p172 = scmp.ne.s32.totalorder %s163, %s164
      %p173 = scmp.eq.s32.totalorder %s27, 0
      %p174 = por %p172, %p173
      %p175 = scmp.ne.s32.totalorder %s163, %s164
      %p176 = scmp.eq.s32.totalorder %s28, 1
      %p177 = por %p175, %p176
      %p179 = scmp.ne.s32.totalorder %s164, %s178
      %p180 = scmp.eq.s32.totalorder %s28, 0
      %p181 = por %p179, %p180
      %s183 = sadd.s32 %s182, 1
      %p186 = scmp.eq.s32.totalorder %s22, 1
      %p187 = scmp.ne.s32.totalorder %s182, %s184
      %p188 = scmp.eq.s32.totalorder %s22, 0
      %p189 = por %p187, %p188
      %p190 = scmp.ne.s32.totalorder %s182, %s184
      %p191 = scmp.eq.s32.totalorder %s27, 1
      %p192 = por %p190, %p191
      %p193 = scmp.ne.s32.totalorder %s184, %s185
      %p194 = scmp.eq.s32.totalorder %s27, 0
      %p195 = por %p193, %p194
      %p196 = scmp.ne.s32.totalorder %s184, %s185
      %p197 = scmp.eq.s32.totalorder %s28, 1
      %p198 = por %p196, %p197
      %p200 = scmp.ne.s32.totalorder %s185, %s199
      %p201 = scmp.eq.s32.totalorder %s28, 0
      %p202 = por %p200, %p201
      %s204 = sadd.s32 %s203, 1
      %p207 = scmp.eq.s32.totalorder %s22, 1
      %p208 = scmp.ne.s32.totalorder %s203, %s205
      %p209 = scmp.eq.s32.totalorder %s22, 0
      %p210 = por %p208, %p209
      %p211 = scmp.ne.s32.totalorder %s203, %s205
      %p212 = scmp.eq.s32.totalorder %s27, 1
      %p213 = por %p211, %p212
      %p214 = scmp.ne.s32.totalorder %s205, %s206
      %p215 = scmp.eq.s32.totalorder %s27, 0
      %p216 = por %p214, %p215
      %p217 = scmp.ne.s32.totalorder %s205, %s206
      %p218 = scmp.eq.s32.totalorder %s28, 1
      %p219 = por %p217, %p218
      %p221 = scmp.ne.s32.totalorder %s206, %s220
      %p222 = scmp.eq.s32.totalorder %s28, 0
      %p223 = por %p221, %p222
      %s225 = sadd.s32 %s224, 1
      %p228 = scmp.eq.s32.totalorder %s22, 1
      %p229 = scmp.ne.s32.totalorder %s224, %s226
      %p230 = scmp.eq.s32.totalorder %s22, 0
      %p231 = por %p229, %p230
      %p232 = scmp.ne.s32.totalorder %s224, %s226
      %p233 = scmp.eq.s32.totalorder %s27, 1
      %p234 = por %p232, %p233
      %p235 = scmp.ne.s32.totalorder %s226, %s227
      %p236 = scmp.eq.s32.totalorder %s27, 0
      %p237 = por %p235, %p236
      %p238 = scmp.ne.s32.totalorder %s226, %s227
      %p239 = scmp.eq.s32.totalorder %s28, 1
      %p240 = por %p238, %p239
      %p242 = scmp.ne.s32.totalorder %s227, %s241
      %p243 = scmp.eq.s32.totalorder %s28, 0
      %p244 = por %p242, %p243
      %s246 = sadd.s32 %s245, 1
      %p249 = scmp.eq.s32.totalorder %s22, 1
      %p250 = scmp.ne.s32.totalorder %s245, %s247
      %p251 = scmp.eq.s32.totalorder %s22, 0
      %p252 = por %p250, %p251
      %p253 = scmp.ne.s32.totalorder %s245, %s247
      %p254 = scmp.eq.s32.totalorder %s27, 1
      %p255 = por %p253, %p254
      %p256 = scmp.ne.s32.totalorder %s247, %s248
      %p257 = scmp.eq.s32.totalorder %s27, 0
      %p258 = por %p256, %p257
      %p259 = scmp.ne.s32.totalorder %s247, %s248
      %p260 = scmp.eq.s32.totalorder %s28, 1
      %p261 = por %p259, %p260
      %p263 = scmp.ne.s32.totalorder %s248, %s262
      %p264 = scmp.eq.s32.totalorder %s28, 0
      %p265 = por %p263, %p264
      %s267 = sadd.s32 %s266, 1
      %p270 = scmp.eq.s32.totalorder %s22, 1
      %p271 = scmp.ne.s32.totalorder %s266, %s268
      %p272 = scmp.eq.s32.totalorder %s22, 0
      %p273 = por %p271, %p272
      %p274 = scmp.ne.s32.totalorder %s266, %s268
      %p275 = scmp.eq.s32.totalorder %s27, 1
      %p276 = por %p274, %p275
      %p277 = scmp.ne.s32.totalorder %s268, %s269
      %p278 = scmp.eq.s32.totalorder %s27, 0
      %p279 = por %p277, %p278
      %p280 = scmp.ne.s32.totalorder %s268, %s269
      %p281 = scmp.eq.s32.totalorder %s28, 1
      %p282 = por %p280, %p281
      %p284 = scmp.ne.s32.totalorder %s269, %s283
      %p285 = scmp.eq.s32.totalorder %s28, 0
      %p286 = por %p284, %p285
      %s288 = sadd.s32 %s287, 1
      %p291 = scmp.eq.s32.totalorder %s22, 1
      %p292 = scmp.ne.s32.totalorder %s287, %s289
      %p293 = scmp.eq.s32.totalorder %s22, 0
      %p294 = por %p292, %p293
      %p295 = scmp.ne.s32.totalorder %s287, %s289
      %p296 = scmp.eq.s32.totalorder %s27, 1
      %p297 = por %p295, %p296
      %p298 = scmp.ne.s32.totalorder %s289, %s290
      %p299 = scmp.eq.s32.totalorder %s27, 0
      %p300 = por %p298, %p299
      %p301 = scmp.ne.s32.totalorder %s289, %s290
      %p302 = scmp.eq.s32.totalorder %s28, 1
      %p303 = por %p301, %p302
      %p305 = scmp.ne.s32.totalorder %s290, %s304
      %p306 = scmp.eq.s32.totalorder %s28, 0
      %p307 = por %p305, %p306
      %s308 = ssub.s32 %s22, %s29
      %p309 = scmp.eq.s32.totalorder %s308, 0
      %s311 = sadd.s32 %s310, 1
      %s312 = scalar_select %p309, %s310, %s311
      %p315 = pneg %p309
      %p316 = scmp.eq.s32.totalorder %s22, 1
      %p317 = por %p315, %p316
      %p318 = scmp.ne.s32.totalorder %s310, %s313
      %p319 = scmp.eq.s32.totalorder %s22, 0
      %p320 = por %p318, %p319
      %p321 = scmp.ne.s32.totalorder %s310, %s313
      %p322 = scmp.eq.s32.totalorder %s27, 1
      %p323 = por %p321, %p322
      %p324 = scmp.ne.s32.totalorder %s313, %s314
      %p325 = scmp.eq.s32.totalorder %s27, 0
      %p326 = por %p324, %p325
      %p327 = scmp.ne.s32.totalorder %s313, %s314
      %p328 = scmp.eq.s32.totalorder %s28, 1
      %p329 = por %p327, %p328
      %p331 = scmp.ne.s32.totalorder %s314, %s330
      %p332 = scmp.eq.s32.totalorder %s28, 0
      %p333 = por %p331, %p332
      %p334 = scmp.le.s32.totalorder 1, %s22
      %p335 = scmp.lt.s32.totalorder %s22, 3
      %p336 = pnand %p334, %p335
      %p337 = pneg %p336
      // Predicated region
      $region9: #{tpu_custom_call.1} parent=5 // pred_check
        _
      $region10: #{tpu_custom_call.1} parent=5 // pred_check_branch
        %339 = sbr.rel (%p336) target = $region12
      $region11: #{tpu_custom_call.1} parent=5 // pred_region
        %s340 = ssub.s32 %s22, 1
        // Predicated region
        $region13: #{tpu_custom_call.1} parent=11 // pred_check
          %p341 = pneg %p69
        $region14: #{tpu_custom_call.1} parent=11 // pred_check_branch
          %343 = sbr.rel (%p341) target = $region16
        $region15: #{tpu_custom_call.1} parent=11 // pred_region
          _
        $region16: #{tpu_custom_call.1} parent=11 // pred_fallthru
          _
        // Predicated region
        $region17: #{tpu_custom_call.1} parent=11 // pred_check
          %p344 = pneg %p90
        $region18: #{tpu_custom_call.1} parent=11 // pred_check_branch
          %346 = sbr.rel (%p344) target = $region20
        $region19: #{tpu_custom_call.1} parent=11 // pred_region
          _
        $region20: #{tpu_custom_call.1} parent=11 // pred_fallthru
          _
        // Predicated region
        $region21: #{tpu_custom_call.1} parent=11 // pred_check
          %p347 = pneg %p111
        $region22: #{tpu_custom_call.1} parent=11 // pred_check_branch
          %349 = sbr.rel (%p347) target = $region24
        $region23: #{tpu_custom_call.1} parent=11 // pred_region
          _
        $region24: #{tpu_custom_call.1} parent=11 // pred_fallthru
          _
        // Predicated region
        $region25: #{tpu_custom_call.1} parent=11 // pred_check
          %p350 = pneg %p132
        $region26: #{tpu_custom_call.1} parent=11 // pred_check_branch
          %352 = sbr.rel (%p350) target = $region28
        $region27: #{tpu_custom_call.1} parent=11 // pred_region
          _
        $region28: #{tpu_custom_call.1} parent=11 // pred_fallthru
          _
        // Predicated region
        $region29: #{tpu_custom_call.1} parent=11 // pred_check
          %p353 = pneg %p153
        $region30: #{tpu_custom_call.1} parent=11 // pred_check_branch
          %355 = sbr.rel (%p353) target = $region32
        $region31: #{tpu_custom_call.1} parent=11 // pred_region
          _
        $region32: #{tpu_custom_call.1} parent=11 // pred_fallthru
          _
        // Predicated region
        $region33: #{tpu_custom_call.1} parent=11 // pred_check
          %p356 = pneg %p174
        $region34: #{tpu_custom_call.1} parent=11 // pred_check_branch
          %358 = sbr.rel (%p356) target = $region36
        $region35: #{tpu_custom_call.1} parent=11 // pred_region
          _
        $region36: #{tpu_custom_call.1} parent=11 // pred_fallthru
          _
        // Predicated region
        $region37: #{tpu_custom_call.1} parent=11 // pred_check
          %p359 = pneg %p195
        $region38: #{tpu_custom_call.1} parent=11 // pred_check_branch
          %361 = sbr.rel (%p359) target = $region40
        $region39: #{tpu_custom_call.1} parent=11 // pred_region
          _
        $region40: #{tpu_custom_call.1} parent=11 // pred_fallthru
          _
        // Predicated region
        $region41: #{tpu_custom_call.1} parent=11 // pred_check
          %p362 = pneg %p216
        $region42: #{tpu_custom_call.1} parent=11 // pred_check_branch
          %364 = sbr.rel (%p362) target = $region44
        $region43: #{tpu_custom_call.1} parent=11 // pred_region
          _
        $region44: #{tpu_custom_call.1} parent=11 // pred_fallthru
          _
        // Predicated region
        $region45: #{tpu_custom_call.1} parent=11 // pred_check
          %p365 = pneg %p237
        $region46: #{tpu_custom_call.1} parent=11 // pred_check_branch
          %367 = sbr.rel (%p365) target = $region48
        $region47: #{tpu_custom_call.1} parent=11 // pred_region
          _
        $region48: #{tpu_custom_call.1} parent=11 // pred_fallthru
          _
        // Predicated region
        $region49: #{tpu_custom_call.1} parent=11 // pred_check
          %p368 = pneg %p258
        $region50: #{tpu_custom_call.1} parent=11 // pred_check_branch
          %370 = sbr.rel (%p368) target = $region52
        $region51: #{tpu_custom_call.1} parent=11 // pred_region
          _
        $region52: #{tpu_custom_call.1} parent=11 // pred_fallthru
          _
        // Predicated region
        $region53: #{tpu_custom_call.1} parent=11 // pred_check
          %p371 = pneg %p279
        $region54: #{tpu_custom_call.1} parent=11 // pred_check_branch
          %373 = sbr.rel (%p371) target = $region56
        $region55: #{tpu_custom_call.1} parent=11 // pred_region
          _
        $region56: #{tpu_custom_call.1} parent=11 // pred_fallthru
          _
        // Predicated region
        $region57: #{tpu_custom_call.1} parent=11 // pred_check
          %p374 = pneg %p300
        $region58: #{tpu_custom_call.1} parent=11 // pred_check_branch
          %376 = sbr.rel (%p374) target = $region60
        $region59: #{tpu_custom_call.1} parent=11 // pred_region
          _
        $region60: #{tpu_custom_call.1} parent=11 // pred_fallthru
          _
      $region12: #{tpu_custom_call.1} parent=5 // pred_fallthru
        _
      %p377 = scmp.lt.s32.totalorder %s22, 2
      // Predicated region
      $region61: #{tpu_custom_call.1} parent=5 // pred_check
        %p378 = pneg %p377
      $region62: #{tpu_custom_call.1} parent=5 // pred_check_branch
        %380 = sbr.rel (%p378) target = $region64
      $region63: #{tpu_custom_call.1} parent=5 // pred_region
        // Predicated region
        $region65: #{tpu_custom_call.1} parent=63 // pred_check
          %p381 = pneg %p42
        $region66: #{tpu_custom_call.1} parent=63 // pred_check_branch
          %383 = sbr.rel (%p381) target = $region68
        $region67: #{tpu_custom_call.1} parent=63 // pred_region
          %s384 = sand.u32 %s32, 1
          %s385 = sand.u32 %s32, 1
          %s386 = smul.addr %s385, 32
          %s387 = scalar_lea.vmem [#allocation5], %s386
          %s388 = smul.addr %s22, 8
          %s389 = scalar_lea.vmem %s0, %s388
          // Predicated region
          $region69: #{tpu_custom_call.1} parent=67 // pred_check
            _
          $region70: #{tpu_custom_call.1} parent=67 // pred_check_branch
            %391 = sbr.rel (0) target = $region72
          $region71: #{tpu_custom_call.1} parent=67 // pred_region
            // Predicated region
            $region73: #{tpu_custom_call.1} parent=71 // pred_check
              _
            $region74: #{tpu_custom_call.1} parent=71 // pred_check_branch
              %393 = sbr.rel (0) target = $region76
            $region75: #{tpu_custom_call.1} parent=71 // pred_region
              // Predicated region
              $region88: #{tpu_custom_call.1} parent=75 // pred_check
                _
              $region89: #{tpu_custom_call.1} parent=75 // pred_check_branch
                %414 = sbr.rel (0) target = $region91
              $region90: #{tpu_custom_call.1} parent=75 // pred_region
                loop: start=0, step=1, limit=1
                $region92: #{tpu_custom_call.1} parent=90 // loop_pre_header
                  _
                $region93: #{tpu_custom_call.1} parent=90 // loop_header
                  %s416 = sphi 0, %s420
                  %p417 = scmp.ge.s32.totalorder %s416, 1
                  %s421 = sphi %s389, %s389
                  %s422 = sphi %s387, %s387
                $region94: #{tpu_custom_call.1} parent=90 // loop_header_branch
                  %419 = sbr.rel (%p417) target = $region98
                $region95: #{tpu_custom_call.1} parent=90 // loop_body
                  %v423 = vld [vmem:[%s421] sm:$0xff]
                  %424 = vst [vmem:[%s422] sm:$0xff] %v423
                  %v425 = vld [vmem:[%s421 + $0x10] sm:$0xff]
                  %426 = vst [vmem:[%s422 + $0x8] sm:$0xff] %v425
                  %v427 = vld [vmem:[%s421 + $0x20] sm:$0xff]
                  %428 = vst [vmem:[%s422 + $0x10] sm:$0xff] %v427
                  %v429 = vld [vmem:[%s421 + $0x30] sm:$0xff]
                  %430 = vst [vmem:[%s422 + $0x18] sm:$0xff] %v429
                $region96: #{tpu_custom_call.1} parent=90 // loop_footer
                  %s420 = sadd.s32 1, %s416
                $region97: #{tpu_custom_call.1} parent=90 // loop_footer_branch
                  %415 = sbr.rel target = $region93
                $region98: #{tpu_custom_call.1} parent=90 // loop_exit
                  _
              $region91: #{tpu_custom_call.1} parent=75 // pred_fallthru
                _
              // Predicated region
              $region99: #{tpu_custom_call.1} parent=75 // pred_check
                _
              $region100: #{tpu_custom_call.1} parent=75 // pred_check_branch
                %432 = sbr.rel target = $region102
              $region101: #{tpu_custom_call.1} parent=75 // pred_region
                _
              $region102: #{tpu_custom_call.1} parent=75 // pred_fallthru
                _
            $region76: #{tpu_custom_call.1} parent=71 // pred_fallthru
              _
            // Predicated region
            $region77: #{tpu_custom_call.1} parent=71 // pred_check
              _
            $region78: #{tpu_custom_call.1} parent=71 // pred_check_branch
              %395 = sbr.rel target = $region80
            $region79: #{tpu_custom_call.1} parent=71 // pred_region
              loop: start=0, step=1, limit=1
              $region81: #{tpu_custom_call.1} parent=79 // loop_pre_header
                _
              $region82: #{tpu_custom_call.1} parent=79 // loop_header
                %s398 = sphi 0, %s402
                %p399 = scmp.ge.s32.totalorder %s398, 1
                %s403 = sphi %s389, %s389
                %s404 = sphi %s387, %s387
              $region83: #{tpu_custom_call.1} parent=79 // loop_header_branch
                %401 = sbr.rel (%p399) target = $region87
              $region84: #{tpu_custom_call.1} parent=79 // loop_body
                %v405 = vld [vmem:[%s403] sm:$0xff]
                %406 = vst [vmem:[%s404] sm:$0xff] %v405
                %v407 = vld [vmem:[%s403 + $0x10] sm:$0xff]
                %408 = vst [vmem:[%s404 + $0x8] sm:$0xff] %v407
                %v409 = vld [vmem:[%s403 + $0x20] sm:$0xff]
                %410 = vst [vmem:[%s404 + $0x10] sm:$0xff] %v409
                %v411 = vld [vmem:[%s403 + $0x30] sm:$0xff]
                %412 = vst [vmem:[%s404 + $0x18] sm:$0xff] %v411
              $region85: #{tpu_custom_call.1} parent=79 // loop_footer
                %s402 = sadd.s32 1, %s398
              $region86: #{tpu_custom_call.1} parent=79 // loop_footer_branch
                %397 = sbr.rel target = $region82
              $region87: #{tpu_custom_call.1} parent=79 // loop_exit
                _
            $region80: #{tpu_custom_call.1} parent=71 // pred_fallthru
              _
          $region72: #{tpu_custom_call.1} parent=67 // pred_fallthru
            _
          %433 = vnop
        $region68: #{tpu_custom_call.1} parent=63 // pred_fallthru
          _
      $region64: #{tpu_custom_call.1} parent=5 // pred_fallthru
        _
      %p434 = scmp.le.s32.totalorder 1, %s22
      %p435 = scmp.lt.s32.totalorder %s22, 3
      %p436 = pnand %p434, %p435
      %p437 = pneg %p436
      // Predicated region
      $region103: #{tpu_custom_call.1} parent=5 // pred_check
        _
      $region104: #{tpu_custom_call.1} parent=5 // pred_check_branch
        %439 = sbr.rel (%p436) target = $region106
      $region105: #{tpu_custom_call.1} parent=5 // pred_region
        %s440 = ssub.s32 %s22, 1
        %s441 = sand.u32 %s35, 1
        %s442 = sand.u32 %s35, 1
        %s443 = smul.addr %s442, 32
        %s444 = scalar_lea.vmem [#allocation5], %s443
        // Predicated region
        $region107: #{tpu_custom_call.1} parent=105 // pred_check
          %p445 = pneg %p48
        $region108: #{tpu_custom_call.1} parent=105 // pred_check_branch
          %447 = sbr.rel (%p445) target = $region110
        $region109: #{tpu_custom_call.1} parent=105 // pred_region
          _
        $region110: #{tpu_custom_call.1} parent=105 // pred_fallthru
          _
        %s448 = sand.u32 %s35, 1
        %s449 = sand.u32 %s35, 1
        %s450 = smul.addr %s449, 32
        %s451 = scalar_lea.vmem [#allocation5], %s450
        %p452 = pneg %p48
        %p453 = pneg %p45
        %p454 = pneg %p69
        %p455 = pneg %p66
        %p456 = pneg %p90
        %p457 = pneg %p87
        %p458 = pneg %p111
        %p459 = pneg %p108
        %p460 = pneg %p132
        %p461 = pneg %p129
        %p462 = pneg %p153
        %p463 = pneg %p150
        %p464 = pneg %p174
        %p465 = pneg %p171
        %p466 = pneg %p195
        %p467 = pneg %p192
        %p468 = pneg %p216
        %p469 = pneg %p213
        %p470 = pneg %p237
        %p471 = pneg %p234
        %p472 = pneg %p258
        %p473 = pneg %p255
        %p474 = pneg %p279
        %p475 = pneg %p276
        %p476 = pneg %p300
        %p477 = pneg %p297
        %p478 = pneg %p326
        %p479 = pneg %p323
        %s480 = sand.u32 %s313, 1
        %s481 = scalar_lea.sflag [#allocation7], %s480
        %s482 = sand.u32 %s313, 1
        %s483 = smul.addr %s482, 512
        %s484 = scalar_lea.vmem [#allocation6], %s483
        %v486 = vld [vmem:[%s444] sm:$0xff]
        %v487 = vld [vmem:[%s444 + $0x8] sm:$0xff]
        %v488 = vld [vmem:[%s444 + $0x10] sm:$0xff]
        %v489 = vld [vmem:[%s444 + $0x18] sm:$0xff]
        %v490 = vld [vmem:[%s1] sm:$0xf]
        %v491 = vld [vmem:[%s1 + $0x4] sm:$0xf]
        %v492 = vld [vmem:[%s1 + $0x8] sm:$0xf]
        %v493 = vld [vmem:[%s1 + $0xc] sm:$0xf]
        %v494 = vld [vmem:[%s1 + $0x10] sm:$0xf]
        %v495 = vld [vmem:[%s1 + $0x14] sm:$0xf]
        %v496 = vld [vmem:[%s1 + $0x18] sm:$0xf]
        %v497 = vld [vmem:[%s1 + $0x1c] sm:$0xf]
        %v498 = vpack.c.bf16 %v487, %v486
        %v499 = vpack.c.bf16 %v489, %v488
        %v500 = vld [vmem:[%s2] sm:$0xff]
        %v501 = vld [vmem:[%s2 + $0x8] sm:$0xff]
        %v502 = vld [vmem:[%s2 + $0x10] sm:$0xff]
        %v503 = vld [vmem:[%s2 + $0x18] sm:$0xff]
        %v504 = vld [vmem:[%s2 + $0x20] sm:$0xff]
        %v505 = vld [vmem:[%s2 + $0x28] sm:$0xff]
        %v506 = vld [vmem:[%s2 + $0x30] sm:$0xff]
        %v507 = vld [vmem:[%s2 + $0x38] sm:$0xff]
        %509 = vset.pattern.permute.xlu0 0
        %510 = vperm.xlu0 %509, %v500
        %v511 = vpop.permute.xlu0 %510
        %514 = vset.pattern.permute.xlu0 0
        %515 = vperm.xlu0 %514, %v501
        %v516 = vpop.permute.xlu0 %515
        %519 = vset.pattern.permute.xlu0 0
        %520 = vperm.xlu0 %519, %v502
        %v521 = vpop.permute.xlu0 %520
        %524 = vset.pattern.permute.xlu0 0
        %525 = vperm.xlu0 %524, %v503
        %v526 = vpop.permute.xlu0 %525
        %529 = vset.pattern.permute.xlu0 0
        %530 = vperm.xlu0 %529, %v504
        %v531 = vpop.permute.xlu0 %530
        %534 = vset.pattern.permute.xlu0 0
        %535 = vperm.xlu0 %534, %v505
        %v536 = vpop.permute.xlu0 %535
        %539 = vset.pattern.permute.xlu0 0
        %540 = vperm.xlu0 %539, %v506
        %v541 = vpop.permute.xlu0 %540
        %544 = vset.pattern.permute.xlu0 0
        %545 = vperm.xlu0 %544, %v507
        %v546 = vpop.permute.xlu0 %545
        %v556 = vunpack.c.l.b16 %v490
        %v557 = vunpack.c.l.b16 %v491
        %v558 = vunpack.c.l.b16 %v492
        %v559 = vunpack.c.l.b16 %v493
        %v560 = vunpack.c.l.b16 %v494
        %v561 = vunpack.c.l.b16 %v495
        %v562 = vunpack.c.l.b16 %v496
        %v563 = vunpack.c.l.b16 %v497
        %v564 = vpack.c.b16 %v557, %v556
        %v565 = vpack.c.b16 %v559, %v558
        %v566 = vpack.c.b16 %v561, %v560
        %v567 = vpack.c.b16 %v563, %v562
        %vm568 = vcmask 261120
        %v570 = vsel %vm568, %v564, 0
        %v573 = vsel %vm568, %v565, 0
        %v576 = vsel %vm568, %v566, 0
        %v579 = vsel %vm568, %v567, 0
        %581 = vmatprep.subr.bf16.mxu0 0
        %582 = vmatpush1.bf16.msra.mxu0 %v498
        %583 = vmatprep.subr.bf16.mxu0 0
        %584 = vmatpush1.bf16.msra.mxu0 %v499
        %585 = vmatprep.subr.bf16.mxu0 0
        %586 = vmatpush1.bf16.msra.mxu0 0
        %587 = vmatprep.subr.bf16.mxu0 0
        %588 = vmatpush1.bf16.msra.mxu0 0
        %589 = vmatprep.subr.bf16.mxu0 0
        %590 = vmatpush1.bf16.msra.mxu0 0
        %591 = vmatprep.subr.bf16.mxu0 0
        %592 = vmatpush1.bf16.msra.mxu0 0
        %593 = vmatprep.subr.bf16.mxu0 0
        %594 = vmatpush1.bf16.msra.mxu0 0
        %595 = vmatprep.subr.bf16.mxu0 0
        %596 = vmatpush1.bf16.msra.mxu0 0
        %597 = vmatprep.subr.bf16.mxu0 0
        %598 = vmatpush1.bf16.msra.mxu0 0
        %599 = vmatprep.subr.bf16.mxu0 0
        %600 = vmatpush1.bf16.msra.mxu0 0
        %601 = vmatprep.subr.bf16.mxu0 0
        %602 = vmatpush1.bf16.msra.mxu0 0
        %603 = vmatprep.subr.bf16.mxu0 0
        %604 = vmatpush1.bf16.msra.mxu0 0
        %605 = vmatprep.subr.bf16.mxu0 0
        %606 = vmatpush1.bf16.msra.mxu0 0
        %607 = vmatprep.subr.bf16.mxu0 0
        %608 = vmatpush1.bf16.msra.mxu0 0
        %609 = vmatprep.subr.bf16.mxu0 0
        %610 = vmatpush1.bf16.msra.mxu0 0
        %611 = vmatprep.subr.bf16.mxu0 0
        %612 = vmatpush1.bf16.msra.mxu0 0
        %613 = vmatprep.mubr.bf16.mxu0 0
        %614 = vmatmul.mubr.bf16.gmra.mrb[0].mxu0 %v570
        %v615 = vpop.f32.mrb[0].mxu0
        %v616 = vadd.f32 %v511, %v615
        %v617 = vpop.f32.mrb[0].mxu0
        %v618 = vpop.f32.mrb[0].mxu0
        %v619 = vadd.f32 %v516, %v618
        %v620 = vpop.f32.mrb[0].mxu0
        %621 = vmatprep.mubr.bf16.mxu0 0
        %622 = vmatmul.mubr.bf16.gmra.mrb[0].mxu0 %v573
        %v623 = vpop.f32.mrb[0].mxu0
        %v624 = vadd.f32 %v521, %v623
        %v625 = vpop.f32.mrb[0].mxu0
        %v626 = vpop.f32.mrb[0].mxu0
        %v627 = vadd.f32 %v526, %v626
        %v628 = vpop.f32.mrb[0].mxu0
        %629 = vmatprep.mubr.bf16.mxu0 0
        %630 = vmatmul.mubr.bf16.gmra.mrb[0].mxu0 %v576
        %v631 = vpop.f32.mrb[0].mxu0
        %v632 = vadd.f32 %v531, %v631
        %v633 = vpop.f32.mrb[0].mxu0
        %v634 = vpop.f32.mrb[0].mxu0
        %v635 = vadd.f32 %v536, %v634
        %v636 = vpop.f32.mrb[0].mxu0
        %637 = vmatprep.mubr.bf16.mxu0 0
        %638 = vmatmul.mubr.bf16.gmra.mrb[0].mxu0 %v579
        %v639 = vpop.f32.mrb[0].mxu0
        %v640 = vadd.f32 %v541, %v639
        %v641 = vpop.f32.mrb[0].mxu0
        %v642 = vpop.f32.mrb[0].mxu0
        %v643 = vadd.f32 %v546, %v642
        %v644 = vpop.f32.mrb[0].mxu0
        %645 = vdwg.mxu0
        %v646 = vmax.f32 %v616, 0.0
        %v647 = vmax.f32 %v619, 0.0
        %v648 = vmax.f32 %v624, 0.0
        %v649 = vmax.f32 %v627, 0.0
        %v650 = vmax.f32 %v632, 0.0
        %v651 = vmax.f32 %v635, 0.0
        %v652 = vmax.f32 %v640, 0.0
        %v653 = vmax.f32 %v643, 0.0
        %v654 = vld [vmem:[%s3] sm:$0xf]
        %v655 = vld [vmem:[%s3 + $0x4] sm:$0xf]
        %v656 = vld [vmem:[%s3 + $0x8] sm:$0xf]
        %v657 = vld [vmem:[%s3 + $0xc] sm:$0xf]
        %v658 = vld [vmem:[%s3 + $0x10] sm:$0xf]
        %v659 = vld [vmem:[%s3 + $0x14] sm:$0xf]
        %v660 = vld [vmem:[%s3 + $0x18] sm:$0xf]
        %v661 = vld [vmem:[%s3 + $0x1c] sm:$0xf]
        %v662 = vpack.c.bf16 %v647, %v646
        %v663 = vpack.c.bf16 %v649, %v648
        %v664 = vpack.c.bf16 %v651, %v650
        %v665 = vpack.c.bf16 %v653, %v652
        %v666 = vld [vmem:[%s4] sm:$0xff]
        %v667 = vld [vmem:[%s4 + $0x8] sm:$0xff]
        %v668 = vld [vmem:[%s4 + $0x10] sm:$0xff]
        %v669 = vld [vmem:[%s4 + $0x18] sm:$0xff]
        %v670 = vld [vmem:[%s4 + $0x20] sm:$0xff]
        %v671 = vld [vmem:[%s4 + $0x28] sm:$0xff]
        %v672 = vld [vmem:[%s4 + $0x30] sm:$0xff]
        %v673 = vld [vmem:[%s4 + $0x38] sm:$0xff]
        %675 = vset.pattern.permute.xlu0 0
        %676 = vperm.xlu0 %675, %v666
        %v677 = vpop.permute.xlu0 %676
        %680 = vset.pattern.permute.xlu0 0
        %681 = vperm.xlu0 %680, %v667
        %v682 = vpop.permute.xlu0 %681
        %685 = vset.pattern.permute.xlu0 0
        %686 = vperm.xlu0 %685, %v668
        %v687 = vpop.permute.xlu0 %686
        %690 = vset.pattern.permute.xlu0 0
        %691 = vperm.xlu0 %690, %v669
        %v692 = vpop.permute.xlu0 %691
        %695 = vset.pattern.permute.xlu0 0
        %696 = vperm.xlu0 %695, %v670
        %v697 = vpop.permute.xlu0 %696
        %700 = vset.pattern.permute.xlu0 0
        %701 = vperm.xlu0 %700, %v671
        %v702 = vpop.permute.xlu0 %701
        %705 = vset.pattern.permute.xlu0 0
        %706 = vperm.xlu0 %705, %v672
        %v707 = vpop.permute.xlu0 %706
        %710 = vset.pattern.permute.xlu0 0
        %711 = vperm.xlu0 %710, %v673
        %v712 = vpop.permute.xlu0 %711
        %v722 = vunpack.c.l.b16 %v654
        %v723 = vunpack.c.l.b16 %v655
        %v724 = vunpack.c.l.b16 %v656
        %v725 = vunpack.c.l.b16 %v657
        %v726 = vunpack.c.l.b16 %v658
        %v727 = vunpack.c.l.b16 %v659
        %v728 = vunpack.c.l.b16 %v660
        %v729 = vunpack.c.l.b16 %v661
        %v730 = vpack.c.b16 %v723, %v722
        %v731 = vpack.c.b16 %v725, %v724
        %v732 = vpack.c.b16 %v727, %v726
        %v733 = vpack.c.b16 %v729, %v728
        %vm734 = vcmask 523264
        %v736 = vsel %vm734, %v730, 0
        %v739 = vsel %vm734, %v731, 0
        %v742 = vsel %vm734, %v732, 0
        %v745 = vsel %vm734, %v733, 0
        %747 = vmatprep.subr.bf16.mxu0 0
        %748 = vmatpush1.bf16.msra.mxu0 %v662
        %749 = vmatprep.subr.bf16.mxu0 0
        %750 = vmatpush1.bf16.msra.mxu0 %v663
        %751 = vmatprep.subr.bf16.mxu0 0
        %752 = vmatpush1.bf16.msra.mxu0 %v664
        %753 = vmatprep.subr.bf16.mxu0 0
        %754 = vmatpush1.bf16.msra.mxu0 %v665
        %755 = vmatprep.subr.bf16.mxu0 0
        %756 = vmatpush1.bf16.msra.mxu0 0
        %757 = vmatprep.subr.bf16.mxu0 0
        %758 = vmatpush1.bf16.msra.mxu0 0
        %759 = vmatprep.subr.bf16.mxu0 0
        %760 = vmatpush1.bf16.msra.mxu0 0
        %761 = vmatprep.subr.bf16.mxu0 0
        %762 = vmatpush1.bf16.msra.mxu0 0
        %763 = vmatprep.subr.bf16.mxu0 0
        %764 = vmatpush1.bf16.msra.mxu0 0
        %765 = vmatprep.subr.bf16.mxu0 0
        %766 = vmatpush1.bf16.msra.mxu0 0
        %767 = vmatprep.subr.bf16.mxu0 0
        %768 = vmatpush1.bf16.msra.mxu0 0
        %769 = vmatprep.subr.bf16.mxu0 0
        %770 = vmatpush1.bf16.msra.mxu0 0
        %771 = vmatprep.subr.bf16.mxu0 0
        %772 = vmatpush1.bf16.msra.mxu0 0
        %773 = vmatprep.subr.bf16.mxu0 0
        %774 = vmatpush1.bf16.msra.mxu0 0
        %775 = vmatprep.subr.bf16.mxu0 0
        %776 = vmatpush1.bf16.msra.mxu0 0
        %777 = vmatprep.subr.bf16.mxu0 0
        %778 = vmatpush1.bf16.msra.mxu0 0
        %779 = vmatprep.mubr.bf16.mxu0 0
        %780 = vmatmul.mubr.bf16.gmra.mrb[0].mxu0 %v736
        %v781 = vpop.f32.mrb[0].mxu0
        %v782 = vadd.f32 %v677, %v781
        %v783 = vpop.f32.mrb[0].mxu0
        %v784 = vpop.f32.mrb[0].mxu0
        %v785 = vadd.f32 %v682, %v784
        %v786 = vpop.f32.mrb[0].mxu0
        %787 = vmatprep.mubr.bf16.mxu0 0
        %788 = vmatmul.mubr.bf16.gmra.mrb[0].mxu0 %v739
        %v789 = vpop.f32.mrb[0].mxu0
        %v790 = vadd.f32 %v687, %v789
        %v791 = vpop.f32.mrb[0].mxu0
        %v792 = vpop.f32.mrb[0].mxu0
        %v793 = vadd.f32 %v692, %v792
        %v794 = vpop.f32.mrb[0].mxu0
        %795 = vmatprep.mubr.bf16.mxu0 0
        %796 = vmatmul.mubr.bf16.gmra.mrb[0].mxu0 %v742
        %v797 = vpop.f32.mrb[0].mxu0
        %v798 = vadd.f32 %v697, %v797
        %v799 = vpop.f32.mrb[0].mxu0
        %v800 = vpop.f32.mrb[0].mxu0
        %v801 = vadd.f32 %v702, %v800
        %v802 = vpop.f32.mrb[0].mxu0
        %803 = vmatprep.mubr.bf16.mxu0 0
        %804 = vmatmul.mubr.bf16.gmra.mrb[0].mxu0 %v745
        %v805 = vpop.f32.mrb[0].mxu0
        %v806 = vadd.f32 %v707, %v805
        %v807 = vpop.f32.mrb[0].mxu0
        %v808 = vpop.f32.mrb[0].mxu0
        %v809 = vadd.f32 %v712, %v808
        %v810 = vpop.f32.mrb[0].mxu0
        %811 = vdwg.mxu0
        %v812 = vmax.f32 %v782, 0.0
        %v813 = vmax.f32 %v785, 0.0
        %v814 = vmax.f32 %v790, 0.0
        %v815 = vmax.f32 %v793, 0.0
        %v816 = vmax.f32 %v798, 0.0
        %v817 = vmax.f32 %v801, 0.0
        %v818 = vmax.f32 %v806, 0.0
        %v819 = vmax.f32 %v809, 0.0
        %v820 = vld [vmem:[%s5] sm:$0xf]
        %v821 = vld [vmem:[%s5 + $0x4] sm:$0xf]
        %v822 = vld [vmem:[%s5 + $0x8] sm:$0xf]
        %v823 = vld [vmem:[%s5 + $0xc] sm:$0xf]
        %v824 = vpack.c.bf16 %v813, %v812
        %v825 = vpack.c.bf16 %v815, %v814
        %v826 = vpack.c.bf16 %v817, %v816
        %v827 = vpack.c.bf16 %v819, %v818
        %v828 = vld [vmem:[%s6] sm:$0xff]
        %v829 = vld [vmem:[%s6 + $0x8] sm:$0xff]
        %v830 = vld [vmem:[%s6 + $0x10] sm:$0xff]
        %v831 = vld [vmem:[%s6 + $0x18] sm:$0xff]
        %833 = vset.pattern.permute.xlu0 0
        %834 = vperm.xlu0 %833, %v828
        %v835 = vpop.permute.xlu0 %834
        %838 = vset.pattern.permute.xlu0 0
        %839 = vperm.xlu0 %838, %v829
        %v840 = vpop.permute.xlu0 %839
        %843 = vset.pattern.permute.xlu0 0
        %844 = vperm.xlu0 %843, %v830
        %v845 = vpop.permute.xlu0 %844
        %848 = vset.pattern.permute.xlu0 0
        %849 = vperm.xlu0 %848, %v831
        %v850 = vpop.permute.xlu0 %849
        %v856 = vunpack.c.l.b16 %v820
        %v857 = vunpack.c.l.b16 %v821
        %v858 = vunpack.c.l.b16 %v822
        %v859 = vunpack.c.l.b16 %v823
        %v860 = vpack.c.b16 %v857, %v856
        %v861 = vpack.c.b16 %v859, %v858
        %v863 = vsel %vm734, %v860, 0
        %v866 = vsel %vm734, %v861, 0
        %868 = vmatprep.subr.bf16.mxu0 0
        %869 = vmatpush1.bf16.msra.mxu0 %v824
        %870 = vmatprep.subr.bf16.mxu0 0
        %871 = vmatpush1.bf16.msra.mxu0 %v825
        %872 = vmatprep.subr.bf16.mxu0 0
        %873 = vmatpush1.bf16.msra.mxu0 %v826
        %874 = vmatprep.subr.bf16.mxu0 0
        %875 = vmatpush1.bf16.msra.mxu0 %v827
        %876 = vmatprep.subr.bf16.mxu0 0
        %877 = vmatpush1.bf16.msra.mxu0 0
        %878 = vmatprep.subr.bf16.mxu0 0
        %879 = vmatpush1.bf16.msra.mxu0 0
        %880 = vmatprep.subr.bf16.mxu0 0
        %881 = vmatpush1.bf16.msra.mxu0 0
        %882 = vmatprep.subr.bf16.mxu0 0
        %883 = vmatpush1.bf16.msra.mxu0 0
        %884 = vmatprep.subr.bf16.mxu0 0
        %885 = vmatpush1.bf16.msra.mxu0 0
        %886 = vmatprep.subr.bf16.mxu0 0
        %887 = vmatpush1.bf16.msra.mxu0 0
        %888 = vmatprep.subr.bf16.mxu0 0
        %889 = vmatpush1.bf16.msra.mxu0 0
        %890 = vmatprep.subr.bf16.mxu0 0
        %891 = vmatpush1.bf16.msra.mxu0 0
        %892 = vmatprep.subr.bf16.mxu0 0
        %893 = vmatpush1.bf16.msra.mxu0 0
        %894 = vmatprep.subr.bf16.mxu0 0
        %895 = vmatpush1.bf16.msra.mxu0 0
        %896 = vmatprep.subr.bf16.mxu0 0
        %897 = vmatpush1.bf16.msra.mxu0 0
        %898 = vmatprep.subr.bf16.mxu0 0
        %899 = vmatpush1.bf16.msra.mxu0 0
        %900 = vmatprep.mubr.bf16.mxu0 0
        %901 = vmatmul.mubr.bf16.gmra.mrb[0].mxu0 %v863
        %v902 = vpop.f32.mrb[0].mxu0
        %v903 = vadd.f32 %v835, %v902
        %v904 = vpop.f32.mrb[0].mxu0
        %v905 = vpop.f32.mrb[0].mxu0
        %v906 = vadd.f32 %v840, %v905
        %v907 = vpop.f32.mrb[0].mxu0
        %908 = vmatprep.mubr.bf16.mxu0 0
        %909 = vmatmul.mubr.bf16.gmra.mrb[0].mxu0 %v866
        %v910 = vpop.f32.mrb[0].mxu0
        %v911 = vadd.f32 %v845, %v910
        %v912 = vpop.f32.mrb[0].mxu0
        %v913 = vpop.f32.mrb[0].mxu0
        %v914 = vadd.f32 %v850, %v913
        %v915 = vpop.f32.mrb[0].mxu0
        %916 = vdwg.mxu0
        %v917 = vxor.u32 %v903, 2147483648
        %v918 = vxor.u32 %v906, 2147483648
        %v919 = vxor.u32 %v911, 2147483648
        %v920 = vxor.u32 %v914, 2147483648
        %v921 = vmul.f32 %v917, 1.442695
        %v922 = vpow.pop %v921
        %v923 = vmul.f32 %v918, 1.442695
        %v924 = vpow.pop %v923
        %v925 = vmul.f32 %v919, 1.442695
        %v926 = vpow.pop %v925
        %v927 = vmul.f32 %v920, 1.442695
        %v928 = vpow.pop %v927
        %v929 = vadd.f32 %v922, 1.0
        %v930 = vadd.f32 %v924, 1.0
        %v931 = vadd.f32 %v926, 1.0
        %v932 = vadd.f32 %v928, 1.0
        %v933 = vrcp.pop %v929
        %v934 = vmul.f32 1.0, %v933
        %v935 = vrcp.pop %v930
        %v936 = vmul.f32 1.0, %v935
        %v937 = vrcp.pop %v931
        %v938 = vmul.f32 1.0, %v937
        %v939 = vrcp.pop %v932
        %v940 = vmul.f32 1.0, %v939
        %v941 = vmul.f32 %v486, %v934
        %v942 = vmul.f32 %v487, %v936
        %v943 = vmul.f32 %v488, %v938
        %v944 = vmul.f32 %v489, %v940
        %945 = vst [vmem:[#allocation2] sm:$0xff] 0.0
        %946 = vst [vmem:[#allocation2 + $0x28] sm:$0xff] 0.0
        %947 = vst [vmem:[#allocation3] sm:$0xff] 0
        %948 = vst [vmem:[#allocation3 + $0x8] sm:$0xff] 0
        %949 = vst [vmem:[#allocation3 + $0x110] sm:$0xff] 0
        %950 = vst [vmem:[#allocation3 + $0x118] sm:$0xff] 0
        %951 = vst [vmem:[#allocation4] sm:$0xff] 0
        %952 = vst [vmem:[#allocation4 + $0x108] sm:$0xff] 0
        %953 = vst [vmem:[#allocation2 + $0x8] sm:$0xff] %v941
        %954 = vst [vmem:[#allocation2 + $0x10] sm:$0xff] %v942
        %955 = vst [vmem:[#allocation2 + $0x18] sm:$0xff] %v943
        %956 = vst [vmem:[#allocation2 + $0x20] sm:$0xff] %v944
        %v957 = vld [vmem:[%s7] sm:$0xf]
        %v958 = vld [vmem:[%s7 + $0x4] sm:$0xf]
        %v959 = vld [vmem:[%s8] sm:$0xff]
        %v960 = vld [vmem:[%s8 + $0x8] sm:$0xff]
        %v961 = vld [vmem:[%s9] sm:$0xf]
        %v962 = vld [vmem:[%s9 + $0x4] sm:$0xf]
        %v963 = vld [vmem:[%s10] sm:$0xff]
        %v964 = vld [vmem:[%s10 + $0x8] sm:$0xff]
        %v965 = vld [vmem:[%s11] sm:$0xf]
        %v966 = vld [vmem:[%s11 + $0x4] sm:$0xf]
        %v967 = vld [vmem:[%s12] sm:$0xff]
        %v968 = vld [vmem:[%s12 + $0x8] sm:$0xff]
        %v969 = vld [vmem:[#allocation2 + $0x5] sm:$0xff]
        %v970 = vpack.c.bf16 %v969, %v969
        %972 = vset.pattern.permute.xlu0 0
        %973 = vperm.xlu0 %972, %v959
        %v974 = vpop.permute.xlu0 %973
        %977 = vset.pattern.permute.xlu0 0
        %978 = vperm.xlu0 %977, %v960
        %v979 = vpop.permute.xlu0 %978
        %v983 = vunpack.c.l.b16 %v957
        %v984 = vunpack.c.l.b16 %v958
        %v985 = vpack.c.b16 %v984, %v983
        %vm986 = vcmask 64512
        %v988 = vsel %vm986, %v985, 0
        %vm990 = vcmask 1043456
        %v992 = vsel %vm990, %v970, 0
        %994 = vmatprep.subr.bf16.mxu0 0
        %995 = vmatpush1.bf16.msra.mxu0 %v992
        %996 = vmatprep.subr.bf16.mxu0 0
        %997 = vmatpush1.bf16.msra.mxu0 0
        %998 = vmatprep.subr.bf16.mxu0 0
        %999 = vmatpush1.bf16.msra.mxu0 0
        %1000 = vmatprep.subr.bf16.mxu0 0
        %1001 = vmatpush1.bf16.msra.mxu0 0
        %1002 = vmatprep.subr.bf16.mxu0 0
        %1003 = vmatpush1.bf16.msra.mxu0 0
        %1004 = vmatprep.subr.bf16.mxu0 0
        %1005 = vmatpush1.bf16.msra.mxu0 0
        %1006 = vmatprep.subr.bf16.mxu0 0
        %1007 = vmatpush1.bf16.msra.mxu0 0
        %1008 = vmatprep.subr.bf16.mxu0 0
        %1009 = vmatpush1.bf16.msra.mxu0 0
        %1010 = vmatprep.subr.bf16.mxu0 0
        %1011 = vmatpush1.bf16.msra.mxu0 0
        %1012 = vmatprep.subr.bf16.mxu0 0
        %1013 = vmatpush1.bf16.msra.mxu0 0
        %1014 = vmatprep.subr.bf16.mxu0 0
        %1015 = vmatpush1.bf16.msra.mxu0 0
        %1016 = vmatprep.subr.bf16.mxu0 0
        %1017 = vmatpush1.bf16.msra.mxu0 0
        %1018 = vmatprep.subr.bf16.mxu0 0
        %1019 = vmatpush1.bf16.msra.mxu0 0
        %1020 = vmatprep.subr.bf16.mxu0 0
        %1021 = vmatpush1.bf16.msra.mxu0 0
        %1022 = vmatprep.subr.bf16.mxu0 0
        %1023 = vmatpush1.bf16.msra.mxu0 0
        %1024 = vmatprep.subr.bf16.mxu0 0
        %1025 = vmatpush1.bf16.msra.mxu0 0
        %1026 = vmatprep.mubr.bf16.mxu0 0
        %1027 = vmatmul.mubr.bf16.gmra.mrb[0].mxu0 %v988
        %v1028 = vpop.f32.mrb[0].mxu0
        %v1029 = vadd.f32 %v974, %v1028
        %v1030 = vpop.f32.mrb[0].mxu0
        %v1031 = vpop.f32.mrb[0].mxu0
        %v1032 = vadd.f32 %v979, %v1031
        %v1033 = vpop.f32.mrb[0].mxu0
        %1034 = vdwg.mxu0
        %v1035 = vpack.c.bf16 %v1032, %v1029
        %1036 = vst [vmem:[#allocation3 + $0x10] sm:$0xff] %v1035
        %v1037 = vld [vmem:[#allocation2 + $0x6] sm:$0xff]
        %v1038 = vpack.c.bf16 %v1037, %v1037
        %v1040 = vsel %vm990, %v1038, 0
        %1042 = vmatprep.subr.bf16.mxu0 0
        %1043 = vmatpush1.bf16.msra.mxu0 %v1040
        %1044 = vmatprep.subr.bf16.mxu0 0
        %1045 = vmatpush1.bf16.msra.mxu0 0
        %1046 = vmatprep.subr.bf16.mxu0 0
        %1047 = vmatpush1.bf16.msra.mxu0 0
        %1048 = vmatprep.subr.bf16.mxu0 0
        %1049 = vmatpush1.bf16.msra.mxu0 0
        %1050 = vmatprep.subr.bf16.mxu0 0
        %1051 = vmatpush1.bf16.msra.mxu0 0
        %1052 = vmatprep.subr.bf16.mxu0 0
        %1053 = vmatpush1.bf16.msra.mxu0 0
        %1054 = vmatprep.subr.bf16.mxu0 0
        %1055 = vmatpush1.bf16.msra.mxu0 0
        %1056 = vmatprep.subr.bf16.mxu0 0
        %1057 = vmatpush1.bf16.msra.mxu0 0
        %1058 = vmatprep.subr.bf16.mxu0 0
        %1059 = vmatpush1.bf16.msra.mxu0 0
        %1060 = vmatprep.subr.bf16.mxu0 0
        %1061 = vmatpush1.bf16.msra.mxu0 0
        %1062 = vmatprep.subr.bf16.mxu0 0
        %1063 = vmatpush1.bf16.msra.mxu0 0
        %1064 = vmatprep.subr.bf16.mxu0 0
        %1065 = vmatpush1.bf16.msra.mxu0 0
        %1066 = vmatprep.subr.bf16.mxu0 0
        %1067 = vmatpush1.bf16.msra.mxu0 0
        %1068 = vmatprep.subr.bf16.mxu0 0
        %1069 = vmatpush1.bf16.msra.mxu0 0
        %1070 = vmatprep.subr.bf16.mxu0 0
        %1071 = vmatpush1.bf16.msra.mxu0 0
        %1072 = vmatprep.subr.bf16.mxu0 0
        %1073 = vmatpush1.bf16.msra.mxu0 0
        %1074 = vmatprep.mubr.bf16.mxu0 0
        %1075 = vmatmul.mubr.bf16.gmra.mrb[0].mxu0 %v988
        %v1076 = vpop.f32.mrb[0].mxu0
        %v1077 = vadd.f32 %v974, %v1076
        %v1078 = vpop.f32.mrb[0].mxu0
        %v1079 = vpop.f32.mrb[0].mxu0
        %v1080 = vadd.f32 %v979, %v1079
        %v1081 = vpop.f32.mrb[0].mxu0
        %1082 = vdwg.mxu0
        %v1083 = vpack.c.bf16 %v1080, %v1077
        %1084 = vst [vmem:[#allocation3 + $0x18] sm:$0xff] %v1083
        %v1085 = vld [vmem:[#allocation2 + $0x7] sm:$0xff]
        %v1086 = vpack.c.bf16 %v1085, %v1085
        %v1088 = vsel %vm990, %v1086, 0
        %1090 = vmatprep.subr.bf16.mxu0 0
        %1091 = vmatpush1.bf16.msra.mxu0 %v1088
        %1092 = vmatprep.subr.bf16.mxu0 0
        %1093 = vmatpush1.bf16.msra.mxu0 0
        %1094 = vmatprep.subr.bf16.mxu0 0
        %1095 = vmatpush1.bf16.msra.mxu0 0
        %1096 = vmatprep.subr.bf16.mxu0 0
        %1097 = vmatpush1.bf16.msra.mxu0 0
        %1098 = vmatprep.subr.bf16.mxu0 0
        %1099 = vmatpush1.bf16.msra.mxu0 0
        %1100 = vmatprep.subr.bf16.mxu0 0
        %1101 = vmatpush1.bf16.msra.mxu0 0
        %1102 = vmatprep.subr.bf16.mxu0 0
        %1103 = vmatpush1.bf16.msra.mxu0 0
        %1104 = vmatprep.subr.bf16.mxu0 0
        %1105 = vmatpush1.bf16.msra.mxu0 0
        %1106 = vmatprep.subr.bf16.mxu0 0
        %1107 = vmatpush1.bf16.msra.mxu0 0
        %1108 = vmatprep.subr.bf16.mxu0 0
        %1109 = vmatpush1.bf16.msra.mxu0 0
        %1110 = vmatprep.subr.bf16.mxu0 0
        %1111 = vmatpush1.bf16.msra.mxu0 0
        %1112 = vmatprep.subr.bf16.mxu0 0
        %1113 = vmatpush1.bf16.msra.mxu0 0
        %1114 = vmatprep.subr.bf16.mxu0 0
        %1115 = vmatpush1.bf16.msra.mxu0 0
        %1116 = vmatprep.subr.bf16.mxu0 0
        %1117 = vmatpush1.bf16.msra.mxu0 0
        %1118 = vmatprep.subr.bf16.mxu0 0
        %1119 = vmatpush1.bf16.msra.mxu0 0
        %1120 = vmatprep.subr.bf16.mxu0 0
        %1121 = vmatpush1.bf16.msra.mxu0 0
        %1122 = vmatprep.mubr.bf16.mxu0 0
        %1123 = vmatmul.mubr.bf16.gmra.mrb[0].mxu0 %v988
        %v1124 = vpop.f32.mrb[0].mxu0
        %v1125 = vadd.f32 %v974, %v1124
        %v1126 = vpop.f32.mrb[0].mxu0
        %v1127 = vpop.f32.mrb[0].mxu0
        %v1128 = vadd.f32 %v979, %v1127
        %v1129 = vpop.f32.mrb[0].mxu0
        %1130 = vdwg.mxu0
        %v1131 = vpack.c.bf16 %v1128, %v1125
        %1132 = vst [vmem:[#allocation3 + $0x20] sm:$0xff] %v1131
        %v1133 = vld [vmem:[#allocation2 + $0x8] sm:$0xff]
        %v1134 = vpack.c.bf16 %v1133, %v1133
        %v1136 = vsel %vm990, %v1134, 0
        %1138 = vmatprep.subr.bf16.mxu0 0
        %1139 = vmatpush1.bf16.msra.mxu0 %v1136
        %1140 = vmatprep.subr.bf16.mxu0 0
        %1141 = vmatpush1.bf16.msra.mxu0 0
        %1142 = vmatprep.subr.bf16.mxu0 0
        %1143 = vmatpush1.bf16.msra.mxu0 0
        %1144 = vmatprep.subr.bf16.mxu0 0
        %1145 = vmatpush1.bf16.msra.mxu0 0
        %1146 = vmatprep.subr.bf16.mxu0 0
        %1147 = vmatpush1.bf16.msra.mxu0 0
        %1148 = vmatprep.subr.bf16.mxu0 0
        %1149 = vmatpush1.bf16.msra.mxu0 0
        %1150 = vmatprep.subr.bf16.mxu0 0
        %1151 = vmatpush1.bf16.msra.mxu0 0
        %1152 = vmatprep.subr.bf16.mxu0 0
        %1153 = vmatpush1.bf16.msra.mxu0 0
        %1154 = vmatprep.subr.bf16.mxu0 0
        %1155 = vmatpush1.bf16.msra.mxu0 0
        %1156 = vmatprep.subr.bf16.mxu0 0
        %1157 = vmatpush1.bf16.msra.mxu0 0
        %1158 = vmatprep.subr.bf16.mxu0 0
        %1159 = vmatpush1.bf16.msra.mxu0 0
        %1160 = vmatprep.subr.bf16.mxu0 0
        %1161 = vmatpush1.bf16.msra.mxu0 0
        %1162 = vmatprep.subr.bf16.mxu0 0
        %1163 = vmatpush1.bf16.msra.mxu0 0
        %1164 = vmatprep.subr.bf16.mxu0 0
        %1165 = vmatpush1.bf16.msra.mxu0 0
        %1166 = vmatprep.subr.bf16.mxu0 0
        %1167 = vmatpush1.bf16.msra.mxu0 0
        %1168 = vmatprep.subr.bf16.mxu0 0
        %1169 = vmatpush1.bf16.msra.mxu0 0
        %1170 = vmatprep.mubr.bf16.mxu0 0
        %1171 = vmatmul.mubr.bf16.gmra.mrb[0].mxu0 %v988
        %v1172 = vpop.f32.mrb[0].mxu0
        %v1173 = vadd.f32 %v974, %v1172
        %v1174 = vpop.f32.mrb[0].mxu0
        %v1175 = vpop.f32.mrb[0].mxu0
        %v1176 = vadd.f32 %v979, %v1175
        %v1177 = vpop.f32.mrb[0].mxu0
        %1178 = vdwg.mxu0
        %v1179 = vpack.c.bf16 %v1176, %v1173
        %1180 = vst [vmem:[#allocation3 + $0x28] sm:$0xff] %v1179
        %v1181 = vld [vmem:[#allocation2 + $0x9] sm:$0xff]
        %v1182 = vpack.c.bf16 %v1181, %v1181
        %v1184 = vsel %vm990, %v1182, 0
        %1186 = vmatprep.subr.bf16.mxu0 0
        %1187 = vmatpush1.bf16.msra.mxu0 %v1184
        %1188 = vmatprep.subr.bf16.mxu0 0
        %1189 = vmatpush1.bf16.msra.mxu0 0
        %1190 = vmatprep.subr.bf16.mxu0 0
        %1191 = vmatpush1.bf16.msra.mxu0 0
        %1192 = vmatprep.subr.bf16.mxu0 0
        %1193 = vmatpush1.bf16.msra.mxu0 0
        %1194 = vmatprep.subr.bf16.mxu0 0
        %1195 = vmatpush1.bf16.msra.mxu0 0
        %1196 = vmatprep.subr.bf16.mxu0 0
        %1197 = vmatpush1.bf16.msra.mxu0 0
        %1198 = vmatprep.subr.bf16.mxu0 0
        %1199 = vmatpush1.bf16.msra.mxu0 0
        %1200 = vmatprep.subr.bf16.mxu0 0
        %1201 = vmatpush1.bf16.msra.mxu0 0
        %1202 = vmatprep.subr.bf16.mxu0 0
        %1203 = vmatpush1.bf16.msra.mxu0 0
        %1204 = vmatprep.subr.bf16.mxu0 0
        %1205 = vmatpush1.bf16.msra.mxu0 0
        %1206 = vmatprep.subr.bf16.mxu0 0
        %1207 = vmatpush1.bf16.msra.mxu0 0
        %1208 = vmatprep.subr.bf16.mxu0 0
        %1209 = vmatpush1.bf16.msra.mxu0 0
        %1210 = vmatprep.subr.bf16.mxu0 0
        %1211 = vmatpush1.bf16.msra.mxu0 0
        %1212 = vmatprep.subr.bf16.mxu0 0
        %1213 = vmatpush1.bf16.msra.mxu0 0
        %1214 = vmatprep.subr.bf16.mxu0 0
        %1215 = vmatpush1.bf16.msra.mxu0 0
        %1216 = vmatprep.subr.bf16.mxu0 0
        %1217 = vmatpush1.bf16.msra.mxu0 0
        %1218 = vmatprep.mubr.bf16.mxu0 0
        %1219 = vmatmul.mubr.bf16.gmra.mrb[0].mxu0 %v988
        %v1220 = vpop.f32.mrb[0].mxu0
        %v1221 = vadd.f32 %v974, %v1220
        %v1222 = vpop.f32.mrb[0].mxu0
        %v1223 = vpop.f32.mrb[0].mxu0
        %v1224 = vadd.f32 %v979, %v1223
        %v1225 = vpop.f32.mrb[0].mxu0
        %1226 = vdwg.mxu0
        %v1227 = vpack.c.bf16 %v1224, %v1221
        %1228 = vst [vmem:[#allocation3 + $0x30] sm:$0xff] %v1227
        %v1229 = vld [vmem:[#allocation2 + $0xa] sm:$0xff]
        %v1230 = vpack.c.bf16 %v1229, %v1229
        %v1232 = vsel %vm990, %v1230, 0
        %1234 = vmatprep.subr.bf16.mxu0 0
        %1235 = vmatpush1.bf16.msra.mxu0 %v1232
        %1236 = vmatprep.subr.bf16.mxu0 0
        %1237 = vmatpush1.bf16.msra.mxu0 0
        %1238 = vmatprep.subr.bf16.mxu0 0
        %1239 = vmatpush1.bf16.msra.mxu0 0
        %1240 = vmatprep.subr.bf16.mxu0 0
        %1241 = vmatpush1.bf16.msra.mxu0 0
        %1242 = vmatprep.subr.bf16.mxu0 0
        %1243 = vmatpush1.bf16.msra.mxu0 0
        %1244 = vmatprep.subr.bf16.mxu0 0
        %1245 = vmatpush1.bf16.msra.mxu0 0
        %1246 = vmatprep.subr.bf16.mxu0 0
        %1247 = vmatpush1.bf16.msra.mxu0 0
        %1248 = vmatprep.subr.bf16.mxu0 0
        %1249 = vmatpush1.bf16.msra.mxu0 0
        %1250 = vmatprep.subr.bf16.mxu0 0
        %1251 = vmatpush1.bf16.msra.mxu0 0
        %1252 = vmatprep.subr.bf16.mxu0 0
        %1253 = vmatpush1.bf16.msra.mxu0 0
        %1254 = vmatprep.subr.bf16.mxu0 0
        %1255 = vmatpush1.bf16.msra.mxu0 0
        %1256 = vmatprep.subr.bf16.mxu0 0
        %1257 = vmatpush1.bf16.msra.mxu0 0
        %1258 = vmatprep.subr.bf16.mxu0 0
        %1259 = vmatpush1.bf16.msra.mxu0 0
        %1260 = vmatprep.subr.bf16.mxu0 0
        %1261 = vmatpush1.bf16.msra.mxu0 0
        %1262 = vmatprep.subr.bf16.mxu0 0
        %1263 = vmatpush1.bf16.msra.mxu0 0
        %1264 = vmatprep.subr.bf16.mxu0 0
        %1265 = vmatpush1.bf16.msra.mxu0 0
        %1266 = vmatprep.mubr.bf16.mxu0 0
        %1267 = vmatmul.mubr.bf16.gmra.mrb[0].mxu0 %v988
        %v1268 = vpop.f32.mrb[0].mxu0
        %v1269 = vadd.f32 %v974, %v1268
        %v1270 = vpop.f32.mrb[0].mxu0
        %v1271 = vpop.f32.mrb[0].mxu0
        %v1272 = vadd.f32 %v979, %v1271
        %v1273 = vpop.f32.mrb[0].mxu0
        %1274 = vdwg.mxu0
        %v1275 = vpack.c.bf16 %v1272, %v1269
        %1276 = vst [vmem:[#allocation3 + $0x38] sm:$0xff] %v1275
        %v1277 = vld [vmem:[#allocation2 + $0xb] sm:$0xff]
        %v1278 = vpack.c.bf16 %v1277, %v1277
        %v1280 = vsel %vm990, %v1278, 0
        %1282 = vmatprep.subr.bf16.mxu0 0
        %1283 = vmatpush1.bf16.msra.mxu0 %v1280
        %1284 = vmatprep.subr.bf16.mxu0 0
        %1285 = vmatpush1.bf16.msra.mxu0 0
        %1286 = vmatprep.subr.bf16.mxu0 0
        %1287 = vmatpush1.bf16.msra.mxu0 0
        %1288 = vmatprep.subr.bf16.mxu0 0
        %1289 = vmatpush1.bf16.msra.mxu0 0
        %1290 = vmatprep.subr.bf16.mxu0 0
        %1291 = vmatpush1.bf16.msra.mxu0 0
        %1292 = vmatprep.subr.bf16.mxu0 0
        %1293 = vmatpush1.bf16.msra.mxu0 0
        %1294 = vmatprep.subr.bf16.mxu0 0
        %1295 = vmatpush1.bf16.msra.mxu0 0
        %1296 = vmatprep.subr.bf16.mxu0 0
        %1297 = vmatpush1.bf16.msra.mxu0 0
        %1298 = vmatprep.subr.bf16.mxu0 0
        %1299 = vmatpush1.bf16.msra.mxu0 0
        %1300 = vmatprep.subr.bf16.mxu0 0
        %1301 = vmatpush1.bf16.msra.mxu0 0
        %1302 = vmatprep.subr.bf16.mxu0 0
        %1303 = vmatpush1.bf16.msra.mxu0 0
        %1304 = vmatprep.subr.bf16.mxu0 0
        %1305 = vmatpush1.bf16.msra.mxu0 0
        %1306 = vmatprep.subr.bf16.mxu0 0
        %1307 = vmatpush1.bf16.msra.mxu0 0
        %1308 = vmatprep.subr.bf16.mxu0 0
        %1309 = vmatpush1.bf16.msra.mxu0 0
        %1310 = vmatprep.subr.bf16.mxu0 0
        %1311 = vmatpush1.bf16.msra.mxu0 0
        %1312 = vmatprep.subr.bf16.mxu0 0
        %1313 = vmatpush1.bf16.msra.mxu0 0
        %1314 = vmatprep.mubr.bf16.mxu0 0
        %1315 = vmatmul.mubr.bf16.gmra.mrb[0].mxu0 %v988
        %v1316 = vpop.f32.mrb[0].mxu0
        %v1317 = vadd.f32 %v974, %v1316
        %v1318 = vpop.f32.mrb[0].mxu0
        %v1319 = vpop.f32.mrb[0].mxu0
        %v1320 = vadd.f32 %v979, %v1319
        %v1321 = vpop.f32.mrb[0].mxu0
        %1322 = vdwg.mxu0
        %v1323 = vpack.c.bf16 %v1320, %v1317
        %1324 = vst [vmem:[#allocation3 + $0x40] sm:$0xff] %v1323
        %v1325 = vld [vmem:[#allocation2 + $0xc] sm:$0xff]
        %v1326 = vpack.c.bf16 %v1325, %v1325
        %v1328 = vsel %vm990, %v1326, 0
        %1330 = vmatprep.subr.bf16.mxu0 0
        %1331 = vmatpush1.bf16.msra.mxu0 %v1328
        %1332 = vmatprep.subr.bf16.mxu0 0
        %1333 = vmatpush1.bf16.msra.mxu0 0
        %1334 = vmatprep.subr.bf16.mxu0 0
        %1335 = vmatpush1.bf16.msra.mxu0 0
        %1336 = vmatprep.subr.bf16.mxu0 0
        %1337 = vmatpush1.bf16.msra.mxu0 0
        %1338 = vmatprep.subr.bf16.mxu0 0
        %1339 = vmatpush1.bf16.msra.mxu0 0
        %1340 = vmatprep.subr.bf16.mxu0 0
        %1341 = vmatpush1.bf16.msra.mxu0 0
        %1342 = vmatprep.subr.bf16.mxu0 0
        %1343 = vmatpush1.bf16.msra.mxu0 0
        %1344 = vmatprep.subr.bf16.mxu0 0
        %1345 = vmatpush1.bf16.msra.mxu0 0
        %1346 = vmatprep.subr.bf16.mxu0 0
        %1347 = vmatpush1.bf16.msra.mxu0 0
        %1348 = vmatprep.subr.bf16.mxu0 0
        %1349 = vmatpush1.bf16.msra.mxu0 0
        %1350 = vmatprep.subr.bf16.mxu0 0
        %1351 = vmatpush1.bf16.msra.mxu0 0
        %1352 = vmatprep.subr.bf16.mxu0 0
        %1353 = vmatpush1.bf16.msra.mxu0 0
        %1354 = vmatprep.subr.bf16.mxu0 0
        %1355 = vmatpush1.bf16.msra.mxu0 0
        %1356 = vmatprep.subr.bf16.mxu0 0
        %1357 = vmatpush1.bf16.msra.mxu0 0
        %1358 = vmatprep.subr.bf16.mxu0 0
        %1359 = vmatpush1.bf16.msra.mxu0 0
        %1360 = vmatprep.subr.bf16.mxu0 0
        %1361 = vmatpush1.bf16.msra.mxu0 0
        %1362 = vmatprep.mubr.bf16.mxu0 0
        %1363 = vmatmul.mubr.bf16.gmra.mrb[0].mxu0 %v988
        %v1364 = vpop.f32.mrb[0].mxu0
        %v1365 = vadd.f32 %v974, %v1364
        %v1366 = vpop.f32.mrb[0].mxu0
        %v1367 = vpop.f32.mrb[0].mxu0
        %v1368 = vadd.f32 %v979, %v1367
        %v1369 = vpop.f32.mrb[0].mxu0
        %1370 = vdwg.mxu0
        %v1371 = vpack.c.bf16 %v1368, %v1365
        %1372 = vst [vmem:[#allocation3 + $0x48] sm:$0xff] %v1371
        %v1373 = vld [vmem:[#allocation2 + $0xd] sm:$0xff]
        %v1374 = vpack.c.bf16 %v1373, %v1373
        %v1376 = vsel %vm990, %v1374, 0
        %1378 = vmatprep.subr.bf16.mxu0 0
        %1379 = vmatpush1.bf16.msra.mxu0 %v1376
        %1380 = vmatprep.subr.bf16.mxu0 0
        %1381 = vmatpush1.bf16.msra.mxu0 0
        %1382 = vmatprep.subr.bf16.mxu0 0
        %1383 = vmatpush1.bf16.msra.mxu0 0
        %1384 = vmatprep.subr.bf16.mxu0 0
        %1385 = vmatpush1.bf16.msra.mxu0 0
        %1386 = vmatprep.subr.bf16.mxu0 0
        %1387 = vmatpush1.bf16.msra.mxu0 0
        %1388 = vmatprep.subr.bf16.mxu0 0
        %1389 = vmatpush1.bf16.msra.mxu0 0
        %1390 = vmatprep.subr.bf16.mxu0 0
        %1391 = vmatpush1.bf16.msra.mxu0 0
        %1392 = vmatprep.subr.bf16.mxu0 0
        %1393 = vmatpush1.bf16.msra.mxu0 0
        %1394 = vmatprep.subr.bf16.mxu0 0
        %1395 = vmatpush1.bf16.msra.mxu0 0
        %1396 = vmatprep.subr.bf16.mxu0 0
        %1397 = vmatpush1.bf16.msra.mxu0 0
        %1398 = vmatprep.subr.bf16.mxu0 0
        %1399 = vmatpush1.bf16.msra.mxu0 0
        %1400 = vmatprep.subr.bf16.mxu0 0
        %1401 = vmatpush1.bf16.msra.mxu0 0
        %1402 = vmatprep.subr.bf16.mxu0 0
        %1403 = vmatpush1.bf16.msra.mxu0 0
        %1404 = vmatprep.subr.bf16.mxu0 0
        %1405 = vmatpush1.bf16.msra.mxu0 0
        %1406 = vmatprep.subr.bf16.mxu0 0
        %1407 = vmatpush1.bf16.msra.mxu0 0
        %1408 = vmatprep.subr.bf16.mxu0 0
        %1409 = vmatpush1.bf16.msra.mxu0 0
        %1410 = vmatprep.mubr.bf16.mxu0 0
        %1411 = vmatmul.mubr.bf16.gmra.mrb[0].mxu0 %v988
        %v1412 = vpop.f32.mrb[0].mxu0
        %v1413 = vadd.f32 %v974, %v1412
        %v1414 = vpop.f32.mrb[0].mxu0
        %v1415 = vpop.f32.mrb[0].mxu0
        %v1416 = vadd.f32 %v979, %v1415
        %v1417 = vpop.f32.mrb[0].mxu0
        %1418 = vdwg.mxu0
        %v1419 = vpack.c.bf16 %v1416, %v1413
        %1420 = vst [vmem:[#allocation3 + $0x50] sm:$0xff] %v1419
        %v1421 = vld [vmem:[#allocation2 + $0xe] sm:$0xff]
        %v1422 = vpack.c.bf16 %v1421, %v1421
        %v1424 = vsel %vm990, %v1422, 0
        %1426 = vmatprep.subr.bf16.mxu0 0
        %1427 = vmatpush1.bf16.msra.mxu0 %v1424
        %1428 = vmatprep.subr.bf16.mxu0 0
        %1429 = vmatpush1.bf16.msra.mxu0 0
        %1430 = vmatprep.subr.bf16.mxu0 0
        %1431 = vmatpush1.bf16.msra.mxu0 0
        %1432 = vmatprep.subr.bf16.mxu0 0
        %1433 = vmatpush1.bf16.msra.mxu0 0
        %1434 = vmatprep.subr.bf16.mxu0 0
        %1435 = vmatpush1.bf16.msra.mxu0 0
        %1436 = vmatprep.subr.bf16.mxu0 0
        %1437 = vmatpush1.bf16.msra.mxu0 0
        %1438 = vmatprep.subr.bf16.mxu0 0
        %1439 = vmatpush1.bf16.msra.mxu0 0
        %1440 = vmatprep.subr.bf16.mxu0 0
        %1441 = vmatpush1.bf16.msra.mxu0 0
        %1442 = vmatprep.subr.bf16.mxu0 0
        %1443 = vmatpush1.bf16.msra.mxu0 0
        %1444 = vmatprep.subr.bf16.mxu0 0
        %1445 = vmatpush1.bf16.msra.mxu0 0
        %1446 = vmatprep.subr.bf16.mxu0 0
        %1447 = vmatpush1.bf16.msra.mxu0 0
        %1448 = vmatprep.subr.bf16.mxu0 0
        %1449 = vmatpush1.bf16.msra.mxu0 0
        %1450 = vmatprep.subr.bf16.mxu0 0
        %1451 = vmatpush1.bf16.msra.mxu0 0
        %1452 = vmatprep.subr.bf16.mxu0 0
        %1453 = vmatpush1.bf16.msra.mxu0 0
        %1454 = vmatprep.subr.bf16.mxu0 0
        %1455 = vmatpush1.bf16.msra.mxu0 0
        %1456 = vmatprep.subr.bf16.mxu0 0
        %1457 = vmatpush1.bf16.msra.mxu0 0
        %1458 = vmatprep.mubr.bf16.mxu0 0
        %1459 = vmatmul.mubr.bf16.gmra.mrb[0].mxu0 %v988
        %v1460 = vpop.f32.mrb[0].mxu0
        %v1461 = vadd.f32 %v974, %v1460
        %v1462 = vpop.f32.mrb[0].mxu0
        %v1463 = vpop.f32.mrb[0].mxu0
        %v1464 = vadd.f32 %v979, %v1463
        %v1465 = vpop.f32.mrb[0].mxu0
        %1466 = vdwg.mxu0
        %v1467 = vpack.c.bf16 %v1464, %v1461
        %1468 = vst [vmem:[#allocation3 + $0x58] sm:$0xff] %v1467
        %v1469 = vld [vmem:[#allocation2 + $0xf] sm:$0xff]
        %v1470 = vpack.c.bf16 %v1469, %v1469
        %v1472 = vsel %vm990, %v1470, 0
        %1474 = vmatprep.subr.bf16.mxu0 0
        %1475 = vmatpush1.bf16.msra.mxu0 %v1472
        %1476 = vmatprep.subr.bf16.mxu0 0
        %1477 = vmatpush1.bf16.msra.mxu0 0
        %1478 = vmatprep.subr.bf16.mxu0 0
        %1479 = vmatpush1.bf16.msra.mxu0 0
        %1480 = vmatprep.subr.bf16.mxu0 0
        %1481 = vmatpush1.bf16.msra.mxu0 0
        %1482 = vmatprep.subr.bf16.mxu0 0
        %1483 = vmatpush1.bf16.msra.mxu0 0
        %1484 = vmatprep.subr.bf16.mxu0 0
        %1485 = vmatpush1.bf16.msra.mxu0 0
        %1486 = vmatprep.subr.bf16.mxu0 0
        %1487 = vmatpush1.bf16.msra.mxu0 0
        %1488 = vmatprep.subr.bf16.mxu0 0
        %1489 = vmatpush1.bf16.msra.mxu0 0
        %1490 = vmatprep.subr.bf16.mxu0 0
        %1491 = vmatpush1.bf16.msra.mxu0 0
        %1492 = vmatprep.subr.bf16.mxu0 0
        %1493 = vmatpush1.bf16.msra.mxu0 0
        %1494 = vmatprep.subr.bf16.mxu0 0
        %1495 = vmatpush1.bf16.msra.mxu0 0
        %1496 = vmatprep.subr.bf16.mxu0 0
        %1497 = vmatpush1.bf16.msra.mxu0 0
        %1498 = vmatprep.subr.bf16.mxu0 0
        %1499 = vmatpush1.bf16.msra.mxu0 0
        %1500 = vmatprep.subr.bf16.mxu0 0
        %1501 = vmatpush1.bf16.msra.mxu0 0
        %1502 = vmatprep.subr.bf16.mxu0 0
        %1503 = vmatpush1.bf16.msra.mxu0 0
        %1504 = vmatprep.subr.bf16.mxu0 0
        %1505 = vmatpush1.bf16.msra.mxu0 0
        %1506 = vmatprep.mubr.bf16.mxu0 0
        %1507 = vmatmul.mubr.bf16.gmra.mrb[0].mxu0 %v988
        %v1508 = vpop.f32.mrb[0].mxu0
        %v1509 = vadd.f32 %v974, %v1508
        %v1510 = vpop.f32.mrb[0].mxu0
        %v1511 = vpop.f32.mrb[0].mxu0
        %v1512 = vadd.f32 %v979, %v1511
        %v1513 = vpop.f32.mrb[0].mxu0
        %1514 = vdwg.mxu0
        %v1515 = vpack.c.bf16 %v1512, %v1509
        %1516 = vst [vmem:[#allocation3 + $0x60] sm:$0xff] %v1515
        %v1517 = vld [vmem:[#allocation2 + $0x10] sm:$0xff]
        %v1518 = vpack.c.bf16 %v1517, %v1517
        %v1520 = vsel %vm990, %v1518, 0
        %1522 = vmatprep.subr.bf16.mxu0 0
        %1523 = vmatpush1.bf16.msra.mxu0 %v1520
        %1524 = vmatprep.subr.bf16.mxu0 0
        %1525 = vmatpush1.bf16.msra.mxu0 0
        %1526 = vmatprep.subr.bf16.mxu0 0
        %1527 = vmatpush1.bf16.msra.mxu0 0
        %1528 = vmatprep.subr.bf16.mxu0 0
        %1529 = vmatpush1.bf16.msra.mxu0 0
        %1530 = vmatprep.subr.bf16.mxu0 0
        %1531 = vmatpush1.bf16.msra.mxu0 0
        %1532 = vmatprep.subr.bf16.mxu0 0
        %1533 = vmatpush1.bf16.msra.mxu0 0
        %1534 = vmatprep.subr.bf16.mxu0 0
        %1535 = vmatpush1.bf16.msra.mxu0 0
        %1536 = vmatprep.subr.bf16.mxu0 0
        %1537 = vmatpush1.bf16.msra.mxu0 0
        %1538 = vmatprep.subr.bf16.mxu0 0
        %1539 = vmatpush1.bf16.msra.mxu0 0
        %1540 = vmatprep.subr.bf16.mxu0 0
        %1541 = vmatpush1.bf16.msra.mxu0 0
        %1542 = vmatprep.subr.bf16.mxu0 0
        %1543 = vmatpush1.bf16.msra.mxu0 0
        %1544 = vmatprep.subr.bf16.mxu0 0
        %1545 = vmatpush1.bf16.msra.mxu0 0
        %1546 = vmatprep.subr.bf16.mxu0 0
        %1547 = vmatpush1.bf16.msra.mxu0 0
        %1548 = vmatprep.subr.bf16.mxu0 0
        %1549 = vmatpush1.bf16.msra.mxu0 0
        %1550 = vmatprep.subr.bf16.mxu0 0
        %1551 = vmatpush1.bf16.msra.mxu0 0
        %1552 = vmatprep.subr.bf16.mxu0 0
        %1553 = vmatpush1.bf16.msra.mxu0 0
        %1554 = vmatprep.mubr.bf16.mxu0 0
        %1555 = vmatmul.mubr.bf16.gmra.mrb[0].mxu0 %v988
        %v1556 = vpop.f32.mrb[0].mxu0
        %v1557 = vadd.f32 %v974, %v1556
        %v1558 = vpop.f32.mrb[0].mxu0
        %v1559 = vpop.f32.mrb[0].mxu0
        %v1560 = vadd.f32 %v979, %v1559
        %v1561 = vpop.f32.mrb[0].mxu0
        %1562 = vdwg.mxu0
        %v1563 = vpack.c.bf16 %v1560, %v1557
        %1564 = vst [vmem:[#allocation3 + $0x68] sm:$0xff] %v1563
        %v1565 = vld [vmem:[#allocation2 + $0x11] sm:$0xff]
        %v1566 = vpack.c.bf16 %v1565, %v1565
        %v1568 = vsel %vm990, %v1566, 0
        %1570 = vmatprep.subr.bf16.mxu0 0
        %1571 = vmatpush1.bf16.msra.mxu0 %v1568
        %1572 = vmatprep.subr.bf16.mxu0 0
        %1573 = vmatpush1.bf16.msra.mxu0 0
        %1574 = vmatprep.subr.bf16.mxu0 0
        %1575 = vmatpush1.bf16.msra.mxu0 0
        %1576 = vmatprep.subr.bf16.mxu0 0
        %1577 = vmatpush1.bf16.msra.mxu0 0
        %1578 = vmatprep.subr.bf16.mxu0 0
        %1579 = vmatpush1.bf16.msra.mxu0 0
        %1580 = vmatprep.subr.bf16.mxu0 0
        %1581 = vmatpush1.bf16.msra.mxu0 0
        %1582 = vmatprep.subr.bf16.mxu0 0
        %1583 = vmatpush1.bf16.msra.mxu0 0
        %1584 = vmatprep.subr.bf16.mxu0 0
        %1585 = vmatpush1.bf16.msra.mxu0 0
        %1586 = vmatprep.subr.bf16.mxu0 0
        %1587 = vmatpush1.bf16.msra.mxu0 0
        %1588 = vmatprep.subr.bf16.mxu0 0
        %1589 = vmatpush1.bf16.msra.mxu0 0
        %1590 = vmatprep.subr.bf16.mxu0 0
        %1591 = vmatpush1.bf16.msra.mxu0 0
        %1592 = vmatprep.subr.bf16.mxu0 0
        %1593 = vmatpush1.bf16.msra.mxu0 0
        %1594 = vmatprep.subr.bf16.mxu0 0
        %1595 = vmatpush1.bf16.msra.mxu0 0
        %1596 = vmatprep.subr.bf16.mxu0 0
        %1597 = vmatpush1.bf16.msra.mxu0 0
        %1598 = vmatprep.subr.bf16.mxu0 0
        %1599 = vmatpush1.bf16.msra.mxu0 0
        %1600 = vmatprep.subr.bf16.mxu0 0
        %1601 = vmatpush1.bf16.msra.mxu0 0
        %1602 = vmatprep.mubr.bf16.mxu0 0
        %1603 = vmatmul.mubr.bf16.gmra.mrb[0].mxu0 %v988
        %v1604 = vpop.f32.mrb[0].mxu0
        %v1605 = vadd.f32 %v974, %v1604
        %v1606 = vpop.f32.mrb[0].mxu0
        %v1607 = vpop.f32.mrb[0].mxu0
        %v1608 = vadd.f32 %v979, %v1607
        %v1609 = vpop.f32.mrb[0].mxu0
        %1610 = vdwg.mxu0
        %v1611 = vpack.c.bf16 %v1608, %v1605
        %1612 = vst [vmem:[#allocation3 + $0x70] sm:$0xff] %v1611
        %v1613 = vld [vmem:[#allocation2 + $0x12] sm:$0xff]
        %v1614 = vpack.c.bf16 %v1613, %v1613
        %v1616 = vsel %vm990, %v1614, 0
        %1618 = vmatprep.subr.bf16.mxu0 0
        %1619 = vmatpush1.bf16.msra.mxu0 %v1616
        %1620 = vmatprep.subr.bf16.mxu0 0
        %1621 = vmatpush1.bf16.msra.mxu0 0
        %1622 = vmatprep.subr.bf16.mxu0 0
        %1623 = vmatpush1.bf16.msra.mxu0 0
        %1624 = vmatprep.subr.bf16.mxu0 0
        %1625 = vmatpush1.bf16.msra.mxu0 0
        %1626 = vmatprep.subr.bf16.mxu0 0
        %1627 = vmatpush1.bf16.msra.mxu0 0
        %1628 = vmatprep.subr.bf16.mxu0 0
        %1629 = vmatpush1.bf16.msra.mxu0 0
        %1630 = vmatprep.subr.bf16.mxu0 0
        %1631 = vmatpush1.bf16.msra.mxu0 0
        %1632 = vmatprep.subr.bf16.mxu0 0
        %1633 = vmatpush1.bf16.msra.mxu0 0
        %1634 = vmatprep.subr.bf16.mxu0 0
        %1635 = vmatpush1.bf16.msra.mxu0 0
        %1636 = vmatprep.subr.bf16.mxu0 0
        %1637 = vmatpush1.bf16.msra.mxu0 0
        %1638 = vmatprep.subr.bf16.mxu0 0
        %1639 = vmatpush1.bf16.msra.mxu0 0
        %1640 = vmatprep.subr.bf16.mxu0 0
        %1641 = vmatpush1.bf16.msra.mxu0 0
        %1642 = vmatprep.subr.bf16.mxu0 0
        %1643 = vmatpush1.bf16.msra.mxu0 0
        %1644 = vmatprep.subr.bf16.mxu0 0
        %1645 = vmatpush1.bf16.msra.mxu0 0
        %1646 = vmatprep.subr.bf16.mxu0 0
        %1647 = vmatpush1.bf16.msra.mxu0 0
        %1648 = vmatprep.subr.bf16.mxu0 0
        %1649 = vmatpush1.bf16.msra.mxu0 0
        %1650 = vmatprep.mubr.bf16.mxu0 0
        %1651 = vmatmul.mubr.bf16.gmra.mrb[0].mxu0 %v988
        %v1652 = vpop.f32.mrb[0].mxu0
        %v1653 = vadd.f32 %v974, %v1652
        %v1654 = vpop.f32.mrb[0].mxu0
        %v1655 = vpop.f32.mrb[0].mxu0
        %v1656 = vadd.f32 %v979, %v1655
        %v1657 = vpop.f32.mrb[0].mxu0
        %1658 = vdwg.mxu0
        %v1659 = vpack.c.bf16 %v1656, %v1653
        %1660 = vst [vmem:[#allocation3 + $0x78] sm:$0xff] %v1659
        %v1661 = vld [vmem:[#allocation2 + $0x13] sm:$0xff]
        %v1662 = vpack.c.bf16 %v1661, %v1661
        %v1664 = vsel %vm990, %v1662, 0
        %1666 = vmatprep.subr.bf16.mxu0 0
        %1667 = vmatpush1.bf16.msra.mxu0 %v1664
        %1668 = vmatprep.subr.bf16.mxu0 0
        %1669 = vmatpush1.bf16.msra.mxu0 0
        %1670 = vmatprep.subr.bf16.mxu0 0
        %1671 = vmatpush1.bf16.msra.mxu0 0
        %1672 = vmatprep.subr.bf16.mxu0 0
        %1673 = vmatpush1.bf16.msra.mxu0 0
        %1674 = vmatprep.subr.bf16.mxu0 0
        %1675 = vmatpush1.bf16.msra.mxu0 0
        %1676 = vmatprep.subr.bf16.mxu0 0
        %1677 = vmatpush1.bf16.msra.mxu0 0
        %1678 = vmatprep.subr.bf16.mxu0 0
        %1679 = vmatpush1.bf16.msra.mxu0 0
        %1680 = vmatprep.subr.bf16.mxu0 0
        %1681 = vmatpush1.bf16.msra.mxu0 0
        %1682 = vmatprep.subr.bf16.mxu0 0
        %1683 = vmatpush1.bf16.msra.mxu0 0
        %1684 = vmatprep.subr.bf16.mxu0 0
        %1685 = vmatpush1.bf16.msra.mxu0 0
        %1686 = vmatprep.subr.bf16.mxu0 0
        %1687 = vmatpush1.bf16.msra.mxu0 0
        %1688 = vmatprep.subr.bf16.mxu0 0
        %1689 = vmatpush1.bf16.msra.mxu0 0
        %1690 = vmatprep.subr.bf16.mxu0 0
        %1691 = vmatpush1.bf16.msra.mxu0 0
        %1692 = vmatprep.subr.bf16.mxu0 0
        %1693 = vmatpush1.bf16.msra.mxu0 0
        %1694 = vmatprep.subr.bf16.mxu0 0
        %1695 = vmatpush1.bf16.msra.mxu0 0
        %1696 = vmatprep.subr.bf16.mxu0 0
        %1697 = vmatpush1.bf16.msra.mxu0 0
        %1698 = vmatprep.mubr.bf16.mxu0 0
        %1699 = vmatmul.mubr.bf16.gmra.mrb[0].mxu0 %v988
        %v1700 = vpop.f32.mrb[0].mxu0
        %v1701 = vadd.f32 %v974, %v1700
        %v1702 = vpop.f32.mrb[0].mxu0
        %v1703 = vpop.f32.mrb[0].mxu0
        %v1704 = vadd.f32 %v979, %v1703
        %v1705 = vpop.f32.mrb[0].mxu0
        %1706 = vdwg.mxu0
        %v1707 = vpack.c.bf16 %v1704, %v1701
        %1708 = vst [vmem:[#allocation3 + $0x80] sm:$0xff] %v1707
        %v1709 = vld [vmem:[#allocation2 + $0x14] sm:$0xff]
        %v1710 = vpack.c.bf16 %v1709, %v1709
        %v1712 = vsel %vm990, %v1710, 0
        %1714 = vmatprep.subr.bf16.mxu0 0
        %1715 = vmatpush1.bf16.msra.mxu0 %v1712
        %1716 = vmatprep.subr.bf16.mxu0 0
        %1717 = vmatpush1.bf16.msra.mxu0 0
        %1718 = vmatprep.subr.bf16.mxu0 0
        %1719 = vmatpush1.bf16.msra.mxu0 0
        %1720 = vmatprep.subr.bf16.mxu0 0
        %1721 = vmatpush1.bf16.msra.mxu0 0
        %1722 = vmatprep.subr.bf16.mxu0 0
        %1723 = vmatpush1.bf16.msra.mxu0 0
        %1724 = vmatprep.subr.bf16.mxu0 0
        %1725 = vmatpush1.bf16.msra.mxu0 0
        %1726 = vmatprep.subr.bf16.mxu0 0
        %1727 = vmatpush1.bf16.msra.mxu0 0
        %1728 = vmatprep.subr.bf16.mxu0 0
        %1729 = vmatpush1.bf16.msra.mxu0 0
        %1730 = vmatprep.subr.bf16.mxu0 0
        %1731 = vmatpush1.bf16.msra.mxu0 0
        %1732 = vmatprep.subr.bf16.mxu0 0
        %1733 = vmatpush1.bf16.msra.mxu0 0
        %1734 = vmatprep.subr.bf16.mxu0 0
        %1735 = vmatpush1.bf16.msra.mxu0 0
        %1736 = vmatprep.subr.bf16.mxu0 0
        %1737 = vmatpush1.bf16.msra.mxu0 0
        %1738 = vmatprep.subr.bf16.mxu0 0
        %1739 = vmatpush1.bf16.msra.mxu0 0
        %1740 = vmatprep.subr.bf16.mxu0 0
        %1741 = vmatpush1.bf16.msra.mxu0 0
        %1742 = vmatprep.subr.bf16.mxu0 0
        %1743 = vmatpush1.bf16.msra.mxu0 0
        %1744 = vmatprep.subr.bf16.mxu0 0
        %1745 = vmatpush1.bf16.msra.mxu0 0
        %1746 = vmatprep.mubr.bf16.mxu0 0
        %1747 = vmatmul.mubr.bf16.gmra.mrb[0].mxu0 %v988
        %v1748 = vpop.f32.mrb[0].mxu0
        %v1749 = vadd.f32 %v974, %v1748
        %v1750 = vpop.f32.mrb[0].mxu0
        %v1751 = vpop.f32.mrb[0].mxu0
        %v1752 = vadd.f32 %v979, %v1751
        %v1753 = vpop.f32.mrb[0].mxu0
        %1754 = vdwg.mxu0
        %v1755 = vpack.c.bf16 %v1752, %v1749
        %1756 = vst [vmem:[#allocation3 + $0x88] sm:$0xff] %v1755
        %v1757 = vld [vmem:[#allocation2 + $0x15] sm:$0xff]
        %v1758 = vpack.c.bf16 %v1757, %v1757
        %v1760 = vsel %vm990, %v1758, 0
        %1762 = vmatprep.subr.bf16.mxu0 0
        %1763 = vmatpush1.bf16.msra.mxu0 %v1760
        %1764 = vmatprep.subr.bf16.mxu0 0
        %1765 = vmatpush1.bf16.msra.mxu0 0
        %1766 = vmatprep.subr.bf16.mxu0 0
        %1767 = vmatpush1.bf16.msra.mxu0 0
        %1768 = vmatprep.subr.bf16.mxu0 0
        %1769 = vmatpush1.bf16.msra.mxu0 0
        %1770 = vmatprep.subr.bf16.mxu0 0
        %1771 = vmatpush1.bf16.msra.mxu0 0
        %1772 = vmatprep.subr.bf16.mxu0 0
        %1773 = vmatpush1.bf16.msra.mxu0 0
        %1774 = vmatprep.subr.bf16.mxu0 0
        %1775 = vmatpush1.bf16.msra.mxu0 0
        %1776 = vmatprep.subr.bf16.mxu0 0
        %1777 = vmatpush1.bf16.msra.mxu0 0
        %1778 = vmatprep.subr.bf16.mxu0 0
        %1779 = vmatpush1.bf16.msra.mxu0 0
        %1780 = vmatprep.subr.bf16.mxu0 0
        %1781 = vmatpush1.bf16.msra.mxu0 0
        %1782 = vmatprep.subr.bf16.mxu0 0
        %1783 = vmatpush1.bf16.msra.mxu0 0
        %1784 = vmatprep.subr.bf16.mxu0 0
        %1785 = vmatpush1.bf16.msra.mxu0 0
        %1786 = vmatprep.subr.bf16.mxu0 0
        %1787 = vmatpush1.bf16.msra.mxu0 0
        %1788 = vmatprep.subr.bf16.mxu0 0
        %1789 = vmatpush1.bf16.msra.mxu0 0
        %1790 = vmatprep.subr.bf16.mxu0 0
        %1791 = vmatpush1.bf16.msra.mxu0 0
        %1792 = vmatprep.subr.bf16.mxu0 0
        %1793 = vmatpush1.bf16.msra.mxu0 0
        %1794 = vmatprep.mubr.bf16.mxu0 0
        %1795 = vmatmul.mubr.bf16.gmra.mrb[0].mxu0 %v988
        %v1796 = vpop.f32.mrb[0].mxu0
        %v1797 = vadd.f32 %v974, %v1796
        %v1798 = vpop.f32.mrb[0].mxu0
        %v1799 = vpop.f32.mrb[0].mxu0
        %v1800 = vadd.f32 %v979, %v1799
        %v1801 = vpop.f32.mrb[0].mxu0
        %1802 = vdwg.mxu0
        %v1803 = vpack.c.bf16 %v1800, %v1797
        %1804 = vst [vmem:[#allocation3 + $0x90] sm:$0xff] %v1803
        %v1805 = vld [vmem:[#allocation2 + $0x16] sm:$0xff]
        %v1806 = vpack.c.bf16 %v1805, %v1805
        %v1808 = vsel %vm990, %v1806, 0
        %1810 = vmatprep.subr.bf16.mxu0 0
        %1811 = vmatpush1.bf16.msra.mxu0 %v1808
        %1812 = vmatprep.subr.bf16.mxu0 0
        %1813 = vmatpush1.bf16.msra.mxu0 0
        %1814 = vmatprep.subr.bf16.mxu0 0
        %1815 = vmatpush1.bf16.msra.mxu0 0
        %1816 = vmatprep.subr.bf16.mxu0 0
        %1817 = vmatpush1.bf16.msra.mxu0 0
        %1818 = vmatprep.subr.bf16.mxu0 0
        %1819 = vmatpush1.bf16.msra.mxu0 0
        %1820 = vmatprep.subr.bf16.mxu0 0
        %1821 = vmatpush1.bf16.msra.mxu0 0
        %1822 = vmatprep.subr.bf16.mxu0 0
        %1823 = vmatpush1.bf16.msra.mxu0 0
        %1824 = vmatprep.subr.bf16.mxu0 0
        %1825 = vmatpush1.bf16.msra.mxu0 0
        %1826 = vmatprep.subr.bf16.mxu0 0
        %1827 = vmatpush1.bf16.msra.mxu0 0
        %1828 = vmatprep.subr.bf16.mxu0 0
        %1829 = vmatpush1.bf16.msra.mxu0 0
        %1830 = vmatprep.subr.bf16.mxu0 0
        %1831 = vmatpush1.bf16.msra.mxu0 0
        %1832 = vmatprep.subr.bf16.mxu0 0
        %1833 = vmatpush1.bf16.msra.mxu0 0
        %1834 = vmatprep.subr.bf16.mxu0 0
        %1835 = vmatpush1.bf16.msra.mxu0 0
        %1836 = vmatprep.subr.bf16.mxu0 0
        %1837 = vmatpush1.bf16.msra.mxu0 0
        %1838 = vmatprep.subr.bf16.mxu0 0
        %1839 = vmatpush1.bf16.msra.mxu0 0
        %1840 = vmatprep.subr.bf16.mxu0 0
        %1841 = vmatpush1.bf16.msra.mxu0 0
        %1842 = vmatprep.mubr.bf16.mxu0 0
        %1843 = vmatmul.mubr.bf16.gmra.mrb[0].mxu0 %v988
        %v1844 = vpop.f32.mrb[0].mxu0
        %v1845 = vadd.f32 %v974, %v1844
        %v1846 = vpop.f32.mrb[0].mxu0
        %v1847 = vpop.f32.mrb[0].mxu0
        %v1848 = vadd.f32 %v979, %v1847
        %v1849 = vpop.f32.mrb[0].mxu0
        %1850 = vdwg.mxu0
        %v1851 = vpack.c.bf16 %v1848, %v1845
        %1852 = vst [vmem:[#allocation3 + $0x98] sm:$0xff] %v1851
        %v1853 = vld [vmem:[#allocation2 + $0x17] sm:$0xff]
        %v1854 = vpack.c.bf16 %v1853, %v1853
        %v1856 = vsel %vm990, %v1854, 0
        %1858 = vmatprep.subr.bf16.mxu0 0
        %1859 = vmatpush1.bf16.msra.mxu0 %v1856
        %1860 = vmatprep.subr.bf16.mxu0 0
        %1861 = vmatpush1.bf16.msra.mxu0 0
        %1862 = vmatprep.subr.bf16.mxu0 0
        %1863 = vmatpush1.bf16.msra.mxu0 0
        %1864 = vmatprep.subr.bf16.mxu0 0
        %1865 = vmatpush1.bf16.msra.mxu0 0
        %1866 = vmatprep.subr.bf16.mxu0 0
        %1867 = vmatpush1.bf16.msra.mxu0 0
        %1868 = vmatprep.subr.bf16.mxu0 0
        %1869 = vmatpush1.bf16.msra.mxu0 0
        %1870 = vmatprep.subr.bf16.mxu0 0
        %1871 = vmatpush1.bf16.msra.mxu0 0
        %1872 = vmatprep.subr.bf16.mxu0 0
        %1873 = vmatpush1.bf16.msra.mxu0 0
        %1874 = vmatprep.subr.bf16.mxu0 0
        %1875 = vmatpush1.bf16.msra.mxu0 0
        %1876 = vmatprep.subr.bf16.mxu0 0
        %1877 = vmatpush1.bf16.msra.mxu0 0
        %1878 = vmatprep.subr.bf16.mxu0 0
        %1879 = vmatpush1.bf16.msra.mxu0 0
        %1880 = vmatprep.subr.bf16.mxu0 0
        %1881 = vmatpush1.bf16.msra.mxu0 0
        %1882 = vmatprep.subr.bf16.mxu0 0
        %1883 = vmatpush1.bf16.msra.mxu0 0
        %1884 = vmatprep.subr.bf16.mxu0 0
        %1885 = vmatpush1.bf16.msra.mxu0 0
        %1886 = vmatprep.subr.bf16.mxu0 0
        %1887 = vmatpush1.bf16.msra.mxu0 0
        %1888 = vmatprep.subr.bf16.mxu0 0
        %1889 = vmatpush1.bf16.msra.mxu0 0
        %1890 = vmatprep.mubr.bf16.mxu0 0
        %1891 = vmatmul.mubr.bf16.gmra.mrb[0].mxu0 %v988
        %v1892 = vpop.f32.mrb[0].mxu0
        %v1893 = vadd.f32 %v974, %v1892
        %v1894 = vpop.f32.mrb[0].mxu0
        %v1895 = vpop.f32.mrb[0].mxu0
        %v1896 = vadd.f32 %v979, %v1895
        %v1897 = vpop.f32.mrb[0].mxu0
        %1898 = vdwg.mxu0
        %v1899 = vpack.c.bf16 %v1896, %v1893
        %1900 = vst [vmem:[#allocation3 + $0xa0] sm:$0xff] %v1899
        %v1901 = vld [vmem:[#allocation2 + $0x18] sm:$0xff]
        %v1902 = vpack.c.bf16 %v1901, %v1901
        %v1904 = vsel %vm990, %v1902, 0
        %1906 = vmatprep.subr.bf16.mxu0 0
        %1907 = vmatpush1.bf16.msra.mxu0 %v1904
        %1908 = vmatprep.subr.bf16.mxu0 0
        %1909 = vmatpush1.bf16.msra.mxu0 0
        %1910 = vmatprep.subr.bf16.mxu0 0
        %1911 = vmatpush1.bf16.msra.mxu0 0
        %1912 = vmatprep.subr.bf16.mxu0 0
        %1913 = vmatpush1.bf16.msra.mxu0 0
        %1914 = vmatprep.subr.bf16.mxu0 0
        %1915 = vmatpush1.bf16.msra.mxu0 0
        %1916 = vmatprep.subr.bf16.mxu0 0
        %1917 = vmatpush1.bf16.msra.mxu0 0
        %1918 = vmatprep.subr.bf16.mxu0 0
        %1919 = vmatpush1.bf16.msra.mxu0 0
        %1920 = vmatprep.subr.bf16.mxu0 0
        %1921 = vmatpush1.bf16.msra.mxu0 0
        %1922 = vmatprep.subr.bf16.mxu0 0
        %1923 = vmatpush1.bf16.msra.mxu0 0
        %1924 = vmatprep.subr.bf16.mxu0 0
        %1925 = vmatpush1.bf16.msra.mxu0 0
        %1926 = vmatprep.subr.bf16.mxu0 0
        %1927 = vmatpush1.bf16.msra.mxu0 0
        %1928 = vmatprep.subr.bf16.mxu0 0
        %1929 = vmatpush1.bf16.msra.mxu0 0
        %1930 = vmatprep.subr.bf16.mxu0 0
        %1931 = vmatpush1.bf16.msra.mxu0 0
        %1932 = vmatprep.subr.bf16.mxu0 0
        %1933 = vmatpush1.bf16.msra.mxu0 0
        %1934 = vmatprep.subr.bf16.mxu0 0
        %1935 = vmatpush1.bf16.msra.mxu0 0
        %1936 = vmatprep.subr.bf16.mxu0 0
        %1937 = vmatpush1.bf16.msra.mxu0 0
        %1938 = vmatprep.mubr.bf16.mxu0 0
        %1939 = vmatmul.mubr.bf16.gmra.mrb[0].mxu0 %v988
        %v1940 = vpop.f32.mrb[0].mxu0
        %v1941 = vadd.f32 %v974, %v1940
        %v1942 = vpop.f32.mrb[0].mxu0
        %v1943 = vpop.f32.mrb[0].mxu0
        %v1944 = vadd.f32 %v979, %v1943
        %v1945 = vpop.f32.mrb[0].mxu0
        %1946 = vdwg.mxu0
        %v1947 = vpack.c.bf16 %v1944, %v1941
        %1948 = vst [vmem:[#allocation3 + $0xa8] sm:$0xff] %v1947
        %v1949 = vld [vmem:[#allocation2 + $0x19] sm:$0xff]
        %v1950 = vpack.c.bf16 %v1949, %v1949
        %v1952 = vsel %vm990, %v1950, 0
        %1954 = vmatprep.subr.bf16.mxu0 0
        %1955 = vmatpush1.bf16.msra.mxu0 %v1952
        %1956 = vmatprep.subr.bf16.mxu0 0
        %1957 = vmatpush1.bf16.msra.mxu0 0
        %1958 = vmatprep.subr.bf16.mxu0 0
        %1959 = vmatpush1.bf16.msra.mxu0 0
        %1960 = vmatprep.subr.bf16.mxu0 0
        %1961 = vmatpush1.bf16.msra.mxu0 0
        %1962 = vmatprep.subr.bf16.mxu0 0
        %1963 = vmatpush1.bf16.msra.mxu0 0
        %1964 = vmatprep.subr.bf16.mxu0 0
        %1965 = vmatpush1.bf16.msra.mxu0 0
        %1966 = vmatprep.subr.bf16.mxu0 0
        %1967 = vmatpush1.bf16.msra.mxu0 0
        %1968 = vmatprep.subr.bf16.mxu0 0
        %1969 = vmatpush1.bf16.msra.mxu0 0
        %1970 = vmatprep.subr.bf16.mxu0 0
        %1971 = vmatpush1.bf16.msra.mxu0 0
        %1972 = vmatprep.subr.bf16.mxu0 0
        %1973 = vmatpush1.bf16.msra.mxu0 0
        %1974 = vmatprep.subr.bf16.mxu0 0
        %1975 = vmatpush1.bf16.msra.mxu0 0
        %1976 = vmatprep.subr.bf16.mxu0 0
        %1977 = vmatpush1.bf16.msra.mxu0 0
        %1978 = vmatprep.subr.bf16.mxu0 0
        %1979 = vmatpush1.bf16.msra.mxu0 0
        %1980 = vmatprep.subr.bf16.mxu0 0
        %1981 = vmatpush1.bf16.msra.mxu0 0
        %1982 = vmatprep.subr.bf16.mxu0 0
        %1983 = vmatpush1.bf16.msra.mxu0 0
        %1984 = vmatprep.subr.bf16.mxu0 0
        %1985 = vmatpush1.bf16.msra.mxu0 0
        %1986 = vmatprep.mubr.bf16.mxu0 0
        %1987 = vmatmul.mubr.bf16.gmra.mrb[0].mxu0 %v988
        %v1988 = vpop.f32.mrb[0].mxu0
        %v1989 = vadd.f32 %v974, %v1988
        %v1990 = vpop.f32.mrb[0].mxu0
        %v1991 = vpop.f32.mrb[0].mxu0
        %v1992 = vadd.f32 %v979, %v1991
        %v1993 = vpop.f32.mrb[0].mxu0
        %1994 = vdwg.mxu0
        %v1995 = vpack.c.bf16 %v1992, %v1989
        %1996 = vst [vmem:[#allocation3 + $0xb0] sm:$0xff] %v1995
        %v1997 = vld [vmem:[#allocation2 + $0x1a] sm:$0xff]
        %v1998 = vpack.c.bf16 %v1997, %v1997
        %v2000 = vsel %vm990, %v1998, 0
        %2002 = vmatprep.subr.bf16.mxu0 0
        %2003 = vmatpush1.bf16.msra.mxu0 %v2000
        %2004 = vmatprep.subr.bf16.mxu0 0
        %2005 = vmatpush1.bf16.msra.mxu0 0
        %2006 = vmatprep.subr.bf16.mxu0 0
        %2007 = vmatpush1.bf16.msra.mxu0 0
        %2008 = vmatprep.subr.bf16.mxu0 0
        %2009 = vmatpush1.bf16.msra.mxu0 0
        %2010 = vmatprep.subr.bf16.mxu0 0
        %2011 = vmatpush1.bf16.msra.mxu0 0
        %2012 = vmatprep.subr.bf16.mxu0 0
        %2013 = vmatpush1.bf16.msra.mxu0 0
        %2014 = vmatprep.subr.bf16.mxu0 0
        %2015 = vmatpush1.bf16.msra.mxu0 0
        %2016 = vmatprep.subr.bf16.mxu0 0
        %2017 = vmatpush1.bf16.msra.mxu0 0
        %2018 = vmatprep.subr.bf16.mxu0 0
        %2019 = vmatpush1.bf16.msra.mxu0 0
        %2020 = vmatprep.subr.bf16.mxu0 0
        %2021 = vmatpush1.bf16.msra.mxu0 0
        %2022 = vmatprep.subr.bf16.mxu0 0
        %2023 = vmatpush1.bf16.msra.mxu0 0
        %2024 = vmatprep.subr.bf16.mxu0 0
        %2025 = vmatpush1.bf16.msra.mxu0 0
        %2026 = vmatprep.subr.bf16.mxu0 0
        %2027 = vmatpush1.bf16.msra.mxu0 0
        %2028 = vmatprep.subr.bf16.mxu0 0
        %2029 = vmatpush1.bf16.msra.mxu0 0
        %2030 = vmatprep.subr.bf16.mxu0 0
        %2031 = vmatpush1.bf16.msra.mxu0 0
        %2032 = vmatprep.subr.bf16.mxu0 0
        %2033 = vmatpush1.bf16.msra.mxu0 0
        %2034 = vmatprep.mubr.bf16.mxu0 0
        %2035 = vmatmul.mubr.bf16.gmra.mrb[0].mxu0 %v988
        %v2036 = vpop.f32.mrb[0].mxu0
        %v2037 = vadd.f32 %v974, %v2036
        %v2038 = vpop.f32.mrb[0].mxu0
        %v2039 = vpop.f32.mrb[0].mxu0
        %v2040 = vadd.f32 %v979, %v2039
        %v2041 = vpop.f32.mrb[0].mxu0
        %2042 = vdwg.mxu0
        %v2043 = vpack.c.bf16 %v2040, %v2037
        %2044 = vst [vmem:[#allocation3 + $0xb8] sm:$0xff] %v2043
        %v2045 = vld [vmem:[#allocation2 + $0x1b] sm:$0xff]
        %v2046 = vpack.c.bf16 %v2045, %v2045
        %v2048 = vsel %vm990, %v2046, 0
        %2050 = vmatprep.subr.bf16.mxu0 0
        %2051 = vmatpush1.bf16.msra.mxu0 %v2048
        %2052 = vmatprep.subr.bf16.mxu0 0
        %2053 = vmatpush1.bf16.msra.mxu0 0
        %2054 = vmatprep.subr.bf16.mxu0 0
        %2055 = vmatpush1.bf16.msra.mxu0 0
        %2056 = vmatprep.subr.bf16.mxu0 0
        %2057 = vmatpush1.bf16.msra.mxu0 0
        %2058 = vmatprep.subr.bf16.mxu0 0
        %2059 = vmatpush1.bf16.msra.mxu0 0
        %2060 = vmatprep.subr.bf16.mxu0 0
        %2061 = vmatpush1.bf16.msra.mxu0 0
        %2062 = vmatprep.subr.bf16.mxu0 0
        %2063 = vmatpush1.bf16.msra.mxu0 0
        %2064 = vmatprep.subr.bf16.mxu0 0
        %2065 = vmatpush1.bf16.msra.mxu0 0
        %2066 = vmatprep.subr.bf16.mxu0 0
        %2067 = vmatpush1.bf16.msra.mxu0 0
        %2068 = vmatprep.subr.bf16.mxu0 0
        %2069 = vmatpush1.bf16.msra.mxu0 0
        %2070 = vmatprep.subr.bf16.mxu0 0
        %2071 = vmatpush1.bf16.msra.mxu0 0
        %2072 = vmatprep.subr.bf16.mxu0 0
        %2073 = vmatpush1.bf16.msra.mxu0 0
        %2074 = vmatprep.subr.bf16.mxu0 0
        %2075 = vmatpush1.bf16.msra.mxu0 0
        %2076 = vmatprep.subr.bf16.mxu0 0
        %2077 = vmatpush1.bf16.msra.mxu0 0
        %2078 = vmatprep.subr.bf16.mxu0 0
        %2079 = vmatpush1.bf16.msra.mxu0 0
        %2080 = vmatprep.subr.bf16.mxu0 0
        %2081 = vmatpush1.bf16.msra.mxu0 0
        %2082 = vmatprep.mubr.bf16.mxu0 0
        %2083 = vmatmul.mubr.bf16.gmra.mrb[0].mxu0 %v988
        %v2084 = vpop.f32.mrb[0].mxu0
        %v2085 = vadd.f32 %v974, %v2084
        %v2086 = vpop.f32.mrb[0].mxu0
        %v2087 = vpop.f32.mrb[0].mxu0
        %v2088 = vadd.f32 %v979, %v2087
        %v2089 = vpop.f32.mrb[0].mxu0
        %2090 = vdwg.mxu0
        %v2091 = vpack.c.bf16 %v2088, %v2085
        %2092 = vst [vmem:[#allocation3 + $0xc0] sm:$0xff] %v2091
        %v2093 = vld [vmem:[#allocation2 + $0x1c] sm:$0xff]
        %v2094 = vpack.c.bf16 %v2093, %v2093
        %v2096 = vsel %vm990, %v2094, 0
        %2098 = vmatprep.subr.bf16.mxu0 0
        %2099 = vmatpush1.bf16.msra.mxu0 %v2096
        %2100 = vmatprep.subr.bf16.mxu0 0
        %2101 = vmatpush1.bf16.msra.mxu0 0
        %2102 = vmatprep.subr.bf16.mxu0 0
        %2103 = vmatpush1.bf16.msra.mxu0 0
        %2104 = vmatprep.subr.bf16.mxu0 0
        %2105 = vmatpush1.bf16.msra.mxu0 0
        %2106 = vmatprep.subr.bf16.mxu0 0
        %2107 = vmatpush1.bf16.msra.mxu0 0
        %2108 = vmatprep.subr.bf16.mxu0 0
        %2109 = vmatpush1.bf16.msra.mxu0 0
        %2110 = vmatprep.subr.bf16.mxu0 0
        %2111 = vmatpush1.bf16.msra.mxu0 0
        %2112 = vmatprep.subr.bf16.mxu0 0
        %2113 = vmatpush1.bf16.msra.mxu0 0
        %2114 = vmatprep.subr.bf16.mxu0 0
        %2115 = vmatpush1.bf16.msra.mxu0 0
        %2116 = vmatprep.subr.bf16.mxu0 0
        %2117 = vmatpush1.bf16.msra.mxu0 0
        %2118 = vmatprep.subr.bf16.mxu0 0
        %2119 = vmatpush1.bf16.msra.mxu0 0
        %2120 = vmatprep.subr.bf16.mxu0 0
        %2121 = vmatpush1.bf16.msra.mxu0 0
        %2122 = vmatprep.subr.bf16.mxu0 0
        %2123 = vmatpush1.bf16.msra.mxu0 0
        %2124 = vmatprep.subr.bf16.mxu0 0
        %2125 = vmatpush1.bf16.msra.mxu0 0
        %2126 = vmatprep.subr.bf16.mxu0 0
        %2127 = vmatpush1.bf16.msra.mxu0 0
        %2128 = vmatprep.subr.bf16.mxu0 0
        %2129 = vmatpush1.bf16.msra.mxu0 0
        %2130 = vmatprep.mubr.bf16.mxu0 0
        %2131 = vmatmul.mubr.bf16.gmra.mrb[0].mxu0 %v988
        %v2132 = vpop.f32.mrb[0].mxu0
        %v2133 = vadd.f32 %v974, %v2132
        %v2134 = vpop.f32.mrb[0].mxu0
        %v2135 = vpop.f32.mrb[0].mxu0
        %v2136 = vadd.f32 %v979, %v2135
        %v2137 = vpop.f32.mrb[0].mxu0
        %2138 = vdwg.mxu0
        %v2139 = vpack.c.bf16 %v2136, %v2133
        %2140 = vst [vmem:[#allocation3 + $0xc8] sm:$0xff] %v2139
        %v2141 = vld [vmem:[#allocation2 + $0x1d] sm:$0xff]
        %v2142 = vpack.c.bf16 %v2141, %v2141
        %v2144 = vsel %vm990, %v2142, 0
        %2146 = vmatprep.subr.bf16.mxu0 0
        %2147 = vmatpush1.bf16.msra.mxu0 %v2144
        %2148 = vmatprep.subr.bf16.mxu0 0
        %2149 = vmatpush1.bf16.msra.mxu0 0
        %2150 = vmatprep.subr.bf16.mxu0 0
        %2151 = vmatpush1.bf16.msra.mxu0 0
        %2152 = vmatprep.subr.bf16.mxu0 0
        %2153 = vmatpush1.bf16.msra.mxu0 0
        %2154 = vmatprep.subr.bf16.mxu0 0
        %2155 = vmatpush1.bf16.msra.mxu0 0
        %2156 = vmatprep.subr.bf16.mxu0 0
        %2157 = vmatpush1.bf16.msra.mxu0 0
        %2158 = vmatprep.subr.bf16.mxu0 0
        %2159 = vmatpush1.bf16.msra.mxu0 0
        %2160 = vmatprep.subr.bf16.mxu0 0
        %2161 = vmatpush1.bf16.msra.mxu0 0
        %2162 = vmatprep.subr.bf16.mxu0 0
        %2163 = vmatpush1.bf16.msra.mxu0 0
        %2164 = vmatprep.subr.bf16.mxu0 0
        %2165 = vmatpush1.bf16.msra.mxu0 0
        %2166 = vmatprep.subr.bf16.mxu0 0
        %2167 = vmatpush1.bf16.msra.mxu0 0
        %2168 = vmatprep.subr.bf16.mxu0 0
        %2169 = vmatpush1.bf16.msra.mxu0 0
        %2170 = vmatprep.subr.bf16.mxu0 0
        %2171 = vmatpush1.bf16.msra.mxu0 0
        %2172 = vmatprep.subr.bf16.mxu0 0
        %2173 = vmatpush1.bf16.msra.mxu0 0
        %2174 = vmatprep.subr.bf16.mxu0 0
        %2175 = vmatpush1.bf16.msra.mxu0 0
        %2176 = vmatprep.subr.bf16.mxu0 0
        %2177 = vmatpush1.bf16.msra.mxu0 0
        %2178 = vmatprep.mubr.bf16.mxu0 0
        %2179 = vmatmul.mubr.bf16.gmra.mrb[0].mxu0 %v988
        %v2180 = vpop.f32.mrb[0].mxu0
        %v2181 = vadd.f32 %v974, %v2180
        %v2182 = vpop.f32.mrb[0].mxu0
        %v2183 = vpop.f32.mrb[0].mxu0
        %v2184 = vadd.f32 %v979, %v2183
        %v2185 = vpop.f32.mrb[0].mxu0
        %2186 = vdwg.mxu0
        %v2187 = vpack.c.bf16 %v2184, %v2181
        %2188 = vst [vmem:[#allocation3 + $0xd0] sm:$0xff] %v2187
        %v2189 = vld [vmem:[#allocation2 + $0x1e] sm:$0xff]
        %v2190 = vpack.c.bf16 %v2189, %v2189
        %v2192 = vsel %vm990, %v2190, 0
        %2194 = vmatprep.subr.bf16.mxu0 0
        %2195 = vmatpush1.bf16.msra.mxu0 %v2192
        %2196 = vmatprep.subr.bf16.mxu0 0
        %2197 = vmatpush1.bf16.msra.mxu0 0
        %2198 = vmatprep.subr.bf16.mxu0 0
        %2199 = vmatpush1.bf16.msra.mxu0 0
        %2200 = vmatprep.subr.bf16.mxu0 0
        %2201 = vmatpush1.bf16.msra.mxu0 0
        %2202 = vmatprep.subr.bf16.mxu0 0
        %2203 = vmatpush1.bf16.msra.mxu0 0
        %2204 = vmatprep.subr.bf16.mxu0 0
        %2205 = vmatpush1.bf16.msra.mxu0 0
        %2206 = vmatprep.subr.bf16.mxu0 0
        %2207 = vmatpush1.bf16.msra.mxu0 0
        %2208 = vmatprep.subr.bf16.mxu0 0
        %2209 = vmatpush1.bf16.msra.mxu0 0
        %2210 = vmatprep.subr.bf16.mxu0 0
        %2211 = vmatpush1.bf16.msra.mxu0 0
        %2212 = vmatprep.subr.bf16.mxu0 0
        %2213 = vmatpush1.bf16.msra.mxu0 0
        %2214 = vmatprep.subr.bf16.mxu0 0
        %2215 = vmatpush1.bf16.msra.mxu0 0
        %2216 = vmatprep.subr.bf16.mxu0 0
        %2217 = vmatpush1.bf16.msra.mxu0 0
        %2218 = vmatprep.subr.bf16.mxu0 0
        %2219 = vmatpush1.bf16.msra.mxu0 0
        %2220 = vmatprep.subr.bf16.mxu0 0
        %2221 = vmatpush1.bf16.msra.mxu0 0
        %2222 = vmatprep.subr.bf16.mxu0 0
        %2223 = vmatpush1.bf16.msra.mxu0 0
        %2224 = vmatprep.subr.bf16.mxu0 0
        %2225 = vmatpush1.bf16.msra.mxu0 0
        %2226 = vmatprep.mubr.bf16.mxu0 0
        %2227 = vmatmul.mubr.bf16.gmra.mrb[0].mxu0 %v988
        %v2228 = vpop.f32.mrb[0].mxu0
        %v2229 = vadd.f32 %v974, %v2228
        %v2230 = vpop.f32.mrb[0].mxu0
        %v2231 = vpop.f32.mrb[0].mxu0
        %v2232 = vadd.f32 %v979, %v2231
        %v2233 = vpop.f32.mrb[0].mxu0
        %2234 = vdwg.mxu0
        %v2235 = vpack.c.bf16 %v2232, %v2229
        %2236 = vst [vmem:[#allocation3 + $0xd8] sm:$0xff] %v2235
        %v2237 = vld [vmem:[#allocation2 + $0x1f] sm:$0xff]
        %v2238 = vpack.c.bf16 %v2237, %v2237
        %v2240 = vsel %vm990, %v2238, 0
        %2242 = vmatprep.subr.bf16.mxu0 0
        %2243 = vmatpush1.bf16.msra.mxu0 %v2240
        %2244 = vmatprep.subr.bf16.mxu0 0
        %2245 = vmatpush1.bf16.msra.mxu0 0
        %2246 = vmatprep.subr.bf16.mxu0 0
        %2247 = vmatpush1.bf16.msra.mxu0 0
        %2248 = vmatprep.subr.bf16.mxu0 0
        %2249 = vmatpush1.bf16.msra.mxu0 0
        %2250 = vmatprep.subr.bf16.mxu0 0
        %2251 = vmatpush1.bf16.msra.mxu0 0
        %2252 = vmatprep.subr.bf16.mxu0 0
        %2253 = vmatpush1.bf16.msra.mxu0 0
        %2254 = vmatprep.subr.bf16.mxu0 0
        %2255 = vmatpush1.bf16.msra.mxu0 0
        %2256 = vmatprep.subr.bf16.mxu0 0
        %2257 = vmatpush1.bf16.msra.mxu0 0
        %2258 = vmatprep.subr.bf16.mxu0 0
        %2259 = vmatpush1.bf16.msra.mxu0 0
        %2260 = vmatprep.subr.bf16.mxu0 0
        %2261 = vmatpush1.bf16.msra.mxu0 0
        %2262 = vmatprep.subr.bf16.mxu0 0
        %2263 = vmatpush1.bf16.msra.mxu0 0
        %2264 = vmatprep.subr.bf16.mxu0 0
        %2265 = vmatpush1.bf16.msra.mxu0 0
        %2266 = vmatprep.subr.bf16.mxu0 0
        %2267 = vmatpush1.bf16.msra.mxu0 0
        %2268 = vmatprep.subr.bf16.mxu0 0
        %2269 = vmatpush1.bf16.msra.mxu0 0
        %2270 = vmatprep.subr.bf16.mxu0 0
        %2271 = vmatpush1.bf16.msra.mxu0 0
        %2272 = vmatprep.subr.bf16.mxu0 0
        %2273 = vmatpush1.bf16.msra.mxu0 0
        %2274 = vmatprep.mubr.bf16.mxu0 0
        %2275 = vmatmul.mubr.bf16.gmra.mrb[0].mxu0 %v988
        %v2276 = vpop.f32.mrb[0].mxu0
        %v2277 = vadd.f32 %v974, %v2276
        %v2278 = vpop.f32.mrb[0].mxu0
        %v2279 = vpop.f32.mrb[0].mxu0
        %v2280 = vadd.f32 %v979, %v2279
        %v2281 = vpop.f32.mrb[0].mxu0
        %2282 = vdwg.mxu0
        %v2283 = vpack.c.bf16 %v2280, %v2277
        %2284 = vst [vmem:[#allocation3 + $0xe0] sm:$0xff] %v2283
        %v2285 = vld [vmem:[#allocation2 + $0x20] sm:$0xff]
        %v2286 = vpack.c.bf16 %v2285, %v2285
        %v2288 = vsel %vm990, %v2286, 0
        %2290 = vmatprep.subr.bf16.mxu0 0
        %2291 = vmatpush1.bf16.msra.mxu0 %v2288
        %2292 = vmatprep.subr.bf16.mxu0 0
        %2293 = vmatpush1.bf16.msra.mxu0 0
        %2294 = vmatprep.subr.bf16.mxu0 0
        %2295 = vmatpush1.bf16.msra.mxu0 0
        %2296 = vmatprep.subr.bf16.mxu0 0
        %2297 = vmatpush1.bf16.msra.mxu0 0
        %2298 = vmatprep.subr.bf16.mxu0 0
        %2299 = vmatpush1.bf16.msra.mxu0 0
        %2300 = vmatprep.subr.bf16.mxu0 0
        %2301 = vmatpush1.bf16.msra.mxu0 0
        %2302 = vmatprep.subr.bf16.mxu0 0
        %2303 = vmatpush1.bf16.msra.mxu0 0
        %2304 = vmatprep.subr.bf16.mxu0 0
        %2305 = vmatpush1.bf16.msra.mxu0 0
        %2306 = vmatprep.subr.bf16.mxu0 0
        %2307 = vmatpush1.bf16.msra.mxu0 0
        %2308 = vmatprep.subr.bf16.mxu0 0
        %2309 = vmatpush1.bf16.msra.mxu0 0
        %2310 = vmatprep.subr.bf16.mxu0 0
        %2311 = vmatpush1.bf16.msra.mxu0 0
        %2312 = vmatprep.subr.bf16.mxu0 0
        %2313 = vmatpush1.bf16.msra.mxu0 0
        %2314 = vmatprep.subr.bf16.mxu0 0
        %2315 = vmatpush1.bf16.msra.mxu0 0
        %2316 = vmatprep.subr.bf16.mxu0 0
        %2317 = vmatpush1.bf16.msra.mxu0 0
        %2318 = vmatprep.subr.bf16.mxu0 0
        %2319 = vmatpush1.bf16.msra.mxu0 0
        %2320 = vmatprep.subr.bf16.mxu0 0
        %2321 = vmatpush1.bf16.msra.mxu0 0
        %2322 = vmatprep.mubr.bf16.mxu0 0
        %2323 = vmatmul.mubr.bf16.gmra.mrb[0].mxu0 %v988
        %v2324 = vpop.f32.mrb[0].mxu0
        %v2325 = vadd.f32 %v974, %v2324
        %v2326 = vpop.f32.mrb[0].mxu0
        %v2327 = vpop.f32.mrb[0].mxu0
        %v2328 = vadd.f32 %v979, %v2327
        %v2329 = vpop.f32.mrb[0].mxu0
        %2330 = vdwg.mxu0
        %v2331 = vpack.c.bf16 %v2328, %v2325
        %2332 = vst [vmem:[#allocation3 + $0xe8] sm:$0xff] %v2331
        %v2333 = vld [vmem:[#allocation2 + $0x21] sm:$0xff]
        %v2334 = vpack.c.bf16 %v2333, %v2333
        %v2336 = vsel %vm990, %v2334, 0
        %2338 = vmatprep.subr.bf16.mxu0 0
        %2339 = vmatpush1.bf16.msra.mxu0 %v2336
        %2340 = vmatprep.subr.bf16.mxu0 0
        %2341 = vmatpush1.bf16.msra.mxu0 0
        %2342 = vmatprep.subr.bf16.mxu0 0
        %2343 = vmatpush1.bf16.msra.mxu0 0
        %2344 = vmatprep.subr.bf16.mxu0 0
        %2345 = vmatpush1.bf16.msra.mxu0 0
        %2346 = vmatprep.subr.bf16.mxu0 0
        %2347 = vmatpush1.bf16.msra.mxu0 0
        %2348 = vmatprep.subr.bf16.mxu0 0
        %2349 = vmatpush1.bf16.msra.mxu0 0
        %2350 = vmatprep.subr.bf16.mxu0 0
        %2351 = vmatpush1.bf16.msra.mxu0 0
        %2352 = vmatprep.subr.bf16.mxu0 0
        %2353 = vmatpush1.bf16.msra.mxu0 0
        %2354 = vmatprep.subr.bf16.mxu0 0
        %2355 = vmatpush1.bf16.msra.mxu0 0
        %2356 = vmatprep.subr.bf16.mxu0 0
        %2357 = vmatpush1.bf16.msra.mxu0 0
        %2358 = vmatprep.subr.bf16.mxu0 0
        %2359 = vmatpush1.bf16.msra.mxu0 0
        %2360 = vmatprep.subr.bf16.mxu0 0
        %2361 = vmatpush1.bf16.msra.mxu0 0
        %2362 = vmatprep.subr.bf16.mxu0 0
        %2363 = vmatpush1.bf16.msra.mxu0 0
        %2364 = vmatprep.subr.bf16.mxu0 0
        %2365 = vmatpush1.bf16.msra.mxu0 0
        %2366 = vmatprep.subr.bf16.mxu0 0
        %2367 = vmatpush1.bf16.msra.mxu0 0
        %2368 = vmatprep.subr.bf16.mxu0 0
        %2369 = vmatpush1.bf16.msra.mxu0 0
        %2370 = vmatprep.mubr.bf16.mxu0 0
        %2371 = vmatmul.mubr.bf16.gmra.mrb[0].mxu0 %v988
        %v2372 = vpop.f32.mrb[0].mxu0
        %v2373 = vadd.f32 %v974, %v2372
        %v2374 = vpop.f32.mrb[0].mxu0
        %v2375 = vpop.f32.mrb[0].mxu0
        %v2376 = vadd.f32 %v979, %v2375
        %v2377 = vpop.f32.mrb[0].mxu0
        %2378 = vdwg.mxu0
        %v2379 = vpack.c.bf16 %v2376, %v2373
        %2380 = vst [vmem:[#allocation3 + $0xf0] sm:$0xff] %v2379
        %v2381 = vld [vmem:[#allocation2 + $0x22] sm:$0xff]
        %v2382 = vpack.c.bf16 %v2381, %v2381
        %v2384 = vsel %vm990, %v2382, 0
        %2386 = vmatprep.subr.bf16.mxu0 0
        %2387 = vmatpush1.bf16.msra.mxu0 %v2384
        %2388 = vmatprep.subr.bf16.mxu0 0
        %2389 = vmatpush1.bf16.msra.mxu0 0
        %2390 = vmatprep.subr.bf16.mxu0 0
        %2391 = vmatpush1.bf16.msra.mxu0 0
        %2392 = vmatprep.subr.bf16.mxu0 0
        %2393 = vmatpush1.bf16.msra.mxu0 0
        %2394 = vmatprep.subr.bf16.mxu0 0
        %2395 = vmatpush1.bf16.msra.mxu0 0
        %2396 = vmatprep.subr.bf16.mxu0 0
        %2397 = vmatpush1.bf16.msra.mxu0 0
        %2398 = vmatprep.subr.bf16.mxu0 0
        %2399 = vmatpush1.bf16.msra.mxu0 0
        %2400 = vmatprep.subr.bf16.mxu0 0
        %2401 = vmatpush1.bf16.msra.mxu0 0
        %2402 = vmatprep.subr.bf16.mxu0 0
        %2403 = vmatpush1.bf16.msra.mxu0 0
        %2404 = vmatprep.subr.bf16.mxu0 0
        %2405 = vmatpush1.bf16.msra.mxu0 0
        %2406 = vmatprep.subr.bf16.mxu0 0
        %2407 = vmatpush1.bf16.msra.mxu0 0
        %2408 = vmatprep.subr.bf16.mxu0 0
        %2409 = vmatpush1.bf16.msra.mxu0 0
        %2410 = vmatprep.subr.bf16.mxu0 0
        %2411 = vmatpush1.bf16.msra.mxu0 0
        %2412 = vmatprep.subr.bf16.mxu0 0
        %2413 = vmatpush1.bf16.msra.mxu0 0
        %2414 = vmatprep.subr.bf16.mxu0 0
        %2415 = vmatpush1.bf16.msra.mxu0 0
        %2416 = vmatprep.subr.bf16.mxu0 0
        %2417 = vmatpush1.bf16.msra.mxu0 0
        %2418 = vmatprep.mubr.bf16.mxu0 0
        %2419 = vmatmul.mubr.bf16.gmra.mrb[0].mxu0 %v988
        %v2420 = vpop.f32.mrb[0].mxu0
        %v2421 = vadd.f32 %v974, %v2420
        %v2422 = vpop.f32.mrb[0].mxu0
        %v2423 = vpop.f32.mrb[0].mxu0
        %v2424 = vadd.f32 %v979, %v2423
        %v2425 = vpop.f32.mrb[0].mxu0
        %2426 = vdwg.mxu0
        %v2427 = vpack.c.bf16 %v2424, %v2421
        %2428 = vst [vmem:[#allocation3 + $0xf8] sm:$0xff] %v2427
        %v2429 = vld [vmem:[#allocation2 + $0x23] sm:$0xff]
        %v2430 = vpack.c.bf16 %v2429, %v2429
        %v2432 = vsel %vm990, %v2430, 0
        %2434 = vmatprep.subr.bf16.mxu0 0
        %2435 = vmatpush1.bf16.msra.mxu0 %v2432
        %2436 = vmatprep.subr.bf16.mxu0 0
        %2437 = vmatpush1.bf16.msra.mxu0 0
        %2438 = vmatprep.subr.bf16.mxu0 0
        %2439 = vmatpush1.bf16.msra.mxu0 0
        %2440 = vmatprep.subr.bf16.mxu0 0
        %2441 = vmatpush1.bf16.msra.mxu0 0
        %2442 = vmatprep.subr.bf16.mxu0 0
        %2443 = vmatpush1.bf16.msra.mxu0 0
        %2444 = vmatprep.subr.bf16.mxu0 0
        %2445 = vmatpush1.bf16.msra.mxu0 0
        %2446 = vmatprep.subr.bf16.mxu0 0
        %2447 = vmatpush1.bf16.msra.mxu0 0
        %2448 = vmatprep.subr.bf16.mxu0 0
        %2449 = vmatpush1.bf16.msra.mxu0 0
        %2450 = vmatprep.subr.bf16.mxu0 0
        %2451 = vmatpush1.bf16.msra.mxu0 0
        %2452 = vmatprep.subr.bf16.mxu0 0
        %2453 = vmatpush1.bf16.msra.mxu0 0
        %2454 = vmatprep.subr.bf16.mxu0 0
        %2455 = vmatpush1.bf16.msra.mxu0 0
        %2456 = vmatprep.subr.bf16.mxu0 0
        %2457 = vmatpush1.bf16.msra.mxu0 0
        %2458 = vmatprep.subr.bf16.mxu0 0
        %2459 = vmatpush1.bf16.msra.mxu0 0
        %2460 = vmatprep.subr.bf16.mxu0 0
        %2461 = vmatpush1.bf16.msra.mxu0 0
        %2462 = vmatprep.subr.bf16.mxu0 0
        %2463 = vmatpush1.bf16.msra.mxu0 0
        %2464 = vmatprep.subr.bf16.mxu0 0
        %2465 = vmatpush1.bf16.msra.mxu0 0
        %2466 = vmatprep.mubr.bf16.mxu0 0
        %2467 = vmatmul.mubr.bf16.gmra.mrb[0].mxu0 %v988
        %v2468 = vpop.f32.mrb[0].mxu0
        %v2469 = vadd.f32 %v974, %v2468
        %v2470 = vpop.f32.mrb[0].mxu0
        %v2471 = vpop.f32.mrb[0].mxu0
        %v2472 = vadd.f32 %v979, %v2471
        %v2473 = vpop.f32.mrb[0].mxu0
        %2474 = vdwg.mxu0
        %v2475 = vpack.c.bf16 %v2472, %v2469
        %2476 = vst [vmem:[#allocation3 + $0x100] sm:$0xff] %v2475
        %v2477 = vld [vmem:[#allocation2 + $0x24] sm:$0xff]
        %v2478 = vpack.c.bf16 %v2477, %v2477
        %v2480 = vsel %vm990, %v2478, 0
        %2482 = vmatprep.subr.bf16.mxu0 0
        %2483 = vmatpush1.bf16.msra.mxu0 %v2480
        %2484 = vmatprep.subr.bf16.mxu0 0
        %2485 = vmatpush1.bf16.msra.mxu0 0
        %2486 = vmatprep.subr.bf16.mxu0 0
        %2487 = vmatpush1.bf16.msra.mxu0 0
        %2488 = vmatprep.subr.bf16.mxu0 0
        %2489 = vmatpush1.bf16.msra.mxu0 0
        %2490 = vmatprep.subr.bf16.mxu0 0
        %2491 = vmatpush1.bf16.msra.mxu0 0
        %2492 = vmatprep.subr.bf16.mxu0 0
        %2493 = vmatpush1.bf16.msra.mxu0 0
        %2494 = vmatprep.subr.bf16.mxu0 0
        %2495 = vmatpush1.bf16.msra.mxu0 0
        %2496 = vmatprep.subr.bf16.mxu0 0
        %2497 = vmatpush1.bf16.msra.mxu0 0
        %2498 = vmatprep.subr.bf16.mxu0 0
        %2499 = vmatpush1.bf16.msra.mxu0 0
        %2500 = vmatprep.subr.bf16.mxu0 0
        %2501 = vmatpush1.bf16.msra.mxu0 0
        %2502 = vmatprep.subr.bf16.mxu0 0
        %2503 = vmatpush1.bf16.msra.mxu0 0
        %2504 = vmatprep.subr.bf16.mxu0 0
        %2505 = vmatpush1.bf16.msra.mxu0 0
        %2506 = vmatprep.subr.bf16.mxu0 0
        %2507 = vmatpush1.bf16.msra.mxu0 0
        %2508 = vmatprep.subr.bf16.mxu0 0
        %2509 = vmatpush1.bf16.msra.mxu0 0
        %2510 = vmatprep.subr.bf16.mxu0 0
        %2511 = vmatpush1.bf16.msra.mxu0 0
        %2512 = vmatprep.subr.bf16.mxu0 0
        %2513 = vmatpush1.bf16.msra.mxu0 0
        %2514 = vmatprep.mubr.bf16.mxu0 0
        %2515 = vmatmul.mubr.bf16.gmra.mrb[0].mxu0 %v988
        %v2516 = vpop.f32.mrb[0].mxu0
        %v2517 = vadd.f32 %v974, %v2516
        %v2518 = vpop.f32.mrb[0].mxu0
        %v2519 = vpop.f32.mrb[0].mxu0
        %v2520 = vadd.f32 %v979, %v2519
        %v2521 = vpop.f32.mrb[0].mxu0
        %2522 = vdwg.mxu0
        %v2523 = vpack.c.bf16 %v2520, %v2517
        %2524 = vst [vmem:[#allocation3 + $0x108] sm:$0xff] %v2523
        %v2525 = vld [vmem:[#allocation3] sm:$0xff]
        %v2526 = vld [vmem:[#allocation3 + $0x8] sm:$0xff]
        %v2527 = vld [vmem:[#allocation3 + $0x10] sm:$0xff]
        %v2528 = vld [vmem:[#allocation3 + $0x18] sm:$0xff]
        %v2529 = vld [vmem:[#allocation3 + $0x20] sm:$0xff]
        %2531 = vset.pattern.permute.xlu0 0
        %2532 = vperm.xlu0 %2531, %v963
        %v2533 = vpop.permute.xlu0 %2532
        %2536 = vset.pattern.permute.xlu0 0
        %2537 = vperm.xlu0 %2536, %v964
        %v2538 = vpop.permute.xlu0 %2537
        %v2542 = vunpack.c.l.b16 %v961
        %v2543 = vunpack.c.l.b16 %v962
        %v2544 = vpack.c.b16 %v2543, %v2542
        %vm2545 = vcmask 654336
        %v2547 = vsel %vm2545, %v2544, 0
        %2549 = vmatprep.subr.bf16.mxu0 0
        %2550 = vmatpush1.bf16.msra.mxu0 %v2525
        %2551 = vmatprep.subr.bf16.mxu0 0
        %2552 = vmatpush1.bf16.msra.mxu0 %v2526
        %2553 = vmatprep.subr.bf16.mxu0 0
        %2554 = vmatpush1.bf16.msra.mxu0 %v2527
        %2555 = vmatprep.subr.bf16.mxu0 0
        %2556 = vmatpush1.bf16.msra.mxu0 %v2528
        %2557 = vmatprep.subr.bf16.mxu0 0
        %2558 = vmatpush1.bf16.msra.mxu0 %v2529
        %2559 = vmatprep.subr.bf16.mxu0 0
        %2560 = vmatpush1.bf16.msra.mxu0 0
        %2561 = vmatprep.subr.bf16.mxu0 0
        %2562 = vmatpush1.bf16.msra.mxu0 0
        %2563 = vmatprep.subr.bf16.mxu0 0
        %2564 = vmatpush1.bf16.msra.mxu0 0
        %2565 = vmatprep.subr.bf16.mxu0 0
        %2566 = vmatpush1.bf16.msra.mxu0 0
        %2567 = vmatprep.subr.bf16.mxu0 0
        %2568 = vmatpush1.bf16.msra.mxu0 0
        %2569 = vmatprep.subr.bf16.mxu0 0
        %2570 = vmatpush1.bf16.msra.mxu0 0
        %2571 = vmatprep.subr.bf16.mxu0 0
        %2572 = vmatpush1.bf16.msra.mxu0 0
        %2573 = vmatprep.subr.bf16.mxu0 0
        %2574 = vmatpush1.bf16.msra.mxu0 0
        %2575 = vmatprep.subr.bf16.mxu0 0
        %2576 = vmatpush1.bf16.msra.mxu0 0
        %2577 = vmatprep.subr.bf16.mxu0 0
        %2578 = vmatpush1.bf16.msra.mxu0 0
        %2579 = vmatprep.subr.bf16.mxu0 0
        %2580 = vmatpush1.bf16.msra.mxu0 0
        %2581 = vmatprep.mubr.bf16.mxu0 0
        %2582 = vmatmul.mubr.bf16.gmra.mrb[0].mxu0 %v2547
        %v2583 = vpop.f32.mrb[0].mxu0
        %v2584 = vadd.f32 %v2533, %v2583
        %v2585 = vpop.f32.mrb[0].mxu0
        %v2586 = vpop.f32.mrb[0].mxu0
        %v2587 = vadd.f32 %v2538, %v2586
        %v2588 = vpop.f32.mrb[0].mxu0
        %2589 = vdwg.mxu0
        %v2590 = vpack.c.bf16 %v2587, %v2584
        %2591 = vst [vmem:[#allocation4 + $0x8] sm:$0xff] %v2590
        %v2592 = vld [vmem:[#allocation3 + $0x8] sm:$0xff]
        %v2593 = vld [vmem:[#allocation3 + $0x10] sm:$0xff]
        %v2594 = vld [vmem:[#allocation3 + $0x18] sm:$0xff]
        %v2595 = vld [vmem:[#allocation3 + $0x20] sm:$0xff]
        %v2596 = vld [vmem:[#allocation3 + $0x28] sm:$0xff]
        %2597 = vmatprep.subr.bf16.mxu0 0
        %2598 = vmatpush1.bf16.msra.mxu0 %v2592
        %2599 = vmatprep.subr.bf16.mxu0 0
        %2600 = vmatpush1.bf16.msra.mxu0 %v2593
        %2601 = vmatprep.subr.bf16.mxu0 0
        %2602 = vmatpush1.bf16.msra.mxu0 %v2594
        %2603 = vmatprep.subr.bf16.mxu0 0
        %2604 = vmatpush1.bf16.msra.mxu0 %v2595
        %2605 = vmatprep.subr.bf16.mxu0 0
        %2606 = vmatpush1.bf16.msra.mxu0 %v2596
        %2607 = vmatprep.subr.bf16.mxu0 0
        %2608 = vmatpush1.bf16.msra.mxu0 0
        %2609 = vmatprep.subr.bf16.mxu0 0
        %2610 = vmatpush1.bf16.msra.mxu0 0
        %2611 = vmatprep.subr.bf16.mxu0 0
        %2612 = vmatpush1.bf16.msra.mxu0 0
        %2613 = vmatprep.subr.bf16.mxu0 0
        %2614 = vmatpush1.bf16.msra.mxu0 0
        %2615 = vmatprep.subr.bf16.mxu0 0
        %2616 = vmatpush1.bf16.msra.mxu0 0
        %2617 = vmatprep.subr.bf16.mxu0 0
        %2618 = vmatpush1.bf16.msra.mxu0 0
        %2619 = vmatprep.subr.bf16.mxu0 0
        %2620 = vmatpush1.bf16.msra.mxu0 0
        %2621 = vmatprep.subr.bf16.mxu0 0
        %2622 = vmatpush1.bf16.msra.mxu0 0
        %2623 = vmatprep.subr.bf16.mxu0 0
        %2624 = vmatpush1.bf16.msra.mxu0 0
        %2625 = vmatprep.subr.bf16.mxu0 0
        %2626 = vmatpush1.bf16.msra.mxu0 0
        %2627 = vmatprep.subr.bf16.mxu0 0
        %2628 = vmatpush1.bf16.msra.mxu0 0
        %2629 = vmatprep.mubr.bf16.mxu0 0
        %2630 = vmatmul.mubr.bf16.gmra.mrb[0].mxu0 %v2547
        %v2631 = vpop.f32.mrb[0].mxu0
        %v2632 = vadd.f32 %v2533, %v2631
        %v2633 = vpop.f32.mrb[0].mxu0
        %v2634 = vpop.f32.mrb[0].mxu0
        %v2635 = vadd.f32 %v2538, %v2634
        %v2636 = vpop.f32.mrb[0].mxu0
        %2637 = vdwg.mxu0
        %v2638 = vpack.c.bf16 %v2635, %v2632
        %2639 = vst [vmem:[#allocation4 + $0x10] sm:$0xff] %v2638
        %v2640 = vld [vmem:[#allocation3 + $0x10] sm:$0xff]
        %v2641 = vld [vmem:[#allocation3 + $0x18] sm:$0xff]
        %v2642 = vld [vmem:[#allocation3 + $0x20] sm:$0xff]
        %v2643 = vld [vmem:[#allocation3 + $0x28] sm:$0xff]
        %v2644 = vld [vmem:[#allocation3 + $0x30] sm:$0xff]
        %2645 = vmatprep.subr.bf16.mxu0 0
        %2646 = vmatpush1.bf16.msra.mxu0 %v2640
        %2647 = vmatprep.subr.bf16.mxu0 0
        %2648 = vmatpush1.bf16.msra.mxu0 %v2641
        %2649 = vmatprep.subr.bf16.mxu0 0
        %2650 = vmatpush1.bf16.msra.mxu0 %v2642
        %2651 = vmatprep.subr.bf16.mxu0 0
        %2652 = vmatpush1.bf16.msra.mxu0 %v2643
        %2653 = vmatprep.subr.bf16.mxu0 0
        %2654 = vmatpush1.bf16.msra.mxu0 %v2644
        %2655 = vmatprep.subr.bf16.mxu0 0
        %2656 = vmatpush1.bf16.msra.mxu0 0
        %2657 = vmatprep.subr.bf16.mxu0 0
        %2658 = vmatpush1.bf16.msra.mxu0 0
        %2659 = vmatprep.subr.bf16.mxu0 0
        %2660 = vmatpush1.bf16.msra.mxu0 0
        %2661 = vmatprep.subr.bf16.mxu0 0
        %2662 = vmatpush1.bf16.msra.mxu0 0
        %2663 = vmatprep.subr.bf16.mxu0 0
        %2664 = vmatpush1.bf16.msra.mxu0 0
        %2665 = vmatprep.subr.bf16.mxu0 0
        %2666 = vmatpush1.bf16.msra.mxu0 0
        %2667 = vmatprep.subr.bf16.mxu0 0
        %2668 = vmatpush1.bf16.msra.mxu0 0
        %2669 = vmatprep.subr.bf16.mxu0 0
        %2670 = vmatpush1.bf16.msra.mxu0 0
        %2671 = vmatprep.subr.bf16.mxu0 0
        %2672 = vmatpush1.bf16.msra.mxu0 0
        %2673 = vmatprep.subr.bf16.mxu0 0
        %2674 = vmatpush1.bf16.msra.mxu0 0
        %2675 = vmatprep.subr.bf16.mxu0 0
        %2676 = vmatpush1.bf16.msra.mxu0 0
        %2677 = vmatprep.mubr.bf16.mxu0 0
        %2678 = vmatmul.mubr.bf16.gmra.mrb[0].mxu0 %v2547
        %v2679 = vpop.f32.mrb[0].mxu0
        %v2680 = vadd.f32 %v2533, %v2679
        %v2681 = vpop.f32.mrb[0].mxu0
        %v2682 = vpop.f32.mrb[0].mxu0
        %v2683 = vadd.f32 %v2538, %v2682
        %v2684 = vpop.f32.mrb[0].mxu0
        %2685 = vdwg.mxu0
        %v2686 = vpack.c.bf16 %v2683, %v2680
        %2687 = vst [vmem:[#allocation4 + $0x18] sm:$0xff] %v2686
        %v2688 = vld [vmem:[#allocation3 + $0x18] sm:$0xff]
        %v2689 = vld [vmem:[#allocation3 + $0x20] sm:$0xff]
        %v2690 = vld [vmem:[#allocation3 + $0x28] sm:$0xff]
        %v2691 = vld [vmem:[#allocation3 + $0x30] sm:$0xff]
        %v2692 = vld [vmem:[#allocation3 + $0x38] sm:$0xff]
        %2693 = vmatprep.subr.bf16.mxu0 0
        %2694 = vmatpush1.bf16.msra.mxu0 %v2688
        %2695 = vmatprep.subr.bf16.mxu0 0
        %2696 = vmatpush1.bf16.msra.mxu0 %v2689
        %2697 = vmatprep.subr.bf16.mxu0 0
        %2698 = vmatpush1.bf16.msra.mxu0 %v2690
        %2699 = vmatprep.subr.bf16.mxu0 0
        %2700 = vmatpush1.bf16.msra.mxu0 %v2691
        %2701 = vmatprep.subr.bf16.mxu0 0
        %2702 = vmatpush1.bf16.msra.mxu0 %v2692
        %2703 = vmatprep.subr.bf16.mxu0 0
        %2704 = vmatpush1.bf16.msra.mxu0 0
        %2705 = vmatprep.subr.bf16.mxu0 0
        %2706 = vmatpush1.bf16.msra.mxu0 0
        %2707 = vmatprep.subr.bf16.mxu0 0
        %2708 = vmatpush1.bf16.msra.mxu0 0
        %2709 = vmatprep.subr.bf16.mxu0 0
        %2710 = vmatpush1.bf16.msra.mxu0 0
        %2711 = vmatprep.subr.bf16.mxu0 0
        %2712 = vmatpush1.bf16.msra.mxu0 0
        %2713 = vmatprep.subr.bf16.mxu0 0
        %2714 = vmatpush1.bf16.msra.mxu0 0
        %2715 = vmatprep.subr.bf16.mxu0 0
        %2716 = vmatpush1.bf16.msra.mxu0 0
        %2717 = vmatprep.subr.bf16.mxu0 0
        %2718 = vmatpush1.bf16.msra.mxu0 0
        %2719 = vmatprep.subr.bf16.mxu0 0
        %2720 = vmatpush1.bf16.msra.mxu0 0
        %2721 = vmatprep.subr.bf16.mxu0 0
        %2722 = vmatpush1.bf16.msra.mxu0 0
        %2723 = vmatprep.subr.bf16.mxu0 0
        %2724 = vmatpush1.bf16.msra.mxu0 0
        %2725 = vmatprep.mubr.bf16.mxu0 0
        %2726 = vmatmul.mubr.bf16.gmra.mrb[0].mxu0 %v2547
        %v2727 = vpop.f32.mrb[0].mxu0
        %v2728 = vadd.f32 %v2533, %v2727
        %v2729 = vpop.f32.mrb[0].mxu0
        %v2730 = vpop.f32.mrb[0].mxu0
        %v2731 = vadd.f32 %v2538, %v2730
        %v2732 = vpop.f32.mrb[0].mxu0
        %2733 = vdwg.mxu0
        %v2734 = vpack.c.bf16 %v2731, %v2728
        %2735 = vst [vmem:[#allocation4 + $0x20] sm:$0xff] %v2734
        %v2736 = vld [vmem:[#allocation3 + $0x20] sm:$0xff]
        %v2737 = vld [vmem:[#allocation3 + $0x28] sm:$0xff]
        %v2738 = vld [vmem:[#allocation3 + $0x30] sm:$0xff]
        %v2739 = vld [vmem:[#allocation3 + $0x38] sm:$0xff]
        %v2740 = vld [vmem:[#allocation3 + $0x40] sm:$0xff]
        %2741 = vmatprep.subr.bf16.mxu0 0
        %2742 = vmatpush1.bf16.msra.mxu0 %v2736
        %2743 = vmatprep.subr.bf16.mxu0 0
        %2744 = vmatpush1.bf16.msra.mxu0 %v2737
        %2745 = vmatprep.subr.bf16.mxu0 0
        %2746 = vmatpush1.bf16.msra.mxu0 %v2738
        %2747 = vmatprep.subr.bf16.mxu0 0
        %2748 = vmatpush1.bf16.msra.mxu0 %v2739
        %2749 = vmatprep.subr.bf16.mxu0 0
        %2750 = vmatpush1.bf16.msra.mxu0 %v2740
        %2751 = vmatprep.subr.bf16.mxu0 0
        %2752 = vmatpush1.bf16.msra.mxu0 0
        %2753 = vmatprep.subr.bf16.mxu0 0
        %2754 = vmatpush1.bf16.msra.mxu0 0
        %2755 = vmatprep.subr.bf16.mxu0 0
        %2756 = vmatpush1.bf16.msra.mxu0 0
        %2757 = vmatprep.subr.bf16.mxu0 0
        %2758 = vmatpush1.bf16.msra.mxu0 0
        %2759 = vmatprep.subr.bf16.mxu0 0
        %2760 = vmatpush1.bf16.msra.mxu0 0
        %2761 = vmatprep.subr.bf16.mxu0 0
        %2762 = vmatpush1.bf16.msra.mxu0 0
        %2763 = vmatprep.subr.bf16.mxu0 0
        %2764 = vmatpush1.bf16.msra.mxu0 0
        %2765 = vmatprep.subr.bf16.mxu0 0
        %2766 = vmatpush1.bf16.msra.mxu0 0
        %2767 = vmatprep.subr.bf16.mxu0 0
        %2768 = vmatpush1.bf16.msra.mxu0 0
        %2769 = vmatprep.subr.bf16.mxu0 0
        %2770 = vmatpush1.bf16.msra.mxu0 0
        %2771 = vmatprep.subr.bf16.mxu0 0
        %2772 = vmatpush1.bf16.msra.mxu0 0
        %2773 = vmatprep.mubr.bf16.mxu0 0
        %2774 = vmatmul.mubr.bf16.gmra.mrb[0].mxu0 %v2547
        %v2775 = vpop.f32.mrb[0].mxu0
        %v2776 = vadd.f32 %v2533, %v2775
        %v2777 = vpop.f32.mrb[0].mxu0
        %v2778 = vpop.f32.mrb[0].mxu0
        %v2779 = vadd.f32 %v2538, %v2778
        %v2780 = vpop.f32.mrb[0].mxu0
        %2781 = vdwg.mxu0
        %v2782 = vpack.c.bf16 %v2779, %v2776
        %2783 = vst [vmem:[#allocation4 + $0x28] sm:$0xff] %v2782
        %v2784 = vld [vmem:[#allocation3 + $0x28] sm:$0xff]
        %v2785 = vld [vmem:[#allocation3 + $0x30] sm:$0xff]
        %v2786 = vld [vmem:[#allocation3 + $0x38] sm:$0xff]
        %v2787 = vld [vmem:[#allocation3 + $0x40] sm:$0xff]
        %v2788 = vld [vmem:[#allocation3 + $0x48] sm:$0xff]
        %2789 = vmatprep.subr.bf16.mxu0 0
        %2790 = vmatpush1.bf16.msra.mxu0 %v2784
        %2791 = vmatprep.subr.bf16.mxu0 0
        %2792 = vmatpush1.bf16.msra.mxu0 %v2785
        %2793 = vmatprep.subr.bf16.mxu0 0
        %2794 = vmatpush1.bf16.msra.mxu0 %v2786
        %2795 = vmatprep.subr.bf16.mxu0 0
        %2796 = vmatpush1.bf16.msra.mxu0 %v2787
        %2797 = vmatprep.subr.bf16.mxu0 0
        %2798 = vmatpush1.bf16.msra.mxu0 %v2788
        %2799 = vmatprep.subr.bf16.mxu0 0
        %2800 = vmatpush1.bf16.msra.mxu0 0
        %2801 = vmatprep.subr.bf16.mxu0 0
        %2802 = vmatpush1.bf16.msra.mxu0 0
        %2803 = vmatprep.subr.bf16.mxu0 0
        %2804 = vmatpush1.bf16.msra.mxu0 0
        %2805 = vmatprep.subr.bf16.mxu0 0
        %2806 = vmatpush1.bf16.msra.mxu0 0
        %2807 = vmatprep.subr.bf16.mxu0 0
        %2808 = vmatpush1.bf16.msra.mxu0 0
        %2809 = vmatprep.subr.bf16.mxu0 0
        %2810 = vmatpush1.bf16.msra.mxu0 0
        %2811 = vmatprep.subr.bf16.mxu0 0
        %2812 = vmatpush1.bf16.msra.mxu0 0
        %2813 = vmatprep.subr.bf16.mxu0 0
        %2814 = vmatpush1.bf16.msra.mxu0 0
        %2815 = vmatprep.subr.bf16.mxu0 0
        %2816 = vmatpush1.bf16.msra.mxu0 0
        %2817 = vmatprep.subr.bf16.mxu0 0
        %2818 = vmatpush1.bf16.msra.mxu0 0
        %2819 = vmatprep.subr.bf16.mxu0 0
        %2820 = vmatpush1.bf16.msra.mxu0 0
        %2821 = vmatprep.mubr.bf16.mxu0 0
        %2822 = vmatmul.mubr.bf16.gmra.mrb[0].mxu0 %v2547
        %v2823 = vpop.f32.mrb[0].mxu0
        %v2824 = vadd.f32 %v2533, %v2823
        %v2825 = vpop.f32.mrb[0].mxu0
        %v2826 = vpop.f32.mrb[0].mxu0
        %v2827 = vadd.f32 %v2538, %v2826
        %v2828 = vpop.f32.mrb[0].mxu0
        %2829 = vdwg.mxu0
        %v2830 = vpack.c.bf16 %v2827, %v2824
        %2831 = vst [vmem:[#allocation4 + $0x30] sm:$0xff] %v2830
        %v2832 = vld [vmem:[#allocation3 + $0x30] sm:$0xff]
        %v2833 = vld [vmem:[#allocation3 + $0x38] sm:$0xff]
        %v2834 = vld [vmem:[#allocation3 + $0x40] sm:$0xff]
        %v2835 = vld [vmem:[#allocation3 + $0x48] sm:$0xff]
        %v2836 = vld [vmem:[#allocation3 + $0x50] sm:$0xff]
        %2837 = vmatprep.subr.bf16.mxu0 0
        %2838 = vmatpush1.bf16.msra.mxu0 %v2832
        %2839 = vmatprep.subr.bf16.mxu0 0
        %2840 = vmatpush1.bf16.msra.mxu0 %v2833
        %2841 = vmatprep.subr.bf16.mxu0 0
        %2842 = vmatpush1.bf16.msra.mxu0 %v2834
        %2843 = vmatprep.subr.bf16.mxu0 0
        %2844 = vmatpush1.bf16.msra.mxu0 %v2835
        %2845 = vmatprep.subr.bf16.mxu0 0
        %2846 = vmatpush1.bf16.msra.mxu0 %v2836
        %2847 = vmatprep.subr.bf16.mxu0 0
        %2848 = vmatpush1.bf16.msra.mxu0 0
        %2849 = vmatprep.subr.bf16.mxu0 0
        %2850 = vmatpush1.bf16.msra.mxu0 0
        %2851 = vmatprep.subr.bf16.mxu0 0
        %2852 = vmatpush1.bf16.msra.mxu0 0
        %2853 = vmatprep.subr.bf16.mxu0 0
        %2854 = vmatpush1.bf16.msra.mxu0 0
        %2855 = vmatprep.subr.bf16.mxu0 0
        %2856 = vmatpush1.bf16.msra.mxu0 0
        %2857 = vmatprep.subr.bf16.mxu0 0
        %2858 = vmatpush1.bf16.msra.mxu0 0
        %2859 = vmatprep.subr.bf16.mxu0 0
        %2860 = vmatpush1.bf16.msra.mxu0 0
        %2861 = vmatprep.subr.bf16.mxu0 0
        %2862 = vmatpush1.bf16.msra.mxu0 0
        %2863 = vmatprep.subr.bf16.mxu0 0
        %2864 = vmatpush1.bf16.msra.mxu0 0
        %2865 = vmatprep.subr.bf16.mxu0 0
        %2866 = vmatpush1.bf16.msra.mxu0 0
        %2867 = vmatprep.subr.bf16.mxu0 0
        %2868 = vmatpush1.bf16.msra.mxu0 0
        %2869 = vmatprep.mubr.bf16.mxu0 0
        %2870 = vmatmul.mubr.bf16.gmra.mrb[0].mxu0 %v2547
        %v2871 = vpop.f32.mrb[0].mxu0
        %v2872 = vadd.f32 %v2533, %v2871
        %v2873 = vpop.f32.mrb[0].mxu0
        %v2874 = vpop.f32.mrb[0].mxu0
        %v2875 = vadd.f32 %v2538, %v2874
        %v2876 = vpop.f32.mrb[0].mxu0
        %2877 = vdwg.mxu0
        %v2878 = vpack.c.bf16 %v2875, %v2872
        %2879 = vst [vmem:[#allocation4 + $0x38] sm:$0xff] %v2878
        %v2880 = vld [vmem:[#allocation3 + $0x38] sm:$0xff]
        %v2881 = vld [vmem:[#allocation3 + $0x40] sm:$0xff]
        %v2882 = vld [vmem:[#allocation3 + $0x48] sm:$0xff]
        %v2883 = vld [vmem:[#allocation3 + $0x50] sm:$0xff]
        %v2884 = vld [vmem:[#allocation3 + $0x58] sm:$0xff]
        %2885 = vmatprep.subr.bf16.mxu0 0
        %2886 = vmatpush1.bf16.msra.mxu0 %v2880
        %2887 = vmatprep.subr.bf16.mxu0 0
        %2888 = vmatpush1.bf16.msra.mxu0 %v2881
        %2889 = vmatprep.subr.bf16.mxu0 0
        %2890 = vmatpush1.bf16.msra.mxu0 %v2882
        %2891 = vmatprep.subr.bf16.mxu0 0
        %2892 = vmatpush1.bf16.msra.mxu0 %v2883
        %2893 = vmatprep.subr.bf16.mxu0 0
        %2894 = vmatpush1.bf16.msra.mxu0 %v2884
        %2895 = vmatprep.subr.bf16.mxu0 0
        %2896 = vmatpush1.bf16.msra.mxu0 0
        %2897 = vmatprep.subr.bf16.mxu0 0
        %2898 = vmatpush1.bf16.msra.mxu0 0
        %2899 = vmatprep.subr.bf16.mxu0 0
        %2900 = vmatpush1.bf16.msra.mxu0 0
        %2901 = vmatprep.subr.bf16.mxu0 0
        %2902 = vmatpush1.bf16.msra.mxu0 0
        %2903 = vmatprep.subr.bf16.mxu0 0
        %2904 = vmatpush1.bf16.msra.mxu0 0
        %2905 = vmatprep.subr.bf16.mxu0 0
        %2906 = vmatpush1.bf16.msra.mxu0 0
        %2907 = vmatprep.subr.bf16.mxu0 0
        %2908 = vmatpush1.bf16.msra.mxu0 0
        %2909 = vmatprep.subr.bf16.mxu0 0
        %2910 = vmatpush1.bf16.msra.mxu0 0
        %2911 = vmatprep.subr.bf16.mxu0 0
        %2912 = vmatpush1.bf16.msra.mxu0 0
        %2913 = vmatprep.subr.bf16.mxu0 0
        %2914 = vmatpush1.bf16.msra.mxu0 0
        %2915 = vmatprep.subr.bf16.mxu0 0
        %2916 = vmatpush1.bf16.msra.mxu0 0
        %2917 = vmatprep.mubr.bf16.mxu0 0
        %2918 = vmatmul.mubr.bf16.gmra.mrb[0].mxu0 %v2547
        %v2919 = vpop.f32.mrb[0].mxu0
        %v2920 = vadd.f32 %v2533, %v2919
        %v2921 = vpop.f32.mrb[0].mxu0
        %v2922 = vpop.f32.mrb[0].mxu0
        %v2923 = vadd.f32 %v2538, %v2922
        %v2924 = vpop.f32.mrb[0].mxu0
        %2925 = vdwg.mxu0
        %v2926 = vpack.c.bf16 %v2923, %v2920
        %2927 = vst [vmem:[#allocation4 + $0x40] sm:$0xff] %v2926
        %v2928 = vld [vmem:[#allocation3 + $0x40] sm:$0xff]
        %v2929 = vld [vmem:[#allocation3 + $0x48] sm:$0xff]
        %v2930 = vld [vmem:[#allocation3 + $0x50] sm:$0xff]
        %v2931 = vld [vmem:[#allocation3 + $0x58] sm:$0xff]
        %v2932 = vld [vmem:[#allocation3 + $0x60] sm:$0xff]
        %2933 = vmatprep.subr.bf16.mxu0 0
        %2934 = vmatpush1.bf16.msra.mxu0 %v2928
        %2935 = vmatprep.subr.bf16.mxu0 0
        %2936 = vmatpush1.bf16.msra.mxu0 %v2929
        %2937 = vmatprep.subr.bf16.mxu0 0
        %2938 = vmatpush1.bf16.msra.mxu0 %v2930
        %2939 = vmatprep.subr.bf16.mxu0 0
        %2940 = vmatpush1.bf16.msra.mxu0 %v2931
        %2941 = vmatprep.subr.bf16.mxu0 0
        %2942 = vmatpush1.bf16.msra.mxu0 %v2932
        %2943 = vmatprep.subr.bf16.mxu0 0
        %2944 = vmatpush1.bf16.msra.mxu0 0
        %2945 = vmatprep.subr.bf16.mxu0 0
        %2946 = vmatpush1.bf16.msra.mxu0 0
        %2947 = vmatprep.subr.bf16.mxu0 0
        %2948 = vmatpush1.bf16.msra.mxu0 0
        %2949 = vmatprep.subr.bf16.mxu0 0
        %2950 = vmatpush1.bf16.msra.mxu0 0
        %2951 = vmatprep.subr.bf16.mxu0 0
        %2952 = vmatpush1.bf16.msra.mxu0 0
        %2953 = vmatprep.subr.bf16.mxu0 0
        %2954 = vmatpush1.bf16.msra.mxu0 0
        %2955 = vmatprep.subr.bf16.mxu0 0
        %2956 = vmatpush1.bf16.msra.mxu0 0
        %2957 = vmatprep.subr.bf16.mxu0 0
        %2958 = vmatpush1.bf16.msra.mxu0 0
        %2959 = vmatprep.subr.bf16.mxu0 0
        %2960 = vmatpush1.bf16.msra.mxu0 0
        %2961 = vmatprep.subr.bf16.mxu0 0
        %2962 = vmatpush1.bf16.msra.mxu0 0
        %2963 = vmatprep.subr.bf16.mxu0 0
        %2964 = vmatpush1.bf16.msra.mxu0 0
        %2965 = vmatprep.mubr.bf16.mxu0 0
        %2966 = vmatmul.mubr.bf16.gmra.mrb[0].mxu0 %v2547
        %v2967 = vpop.f32.mrb[0].mxu0
        %v2968 = vadd.f32 %v2533, %v2967
        %v2969 = vpop.f32.mrb[0].mxu0
        %v2970 = vpop.f32.mrb[0].mxu0
        %v2971 = vadd.f32 %v2538, %v2970
        %v2972 = vpop.f32.mrb[0].mxu0
        %2973 = vdwg.mxu0
        %v2974 = vpack.c.bf16 %v2971, %v2968
        %2975 = vst [vmem:[#allocation4 + $0x48] sm:$0xff] %v2974
        %v2976 = vld [vmem:[#allocation3 + $0x48] sm:$0xff]
        %v2977 = vld [vmem:[#allocation3 + $0x50] sm:$0xff]
        %v2978 = vld [vmem:[#allocation3 + $0x58] sm:$0xff]
        %v2979 = vld [vmem:[#allocation3 + $0x60] sm:$0xff]
        %v2980 = vld [vmem:[#allocation3 + $0x68] sm:$0xff]
        %2981 = vmatprep.subr.bf16.mxu0 0
        %2982 = vmatpush1.bf16.msra.mxu0 %v2976
        %2983 = vmatprep.subr.bf16.mxu0 0
        %2984 = vmatpush1.bf16.msra.mxu0 %v2977
        %2985 = vmatprep.subr.bf16.mxu0 0
        %2986 = vmatpush1.bf16.msra.mxu0 %v2978
        %2987 = vmatprep.subr.bf16.mxu0 0
        %2988 = vmatpush1.bf16.msra.mxu0 %v2979
        %2989 = vmatprep.subr.bf16.mxu0 0
        %2990 = vmatpush1.bf16.msra.mxu0 %v2980
        %2991 = vmatprep.subr.bf16.mxu0 0
        %2992 = vmatpush1.bf16.msra.mxu0 0
        %2993 = vmatprep.subr.bf16.mxu0 0
        %2994 = vmatpush1.bf16.msra.mxu0 0
        %2995 = vmatprep.subr.bf16.mxu0 0
        %2996 = vmatpush1.bf16.msra.mxu0 0
        %2997 = vmatprep.subr.bf16.mxu0 0
        %2998 = vmatpush1.bf16.msra.mxu0 0
        %2999 = vmatprep.subr.bf16.mxu0 0
        %3000 = vmatpush1.bf16.msra.mxu0 0
        %3001 = vmatprep.subr.bf16.mxu0 0
        %3002 = vmatpush1.bf16.msra.mxu0 0
        %3003 = vmatprep.subr.bf16.mxu0 0
        %3004 = vmatpush1.bf16.msra.mxu0 0
        %3005 = vmatprep.subr.bf16.mxu0 0
        %3006 = vmatpush1.bf16.msra.mxu0 0
        %3007 = vmatprep.subr.bf16.mxu0 0
        %3008 = vmatpush1.bf16.msra.mxu0 0
        %3009 = vmatprep.subr.bf16.mxu0 0
        %3010 = vmatpush1.bf16.msra.mxu0 0
        %3011 = vmatprep.subr.bf16.mxu0 0
        %3012 = vmatpush1.bf16.msra.mxu0 0
        %3013 = vmatprep.mubr.bf16.mxu0 0
        %3014 = vmatmul.mubr.bf16.gmra.mrb[0].mxu0 %v2547
        %v3015 = vpop.f32.mrb[0].mxu0
        %v3016 = vadd.f32 %v2533, %v3015
        %v3017 = vpop.f32.mrb[0].mxu0
        %v3018 = vpop.f32.mrb[0].mxu0
        %v3019 = vadd.f32 %v2538, %v3018
        %v3020 = vpop.f32.mrb[0].mxu0
        %3021 = vdwg.mxu0
        %v3022 = vpack.c.bf16 %v3019, %v3016
        %3023 = vst [vmem:[#allocation4 + $0x50] sm:$0xff] %v3022
        %v3024 = vld [vmem:[#allocation3 + $0x50] sm:$0xff]
        %v3025 = vld [vmem:[#allocation3 + $0x58] sm:$0xff]
        %v3026 = vld [vmem:[#allocation3 + $0x60] sm:$0xff]
        %v3027 = vld [vmem:[#allocation3 + $0x68] sm:$0xff]
        %v3028 = vld [vmem:[#allocation3 + $0x70] sm:$0xff]
        %3029 = vmatprep.subr.bf16.mxu0 0
        %3030 = vmatpush1.bf16.msra.mxu0 %v3024
        %3031 = vmatprep.subr.bf16.mxu0 0
        %3032 = vmatpush1.bf16.msra.mxu0 %v3025
        %3033 = vmatprep.subr.bf16.mxu0 0
        %3034 = vmatpush1.bf16.msra.mxu0 %v3026
        %3035 = vmatprep.subr.bf16.mxu0 0
        %3036 = vmatpush1.bf16.msra.mxu0 %v3027
        %3037 = vmatprep.subr.bf16.mxu0 0
        %3038 = vmatpush1.bf16.msra.mxu0 %v3028
        %3039 = vmatprep.subr.bf16.mxu0 0
        %3040 = vmatpush1.bf16.msra.mxu0 0
        %3041 = vmatprep.subr.bf16.mxu0 0
        %3042 = vmatpush1.bf16.msra.mxu0 0
        %3043 = vmatprep.subr.bf16.mxu0 0
        %3044 = vmatpush1.bf16.msra.mxu0 0
        %3045 = vmatprep.subr.bf16.mxu0 0
        %3046 = vmatpush1.bf16.msra.mxu0 0
        %3047 = vmatprep.subr.bf16.mxu0 0
        %3048 = vmatpush1.bf16.msra.mxu0 0
        %3049 = vmatprep.subr.bf16.mxu0 0
        %3050 = vmatpush1.bf16.msra.mxu0 0
        %3051 = vmatprep.subr.bf16.mxu0 0
        %3052 = vmatpush1.bf16.msra.mxu0 0
        %3053 = vmatprep.subr.bf16.mxu0 0
        %3054 = vmatpush1.bf16.msra.mxu0 0
        %3055 = vmatprep.subr.bf16.mxu0 0
        %3056 = vmatpush1.bf16.msra.mxu0 0
        %3057 = vmatprep.subr.bf16.mxu0 0
        %3058 = vmatpush1.bf16.msra.mxu0 0
        %3059 = vmatprep.subr.bf16.mxu0 0
        %3060 = vmatpush1.bf16.msra.mxu0 0
        %3061 = vmatprep.mubr.bf16.mxu0 0
        %3062 = vmatmul.mubr.bf16.gmra.mrb[0].mxu0 %v2547
        %v3063 = vpop.f32.mrb[0].mxu0
        %v3064 = vadd.f32 %v2533, %v3063
        %v3065 = vpop.f32.mrb[0].mxu0
        %v3066 = vpop.f32.mrb[0].mxu0
        %v3067 = vadd.f32 %v2538, %v3066
        %v3068 = vpop.f32.mrb[0].mxu0
        %3069 = vdwg.mxu0
        %v3070 = vpack.c.bf16 %v3067, %v3064
        %3071 = vst [vmem:[#allocation4 + $0x58] sm:$0xff] %v3070
        %v3072 = vld [vmem:[#allocation3 + $0x58] sm:$0xff]
        %v3073 = vld [vmem:[#allocation3 + $0x60] sm:$0xff]
        %v3074 = vld [vmem:[#allocation3 + $0x68] sm:$0xff]
        %v3075 = vld [vmem:[#allocation3 + $0x70] sm:$0xff]
        %v3076 = vld [vmem:[#allocation3 + $0x78] sm:$0xff]
        %3077 = vmatprep.subr.bf16.mxu0 0
        %3078 = vmatpush1.bf16.msra.mxu0 %v3072
        %3079 = vmatprep.subr.bf16.mxu0 0
        %3080 = vmatpush1.bf16.msra.mxu0 %v3073
        %3081 = vmatprep.subr.bf16.mxu0 0
        %3082 = vmatpush1.bf16.msra.mxu0 %v3074
        %3083 = vmatprep.subr.bf16.mxu0 0
        %3084 = vmatpush1.bf16.msra.mxu0 %v3075
        %3085 = vmatprep.subr.bf16.mxu0 0
        %3086 = vmatpush1.bf16.msra.mxu0 %v3076
        %3087 = vmatprep.subr.bf16.mxu0 0
        %3088 = vmatpush1.bf16.msra.mxu0 0
        %3089 = vmatprep.subr.bf16.mxu0 0
        %3090 = vmatpush1.bf16.msra.mxu0 0
        %3091 = vmatprep.subr.bf16.mxu0 0
        %3092 = vmatpush1.bf16.msra.mxu0 0
        %3093 = vmatprep.subr.bf16.mxu0 0
        %3094 = vmatpush1.bf16.msra.mxu0 0
        %3095 = vmatprep.subr.bf16.mxu0 0
        %3096 = vmatpush1.bf16.msra.mxu0 0
        %3097 = vmatprep.subr.bf16.mxu0 0
        %3098 = vmatpush1.bf16.msra.mxu0 0
        %3099 = vmatprep.subr.bf16.mxu0 0
        %3100 = vmatpush1.bf16.msra.mxu0 0
        %3101 = vmatprep.subr.bf16.mxu0 0
        %3102 = vmatpush1.bf16.msra.mxu0 0
        %3103 = vmatprep.subr.bf16.mxu0 0
        %3104 = vmatpush1.bf16.msra.mxu0 0
        %3105 = vmatprep.subr.bf16.mxu0 0
        %3106 = vmatpush1.bf16.msra.mxu0 0
        %3107 = vmatprep.subr.bf16.mxu0 0
        %3108 = vmatpush1.bf16.msra.mxu0 0
        %3109 = vmatprep.mubr.bf16.mxu0 0
        %3110 = vmatmul.mubr.bf16.gmra.mrb[0].mxu0 %v2547
        %v3111 = vpop.f32.mrb[0].mxu0
        %v3112 = vadd.f32 %v2533, %v3111
        %v3113 = vpop.f32.mrb[0].mxu0
        %v3114 = vpop.f32.mrb[0].mxu0
        %v3115 = vadd.f32 %v2538, %v3114
        %v3116 = vpop.f32.mrb[0].mxu0
        %3117 = vdwg.mxu0
        %v3118 = vpack.c.bf16 %v3115, %v3112
        %3119 = vst [vmem:[#allocation4 + $0x60] sm:$0xff] %v3118
        %v3120 = vld [vmem:[#allocation3 + $0x60] sm:$0xff]
        %v3121 = vld [vmem:[#allocation3 + $0x68] sm:$0xff]
        %v3122 = vld [vmem:[#allocation3 + $0x70] sm:$0xff]
        %v3123 = vld [vmem:[#allocation3 + $0x78] sm:$0xff]
        %v3124 = vld [vmem:[#allocation3 + $0x80] sm:$0xff]
        %3125 = vmatprep.subr.bf16.mxu0 0
        %3126 = vmatpush1.bf16.msra.mxu0 %v3120
        %3127 = vmatprep.subr.bf16.mxu0 0
        %3128 = vmatpush1.bf16.msra.mxu0 %v3121
        %3129 = vmatprep.subr.bf16.mxu0 0
        %3130 = vmatpush1.bf16.msra.mxu0 %v3122
        %3131 = vmatprep.subr.bf16.mxu0 0
        %3132 = vmatpush1.bf16.msra.mxu0 %v3123
        %3133 = vmatprep.subr.bf16.mxu0 0
        %3134 = vmatpush1.bf16.msra.mxu0 %v3124
        %3135 = vmatprep.subr.bf16.mxu0 0
        %3136 = vmatpush1.bf16.msra.mxu0 0
        %3137 = vmatprep.subr.bf16.mxu0 0
        %3138 = vmatpush1.bf16.msra.mxu0 0
        %3139 = vmatprep.subr.bf16.mxu0 0
        %3140 = vmatpush1.bf16.msra.mxu0 0
        %3141 = vmatprep.subr.bf16.mxu0 0
        %3142 = vmatpush1.bf16.msra.mxu0 0
        %3143 = vmatprep.subr.bf16.mxu0 0
        %3144 = vmatpush1.bf16.msra.mxu0 0
        %3145 = vmatprep.subr.bf16.mxu0 0
        %3146 = vmatpush1.bf16.msra.mxu0 0
        %3147 = vmatprep.subr.bf16.mxu0 0
        %3148 = vmatpush1.bf16.msra.mxu0 0
        %3149 = vmatprep.subr.bf16.mxu0 0
        %3150 = vmatpush1.bf16.msra.mxu0 0
        %3151 = vmatprep.subr.bf16.mxu0 0
        %3152 = vmatpush1.bf16.msra.mxu0 0
        %3153 = vmatprep.subr.bf16.mxu0 0
        %3154 = vmatpush1.bf16.msra.mxu0 0
        %3155 = vmatprep.subr.bf16.mxu0 0
        %3156 = vmatpush1.bf16.msra.mxu0 0
        %3157 = vmatprep.mubr.bf16.mxu0 0
        %3158 = vmatmul.mubr.bf16.gmra.mrb[0].mxu0 %v2547
        %v3159 = vpop.f32.mrb[0].mxu0
        %v3160 = vadd.f32 %v2533, %v3159
        %v3161 = vpop.f32.mrb[0].mxu0
        %v3162 = vpop.f32.mrb[0].mxu0
        %v3163 = vadd.f32 %v2538, %v3162
        %v3164 = vpop.f32.mrb[0].mxu0
        %3165 = vdwg.mxu0
        %v3166 = vpack.c.bf16 %v3163, %v3160
        %3167 = vst [vmem:[#allocation4 + $0x68] sm:$0xff] %v3166
        %v3168 = vld [vmem:[#allocation3 + $0x68] sm:$0xff]
        %v3169 = vld [vmem:[#allocation3 + $0x70] sm:$0xff]
        %v3170 = vld [vmem:[#allocation3 + $0x78] sm:$0xff]
        %v3171 = vld [vmem:[#allocation3 + $0x80] sm:$0xff]
        %v3172 = vld [vmem:[#allocation3 + $0x88] sm:$0xff]
        %3173 = vmatprep.subr.bf16.mxu0 0
        %3174 = vmatpush1.bf16.msra.mxu0 %v3168
        %3175 = vmatprep.subr.bf16.mxu0 0
        %3176 = vmatpush1.bf16.msra.mxu0 %v3169
        %3177 = vmatprep.subr.bf16.mxu0 0
        %3178 = vmatpush1.bf16.msra.mxu0 %v3170
        %3179 = vmatprep.subr.bf16.mxu0 0
        %3180 = vmatpush1.bf16.msra.mxu0 %v3171
        %3181 = vmatprep.subr.bf16.mxu0 0
        %3182 = vmatpush1.bf16.msra.mxu0 %v3172
        %3183 = vmatprep.subr.bf16.mxu0 0
        %3184 = vmatpush1.bf16.msra.mxu0 0
        %3185 = vmatprep.subr.bf16.mxu0 0
        %3186 = vmatpush1.bf16.msra.mxu0 0
        %3187 = vmatprep.subr.bf16.mxu0 0
        %3188 = vmatpush1.bf16.msra.mxu0 0
        %3189 = vmatprep.subr.bf16.mxu0 0
        %3190 = vmatpush1.bf16.msra.mxu0 0
        %3191 = vmatprep.subr.bf16.mxu0 0
        %3192 = vmatpush1.bf16.msra.mxu0 0
        %3193 = vmatprep.subr.bf16.mxu0 0
        %3194 = vmatpush1.bf16.msra.mxu0 0
        %3195 = vmatprep.subr.bf16.mxu0 0
        %3196 = vmatpush1.bf16.msra.mxu0 0
        %3197 = vmatprep.subr.bf16.mxu0 0
        %3198 = vmatpush1.bf16.msra.mxu0 0
        %3199 = vmatprep.subr.bf16.mxu0 0
        %3200 = vmatpush1.bf16.msra.mxu0 0
        %3201 = vmatprep.subr.bf16.mxu0 0
        %3202 = vmatpush1.bf16.msra.mxu0 0
        %3203 = vmatprep.subr.bf16.mxu0 0
        %3204 = vmatpush1.bf16.msra.mxu0 0
        %3205 = vmatprep.mubr.bf16.mxu0 0
        %3206 = vmatmul.mubr.bf16.gmra.mrb[0].mxu0 %v2547
        %v3207 = vpop.f32.mrb[0].mxu0
        %v3208 = vadd.f32 %v2533, %v3207
        %v3209 = vpop.f32.mrb[0].mxu0
        %v3210 = vpop.f32.mrb[0].mxu0
        %v3211 = vadd.f32 %v2538, %v3210
        %v3212 = vpop.f32.mrb[0].mxu0
        %3213 = vdwg.mxu0
        %v3214 = vpack.c.bf16 %v3211, %v3208
        %3215 = vst [vmem:[#allocation4 + $0x70] sm:$0xff] %v3214
        %v3216 = vld [vmem:[#allocation3 + $0x70] sm:$0xff]
        %v3217 = vld [vmem:[#allocation3 + $0x78] sm:$0xff]
        %v3218 = vld [vmem:[#allocation3 + $0x80] sm:$0xff]
        %v3219 = vld [vmem:[#allocation3 + $0x88] sm:$0xff]
        %v3220 = vld [vmem:[#allocation3 + $0x90] sm:$0xff]
        %3221 = vmatprep.subr.bf16.mxu0 0
        %3222 = vmatpush1.bf16.msra.mxu0 %v3216
        %3223 = vmatprep.subr.bf16.mxu0 0
        %3224 = vmatpush1.bf16.msra.mxu0 %v3217
        %3225 = vmatprep.subr.bf16.mxu0 0
        %3226 = vmatpush1.bf16.msra.mxu0 %v3218
        %3227 = vmatprep.subr.bf16.mxu0 0
        %3228 = vmatpush1.bf16.msra.mxu0 %v3219
        %3229 = vmatprep.subr.bf16.mxu0 0
        %3230 = vmatpush1.bf16.msra.mxu0 %v3220
        %3231 = vmatprep.subr.bf16.mxu0 0
        %3232 = vmatpush1.bf16.msra.mxu0 0
        %3233 = vmatprep.subr.bf16.mxu0 0
        %3234 = vmatpush1.bf16.msra.mxu0 0
        %3235 = vmatprep.subr.bf16.mxu0 0
        %3236 = vmatpush1.bf16.msra.mxu0 0
        %3237 = vmatprep.subr.bf16.mxu0 0
        %3238 = vmatpush1.bf16.msra.mxu0 0
        %3239 = vmatprep.subr.bf16.mxu0 0
        %3240 = vmatpush1.bf16.msra.mxu0 0
        %3241 = vmatprep.subr.bf16.mxu0 0
        %3242 = vmatpush1.bf16.msra.mxu0 0
        %3243 = vmatprep.subr.bf16.mxu0 0
        %3244 = vmatpush1.bf16.msra.mxu0 0
        %3245 = vmatprep.subr.bf16.mxu0 0
        %3246 = vmatpush1.bf16.msra.mxu0 0
        %3247 = vmatprep.subr.bf16.mxu0 0
        %3248 = vmatpush1.bf16.msra.mxu0 0
        %3249 = vmatprep.subr.bf16.mxu0 0
        %3250 = vmatpush1.bf16.msra.mxu0 0
        %3251 = vmatprep.subr.bf16.mxu0 0
        %3252 = vmatpush1.bf16.msra.mxu0 0
        %3253 = vmatprep.mubr.bf16.mxu0 0
        %3254 = vmatmul.mubr.bf16.gmra.mrb[0].mxu0 %v2547
        %v3255 = vpop.f32.mrb[0].mxu0
        %v3256 = vadd.f32 %v2533, %v3255
        %v3257 = vpop.f32.mrb[0].mxu0
        %v3258 = vpop.f32.mrb[0].mxu0
        %v3259 = vadd.f32 %v2538, %v3258
        %v3260 = vpop.f32.mrb[0].mxu0
        %3261 = vdwg.mxu0
        %v3262 = vpack.c.bf16 %v3259, %v3256
        %3263 = vst [vmem:[#allocation4 + $0x78] sm:$0xff] %v3262
        %v3264 = vld [vmem:[#allocation3 + $0x78] sm:$0xff]
        %v3265 = vld [vmem:[#allocation3 + $0x80] sm:$0xff]
        %v3266 = vld [vmem:[#allocation3 + $0x88] sm:$0xff]
        %v3267 = vld [vmem:[#allocation3 + $0x90] sm:$0xff]
        %v3268 = vld [vmem:[#allocation3 + $0x98] sm:$0xff]
        %3269 = vmatprep.subr.bf16.mxu0 0
        %3270 = vmatpush1.bf16.msra.mxu0 %v3264
        %3271 = vmatprep.subr.bf16.mxu0 0
        %3272 = vmatpush1.bf16.msra.mxu0 %v3265
        %3273 = vmatprep.subr.bf16.mxu0 0
        %3274 = vmatpush1.bf16.msra.mxu0 %v3266
        %3275 = vmatprep.subr.bf16.mxu0 0
        %3276 = vmatpush1.bf16.msra.mxu0 %v3267
        %3277 = vmatprep.subr.bf16.mxu0 0
        %3278 = vmatpush1.bf16.msra.mxu0 %v3268
        %3279 = vmatprep.subr.bf16.mxu0 0
        %3280 = vmatpush1.bf16.msra.mxu0 0
        %3281 = vmatprep.subr.bf16.mxu0 0
        %3282 = vmatpush1.bf16.msra.mxu0 0
        %3283 = vmatprep.subr.bf16.mxu0 0
        %3284 = vmatpush1.bf16.msra.mxu0 0
        %3285 = vmatprep.subr.bf16.mxu0 0
        %3286 = vmatpush1.bf16.msra.mxu0 0
        %3287 = vmatprep.subr.bf16.mxu0 0
        %3288 = vmatpush1.bf16.msra.mxu0 0
        %3289 = vmatprep.subr.bf16.mxu0 0
        %3290 = vmatpush1.bf16.msra.mxu0 0
        %3291 = vmatprep.subr.bf16.mxu0 0
        %3292 = vmatpush1.bf16.msra.mxu0 0
        %3293 = vmatprep.subr.bf16.mxu0 0
        %3294 = vmatpush1.bf16.msra.mxu0 0
        %3295 = vmatprep.subr.bf16.mxu0 0
        %3296 = vmatpush1.bf16.msra.mxu0 0
        %3297 = vmatprep.subr.bf16.mxu0 0
        %3298 = vmatpush1.bf16.msra.mxu0 0
        %3299 = vmatprep.subr.bf16.mxu0 0
        %3300 = vmatpush1.bf16.msra.mxu0 0
        %3301 = vmatprep.mubr.bf16.mxu0 0
        %3302 = vmatmul.mubr.bf16.gmra.mrb[0].mxu0 %v2547
        %v3303 = vpop.f32.mrb[0].mxu0
        %v3304 = vadd.f32 %v2533, %v3303
        %v3305 = vpop.f32.mrb[0].mxu0
        %v3306 = vpop.f32.mrb[0].mxu0
        %v3307 = vadd.f32 %v2538, %v3306
        %v3308 = vpop.f32.mrb[0].mxu0
        %3309 = vdwg.mxu0
        %v3310 = vpack.c.bf16 %v3307, %v3304
        %3311 = vst [vmem:[#allocation4 + $0x80] sm:$0xff] %v3310
        %v3312 = vld [vmem:[#allocation3 + $0x80] sm:$0xff]
        %v3313 = vld [vmem:[#allocation3 + $0x88] sm:$0xff]
        %v3314 = vld [vmem:[#allocation3 + $0x90] sm:$0xff]
        %v3315 = vld [vmem:[#allocation3 + $0x98] sm:$0xff]
        %v3316 = vld [vmem:[#allocation3 + $0xa0] sm:$0xff]
        %3317 = vmatprep.subr.bf16.mxu0 0
        %3318 = vmatpush1.bf16.msra.mxu0 %v3312
        %3319 = vmatprep.subr.bf16.mxu0 0
        %3320 = vmatpush1.bf16.msra.mxu0 %v3313
        %3321 = vmatprep.subr.bf16.mxu0 0
        %3322 = vmatpush1.bf16.msra.mxu0 %v3314
        %3323 = vmatprep.subr.bf16.mxu0 0
        %3324 = vmatpush1.bf16.msra.mxu0 %v3315
        %3325 = vmatprep.subr.bf16.mxu0 0
        %3326 = vmatpush1.bf16.msra.mxu0 %v3316
        %3327 = vmatprep.subr.bf16.mxu0 0
        %3328 = vmatpush1.bf16.msra.mxu0 0
        %3329 = vmatprep.subr.bf16.mxu0 0
        %3330 = vmatpush1.bf16.msra.mxu0 0
        %3331 = vmatprep.subr.bf16.mxu0 0
        %3332 = vmatpush1.bf16.msra.mxu0 0
        %3333 = vmatprep.subr.bf16.mxu0 0
        %3334 = vmatpush1.bf16.msra.mxu0 0
        %3335 = vmatprep.subr.bf16.mxu0 0
        %3336 = vmatpush1.bf16.msra.mxu0 0
        %3337 = vmatprep.subr.bf16.mxu0 0
        %3338 = vmatpush1.bf16.msra.mxu0 0
        %3339 = vmatprep.subr.bf16.mxu0 0
        %3340 = vmatpush1.bf16.msra.mxu0 0
        %3341 = vmatprep.subr.bf16.mxu0 0
        %3342 = vmatpush1.bf16.msra.mxu0 0
        %3343 = vmatprep.subr.bf16.mxu0 0
        %3344 = vmatpush1.bf16.msra.mxu0 0
        %3345 = vmatprep.subr.bf16.mxu0 0
        %3346 = vmatpush1.bf16.msra.mxu0 0
        %3347 = vmatprep.subr.bf16.mxu0 0
        %3348 = vmatpush1.bf16.msra.mxu0 0
        %3349 = vmatprep.mubr.bf16.mxu0 0
        %3350 = vmatmul.mubr.bf16.gmra.mrb[0].mxu0 %v2547
        %v3351 = vpop.f32.mrb[0].mxu0
        %v3352 = vadd.f32 %v2533, %v3351
        %v3353 = vpop.f32.mrb[0].mxu0
        %v3354 = vpop.f32.mrb[0].mxu0
        %v3355 = vadd.f32 %v2538, %v3354
        %v3356 = vpop.f32.mrb[0].mxu0
        %3357 = vdwg.mxu0
        %v3358 = vpack.c.bf16 %v3355, %v3352
        %3359 = vst [vmem:[#allocation4 + $0x88] sm:$0xff] %v3358
        %v3360 = vld [vmem:[#allocation3 + $0x88] sm:$0xff]
        %v3361 = vld [vmem:[#allocation3 + $0x90] sm:$0xff]
        %v3362 = vld [vmem:[#allocation3 + $0x98] sm:$0xff]
        %v3363 = vld [vmem:[#allocation3 + $0xa0] sm:$0xff]
        %v3364 = vld [vmem:[#allocation3 + $0xa8] sm:$0xff]
        %3365 = vmatprep.subr.bf16.mxu0 0
        %3366 = vmatpush1.bf16.msra.mxu0 %v3360
        %3367 = vmatprep.subr.bf16.mxu0 0
        %3368 = vmatpush1.bf16.msra.mxu0 %v3361
        %3369 = vmatprep.subr.bf16.mxu0 0
        %3370 = vmatpush1.bf16.msra.mxu0 %v3362
        %3371 = vmatprep.subr.bf16.mxu0 0
        %3372 = vmatpush1.bf16.msra.mxu0 %v3363
        %3373 = vmatprep.subr.bf16.mxu0 0
        %3374 = vmatpush1.bf16.msra.mxu0 %v3364
        %3375 = vmatprep.subr.bf16.mxu0 0
        %3376 = vmatpush1.bf16.msra.mxu0 0
        %3377 = vmatprep.subr.bf16.mxu0 0
        %3378 = vmatpush1.bf16.msra.mxu0 0
        %3379 = vmatprep.subr.bf16.mxu0 0
        %3380 = vmatpush1.bf16.msra.mxu0 0
        %3381 = vmatprep.subr.bf16.mxu0 0
        %3382 = vmatpush1.bf16.msra.mxu0 0
        %3383 = vmatprep.subr.bf16.mxu0 0
        %3384 = vmatpush1.bf16.msra.mxu0 0
        %3385 = vmatprep.subr.bf16.mxu0 0
        %3386 = vmatpush1.bf16.msra.mxu0 0
        %3387 = vmatprep.subr.bf16.mxu0 0
        %3388 = vmatpush1.bf16.msra.mxu0 0
        %3389 = vmatprep.subr.bf16.mxu0 0
        %3390 = vmatpush1.bf16.msra.mxu0 0
        %3391 = vmatprep.subr.bf16.mxu0 0
        %3392 = vmatpush1.bf16.msra.mxu0 0
        %3393 = vmatprep.subr.bf16.mxu0 0
        %3394 = vmatpush1.bf16.msra.mxu0 0
        %3395 = vmatprep.subr.bf16.mxu0 0
        %3396 = vmatpush1.bf16.msra.mxu0 0
        %3397 = vmatprep.mubr.bf16.mxu0 0
        %3398 = vmatmul.mubr.bf16.gmra.mrb[0].mxu0 %v2547
        %v3399 = vpop.f32.mrb[0].mxu0
        %v3400 = vadd.f32 %v2533, %v3399
        %v3401 = vpop.f32.mrb[0].mxu0
        %v3402 = vpop.f32.mrb[0].mxu0
        %v3403 = vadd.f32 %v2538, %v3402
        %v3404 = vpop.f32.mrb[0].mxu0
        %3405 = vdwg.mxu0
        %v3406 = vpack.c.bf16 %v3403, %v3400
        %3407 = vst [vmem:[#allocation4 + $0x90] sm:$0xff] %v3406
        %v3408 = vld [vmem:[#allocation3 + $0x90] sm:$0xff]
        %v3409 = vld [vmem:[#allocation3 + $0x98] sm:$0xff]
        %v3410 = vld [vmem:[#allocation3 + $0xa0] sm:$0xff]
        %v3411 = vld [vmem:[#allocation3 + $0xa8] sm:$0xff]
        %v3412 = vld [vmem:[#allocation3 + $0xb0] sm:$0xff]
        %3413 = vmatprep.subr.bf16.mxu0 0
        %3414 = vmatpush1.bf16.msra.mxu0 %v3408
        %3415 = vmatprep.subr.bf16.mxu0 0
        %3416 = vmatpush1.bf16.msra.mxu0 %v3409
        %3417 = vmatprep.subr.bf16.mxu0 0
        %3418 = vmatpush1.bf16.msra.mxu0 %v3410
        %3419 = vmatprep.subr.bf16.mxu0 0
        %3420 = vmatpush1.bf16.msra.mxu0 %v3411
        %3421 = vmatprep.subr.bf16.mxu0 0
        %3422 = vmatpush1.bf16.msra.mxu0 %v3412
        %3423 = vmatprep.subr.bf16.mxu0 0
        %3424 = vmatpush1.bf16.msra.mxu0 0
        %3425 = vmatprep.subr.bf16.mxu0 0
        %3426 = vmatpush1.bf16.msra.mxu0 0
        %3427 = vmatprep.subr.bf16.mxu0 0
        %3428 = vmatpush1.bf16.msra.mxu0 0
        %3429 = vmatprep.subr.bf16.mxu0 0
        %3430 = vmatpush1.bf16.msra.mxu0 0
        %3431 = vmatprep.subr.bf16.mxu0 0
        %3432 = vmatpush1.bf16.msra.mxu0 0
        %3433 = vmatprep.subr.bf16.mxu0 0
        %3434 = vmatpush1.bf16.msra.mxu0 0
        %3435 = vmatprep.subr.bf16.mxu0 0
        %3436 = vmatpush1.bf16.msra.mxu0 0
        %3437 = vmatprep.subr.bf16.mxu0 0
        %3438 = vmatpush1.bf16.msra.mxu0 0
        %3439 = vmatprep.subr.bf16.mxu0 0
        %3440 = vmatpush1.bf16.msra.mxu0 0
        %3441 = vmatprep.subr.bf16.mxu0 0
        %3442 = vmatpush1.bf16.msra.mxu0 0
        %3443 = vmatprep.subr.bf16.mxu0 0
        %3444 = vmatpush1.bf16.msra.mxu0 0
        %3445 = vmatprep.mubr.bf16.mxu0 0
        %3446 = vmatmul.mubr.bf16.gmra.mrb[0].mxu0 %v2547
        %v3447 = vpop.f32.mrb[0].mxu0
        %v3448 = vadd.f32 %v2533, %v3447
        %v3449 = vpop.f32.mrb[0].mxu0
        %v3450 = vpop.f32.mrb[0].mxu0
        %v3451 = vadd.f32 %v2538, %v3450
        %v3452 = vpop.f32.mrb[0].mxu0
        %3453 = vdwg.mxu0
        %v3454 = vpack.c.bf16 %v3451, %v3448
        %3455 = vst [vmem:[#allocation4 + $0x98] sm:$0xff] %v3454
        %v3456 = vld [vmem:[#allocation3 + $0x98] sm:$0xff]
        %v3457 = vld [vmem:[#allocation3 + $0xa0] sm:$0xff]
        %v3458 = vld [vmem:[#allocation3 + $0xa8] sm:$0xff]
        %v3459 = vld [vmem:[#allocation3 + $0xb0] sm:$0xff]
        %v3460 = vld [vmem:[#allocation3 + $0xb8] sm:$0xff]
        %3461 = vmatprep.subr.bf16.mxu0 0
        %3462 = vmatpush1.bf16.msra.mxu0 %v3456
        %3463 = vmatprep.subr.bf16.mxu0 0
        %3464 = vmatpush1.bf16.msra.mxu0 %v3457
        %3465 = vmatprep.subr.bf16.mxu0 0
        %3466 = vmatpush1.bf16.msra.mxu0 %v3458
        %3467 = vmatprep.subr.bf16.mxu0 0
        %3468 = vmatpush1.bf16.msra.mxu0 %v3459
        %3469 = vmatprep.subr.bf16.mxu0 0
        %3470 = vmatpush1.bf16.msra.mxu0 %v3460
        %3471 = vmatprep.subr.bf16.mxu0 0
        %3472 = vmatpush1.bf16.msra.mxu0 0
        %3473 = vmatprep.subr.bf16.mxu0 0
        %3474 = vmatpush1.bf16.msra.mxu0 0
        %3475 = vmatprep.subr.bf16.mxu0 0
        %3476 = vmatpush1.bf16.msra.mxu0 0
        %3477 = vmatprep.subr.bf16.mxu0 0
        %3478 = vmatpush1.bf16.msra.mxu0 0
        %3479 = vmatprep.subr.bf16.mxu0 0
        %3480 = vmatpush1.bf16.msra.mxu0 0
        %3481 = vmatprep.subr.bf16.mxu0 0
        %3482 = vmatpush1.bf16.msra.mxu0 0
        %3483 = vmatprep.subr.bf16.mxu0 0
        %3484 = vmatpush1.bf16.msra.mxu0 0
        %3485 = vmatprep.subr.bf16.mxu0 0
        %3486 = vmatpush1.bf16.msra.mxu0 0
        %3487 = vmatprep.subr.bf16.mxu0 0
        %3488 = vmatpush1.bf16.msra.mxu0 0
        %3489 = vmatprep.subr.bf16.mxu0 0
        %3490 = vmatpush1.bf16.msra.mxu0 0
        %3491 = vmatprep.subr.bf16.mxu0 0
        %3492 = vmatpush1.bf16.msra.mxu0 0
        %3493 = vmatprep.mubr.bf16.mxu0 0
        %3494 = vmatmul.mubr.bf16.gmra.mrb[0].mxu0 %v2547
        %v3495 = vpop.f32.mrb[0].mxu0
        %v3496 = vadd.f32 %v2533, %v3495
        %v3497 = vpop.f32.mrb[0].mxu0
        %v3498 = vpop.f32.mrb[0].mxu0
        %v3499 = vadd.f32 %v2538, %v3498
        %v3500 = vpop.f32.mrb[0].mxu0
        %3501 = vdwg.mxu0
        %v3502 = vpack.c.bf16 %v3499, %v3496
        %3503 = vst [vmem:[#allocation4 + $0xa0] sm:$0xff] %v3502
        %v3504 = vld [vmem:[#allocation3 + $0xa0] sm:$0xff]
        %v3505 = vld [vmem:[#allocation3 + $0xa8] sm:$0xff]
        %v3506 = vld [vmem:[#allocation3 + $0xb0] sm:$0xff]
        %v3507 = vld [vmem:[#allocation3 + $0xb8] sm:$0xff]
        %v3508 = vld [vmem:[#allocation3 + $0xc0] sm:$0xff]
        %3509 = vmatprep.subr.bf16.mxu0 0
        %3510 = vmatpush1.bf16.msra.mxu0 %v3504
        %3511 = vmatprep.subr.bf16.mxu0 0
        %3512 = vmatpush1.bf16.msra.mxu0 %v3505
        %3513 = vmatprep.subr.bf16.mxu0 0
        %3514 = vmatpush1.bf16.msra.mxu0 %v3506
        %3515 = vmatprep.subr.bf16.mxu0 0
        %3516 = vmatpush1.bf16.msra.mxu0 %v3507
        %3517 = vmatprep.subr.bf16.mxu0 0
        %3518 = vmatpush1.bf16.msra.mxu0 %v3508
        %3519 = vmatprep.subr.bf16.mxu0 0
        %3520 = vmatpush1.bf16.msra.mxu0 0
        %3521 = vmatprep.subr.bf16.mxu0 0
        %3522 = vmatpush1.bf16.msra.mxu0 0
        %3523 = vmatprep.subr.bf16.mxu0 0
        %3524 = vmatpush1.bf16.msra.mxu0 0
        %3525 = vmatprep.subr.bf16.mxu0 0
        %3526 = vmatpush1.bf16.msra.mxu0 0
        %3527 = vmatprep.subr.bf16.mxu0 0
        %3528 = vmatpush1.bf16.msra.mxu0 0
        %3529 = vmatprep.subr.bf16.mxu0 0
        %3530 = vmatpush1.bf16.msra.mxu0 0
        %3531 = vmatprep.subr.bf16.mxu0 0
        %3532 = vmatpush1.bf16.msra.mxu0 0
        %3533 = vmatprep.subr.bf16.mxu0 0
        %3534 = vmatpush1.bf16.msra.mxu0 0
        %3535 = vmatprep.subr.bf16.mxu0 0
        %3536 = vmatpush1.bf16.msra.mxu0 0
        %3537 = vmatprep.subr.bf16.mxu0 0
        %3538 = vmatpush1.bf16.msra.mxu0 0
        %3539 = vmatprep.subr.bf16.mxu0 0
        %3540 = vmatpush1.bf16.msra.mxu0 0
        %3541 = vmatprep.mubr.bf16.mxu0 0
        %3542 = vmatmul.mubr.bf16.gmra.mrb[0].mxu0 %v2547
        %v3543 = vpop.f32.mrb[0].mxu0
        %v3544 = vadd.f32 %v2533, %v3543
        %v3545 = vpop.f32.mrb[0].mxu0
        %v3546 = vpop.f32.mrb[0].mxu0
        %v3547 = vadd.f32 %v2538, %v3546
        %v3548 = vpop.f32.mrb[0].mxu0
        %3549 = vdwg.mxu0
        %v3550 = vpack.c.bf16 %v3547, %v3544
        %3551 = vst [vmem:[#allocation4 + $0xa8] sm:$0xff] %v3550
        %v3552 = vld [vmem:[#allocation3 + $0xa8] sm:$0xff]
        %v3553 = vld [vmem:[#allocation3 + $0xb0] sm:$0xff]
        %v3554 = vld [vmem:[#allocation3 + $0xb8] sm:$0xff]
        %v3555 = vld [vmem:[#allocation3 + $0xc0] sm:$0xff]
        %v3556 = vld [vmem:[#allocation3 + $0xc8] sm:$0xff]
        %3557 = vmatprep.subr.bf16.mxu0 0
        %3558 = vmatpush1.bf16.msra.mxu0 %v3552
        %3559 = vmatprep.subr.bf16.mxu0 0
        %3560 = vmatpush1.bf16.msra.mxu0 %v3553
        %3561 = vmatprep.subr.bf16.mxu0 0
        %3562 = vmatpush1.bf16.msra.mxu0 %v3554
        %3563 = vmatprep.subr.bf16.mxu0 0
        %3564 = vmatpush1.bf16.msra.mxu0 %v3555
        %3565 = vmatprep.subr.bf16.mxu0 0
        %3566 = vmatpush1.bf16.msra.mxu0 %v3556
        %3567 = vmatprep.subr.bf16.mxu0 0
        %3568 = vmatpush1.bf16.msra.mxu0 0
        %3569 = vmatprep.subr.bf16.mxu0 0
        %3570 = vmatpush1.bf16.msra.mxu0 0
        %3571 = vmatprep.subr.bf16.mxu0 0
        %3572 = vmatpush1.bf16.msra.mxu0 0
        %3573 = vmatprep.subr.bf16.mxu0 0
        %3574 = vmatpush1.bf16.msra.mxu0 0
        %3575 = vmatprep.subr.bf16.mxu0 0
        %3576 = vmatpush1.bf16.msra.mxu0 0
        %3577 = vmatprep.subr.bf16.mxu0 0
        %3578 = vmatpush1.bf16.msra.mxu0 0
        %3579 = vmatprep.subr.bf16.mxu0 0
        %3580 = vmatpush1.bf16.msra.mxu0 0
        %3581 = vmatprep.subr.bf16.mxu0 0
        %3582 = vmatpush1.bf16.msra.mxu0 0
        %3583 = vmatprep.subr.bf16.mxu0 0
        %3584 = vmatpush1.bf16.msra.mxu0 0
        %3585 = vmatprep.subr.bf16.mxu0 0
        %3586 = vmatpush1.bf16.msra.mxu0 0
        %3587 = vmatprep.subr.bf16.mxu0 0
        %3588 = vmatpush1.bf16.msra.mxu0 0
        %3589 = vmatprep.mubr.bf16.mxu0 0
        %3590 = vmatmul.mubr.bf16.gmra.mrb[0].mxu0 %v2547
        %v3591 = vpop.f32.mrb[0].mxu0
        %v3592 = vadd.f32 %v2533, %v3591
        %v3593 = vpop.f32.mrb[0].mxu0
        %v3594 = vpop.f32.mrb[0].mxu0
        %v3595 = vadd.f32 %v2538, %v3594
        %v3596 = vpop.f32.mrb[0].mxu0
        %3597 = vdwg.mxu0
        %v3598 = vpack.c.bf16 %v3595, %v3592
        %3599 = vst [vmem:[#allocation4 + $0xb0] sm:$0xff] %v3598
        %v3600 = vld [vmem:[#allocation3 + $0xb0] sm:$0xff]
        %v3601 = vld [vmem:[#allocation3 + $0xb8] sm:$0xff]
        %v3602 = vld [vmem:[#allocation3 + $0xc0] sm:$0xff]
        %v3603 = vld [vmem:[#allocation3 + $0xc8] sm:$0xff]
        %v3604 = vld [vmem:[#allocation3 + $0xd0] sm:$0xff]
        %3605 = vmatprep.subr.bf16.mxu0 0
        %3606 = vmatpush1.bf16.msra.mxu0 %v3600
        %3607 = vmatprep.subr.bf16.mxu0 0
        %3608 = vmatpush1.bf16.msra.mxu0 %v3601
        %3609 = vmatprep.subr.bf16.mxu0 0
        %3610 = vmatpush1.bf16.msra.mxu0 %v3602
        %3611 = vmatprep.subr.bf16.mxu0 0
        %3612 = vmatpush1.bf16.msra.mxu0 %v3603
        %3613 = vmatprep.subr.bf16.mxu0 0
        %3614 = vmatpush1.bf16.msra.mxu0 %v3604
        %3615 = vmatprep.subr.bf16.mxu0 0
        %3616 = vmatpush1.bf16.msra.mxu0 0
        %3617 = vmatprep.subr.bf16.mxu0 0
        %3618 = vmatpush1.bf16.msra.mxu0 0
        %3619 = vmatprep.subr.bf16.mxu0 0
        %3620 = vmatpush1.bf16.msra.mxu0 0
        %3621 = vmatprep.subr.bf16.mxu0 0
        %3622 = vmatpush1.bf16.msra.mxu0 0
        %3623 = vmatprep.subr.bf16.mxu0 0
        %3624 = vmatpush1.bf16.msra.mxu0 0
        %3625 = vmatprep.subr.bf16.mxu0 0
        %3626 = vmatpush1.bf16.msra.mxu0 0
        %3627 = vmatprep.subr.bf16.mxu0 0
        %3628 = vmatpush1.bf16.msra.mxu0 0
        %3629 = vmatprep.subr.bf16.mxu0 0
        %3630 = vmatpush1.bf16.msra.mxu0 0
        %3631 = vmatprep.subr.bf16.mxu0 0
        %3632 = vmatpush1.bf16.msra.mxu0 0
        %3633 = vmatprep.subr.bf16.mxu0 0
        %3634 = vmatpush1.bf16.msra.mxu0 0
        %3635 = vmatprep.subr.bf16.mxu0 0
        %3636 = vmatpush1.bf16.msra.mxu0 0
        %3637 = vmatprep.mubr.bf16.mxu0 0
        %3638 = vmatmul.mubr.bf16.gmra.mrb[0].mxu0 %v2547
        %v3639 = vpop.f32.mrb[0].mxu0
        %v3640 = vadd.f32 %v2533, %v3639
        %v3641 = vpop.f32.mrb[0].mxu0
        %v3642 = vpop.f32.mrb[0].mxu0
        %v3643 = vadd.f32 %v2538, %v3642
        %v3644 = vpop.f32.mrb[0].mxu0
        %3645 = vdwg.mxu0
        %v3646 = vpack.c.bf16 %v3643, %v3640
        %3647 = vst [vmem:[#allocation4 + $0xb8] sm:$0xff] %v3646
        %v3648 = vld [vmem:[#allocation3 + $0xb8] sm:$0xff]
        %v3649 = vld [vmem:[#allocation3 + $0xc0] sm:$0xff]
        %v3650 = vld [vmem:[#allocation3 + $0xc8] sm:$0xff]
        %v3651 = vld [vmem:[#allocation3 + $0xd0] sm:$0xff]
        %v3652 = vld [vmem:[#allocation3 + $0xd8] sm:$0xff]
        %3653 = vmatprep.subr.bf16.mxu0 0
        %3654 = vmatpush1.bf16.msra.mxu0 %v3648
        %3655 = vmatprep.subr.bf16.mxu0 0
        %3656 = vmatpush1.bf16.msra.mxu0 %v3649
        %3657 = vmatprep.subr.bf16.mxu0 0
        %3658 = vmatpush1.bf16.msra.mxu0 %v3650
        %3659 = vmatprep.subr.bf16.mxu0 0
        %3660 = vmatpush1.bf16.msra.mxu0 %v3651
        %3661 = vmatprep.subr.bf16.mxu0 0
        %3662 = vmatpush1.bf16.msra.mxu0 %v3652
        %3663 = vmatprep.subr.bf16.mxu0 0
        %3664 = vmatpush1.bf16.msra.mxu0 0
        %3665 = vmatprep.subr.bf16.mxu0 0
        %3666 = vmatpush1.bf16.msra.mxu0 0
        %3667 = vmatprep.subr.bf16.mxu0 0
        %3668 = vmatpush1.bf16.msra.mxu0 0
        %3669 = vmatprep.subr.bf16.mxu0 0
        %3670 = vmatpush1.bf16.msra.mxu0 0
        %3671 = vmatprep.subr.bf16.mxu0 0
        %3672 = vmatpush1.bf16.msra.mxu0 0
        %3673 = vmatprep.subr.bf16.mxu0 0
        %3674 = vmatpush1.bf16.msra.mxu0 0
        %3675 = vmatprep.subr.bf16.mxu0 0
        %3676 = vmatpush1.bf16.msra.mxu0 0
        %3677 = vmatprep.subr.bf16.mxu0 0
        %3678 = vmatpush1.bf16.msra.mxu0 0
        %3679 = vmatprep.subr.bf16.mxu0 0
        %3680 = vmatpush1.bf16.msra.mxu0 0
        %3681 = vmatprep.subr.bf16.mxu0 0
        %3682 = vmatpush1.bf16.msra.mxu0 0
        %3683 = vmatprep.subr.bf16.mxu0 0
        %3684 = vmatpush1.bf16.msra.mxu0 0
        %3685 = vmatprep.mubr.bf16.mxu0 0
        %3686 = vmatmul.mubr.bf16.gmra.mrb[0].mxu0 %v2547
        %v3687 = vpop.f32.mrb[0].mxu0
        %v3688 = vadd.f32 %v2533, %v3687
        %v3689 = vpop.f32.mrb[0].mxu0
        %v3690 = vpop.f32.mrb[0].mxu0
        %v3691 = vadd.f32 %v2538, %v3690
        %v3692 = vpop.f32.mrb[0].mxu0
        %3693 = vdwg.mxu0
        %v3694 = vpack.c.bf16 %v3691, %v3688
        %3695 = vst [vmem:[#allocation4 + $0xc0] sm:$0xff] %v3694
        %v3696 = vld [vmem:[#allocation3 + $0xc0] sm:$0xff]
        %v3697 = vld [vmem:[#allocation3 + $0xc8] sm:$0xff]
        %v3698 = vld [vmem:[#allocation3 + $0xd0] sm:$0xff]
        %v3699 = vld [vmem:[#allocation3 + $0xd8] sm:$0xff]
        %v3700 = vld [vmem:[#allocation3 + $0xe0] sm:$0xff]
        %3701 = vmatprep.subr.bf16.mxu0 0
        %3702 = vmatpush1.bf16.msra.mxu0 %v3696
        %3703 = vmatprep.subr.bf16.mxu0 0
        %3704 = vmatpush1.bf16.msra.mxu0 %v3697
        %3705 = vmatprep.subr.bf16.mxu0 0
        %3706 = vmatpush1.bf16.msra.mxu0 %v3698
        %3707 = vmatprep.subr.bf16.mxu0 0
        %3708 = vmatpush1.bf16.msra.mxu0 %v3699
        %3709 = vmatprep.subr.bf16.mxu0 0
        %3710 = vmatpush1.bf16.msra.mxu0 %v3700
        %3711 = vmatprep.subr.bf16.mxu0 0
        %3712 = vmatpush1.bf16.msra.mxu0 0
        %3713 = vmatprep.subr.bf16.mxu0 0
        %3714 = vmatpush1.bf16.msra.mxu0 0
        %3715 = vmatprep.subr.bf16.mxu0 0
        %3716 = vmatpush1.bf16.msra.mxu0 0
        %3717 = vmatprep.subr.bf16.mxu0 0
        %3718 = vmatpush1.bf16.msra.mxu0 0
        %3719 = vmatprep.subr.bf16.mxu0 0
        %3720 = vmatpush1.bf16.msra.mxu0 0
        %3721 = vmatprep.subr.bf16.mxu0 0
        %3722 = vmatpush1.bf16.msra.mxu0 0
        %3723 = vmatprep.subr.bf16.mxu0 0
        %3724 = vmatpush1.bf16.msra.mxu0 0
        %3725 = vmatprep.subr.bf16.mxu0 0
        %3726 = vmatpush1.bf16.msra.mxu0 0
        %3727 = vmatprep.subr.bf16.mxu0 0
        %3728 = vmatpush1.bf16.msra.mxu0 0
        %3729 = vmatprep.subr.bf16.mxu0 0
        %3730 = vmatpush1.bf16.msra.mxu0 0
        %3731 = vmatprep.subr.bf16.mxu0 0
        %3732 = vmatpush1.bf16.msra.mxu0 0
        %3733 = vmatprep.mubr.bf16.mxu0 0
        %3734 = vmatmul.mubr.bf16.gmra.mrb[0].mxu0 %v2547
        %v3735 = vpop.f32.mrb[0].mxu0
        %v3736 = vadd.f32 %v2533, %v3735
        %v3737 = vpop.f32.mrb[0].mxu0
        %v3738 = vpop.f32.mrb[0].mxu0
        %v3739 = vadd.f32 %v2538, %v3738
        %v3740 = vpop.f32.mrb[0].mxu0
        %3741 = vdwg.mxu0
        %v3742 = vpack.c.bf16 %v3739, %v3736
        %3743 = vst [vmem:[#allocation4 + $0xc8] sm:$0xff] %v3742
        %v3744 = vld [vmem:[#allocation3 + $0xc8] sm:$0xff]
        %v3745 = vld [vmem:[#allocation3 + $0xd0] sm:$0xff]
        %v3746 = vld [vmem:[#allocation3 + $0xd8] sm:$0xff]
        %v3747 = vld [vmem:[#allocation3 + $0xe0] sm:$0xff]
        %v3748 = vld [vmem:[#allocation3 + $0xe8] sm:$0xff]
        %3749 = vmatprep.subr.bf16.mxu0 0
        %3750 = vmatpush1.bf16.msra.mxu0 %v3744
        %3751 = vmatprep.subr.bf16.mxu0 0
        %3752 = vmatpush1.bf16.msra.mxu0 %v3745
        %3753 = vmatprep.subr.bf16.mxu0 0
        %3754 = vmatpush1.bf16.msra.mxu0 %v3746
        %3755 = vmatprep.subr.bf16.mxu0 0
        %3756 = vmatpush1.bf16.msra.mxu0 %v3747
        %3757 = vmatprep.subr.bf16.mxu0 0
        %3758 = vmatpush1.bf16.msra.mxu0 %v3748
        %3759 = vmatprep.subr.bf16.mxu0 0
        %3760 = vmatpush1.bf16.msra.mxu0 0
        %3761 = vmatprep.subr.bf16.mxu0 0
        %3762 = vmatpush1.bf16.msra.mxu0 0
        %3763 = vmatprep.subr.bf16.mxu0 0
        %3764 = vmatpush1.bf16.msra.mxu0 0
        %3765 = vmatprep.subr.bf16.mxu0 0
        %3766 = vmatpush1.bf16.msra.mxu0 0
        %3767 = vmatprep.subr.bf16.mxu0 0
        %3768 = vmatpush1.bf16.msra.mxu0 0
        %3769 = vmatprep.subr.bf16.mxu0 0
        %3770 = vmatpush1.bf16.msra.mxu0 0
        %3771 = vmatprep.subr.bf16.mxu0 0
        %3772 = vmatpush1.bf16.msra.mxu0 0
        %3773 = vmatprep.subr.bf16.mxu0 0
        %3774 = vmatpush1.bf16.msra.mxu0 0
        %3775 = vmatprep.subr.bf16.mxu0 0
        %3776 = vmatpush1.bf16.msra.mxu0 0
        %3777 = vmatprep.subr.bf16.mxu0 0
        %3778 = vmatpush1.bf16.msra.mxu0 0
        %3779 = vmatprep.subr.bf16.mxu0 0
        %3780 = vmatpush1.bf16.msra.mxu0 0
        %3781 = vmatprep.mubr.bf16.mxu0 0
        %3782 = vmatmul.mubr.bf16.gmra.mrb[0].mxu0 %v2547
        %v3783 = vpop.f32.mrb[0].mxu0
        %v3784 = vadd.f32 %v2533, %v3783
        %v3785 = vpop.f32.mrb[0].mxu0
        %v3786 = vpop.f32.mrb[0].mxu0
        %v3787 = vadd.f32 %v2538, %v3786
        %v3788 = vpop.f32.mrb[0].mxu0
        %3789 = vdwg.mxu0
        %v3790 = vpack.c.bf16 %v3787, %v3784
        %3791 = vst [vmem:[#allocation4 + $0xd0] sm:$0xff] %v3790
        %v3792 = vld [vmem:[#allocation3 + $0xd0] sm:$0xff]
        %v3793 = vld [vmem:[#allocation3 + $0xd8] sm:$0xff]
        %v3794 = vld [vmem:[#allocation3 + $0xe0] sm:$0xff]
        %v3795 = vld [vmem:[#allocation3 + $0xe8] sm:$0xff]
        %v3796 = vld [vmem:[#allocation3 + $0xf0] sm:$0xff]
        %3797 = vmatprep.subr.bf16.mxu0 0
        %3798 = vmatpush1.bf16.msra.mxu0 %v3792
        %3799 = vmatprep.subr.bf16.mxu0 0
        %3800 = vmatpush1.bf16.msra.mxu0 %v3793
        %3801 = vmatprep.subr.bf16.mxu0 0
        %3802 = vmatpush1.bf16.msra.mxu0 %v3794
        %3803 = vmatprep.subr.bf16.mxu0 0
        %3804 = vmatpush1.bf16.msra.mxu0 %v3795
        %3805 = vmatprep.subr.bf16.mxu0 0
        %3806 = vmatpush1.bf16.msra.mxu0 %v3796
        %3807 = vmatprep.subr.bf16.mxu0 0
        %3808 = vmatpush1.bf16.msra.mxu0 0
        %3809 = vmatprep.subr.bf16.mxu0 0
        %3810 = vmatpush1.bf16.msra.mxu0 0
        %3811 = vmatprep.subr.bf16.mxu0 0
        %3812 = vmatpush1.bf16.msra.mxu0 0
        %3813 = vmatprep.subr.bf16.mxu0 0
        %3814 = vmatpush1.bf16.msra.mxu0 0
        %3815 = vmatprep.subr.bf16.mxu0 0
        %3816 = vmatpush1.bf16.msra.mxu0 0
        %3817 = vmatprep.subr.bf16.mxu0 0
        %3818 = vmatpush1.bf16.msra.mxu0 0
        %3819 = vmatprep.subr.bf16.mxu0 0
        %3820 = vmatpush1.bf16.msra.mxu0 0
        %3821 = vmatprep.subr.bf16.mxu0 0
        %3822 = vmatpush1.bf16.msra.mxu0 0
        %3823 = vmatprep.subr.bf16.mxu0 0
        %3824 = vmatpush1.bf16.msra.mxu0 0
        %3825 = vmatprep.subr.bf16.mxu0 0
        %3826 = vmatpush1.bf16.msra.mxu0 0
        %3827 = vmatprep.subr.bf16.mxu0 0
        %3828 = vmatpush1.bf16.msra.mxu0 0
        %3829 = vmatprep.mubr.bf16.mxu0 0
        %3830 = vmatmul.mubr.bf16.gmra.mrb[0].mxu0 %v2547
        %v3831 = vpop.f32.mrb[0].mxu0
        %v3832 = vadd.f32 %v2533, %v3831
        %v3833 = vpop.f32.mrb[0].mxu0
        %v3834 = vpop.f32.mrb[0].mxu0
        %v3835 = vadd.f32 %v2538, %v3834
        %v3836 = vpop.f32.mrb[0].mxu0
        %3837 = vdwg.mxu0
        %v3838 = vpack.c.bf16 %v3835, %v3832
        %3839 = vst [vmem:[#allocation4 + $0xd8] sm:$0xff] %v3838
        %v3840 = vld [vmem:[#allocation3 + $0xd8] sm:$0xff]
        %v3841 = vld [vmem:[#allocation3 + $0xe0] sm:$0xff]
        %v3842 = vld [vmem:[#allocation3 + $0xe8] sm:$0xff]
        %v3843 = vld [vmem:[#allocation3 + $0xf0] sm:$0xff]
        %v3844 = vld [vmem:[#allocation3 + $0xf8] sm:$0xff]
        %3845 = vmatprep.subr.bf16.mxu0 0
        %3846 = vmatpush1.bf16.msra.mxu0 %v3840
        %3847 = vmatprep.subr.bf16.mxu0 0
        %3848 = vmatpush1.bf16.msra.mxu0 %v3841
        %3849 = vmatprep.subr.bf16.mxu0 0
        %3850 = vmatpush1.bf16.msra.mxu0 %v3842
        %3851 = vmatprep.subr.bf16.mxu0 0
        %3852 = vmatpush1.bf16.msra.mxu0 %v3843
        %3853 = vmatprep.subr.bf16.mxu0 0
        %3854 = vmatpush1.bf16.msra.mxu0 %v3844
        %3855 = vmatprep.subr.bf16.mxu0 0
        %3856 = vmatpush1.bf16.msra.mxu0 0
        %3857 = vmatprep.subr.bf16.mxu0 0
        %3858 = vmatpush1.bf16.msra.mxu0 0
        %3859 = vmatprep.subr.bf16.mxu0 0
        %3860 = vmatpush1.bf16.msra.mxu0 0
        %3861 = vmatprep.subr.bf16.mxu0 0
        %3862 = vmatpush1.bf16.msra.mxu0 0
        %3863 = vmatprep.subr.bf16.mxu0 0
        %3864 = vmatpush1.bf16.msra.mxu0 0
        %3865 = vmatprep.subr.bf16.mxu0 0
        %3866 = vmatpush1.bf16.msra.mxu0 0
        %3867 = vmatprep.subr.bf16.mxu0 0
        %3868 = vmatpush1.bf16.msra.mxu0 0
        %3869 = vmatprep.subr.bf16.mxu0 0
        %3870 = vmatpush1.bf16.msra.mxu0 0
        %3871 = vmatprep.subr.bf16.mxu0 0
        %3872 = vmatpush1.bf16.msra.mxu0 0
        %3873 = vmatprep.subr.bf16.mxu0 0
        %3874 = vmatpush1.bf16.msra.mxu0 0
        %3875 = vmatprep.subr.bf16.mxu0 0
        %3876 = vmatpush1.bf16.msra.mxu0 0
        %3877 = vmatprep.mubr.bf16.mxu0 0
        %3878 = vmatmul.mubr.bf16.gmra.mrb[0].mxu0 %v2547
        %v3879 = vpop.f32.mrb[0].mxu0
        %v3880 = vadd.f32 %v2533, %v3879
        %v3881 = vpop.f32.mrb[0].mxu0
        %v3882 = vpop.f32.mrb[0].mxu0
        %v3883 = vadd.f32 %v2538, %v3882
        %v3884 = vpop.f32.mrb[0].mxu0
        %3885 = vdwg.mxu0
        %v3886 = vpack.c.bf16 %v3883, %v3880
        %3887 = vst [vmem:[#allocation4 + $0xe0] sm:$0xff] %v3886
        %v3888 = vld [vmem:[#allocation3 + $0xe0] sm:$0xff]
        %v3889 = vld [vmem:[#allocation3 + $0xe8] sm:$0xff]
        %v3890 = vld [vmem:[#allocation3 + $0xf0] sm:$0xff]
        %v3891 = vld [vmem:[#allocation3 + $0xf8] sm:$0xff]
        %v3892 = vld [vmem:[#allocation3 + $0x100] sm:$0xff]
        %3893 = vmatprep.subr.bf16.mxu0 0
        %3894 = vmatpush1.bf16.msra.mxu0 %v3888
        %3895 = vmatprep.subr.bf16.mxu0 0
        %3896 = vmatpush1.bf16.msra.mxu0 %v3889
        %3897 = vmatprep.subr.bf16.mxu0 0
        %3898 = vmatpush1.bf16.msra.mxu0 %v3890
        %3899 = vmatprep.subr.bf16.mxu0 0
        %3900 = vmatpush1.bf16.msra.mxu0 %v3891
        %3901 = vmatprep.subr.bf16.mxu0 0
        %3902 = vmatpush1.bf16.msra.mxu0 %v3892
        %3903 = vmatprep.subr.bf16.mxu0 0
        %3904 = vmatpush1.bf16.msra.mxu0 0
        %3905 = vmatprep.subr.bf16.mxu0 0
        %3906 = vmatpush1.bf16.msra.mxu0 0
        %3907 = vmatprep.subr.bf16.mxu0 0
        %3908 = vmatpush1.bf16.msra.mxu0 0
        %3909 = vmatprep.subr.bf16.mxu0 0
        %3910 = vmatpush1.bf16.msra.mxu0 0
        %3911 = vmatprep.subr.bf16.mxu0 0
        %3912 = vmatpush1.bf16.msra.mxu0 0
        %3913 = vmatprep.subr.bf16.mxu0 0
        %3914 = vmatpush1.bf16.msra.mxu0 0
        %3915 = vmatprep.subr.bf16.mxu0 0
        %3916 = vmatpush1.bf16.msra.mxu0 0
        %3917 = vmatprep.subr.bf16.mxu0 0
        %3918 = vmatpush1.bf16.msra.mxu0 0
        %3919 = vmatprep.subr.bf16.mxu0 0
        %3920 = vmatpush1.bf16.msra.mxu0 0
        %3921 = vmatprep.subr.bf16.mxu0 0
        %3922 = vmatpush1.bf16.msra.mxu0 0
        %3923 = vmatprep.subr.bf16.mxu0 0
        %3924 = vmatpush1.bf16.msra.mxu0 0
        %3925 = vmatprep.mubr.bf16.mxu0 0
        %3926 = vmatmul.mubr.bf16.gmra.mrb[0].mxu0 %v2547
        %v3927 = vpop.f32.mrb[0].mxu0
        %v3928 = vadd.f32 %v2533, %v3927
        %v3929 = vpop.f32.mrb[0].mxu0
        %v3930 = vpop.f32.mrb[0].mxu0
        %v3931 = vadd.f32 %v2538, %v3930
        %v3932 = vpop.f32.mrb[0].mxu0
        %3933 = vdwg.mxu0
        %v3934 = vpack.c.bf16 %v3931, %v3928
        %3935 = vst [vmem:[#allocation4 + $0xe8] sm:$0xff] %v3934
        %v3936 = vld [vmem:[#allocation3 + $0xe8] sm:$0xff]
        %v3937 = vld [vmem:[#allocation3 + $0xf0] sm:$0xff]
        %v3938 = vld [vmem:[#allocation3 + $0xf8] sm:$0xff]
        %v3939 = vld [vmem:[#allocation3 + $0x100] sm:$0xff]
        %v3940 = vld [vmem:[#allocation3 + $0x108] sm:$0xff]
        %3941 = vmatprep.subr.bf16.mxu0 0
        %3942 = vmatpush1.bf16.msra.mxu0 %v3936
        %3943 = vmatprep.subr.bf16.mxu0 0
        %3944 = vmatpush1.bf16.msra.mxu0 %v3937
        %3945 = vmatprep.subr.bf16.mxu0 0
        %3946 = vmatpush1.bf16.msra.mxu0 %v3938
        %3947 = vmatprep.subr.bf16.mxu0 0
        %3948 = vmatpush1.bf16.msra.mxu0 %v3939
        %3949 = vmatprep.subr.bf16.mxu0 0
        %3950 = vmatpush1.bf16.msra.mxu0 %v3940
        %3951 = vmatprep.subr.bf16.mxu0 0
        %3952 = vmatpush1.bf16.msra.mxu0 0
        %3953 = vmatprep.subr.bf16.mxu0 0
        %3954 = vmatpush1.bf16.msra.mxu0 0
        %3955 = vmatprep.subr.bf16.mxu0 0
        %3956 = vmatpush1.bf16.msra.mxu0 0
        %3957 = vmatprep.subr.bf16.mxu0 0
        %3958 = vmatpush1.bf16.msra.mxu0 0
        %3959 = vmatprep.subr.bf16.mxu0 0
        %3960 = vmatpush1.bf16.msra.mxu0 0
        %3961 = vmatprep.subr.bf16.mxu0 0
        %3962 = vmatpush1.bf16.msra.mxu0 0
        %3963 = vmatprep.subr.bf16.mxu0 0
        %3964 = vmatpush1.bf16.msra.mxu0 0
        %3965 = vmatprep.subr.bf16.mxu0 0
        %3966 = vmatpush1.bf16.msra.mxu0 0
        %3967 = vmatprep.subr.bf16.mxu0 0
        %3968 = vmatpush1.bf16.msra.mxu0 0
        %3969 = vmatprep.subr.bf16.mxu0 0
        %3970 = vmatpush1.bf16.msra.mxu0 0
        %3971 = vmatprep.subr.bf16.mxu0 0
        %3972 = vmatpush1.bf16.msra.mxu0 0
        %3973 = vmatprep.mubr.bf16.mxu0 0
        %3974 = vmatmul.mubr.bf16.gmra.mrb[0].mxu0 %v2547
        %v3975 = vpop.f32.mrb[0].mxu0
        %v3976 = vadd.f32 %v2533, %v3975
        %v3977 = vpop.f32.mrb[0].mxu0
        %v3978 = vpop.f32.mrb[0].mxu0
        %v3979 = vadd.f32 %v2538, %v3978
        %v3980 = vpop.f32.mrb[0].mxu0
        %3981 = vdwg.mxu0
        %v3982 = vpack.c.bf16 %v3979, %v3976
        %3983 = vst [vmem:[#allocation4 + $0xf0] sm:$0xff] %v3982
        %v3984 = vld [vmem:[#allocation3 + $0xf0] sm:$0xff]
        %v3985 = vld [vmem:[#allocation3 + $0xf8] sm:$0xff]
        %v3986 = vld [vmem:[#allocation3 + $0x100] sm:$0xff]
        %v3987 = vld [vmem:[#allocation3 + $0x108] sm:$0xff]
        %v3988 = vld [vmem:[#allocation3 + $0x110] sm:$0xff]
        %3989 = vmatprep.subr.bf16.mxu0 0
        %3990 = vmatpush1.bf16.msra.mxu0 %v3984
        %3991 = vmatprep.subr.bf16.mxu0 0
        %3992 = vmatpush1.bf16.msra.mxu0 %v3985
        %3993 = vmatprep.subr.bf16.mxu0 0
        %3994 = vmatpush1.bf16.msra.mxu0 %v3986
        %3995 = vmatprep.subr.bf16.mxu0 0
        %3996 = vmatpush1.bf16.msra.mxu0 %v3987
        %3997 = vmatprep.subr.bf16.mxu0 0
        %3998 = vmatpush1.bf16.msra.mxu0 %v3988
        %3999 = vmatprep.subr.bf16.mxu0 0
        %4000 = vmatpush1.bf16.msra.mxu0 0
        %4001 = vmatprep.subr.bf16.mxu0 0
        %4002 = vmatpush1.bf16.msra.mxu0 0
        %4003 = vmatprep.subr.bf16.mxu0 0
        %4004 = vmatpush1.bf16.msra.mxu0 0
        %4005 = vmatprep.subr.bf16.mxu0 0
        %4006 = vmatpush1.bf16.msra.mxu0 0
        %4007 = vmatprep.subr.bf16.mxu0 0
        %4008 = vmatpush1.bf16.msra.mxu0 0
        %4009 = vmatprep.subr.bf16.mxu0 0
        %4010 = vmatpush1.bf16.msra.mxu0 0
        %4011 = vmatprep.subr.bf16.mxu0 0
        %4012 = vmatpush1.bf16.msra.mxu0 0
        %4013 = vmatprep.subr.bf16.mxu0 0
        %4014 = vmatpush1.bf16.msra.mxu0 0
        %4015 = vmatprep.subr.bf16.mxu0 0
        %4016 = vmatpush1.bf16.msra.mxu0 0
        %4017 = vmatprep.subr.bf16.mxu0 0
        %4018 = vmatpush1.bf16.msra.mxu0 0
        %4019 = vmatprep.subr.bf16.mxu0 0
        %4020 = vmatpush1.bf16.msra.mxu0 0
        %4021 = vmatprep.mubr.bf16.mxu0 0
        %4022 = vmatmul.mubr.bf16.gmra.mrb[0].mxu0 %v2547
        %v4023 = vpop.f32.mrb[0].mxu0
        %v4024 = vadd.f32 %v2533, %v4023
        %v4025 = vpop.f32.mrb[0].mxu0
        %v4026 = vpop.f32.mrb[0].mxu0
        %v4027 = vadd.f32 %v2538, %v4026
        %v4028 = vpop.f32.mrb[0].mxu0
        %4029 = vdwg.mxu0
        %v4030 = vpack.c.bf16 %v4027, %v4024
        %4031 = vst [vmem:[#allocation4 + $0xf8] sm:$0xff] %v4030
        %v4032 = vld [vmem:[#allocation3 + $0xf8] sm:$0xff]
        %v4033 = vld [vmem:[#allocation3 + $0x100] sm:$0xff]
        %v4034 = vld [vmem:[#allocation3 + $0x108] sm:$0xff]
        %v4035 = vld [vmem:[#allocation3 + $0x110] sm:$0xff]
        %v4036 = vld [vmem:[#allocation3 + $0x118] sm:$0xff]
        %4037 = vmatprep.subr.bf16.mxu0 0
        %4038 = vmatpush1.bf16.msra.mxu0 %v4032
        %4039 = vmatprep.subr.bf16.mxu0 0
        %4040 = vmatpush1.bf16.msra.mxu0 %v4033
        %4041 = vmatprep.subr.bf16.mxu0 0
        %4042 = vmatpush1.bf16.msra.mxu0 %v4034
        %4043 = vmatprep.subr.bf16.mxu0 0
        %4044 = vmatpush1.bf16.msra.mxu0 %v4035
        %4045 = vmatprep.subr.bf16.mxu0 0
        %4046 = vmatpush1.bf16.msra.mxu0 %v4036
        %4047 = vmatprep.subr.bf16.mxu0 0
        %4048 = vmatpush1.bf16.msra.mxu0 0
        %4049 = vmatprep.subr.bf16.mxu0 0
        %4050 = vmatpush1.bf16.msra.mxu0 0
        %4051 = vmatprep.subr.bf16.mxu0 0
        %4052 = vmatpush1.bf16.msra.mxu0 0
        %4053 = vmatprep.subr.bf16.mxu0 0
        %4054 = vmatpush1.bf16.msra.mxu0 0
        %4055 = vmatprep.subr.bf16.mxu0 0
        %4056 = vmatpush1.bf16.msra.mxu0 0
        %4057 = vmatprep.subr.bf16.mxu0 0
        %4058 = vmatpush1.bf16.msra.mxu0 0
        %4059 = vmatprep.subr.bf16.mxu0 0
        %4060 = vmatpush1.bf16.msra.mxu0 0
        %4061 = vmatprep.subr.bf16.mxu0 0
        %4062 = vmatpush1.bf16.msra.mxu0 0
        %4063 = vmatprep.subr.bf16.mxu0 0
        %4064 = vmatpush1.bf16.msra.mxu0 0
        %4065 = vmatprep.subr.bf16.mxu0 0
        %4066 = vmatpush1.bf16.msra.mxu0 0
        %4067 = vmatprep.subr.bf16.mxu0 0
        %4068 = vmatpush1.bf16.msra.mxu0 0
        %4069 = vmatprep.mubr.bf16.mxu0 0
        %4070 = vmatmul.mubr.bf16.gmra.mrb[0].mxu0 %v2547
        %v4071 = vpop.f32.mrb[0].mxu0
        %v4072 = vadd.f32 %v2533, %v4071
        %v4073 = vpop.f32.mrb[0].mxu0
        %v4074 = vpop.f32.mrb[0].mxu0
        %v4075 = vadd.f32 %v2538, %v4074
        %v4076 = vpop.f32.mrb[0].mxu0
        %4077 = vdwg.mxu0
        %v4078 = vpack.c.bf16 %v4075, %v4072
        %4079 = vst [vmem:[#allocation4 + $0x100] sm:$0xff] %v4078
        %v4080 = vld [vmem:[#allocation4] sm:$0xff]
        %v4081 = vld [vmem:[#allocation4 + $0x8] sm:$0xff]
        %v4082 = vld [vmem:[#allocation4 + $0x10] sm:$0xff]
        %4084 = vset.pattern.permute.xlu0 0
        %4085 = vperm.xlu0 %4084, %v967
        %v4086 = vpop.permute.xlu0 %4085
        %4089 = vset.pattern.permute.xlu0 0
        %4090 = vperm.xlu0 %4089, %v968
        %v4091 = vpop.permute.xlu0 %4090
        %v4095 = vunpack.c.l.b16 %v965
        %v4096 = vunpack.c.l.b16 %v966
        %v4097 = vpack.c.b16 %v4096, %v4095
        %vm4098 = vcmask 392192
        %v4100 = vsel %vm4098, %v4097, 0
        %4102 = vmatprep.subr.bf16.mxu0 0
        %4103 = vmatpush1.bf16.msra.mxu0 %v4080
        %4104 = vmatprep.subr.bf16.mxu0 0
        %4105 = vmatpush1.bf16.msra.mxu0 %v4081
        %4106 = vmatprep.subr.bf16.mxu0 0
        %4107 = vmatpush1.bf16.msra.mxu0 %v4082
        %4108 = vmatprep.subr.bf16.mxu0 0
        %4109 = vmatpush1.bf16.msra.mxu0 0
        %4110 = vmatprep.subr.bf16.mxu0 0
        %4111 = vmatpush1.bf16.msra.mxu0 0
        %4112 = vmatprep.subr.bf16.mxu0 0
        %4113 = vmatpush1.bf16.msra.mxu0 0
        %4114 = vmatprep.subr.bf16.mxu0 0
        %4115 = vmatpush1.bf16.msra.mxu0 0
        %4116 = vmatprep.subr.bf16.mxu0 0
        %4117 = vmatpush1.bf16.msra.mxu0 0
        %4118 = vmatprep.subr.bf16.mxu0 0
        %4119 = vmatpush1.bf16.msra.mxu0 0
        %4120 = vmatprep.subr.bf16.mxu0 0
        %4121 = vmatpush1.bf16.msra.mxu0 0
        %4122 = vmatprep.subr.bf16.mxu0 0
        %4123 = vmatpush1.bf16.msra.mxu0 0
        %4124 = vmatprep.subr.bf16.mxu0 0
        %4125 = vmatpush1.bf16.msra.mxu0 0
        %4126 = vmatprep.subr.bf16.mxu0 0
        %4127 = vmatpush1.bf16.msra.mxu0 0
        %4128 = vmatprep.subr.bf16.mxu0 0
        %4129 = vmatpush1.bf16.msra.mxu0 0
        %4130 = vmatprep.subr.bf16.mxu0 0
        %4131 = vmatpush1.bf16.msra.mxu0 0
        %4132 = vmatprep.subr.bf16.mxu0 0
        %4133 = vmatpush1.bf16.msra.mxu0 0
        %4134 = vmatprep.mubr.bf16.mxu0 0
        %4135 = vmatmul.mubr.bf16.gmra.mrb[0].mxu0 %v4100
        %v4136 = vpop.f32.mrb[0].mxu0
        %v4137 = vadd.f32 %v4086, %v4136
        %v4138 = vpop.f32.mrb[0].mxu0
        %v4139 = vpop.f32.mrb[0].mxu0
        %v4140 = vadd.f32 %v4091, %v4139
        %v4141 = vpop.f32.mrb[0].mxu0
        %4142 = vdwg.mxu0
        %v4143 = vmax.f32 %v4137, 0.0
        %v4144 = vmax.f32 %v4140, 0.0
        %4145 = vst [vmem:[%s484] sm:$0xff] %v4143
        %4146 = vst [vmem:[%s484 + $0x8] sm:$0xff] %v4144
        %v4147 = vld [vmem:[#allocation4 + $0x8] sm:$0xff]
        %v4148 = vld [vmem:[#allocation4 + $0x10] sm:$0xff]
        %v4149 = vld [vmem:[#allocation4 + $0x18] sm:$0xff]
        %4150 = vmatprep.subr.bf16.mxu0 0
        %4151 = vmatpush1.bf16.msra.mxu0 %v4147
        %4152 = vmatprep.subr.bf16.mxu0 0
        %4153 = vmatpush1.bf16.msra.mxu0 %v4148
        %4154 = vmatprep.subr.bf16.mxu0 0
        %4155 = vmatpush1.bf16.msra.mxu0 %v4149
        %4156 = vmatprep.subr.bf16.mxu0 0
        %4157 = vmatpush1.bf16.msra.mxu0 0
        %4158 = vmatprep.subr.bf16.mxu0 0
        %4159 = vmatpush1.bf16.msra.mxu0 0
        %4160 = vmatprep.subr.bf16.mxu0 0
        %4161 = vmatpush1.bf16.msra.mxu0 0
        %4162 = vmatprep.subr.bf16.mxu0 0
        %4163 = vmatpush1.bf16.msra.mxu0 0
        %4164 = vmatprep.subr.bf16.mxu0 0
        %4165 = vmatpush1.bf16.msra.mxu0 0
        %4166 = vmatprep.subr.bf16.mxu0 0
        %4167 = vmatpush1.bf16.msra.mxu0 0
        %4168 = vmatprep.subr.bf16.mxu0 0
        %4169 = vmatpush1.bf16.msra.mxu0 0
        %4170 = vmatprep.subr.bf16.mxu0 0
        %4171 = vmatpush1.bf16.msra.mxu0 0
        %4172 = vmatprep.subr.bf16.mxu0 0
        %4173 = vmatpush1.bf16.msra.mxu0 0
        %4174 = vmatprep.subr.bf16.mxu0 0
        %4175 = vmatpush1.bf16.msra.mxu0 0
        %4176 = vmatprep.subr.bf16.mxu0 0
        %4177 = vmatpush1.bf16.msra.mxu0 0
        %4178 = vmatprep.subr.bf16.mxu0 0
        %4179 = vmatpush1.bf16.msra.mxu0 0
        %4180 = vmatprep.subr.bf16.mxu0 0
        %4181 = vmatpush1.bf16.msra.mxu0 0
        %4182 = vmatprep.mubr.bf16.mxu0 0
        %4183 = vmatmul.mubr.bf16.gmra.mrb[0].mxu0 %v4100
        %v4184 = vpop.f32.mrb[0].mxu0
        %v4185 = vadd.f32 %v4086, %v4184
        %v4186 = vpop.f32.mrb[0].mxu0
        %v4187 = vpop.f32.mrb[0].mxu0
        %v4188 = vadd.f32 %v4091, %v4187
        %v4189 = vpop.f32.mrb[0].mxu0
        %4190 = vdwg.mxu0
        %v4191 = vmax.f32 %v4185, 0.0
        %v4192 = vmax.f32 %v4188, 0.0
        %4193 = vst [vmem:[%s484 + $0x10] sm:$0xff] %v4191
        %4194 = vst [vmem:[%s484 + $0x18] sm:$0xff] %v4192
        %v4195 = vld [vmem:[#allocation4 + $0x10] sm:$0xff]
        %v4196 = vld [vmem:[#allocation4 + $0x18] sm:$0xff]
        %v4197 = vld [vmem:[#allocation4 + $0x20] sm:$0xff]
        %4198 = vmatprep.subr.bf16.mxu0 0
        %4199 = vmatpush1.bf16.msra.mxu0 %v4195
        %4200 = vmatprep.subr.bf16.mxu0 0
        %4201 = vmatpush1.bf16.msra.mxu0 %v4196
        %4202 = vmatprep.subr.bf16.mxu0 0
        %4203 = vmatpush1.bf16.msra.mxu0 %v4197
        %4204 = vmatprep.subr.bf16.mxu0 0
        %4205 = vmatpush1.bf16.msra.mxu0 0
        %4206 = vmatprep.subr.bf16.mxu0 0
        %4207 = vmatpush1.bf16.msra.mxu0 0
        %4208 = vmatprep.subr.bf16.mxu0 0
        %4209 = vmatpush1.bf16.msra.mxu0 0
        %4210 = vmatprep.subr.bf16.mxu0 0
        %4211 = vmatpush1.bf16.msra.mxu0 0
        %4212 = vmatprep.subr.bf16.mxu0 0
        %4213 = vmatpush1.bf16.msra.mxu0 0
        %4214 = vmatprep.subr.bf16.mxu0 0
        %4215 = vmatpush1.bf16.msra.mxu0 0
        %4216 = vmatprep.subr.bf16.mxu0 0
        %4217 = vmatpush1.bf16.msra.mxu0 0
        %4218 = vmatprep.subr.bf16.mxu0 0
        %4219 = vmatpush1.bf16.msra.mxu0 0
        %4220 = vmatprep.subr.bf16.mxu0 0
        %4221 = vmatpush1.bf16.msra.mxu0 0
        %4222 = vmatprep.subr.bf16.mxu0 0
        %4223 = vmatpush1.bf16.msra.mxu0 0
        %4224 = vmatprep.subr.bf16.mxu0 0
        %4225 = vmatpush1.bf16.msra.mxu0 0
        %4226 = vmatprep.subr.bf16.mxu0 0
        %4227 = vmatpush1.bf16.msra.mxu0 0
        %4228 = vmatprep.subr.bf16.mxu0 0
        %4229 = vmatpush1.bf16.msra.mxu0 0
        %4230 = vmatprep.mubr.bf16.mxu0 0
        %4231 = vmatmul.mubr.bf16.gmra.mrb[0].mxu0 %v4100
        %v4232 = vpop.f32.mrb[0].mxu0
        %v4233 = vadd.f32 %v4086, %v4232
        %v4234 = vpop.f32.mrb[0].mxu0
        %v4235 = vpop.f32.mrb[0].mxu0
        %v4236 = vadd.f32 %v4091, %v4235
        %v4237 = vpop.f32.mrb[0].mxu0
        %4238 = vdwg.mxu0
        %v4239 = vmax.f32 %v4233, 0.0
        %v4240 = vmax.f32 %v4236, 0.0
        %4241 = vst [vmem:[%s484 + $0x20] sm:$0xff] %v4239
        %4242 = vst [vmem:[%s484 + $0x28] sm:$0xff] %v4240
        %v4243 = vld [vmem:[#allocation4 + $0x18] sm:$0xff]
        %v4244 = vld [vmem:[#allocation4 + $0x20] sm:$0xff]
        %v4245 = vld [vmem:[#allocation4 + $0x28] sm:$0xff]
        %4246 = vmatprep.subr.bf16.mxu0 0
        %4247 = vmatpush1.bf16.msra.mxu0 %v4243
        %4248 = vmatprep.subr.bf16.mxu0 0
        %4249 = vmatpush1.bf16.msra.mxu0 %v4244
        %4250 = vmatprep.subr.bf16.mxu0 0
        %4251 = vmatpush1.bf16.msra.mxu0 %v4245
        %4252 = vmatprep.subr.bf16.mxu0 0
        %4253 = vmatpush1.bf16.msra.mxu0 0
        %4254 = vmatprep.subr.bf16.mxu0 0
        %4255 = vmatpush1.bf16.msra.mxu0 0
        %4256 = vmatprep.subr.bf16.mxu0 0
        %4257 = vmatpush1.bf16.msra.mxu0 0
        %4258 = vmatprep.subr.bf16.mxu0 0
        %4259 = vmatpush1.bf16.msra.mxu0 0
        %4260 = vmatprep.subr.bf16.mxu0 0
        %4261 = vmatpush1.bf16.msra.mxu0 0
        %4262 = vmatprep.subr.bf16.mxu0 0
        %4263 = vmatpush1.bf16.msra.mxu0 0
        %4264 = vmatprep.subr.bf16.mxu0 0
        %4265 = vmatpush1.bf16.msra.mxu0 0
        %4266 = vmatprep.subr.bf16.mxu0 0
        %4267 = vmatpush1.bf16.msra.mxu0 0
        %4268 = vmatprep.subr.bf16.mxu0 0
        %4269 = vmatpush1.bf16.msra.mxu0 0
        %4270 = vmatprep.subr.bf16.mxu0 0
        %4271 = vmatpush1.bf16.msra.mxu0 0
        %4272 = vmatprep.subr.bf16.mxu0 0
        %4273 = vmatpush1.bf16.msra.mxu0 0
        %4274 = vmatprep.subr.bf16.mxu0 0
        %4275 = vmatpush1.bf16.msra.mxu0 0
        %4276 = vmatprep.subr.bf16.mxu0 0
        %4277 = vmatpush1.bf16.msra.mxu0 0
        %4278 = vmatprep.mubr.bf16.mxu0 0
        %4279 = vmatmul.mubr.bf16.gmra.mrb[0].mxu0 %v4100
        %v4280 = vpop.f32.mrb[0].mxu0
        %v4281 = vadd.f32 %v4086, %v4280
        %v4282 = vpop.f32.mrb[0].mxu0
        %v4283 = vpop.f32.mrb[0].mxu0
        %v4284 = vadd.f32 %v4091, %v4283
        %v4285 = vpop.f32.mrb[0].mxu0
        %4286 = vdwg.mxu0
        %v4287 = vmax.f32 %v4281, 0.0
        %v4288 = vmax.f32 %v4284, 0.0
        %4289 = vst [vmem:[%s484 + $0x30] sm:$0xff] %v4287
        %4290 = vst [vmem:[%s484 + $0x38] sm:$0xff] %v4288
        %v4291 = vld [vmem:[#allocation4 + $0x20] sm:$0xff]
        %v4292 = vld [vmem:[#allocation4 + $0x28] sm:$0xff]
        %v4293 = vld [vmem:[#allocation4 + $0x30] sm:$0xff]
        %4294 = vmatprep.subr.bf16.mxu0 0
        %4295 = vmatpush1.bf16.msra.mxu0 %v4291
        %4296 = vmatprep.subr.bf16.mxu0 0
        %4297 = vmatpush1.bf16.msra.mxu0 %v4292
        %4298 = vmatprep.subr.bf16.mxu0 0
        %4299 = vmatpush1.bf16.msra.mxu0 %v4293
        %4300 = vmatprep.subr.bf16.mxu0 0
        %4301 = vmatpush1.bf16.msra.mxu0 0
        %4302 = vmatprep.subr.bf16.mxu0 0
        %4303 = vmatpush1.bf16.msra.mxu0 0
        %4304 = vmatprep.subr.bf16.mxu0 0
        %4305 = vmatpush1.bf16.msra.mxu0 0
        %4306 = vmatprep.subr.bf16.mxu0 0
        %4307 = vmatpush1.bf16.msra.mxu0 0
        %4308 = vmatprep.subr.bf16.mxu0 0
        %4309 = vmatpush1.bf16.msra.mxu0 0
        %4310 = vmatprep.subr.bf16.mxu0 0
        %4311 = vmatpush1.bf16.msra.mxu0 0
        %4312 = vmatprep.subr.bf16.mxu0 0
        %4313 = vmatpush1.bf16.msra.mxu0 0
        %4314 = vmatprep.subr.bf16.mxu0 0
        %4315 = vmatpush1.bf16.msra.mxu0 0
        %4316 = vmatprep.subr.bf16.mxu0 0
        %4317 = vmatpush1.bf16.msra.mxu0 0
        %4318 = vmatprep.subr.bf16.mxu0 0
        %4319 = vmatpush1.bf16.msra.mxu0 0
        %4320 = vmatprep.subr.bf16.mxu0 0
        %4321 = vmatpush1.bf16.msra.mxu0 0
        %4322 = vmatprep.subr.bf16.mxu0 0
        %4323 = vmatpush1.bf16.msra.mxu0 0
        %4324 = vmatprep.subr.bf16.mxu0 0
        %4325 = vmatpush1.bf16.msra.mxu0 0
        %4326 = vmatprep.mubr.bf16.mxu0 0
        %4327 = vmatmul.mubr.bf16.gmra.mrb[0].mxu0 %v4100
        %v4328 = vpop.f32.mrb[0].mxu0
        %v4329 = vadd.f32 %v4086, %v4328
        %v4330 = vpop.f32.mrb[0].mxu0
        %v4331 = vpop.f32.mrb[0].mxu0
        %v4332 = vadd.f32 %v4091, %v4331
        %v4333 = vpop.f32.mrb[0].mxu0
        %4334 = vdwg.mxu0
        %v4335 = vmax.f32 %v4329, 0.0
        %v4336 = vmax.f32 %v4332, 0.0
        %4337 = vst [vmem:[%s484 + $0x40] sm:$0xff] %v4335
        %4338 = vst [vmem:[%s484 + $0x48] sm:$0xff] %v4336
        %v4339 = vld [vmem:[#allocation4 + $0x28] sm:$0xff]
        %v4340 = vld [vmem:[#allocation4 + $0x30] sm:$0xff]
        %v4341 = vld [vmem:[#allocation4 + $0x38] sm:$0xff]
        %4342 = vmatprep.subr.bf16.mxu0 0
        %4343 = vmatpush1.bf16.msra.mxu0 %v4339
        %4344 = vmatprep.subr.bf16.mxu0 0
        %4345 = vmatpush1.bf16.msra.mxu0 %v4340
        %4346 = vmatprep.subr.bf16.mxu0 0
        %4347 = vmatpush1.bf16.msra.mxu0 %v4341
        %4348 = vmatprep.subr.bf16.mxu0 0
        %4349 = vmatpush1.bf16.msra.mxu0 0
        %4350 = vmatprep.subr.bf16.mxu0 0
        %4351 = vmatpush1.bf16.msra.mxu0 0
        %4352 = vmatprep.subr.bf16.mxu0 0
        %4353 = vmatpush1.bf16.msra.mxu0 0
        %4354 = vmatprep.subr.bf16.mxu0 0
        %4355 = vmatpush1.bf16.msra.mxu0 0
        %4356 = vmatprep.subr.bf16.mxu0 0
        %4357 = vmatpush1.bf16.msra.mxu0 0
        %4358 = vmatprep.subr.bf16.mxu0 0
        %4359 = vmatpush1.bf16.msra.mxu0 0
        %4360 = vmatprep.subr.bf16.mxu0 0
        %4361 = vmatpush1.bf16.msra.mxu0 0
        %4362 = vmatprep.subr.bf16.mxu0 0
        %4363 = vmatpush1.bf16.msra.mxu0 0
        %4364 = vmatprep.subr.bf16.mxu0 0
        %4365 = vmatpush1.bf16.msra.mxu0 0
        %4366 = vmatprep.subr.bf16.mxu0 0
        %4367 = vmatpush1.bf16.msra.mxu0 0
        %4368 = vmatprep.subr.bf16.mxu0 0
        %4369 = vmatpush1.bf16.msra.mxu0 0
        %4370 = vmatprep.subr.bf16.mxu0 0
        %4371 = vmatpush1.bf16.msra.mxu0 0
        %4372 = vmatprep.subr.bf16.mxu0 0
        %4373 = vmatpush1.bf16.msra.mxu0 0
        %4374 = vmatprep.mubr.bf16.mxu0 0
        %4375 = vmatmul.mubr.bf16.gmra.mrb[0].mxu0 %v4100
        %v4376 = vpop.f32.mrb[0].mxu0
        %v4377 = vadd.f32 %v4086, %v4376
        %v4378 = vpop.f32.mrb[0].mxu0
        %v4379 = vpop.f32.mrb[0].mxu0
        %v4380 = vadd.f32 %v4091, %v4379
        %v4381 = vpop.f32.mrb[0].mxu0
        %4382 = vdwg.mxu0
        %v4383 = vmax.f32 %v4377, 0.0
        %v4384 = vmax.f32 %v4380, 0.0
        %4385 = vst [vmem:[%s484 + $0x50] sm:$0xff] %v4383
        %4386 = vst [vmem:[%s484 + $0x58] sm:$0xff] %v4384
        %v4387 = vld [vmem:[#allocation4 + $0x30] sm:$0xff]
        %v4388 = vld [vmem:[#allocation4 + $0x38] sm:$0xff]
        %v4389 = vld [vmem:[#allocation4 + $0x40] sm:$0xff]
        %4390 = vmatprep.subr.bf16.mxu0 0
        %4391 = vmatpush1.bf16.msra.mxu0 %v4387
        %4392 = vmatprep.subr.bf16.mxu0 0
        %4393 = vmatpush1.bf16.msra.mxu0 %v4388
        %4394 = vmatprep.subr.bf16.mxu0 0
        %4395 = vmatpush1.bf16.msra.mxu0 %v4389
        %4396 = vmatprep.subr.bf16.mxu0 0
        %4397 = vmatpush1.bf16.msra.mxu0 0
        %4398 = vmatprep.subr.bf16.mxu0 0
        %4399 = vmatpush1.bf16.msra.mxu0 0
        %4400 = vmatprep.subr.bf16.mxu0 0
        %4401 = vmatpush1.bf16.msra.mxu0 0
        %4402 = vmatprep.subr.bf16.mxu0 0
        %4403 = vmatpush1.bf16.msra.mxu0 0
        %4404 = vmatprep.subr.bf16.mxu0 0
        %4405 = vmatpush1.bf16.msra.mxu0 0
        %4406 = vmatprep.subr.bf16.mxu0 0
        %4407 = vmatpush1.bf16.msra.mxu0 0
        %4408 = vmatprep.subr.bf16.mxu0 0
        %4409 = vmatpush1.bf16.msra.mxu0 0
        %4410 = vmatprep.subr.bf16.mxu0 0
        %4411 = vmatpush1.bf16.msra.mxu0 0
        %4412 = vmatprep.subr.bf16.mxu0 0
        %4413 = vmatpush1.bf16.msra.mxu0 0
        %4414 = vmatprep.subr.bf16.mxu0 0
        %4415 = vmatpush1.bf16.msra.mxu0 0
        %4416 = vmatprep.subr.bf16.mxu0 0
        %4417 = vmatpush1.bf16.msra.mxu0 0
        %4418 = vmatprep.subr.bf16.mxu0 0
        %4419 = vmatpush1.bf16.msra.mxu0 0
        %4420 = vmatprep.subr.bf16.mxu0 0
        %4421 = vmatpush1.bf16.msra.mxu0 0
        %4422 = vmatprep.mubr.bf16.mxu0 0
        %4423 = vmatmul.mubr.bf16.gmra.mrb[0].mxu0 %v4100
        %v4424 = vpop.f32.mrb[0].mxu0
        %v4425 = vadd.f32 %v4086, %v4424
        %v4426 = vpop.f32.mrb[0].mxu0
        %v4427 = vpop.f32.mrb[0].mxu0
        %v4428 = vadd.f32 %v4091, %v4427
        %v4429 = vpop.f32.mrb[0].mxu0
        %4430 = vdwg.mxu0
        %v4431 = vmax.f32 %v4425, 0.0
        %v4432 = vmax.f32 %v4428, 0.0
        %4433 = vst [vmem:[%s484 + $0x60] sm:$0xff] %v4431
        %4434 = vst [vmem:[%s484 + $0x68] sm:$0xff] %v4432
        %v4435 = vld [vmem:[#allocation4 + $0x38] sm:$0xff]
        %v4436 = vld [vmem:[#allocation4 + $0x40] sm:$0xff]
        %v4437 = vld [vmem:[#allocation4 + $0x48] sm:$0xff]
        %4438 = vmatprep.subr.bf16.mxu0 0
        %4439 = vmatpush1.bf16.msra.mxu0 %v4435
        %4440 = vmatprep.subr.bf16.mxu0 0
        %4441 = vmatpush1.bf16.msra.mxu0 %v4436
        %4442 = vmatprep.subr.bf16.mxu0 0
        %4443 = vmatpush1.bf16.msra.mxu0 %v4437
        %4444 = vmatprep.subr.bf16.mxu0 0
        %4445 = vmatpush1.bf16.msra.mxu0 0
        %4446 = vmatprep.subr.bf16.mxu0 0
        %4447 = vmatpush1.bf16.msra.mxu0 0
        %4448 = vmatprep.subr.bf16.mxu0 0
        %4449 = vmatpush1.bf16.msra.mxu0 0
        %4450 = vmatprep.subr.bf16.mxu0 0
        %4451 = vmatpush1.bf16.msra.mxu0 0
        %4452 = vmatprep.subr.bf16.mxu0 0
        %4453 = vmatpush1.bf16.msra.mxu0 0
        %4454 = vmatprep.subr.bf16.mxu0 0
        %4455 = vmatpush1.bf16.msra.mxu0 0
        %4456 = vmatprep.subr.bf16.mxu0 0
        %4457 = vmatpush1.bf16.msra.mxu0 0
        %4458 = vmatprep.subr.bf16.mxu0 0
        %4459 = vmatpush1.bf16.msra.mxu0 0
        %4460 = vmatprep.subr.bf16.mxu0 0
        %4461 = vmatpush1.bf16.msra.mxu0 0
        %4462 = vmatprep.subr.bf16.mxu0 0
        %4463 = vmatpush1.bf16.msra.mxu0 0
        %4464 = vmatprep.subr.bf16.mxu0 0
        %4465 = vmatpush1.bf16.msra.mxu0 0
        %4466 = vmatprep.subr.bf16.mxu0 0
        %4467 = vmatpush1.bf16.msra.mxu0 0
        %4468 = vmatprep.subr.bf16.mxu0 0
        %4469 = vmatpush1.bf16.msra.mxu0 0
        %4470 = vmatprep.mubr.bf16.mxu0 0
        %4471 = vmatmul.mubr.bf16.gmra.mrb[0].mxu0 %v4100
        %v4472 = vpop.f32.mrb[0].mxu0
        %v4473 = vadd.f32 %v4086, %v4472
        %v4474 = vpop.f32.mrb[0].mxu0
        %v4475 = vpop.f32.mrb[0].mxu0
        %v4476 = vadd.f32 %v4091, %v4475
        %v4477 = vpop.f32.mrb[0].mxu0
        %4478 = vdwg.mxu0
        %v4479 = vmax.f32 %v4473, 0.0
        %v4480 = vmax.f32 %v4476, 0.0
        %4481 = vst [vmem:[%s484 + $0x70] sm:$0xff] %v4479
        %4482 = vst [vmem:[%s484 + $0x78] sm:$0xff] %v4480
        %v4483 = vld [vmem:[#allocation4 + $0x40] sm:$0xff]
        %v4484 = vld [vmem:[#allocation4 + $0x48] sm:$0xff]
        %v4485 = vld [vmem:[#allocation4 + $0x50] sm:$0xff]
        %4486 = vmatprep.subr.bf16.mxu0 0
        %4487 = vmatpush1.bf16.msra.mxu0 %v4483
        %4488 = vmatprep.subr.bf16.mxu0 0
        %4489 = vmatpush1.bf16.msra.mxu0 %v4484
        %4490 = vmatprep.subr.bf16.mxu0 0
        %4491 = vmatpush1.bf16.msra.mxu0 %v4485
        %4492 = vmatprep.subr.bf16.mxu0 0
        %4493 = vmatpush1.bf16.msra.mxu0 0
        %4494 = vmatprep.subr.bf16.mxu0 0
        %4495 = vmatpush1.bf16.msra.mxu0 0
        %4496 = vmatprep.subr.bf16.mxu0 0
        %4497 = vmatpush1.bf16.msra.mxu0 0
        %4498 = vmatprep.subr.bf16.mxu0 0
        %4499 = vmatpush1.bf16.msra.mxu0 0
        %4500 = vmatprep.subr.bf16.mxu0 0
        %4501 = vmatpush1.bf16.msra.mxu0 0
        %4502 = vmatprep.subr.bf16.mxu0 0
        %4503 = vmatpush1.bf16.msra.mxu0 0
        %4504 = vmatprep.subr.bf16.mxu0 0
        %4505 = vmatpush1.bf16.msra.mxu0 0
        %4506 = vmatprep.subr.bf16.mxu0 0
        %4507 = vmatpush1.bf16.msra.mxu0 0
        %4508 = vmatprep.subr.bf16.mxu0 0
        %4509 = vmatpush1.bf16.msra.mxu0 0
        %4510 = vmatprep.subr.bf16.mxu0 0
        %4511 = vmatpush1.bf16.msra.mxu0 0
        %4512 = vmatprep.subr.bf16.mxu0 0
        %4513 = vmatpush1.bf16.msra.mxu0 0
        %4514 = vmatprep.subr.bf16.mxu0 0
        %4515 = vmatpush1.bf16.msra.mxu0 0
        %4516 = vmatprep.subr.bf16.mxu0 0
        %4517 = vmatpush1.bf16.msra.mxu0 0
        %4518 = vmatprep.mubr.bf16.mxu0 0
        %4519 = vmatmul.mubr.bf16.gmra.mrb[0].mxu0 %v4100
        %v4520 = vpop.f32.mrb[0].mxu0
        %v4521 = vadd.f32 %v4086, %v4520
        %v4522 = vpop.f32.mrb[0].mxu0
        %v4523 = vpop.f32.mrb[0].mxu0
        %v4524 = vadd.f32 %v4091, %v4523
        %v4525 = vpop.f32.mrb[0].mxu0
        %4526 = vdwg.mxu0
        %v4527 = vmax.f32 %v4521, 0.0
        %v4528 = vmax.f32 %v4524, 0.0
        %4529 = vst [vmem:[%s484 + $0x80] sm:$0xff] %v4527
        %4530 = vst [vmem:[%s484 + $0x88] sm:$0xff] %v4528
        %v4531 = vld [vmem:[#allocation4 + $0x48] sm:$0xff]
        %v4532 = vld [vmem:[#allocation4 + $0x50] sm:$0xff]
        %v4533 = vld [vmem:[#allocation4 + $0x58] sm:$0xff]
        %4534 = vmatprep.subr.bf16.mxu0 0
        %4535 = vmatpush1.bf16.msra.mxu0 %v4531
        %4536 = vmatprep.subr.bf16.mxu0 0
        %4537 = vmatpush1.bf16.msra.mxu0 %v4532
        %4538 = vmatprep.subr.bf16.mxu0 0
        %4539 = vmatpush1.bf16.msra.mxu0 %v4533
        %4540 = vmatprep.subr.bf16.mxu0 0
        %4541 = vmatpush1.bf16.msra.mxu0 0
        %4542 = vmatprep.subr.bf16.mxu0 0
        %4543 = vmatpush1.bf16.msra.mxu0 0
        %4544 = vmatprep.subr.bf16.mxu0 0
        %4545 = vmatpush1.bf16.msra.mxu0 0
        %4546 = vmatprep.subr.bf16.mxu0 0
        %4547 = vmatpush1.bf16.msra.mxu0 0
        %4548 = vmatprep.subr.bf16.mxu0 0
        %4549 = vmatpush1.bf16.msra.mxu0 0
        %4550 = vmatprep.subr.bf16.mxu0 0
        %4551 = vmatpush1.bf16.msra.mxu0 0
        %4552 = vmatprep.subr.bf16.mxu0 0
        %4553 = vmatpush1.bf16.msra.mxu0 0
        %4554 = vmatprep.subr.bf16.mxu0 0
        %4555 = vmatpush1.bf16.msra.mxu0 0
        %4556 = vmatprep.subr.bf16.mxu0 0
        %4557 = vmatpush1.bf16.msra.mxu0 0
        %4558 = vmatprep.subr.bf16.mxu0 0
        %4559 = vmatpush1.bf16.msra.mxu0 0
        %4560 = vmatprep.subr.bf16.mxu0 0
        %4561 = vmatpush1.bf16.msra.mxu0 0
        %4562 = vmatprep.subr.bf16.mxu0 0
        %4563 = vmatpush1.bf16.msra.mxu0 0
        %4564 = vmatprep.subr.bf16.mxu0 0
        %4565 = vmatpush1.bf16.msra.mxu0 0
        %4566 = vmatprep.mubr.bf16.mxu0 0
        %4567 = vmatmul.mubr.bf16.gmra.mrb[0].mxu0 %v4100
        %v4568 = vpop.f32.mrb[0].mxu0
        %v4569 = vadd.f32 %v4086, %v4568
        %v4570 = vpop.f32.mrb[0].mxu0
        %v4571 = vpop.f32.mrb[0].mxu0
        %v4572 = vadd.f32 %v4091, %v4571
        %v4573 = vpop.f32.mrb[0].mxu0
        %4574 = vdwg.mxu0
        %v4575 = vmax.f32 %v4569, 0.0
        %v4576 = vmax.f32 %v4572, 0.0
        %4577 = vst [vmem:[%s484 + $0x90] sm:$0xff] %v4575
        %4578 = vst [vmem:[%s484 + $0x98] sm:$0xff] %v4576
        %v4579 = vld [vmem:[#allocation4 + $0x50] sm:$0xff]
        %v4580 = vld [vmem:[#allocation4 + $0x58] sm:$0xff]
        %v4581 = vld [vmem:[#allocation4 + $0x60] sm:$0xff]
        %4582 = vmatprep.subr.bf16.mxu0 0
        %4583 = vmatpush1.bf16.msra.mxu0 %v4579
        %4584 = vmatprep.subr.bf16.mxu0 0
        %4585 = vmatpush1.bf16.msra.mxu0 %v4580
        %4586 = vmatprep.subr.bf16.mxu0 0
        %4587 = vmatpush1.bf16.msra.mxu0 %v4581
        %4588 = vmatprep.subr.bf16.mxu0 0
        %4589 = vmatpush1.bf16.msra.mxu0 0
        %4590 = vmatprep.subr.bf16.mxu0 0
        %4591 = vmatpush1.bf16.msra.mxu0 0
        %4592 = vmatprep.subr.bf16.mxu0 0
        %4593 = vmatpush1.bf16.msra.mxu0 0
        %4594 = vmatprep.subr.bf16.mxu0 0
        %4595 = vmatpush1.bf16.msra.mxu0 0
        %4596 = vmatprep.subr.bf16.mxu0 0
        %4597 = vmatpush1.bf16.msra.mxu0 0
        %4598 = vmatprep.subr.bf16.mxu0 0
        %4599 = vmatpush1.bf16.msra.mxu0 0
        %4600 = vmatprep.subr.bf16.mxu0 0
        %4601 = vmatpush1.bf16.msra.mxu0 0
        %4602 = vmatprep.subr.bf16.mxu0 0
        %4603 = vmatpush1.bf16.msra.mxu0 0
        %4604 = vmatprep.subr.bf16.mxu0 0
        %4605 = vmatpush1.bf16.msra.mxu0 0
        %4606 = vmatprep.subr.bf16.mxu0 0
        %4607 = vmatpush1.bf16.msra.mxu0 0
        %4608 = vmatprep.subr.bf16.mxu0 0
        %4609 = vmatpush1.bf16.msra.mxu0 0
        %4610 = vmatprep.subr.bf16.mxu0 0
        %4611 = vmatpush1.bf16.msra.mxu0 0
        %4612 = vmatprep.subr.bf16.mxu0 0
        %4613 = vmatpush1.bf16.msra.mxu0 0
        %4614 = vmatprep.mubr.bf16.mxu0 0
        %4615 = vmatmul.mubr.bf16.gmra.mrb[0].mxu0 %v4100
        %v4616 = vpop.f32.mrb[0].mxu0
        %v4617 = vadd.f32 %v4086, %v4616
        %v4618 = vpop.f32.mrb[0].mxu0
        %v4619 = vpop.f32.mrb[0].mxu0
        %v4620 = vadd.f32 %v4091, %v4619
        %v4621 = vpop.f32.mrb[0].mxu0
        %4622 = vdwg.mxu0
        %v4623 = vmax.f32 %v4617, 0.0
        %v4624 = vmax.f32 %v4620, 0.0
        %4625 = vst [vmem:[%s484 + $0xa0] sm:$0xff] %v4623
        %4626 = vst [vmem:[%s484 + $0xa8] sm:$0xff] %v4624
        %v4627 = vld [vmem:[#allocation4 + $0x58] sm:$0xff]
        %v4628 = vld [vmem:[#allocation4 + $0x60] sm:$0xff]
        %v4629 = vld [vmem:[#allocation4 + $0x68] sm:$0xff]
        %4630 = vmatprep.subr.bf16.mxu0 0
        %4631 = vmatpush1.bf16.msra.mxu0 %v4627
        %4632 = vmatprep.subr.bf16.mxu0 0
        %4633 = vmatpush1.bf16.msra.mxu0 %v4628
        %4634 = vmatprep.subr.bf16.mxu0 0
        %4635 = vmatpush1.bf16.msra.mxu0 %v4629
        %4636 = vmatprep.subr.bf16.mxu0 0
        %4637 = vmatpush1.bf16.msra.mxu0 0
        %4638 = vmatprep.subr.bf16.mxu0 0
        %4639 = vmatpush1.bf16.msra.mxu0 0
        %4640 = vmatprep.subr.bf16.mxu0 0
        %4641 = vmatpush1.bf16.msra.mxu0 0
        %4642 = vmatprep.subr.bf16.mxu0 0
        %4643 = vmatpush1.bf16.msra.mxu0 0
        %4644 = vmatprep.subr.bf16.mxu0 0
        %4645 = vmatpush1.bf16.msra.mxu0 0
        %4646 = vmatprep.subr.bf16.mxu0 0
        %4647 = vmatpush1.bf16.msra.mxu0 0
        %4648 = vmatprep.subr.bf16.mxu0 0
        %4649 = vmatpush1.bf16.msra.mxu0 0
        %4650 = vmatprep.subr.bf16.mxu0 0
        %4651 = vmatpush1.bf16.msra.mxu0 0
        %4652 = vmatprep.subr.bf16.mxu0 0
        %4653 = vmatpush1.bf16.msra.mxu0 0
        %4654 = vmatprep.subr.bf16.mxu0 0
        %4655 = vmatpush1.bf16.msra.mxu0 0
        %4656 = vmatprep.subr.bf16.mxu0 0
        %4657 = vmatpush1.bf16.msra.mxu0 0
        %4658 = vmatprep.subr.bf16.mxu0 0
        %4659 = vmatpush1.bf16.msra.mxu0 0
        %4660 = vmatprep.subr.bf16.mxu0 0
        %4661 = vmatpush1.bf16.msra.mxu0 0
        %4662 = vmatprep.mubr.bf16.mxu0 0
        %4663 = vmatmul.mubr.bf16.gmra.mrb[0].mxu0 %v4100
        %v4664 = vpop.f32.mrb[0].mxu0
        %v4665 = vadd.f32 %v4086, %v4664
        %v4666 = vpop.f32.mrb[0].mxu0
        %v4667 = vpop.f32.mrb[0].mxu0
        %v4668 = vadd.f32 %v4091, %v4667
        %v4669 = vpop.f32.mrb[0].mxu0
        %4670 = vdwg.mxu0
        %v4671 = vmax.f32 %v4665, 0.0
        %v4672 = vmax.f32 %v4668, 0.0
        %4673 = vst [vmem:[%s484 + $0xb0] sm:$0xff] %v4671
        %4674 = vst [vmem:[%s484 + $0xb8] sm:$0xff] %v4672
        %v4675 = vld [vmem:[#allocation4 + $0x60] sm:$0xff]
        %v4676 = vld [vmem:[#allocation4 + $0x68] sm:$0xff]
        %v4677 = vld [vmem:[#allocation4 + $0x70] sm:$0xff]
        %4678 = vmatprep.subr.bf16.mxu0 0
        %4679 = vmatpush1.bf16.msra.mxu0 %v4675
        %4680 = vmatprep.subr.bf16.mxu0 0
        %4681 = vmatpush1.bf16.msra.mxu0 %v4676
        %4682 = vmatprep.subr.bf16.mxu0 0
        %4683 = vmatpush1.bf16.msra.mxu0 %v4677
        %4684 = vmatprep.subr.bf16.mxu0 0
        %4685 = vmatpush1.bf16.msra.mxu0 0
        %4686 = vmatprep.subr.bf16.mxu0 0
        %4687 = vmatpush1.bf16.msra.mxu0 0
        %4688 = vmatprep.subr.bf16.mxu0 0
        %4689 = vmatpush1.bf16.msra.mxu0 0
        %4690 = vmatprep.subr.bf16.mxu0 0
        %4691 = vmatpush1.bf16.msra.mxu0 0
        %4692 = vmatprep.subr.bf16.mxu0 0
        %4693 = vmatpush1.bf16.msra.mxu0 0
        %4694 = vmatprep.subr.bf16.mxu0 0
        %4695 = vmatpush1.bf16.msra.mxu0 0
        %4696 = vmatprep.subr.bf16.mxu0 0
        %4697 = vmatpush1.bf16.msra.mxu0 0
        %4698 = vmatprep.subr.bf16.mxu0 0
        %4699 = vmatpush1.bf16.msra.mxu0 0
        %4700 = vmatprep.subr.bf16.mxu0 0
        %4701 = vmatpush1.bf16.msra.mxu0 0
        %4702 = vmatprep.subr.bf16.mxu0 0
        %4703 = vmatpush1.bf16.msra.mxu0 0
        %4704 = vmatprep.subr.bf16.mxu0 0
        %4705 = vmatpush1.bf16.msra.mxu0 0
        %4706 = vmatprep.subr.bf16.mxu0 0
        %4707 = vmatpush1.bf16.msra.mxu0 0
        %4708 = vmatprep.subr.bf16.mxu0 0
        %4709 = vmatpush1.bf16.msra.mxu0 0
        %4710 = vmatprep.mubr.bf16.mxu0 0
        %4711 = vmatmul.mubr.bf16.gmra.mrb[0].mxu0 %v4100
        %v4712 = vpop.f32.mrb[0].mxu0
        %v4713 = vadd.f32 %v4086, %v4712
        %v4714 = vpop.f32.mrb[0].mxu0
        %v4715 = vpop.f32.mrb[0].mxu0
        %v4716 = vadd.f32 %v4091, %v4715
        %v4717 = vpop.f32.mrb[0].mxu0
        %4718 = vdwg.mxu0
        %v4719 = vmax.f32 %v4713, 0.0
        %v4720 = vmax.f32 %v4716, 0.0
        %4721 = vst [vmem:[%s484 + $0xc0] sm:$0xff] %v4719
        %4722 = vst [vmem:[%s484 + $0xc8] sm:$0xff] %v4720
        %v4723 = vld [vmem:[#allocation4 + $0x68] sm:$0xff]
        %v4724 = vld [vmem:[#allocation4 + $0x70] sm:$0xff]
        %v4725 = vld [vmem:[#allocation4 + $0x78] sm:$0xff]
        %4726 = vmatprep.subr.bf16.mxu0 0
        %4727 = vmatpush1.bf16.msra.mxu0 %v4723
        %4728 = vmatprep.subr.bf16.mxu0 0
        %4729 = vmatpush1.bf16.msra.mxu0 %v4724
        %4730 = vmatprep.subr.bf16.mxu0 0
        %4731 = vmatpush1.bf16.msra.mxu0 %v4725
        %4732 = vmatprep.subr.bf16.mxu0 0
        %4733 = vmatpush1.bf16.msra.mxu0 0
        %4734 = vmatprep.subr.bf16.mxu0 0
        %4735 = vmatpush1.bf16.msra.mxu0 0
        %4736 = vmatprep.subr.bf16.mxu0 0
        %4737 = vmatpush1.bf16.msra.mxu0 0
        %4738 = vmatprep.subr.bf16.mxu0 0
        %4739 = vmatpush1.bf16.msra.mxu0 0
        %4740 = vmatprep.subr.bf16.mxu0 0
        %4741 = vmatpush1.bf16.msra.mxu0 0
        %4742 = vmatprep.subr.bf16.mxu0 0
        %4743 = vmatpush1.bf16.msra.mxu0 0
        %4744 = vmatprep.subr.bf16.mxu0 0
        %4745 = vmatpush1.bf16.msra.mxu0 0
        %4746 = vmatprep.subr.bf16.mxu0 0
        %4747 = vmatpush1.bf16.msra.mxu0 0
        %4748 = vmatprep.subr.bf16.mxu0 0
        %4749 = vmatpush1.bf16.msra.mxu0 0
        %4750 = vmatprep.subr.bf16.mxu0 0
        %4751 = vmatpush1.bf16.msra.mxu0 0
        %4752 = vmatprep.subr.bf16.mxu0 0
        %4753 = vmatpush1.bf16.msra.mxu0 0
        %4754 = vmatprep.subr.bf16.mxu0 0
        %4755 = vmatpush1.bf16.msra.mxu0 0
        %4756 = vmatprep.subr.bf16.mxu0 0
        %4757 = vmatpush1.bf16.msra.mxu0 0
        %4758 = vmatprep.mubr.bf16.mxu0 0
        %4759 = vmatmul.mubr.bf16.gmra.mrb[0].mxu0 %v4100
        %v4760 = vpop.f32.mrb[0].mxu0
        %v4761 = vadd.f32 %v4086, %v4760
        %v4762 = vpop.f32.mrb[0].mxu0
        %v4763 = vpop.f32.mrb[0].mxu0
        %v4764 = vadd.f32 %v4091, %v4763
        %v4765 = vpop.f32.mrb[0].mxu0
        %4766 = vdwg.mxu0
        %v4767 = vmax.f32 %v4761, 0.0
        %v4768 = vmax.f32 %v4764, 0.0
        %4769 = vst [vmem:[%s484 + $0xd0] sm:$0xff] %v4767
        %4770 = vst [vmem:[%s484 + $0xd8] sm:$0xff] %v4768
        %v4771 = vld [vmem:[#allocation4 + $0x70] sm:$0xff]
        %v4772 = vld [vmem:[#allocation4 + $0x78] sm:$0xff]
        %v4773 = vld [vmem:[#allocation4 + $0x80] sm:$0xff]
        %4774 = vmatprep.subr.bf16.mxu0 0
        %4775 = vmatpush1.bf16.msra.mxu0 %v4771
        %4776 = vmatprep.subr.bf16.mxu0 0
        %4777 = vmatpush1.bf16.msra.mxu0 %v4772
        %4778 = vmatprep.subr.bf16.mxu0 0
        %4779 = vmatpush1.bf16.msra.mxu0 %v4773
        %4780 = vmatprep.subr.bf16.mxu0 0
        %4781 = vmatpush1.bf16.msra.mxu0 0
        %4782 = vmatprep.subr.bf16.mxu0 0
        %4783 = vmatpush1.bf16.msra.mxu0 0
        %4784 = vmatprep.subr.bf16.mxu0 0
        %4785 = vmatpush1.bf16.msra.mxu0 0
        %4786 = vmatprep.subr.bf16.mxu0 0
        %4787 = vmatpush1.bf16.msra.mxu0 0
        %4788 = vmatprep.subr.bf16.mxu0 0
        %4789 = vmatpush1.bf16.msra.mxu0 0
        %4790 = vmatprep.subr.bf16.mxu0 0
        %4791 = vmatpush1.bf16.msra.mxu0 0
        %4792 = vmatprep.subr.bf16.mxu0 0
        %4793 = vmatpush1.bf16.msra.mxu0 0
        %4794 = vmatprep.subr.bf16.mxu0 0
        %4795 = vmatpush1.bf16.msra.mxu0 0
        %4796 = vmatprep.subr.bf16.mxu0 0
        %4797 = vmatpush1.bf16.msra.mxu0 0
        %4798 = vmatprep.subr.bf16.mxu0 0
        %4799 = vmatpush1.bf16.msra.mxu0 0
        %4800 = vmatprep.subr.bf16.mxu0 0
        %4801 = vmatpush1.bf16.msra.mxu0 0
        %4802 = vmatprep.subr.bf16.mxu0 0
        %4803 = vmatpush1.bf16.msra.mxu0 0
        %4804 = vmatprep.subr.bf16.mxu0 0
        %4805 = vmatpush1.bf16.msra.mxu0 0
        %4806 = vmatprep.mubr.bf16.mxu0 0
        %4807 = vmatmul.mubr.bf16.gmra.mrb[0].mxu0 %v4100
        %v4808 = vpop.f32.mrb[0].mxu0
        %v4809 = vadd.f32 %v4086, %v4808
        %v4810 = vpop.f32.mrb[0].mxu0
        %v4811 = vpop.f32.mrb[0].mxu0
        %v4812 = vadd.f32 %v4091, %v4811
        %v4813 = vpop.f32.mrb[0].mxu0
        %4814 = vdwg.mxu0
        %v4815 = vmax.f32 %v4809, 0.0
        %v4816 = vmax.f32 %v4812, 0.0
        %4817 = vst [vmem:[%s484 + $0xe0] sm:$0xff] %v4815
        %4818 = vst [vmem:[%s484 + $0xe8] sm:$0xff] %v4816
        %v4819 = vld [vmem:[#allocation4 + $0x78] sm:$0xff]
        %v4820 = vld [vmem:[#allocation4 + $0x80] sm:$0xff]
        %v4821 = vld [vmem:[#allocation4 + $0x88] sm:$0xff]
        %4822 = vmatprep.subr.bf16.mxu0 0
        %4823 = vmatpush1.bf16.msra.mxu0 %v4819
        %4824 = vmatprep.subr.bf16.mxu0 0
        %4825 = vmatpush1.bf16.msra.mxu0 %v4820
        %4826 = vmatprep.subr.bf16.mxu0 0
        %4827 = vmatpush1.bf16.msra.mxu0 %v4821
        %4828 = vmatprep.subr.bf16.mxu0 0
        %4829 = vmatpush1.bf16.msra.mxu0 0
        %4830 = vmatprep.subr.bf16.mxu0 0
        %4831 = vmatpush1.bf16.msra.mxu0 0
        %4832 = vmatprep.subr.bf16.mxu0 0
        %4833 = vmatpush1.bf16.msra.mxu0 0
        %4834 = vmatprep.subr.bf16.mxu0 0
        %4835 = vmatpush1.bf16.msra.mxu0 0
        %4836 = vmatprep.subr.bf16.mxu0 0
        %4837 = vmatpush1.bf16.msra.mxu0 0
        %4838 = vmatprep.subr.bf16.mxu0 0
        %4839 = vmatpush1.bf16.msra.mxu0 0
        %4840 = vmatprep.subr.bf16.mxu0 0
        %4841 = vmatpush1.bf16.msra.mxu0 0
        %4842 = vmatprep.subr.bf16.mxu0 0
        %4843 = vmatpush1.bf16.msra.mxu0 0
        %4844 = vmatprep.subr.bf16.mxu0 0
        %4845 = vmatpush1.bf16.msra.mxu0 0
        %4846 = vmatprep.subr.bf16.mxu0 0
        %4847 = vmatpush1.bf16.msra.mxu0 0
        %4848 = vmatprep.subr.bf16.mxu0 0
        %4849 = vmatpush1.bf16.msra.mxu0 0
        %4850 = vmatprep.subr.bf16.mxu0 0
        %4851 = vmatpush1.bf16.msra.mxu0 0
        %4852 = vmatprep.subr.bf16.mxu0 0
        %4853 = vmatpush1.bf16.msra.mxu0 0
        %4854 = vmatprep.mubr.bf16.mxu0 0
        %4855 = vmatmul.mubr.bf16.gmra.mrb[0].mxu0 %v4100
        %v4856 = vpop.f32.mrb[0].mxu0
        %v4857 = vadd.f32 %v4086, %v4856
        %v4858 = vpop.f32.mrb[0].mxu0
        %v4859 = vpop.f32.mrb[0].mxu0
        %v4860 = vadd.f32 %v4091, %v4859
        %v4861 = vpop.f32.mrb[0].mxu0
        %4862 = vdwg.mxu0
        %v4863 = vmax.f32 %v4857, 0.0
        %v4864 = vmax.f32 %v4860, 0.0
        %4865 = vst [vmem:[%s484 + $0xf0] sm:$0xff] %v4863
        %4866 = vst [vmem:[%s484 + $0xf8] sm:$0xff] %v4864
        %v4867 = vld [vmem:[#allocation4 + $0x80] sm:$0xff]
        %v4868 = vld [vmem:[#allocation4 + $0x88] sm:$0xff]
        %v4869 = vld [vmem:[#allocation4 + $0x90] sm:$0xff]
        %4870 = vmatprep.subr.bf16.mxu0 0
        %4871 = vmatpush1.bf16.msra.mxu0 %v4867
        %4872 = vmatprep.subr.bf16.mxu0 0
        %4873 = vmatpush1.bf16.msra.mxu0 %v4868
        %4874 = vmatprep.subr.bf16.mxu0 0
        %4875 = vmatpush1.bf16.msra.mxu0 %v4869
        %4876 = vmatprep.subr.bf16.mxu0 0
        %4877 = vmatpush1.bf16.msra.mxu0 0
        %4878 = vmatprep.subr.bf16.mxu0 0
        %4879 = vmatpush1.bf16.msra.mxu0 0
        %4880 = vmatprep.subr.bf16.mxu0 0
        %4881 = vmatpush1.bf16.msra.mxu0 0
        %4882 = vmatprep.subr.bf16.mxu0 0
        %4883 = vmatpush1.bf16.msra.mxu0 0
        %4884 = vmatprep.subr.bf16.mxu0 0
        %4885 = vmatpush1.bf16.msra.mxu0 0
        %4886 = vmatprep.subr.bf16.mxu0 0
        %4887 = vmatpush1.bf16.msra.mxu0 0
        %4888 = vmatprep.subr.bf16.mxu0 0
        %4889 = vmatpush1.bf16.msra.mxu0 0
        %4890 = vmatprep.subr.bf16.mxu0 0
        %4891 = vmatpush1.bf16.msra.mxu0 0
        %4892 = vmatprep.subr.bf16.mxu0 0
        %4893 = vmatpush1.bf16.msra.mxu0 0
        %4894 = vmatprep.subr.bf16.mxu0 0
        %4895 = vmatpush1.bf16.msra.mxu0 0
        %4896 = vmatprep.subr.bf16.mxu0 0
        %4897 = vmatpush1.bf16.msra.mxu0 0
        %4898 = vmatprep.subr.bf16.mxu0 0
        %4899 = vmatpush1.bf16.msra.mxu0 0
        %4900 = vmatprep.subr.bf16.mxu0 0
        %4901 = vmatpush1.bf16.msra.mxu0 0
        %4902 = vmatprep.mubr.bf16.mxu0 0
        %4903 = vmatmul.mubr.bf16.gmra.mrb[0].mxu0 %v4100
        %v4904 = vpop.f32.mrb[0].mxu0
        %v4905 = vadd.f32 %v4086, %v4904
        %v4906 = vpop.f32.mrb[0].mxu0
        %v4907 = vpop.f32.mrb[0].mxu0
        %v4908 = vadd.f32 %v4091, %v4907
        %v4909 = vpop.f32.mrb[0].mxu0
        %4910 = vdwg.mxu0
        %v4911 = vmax.f32 %v4905, 0.0
        %v4912 = vmax.f32 %v4908, 0.0
        %4913 = vst [vmem:[%s484 + $0x100] sm:$0xff] %v4911
        %4914 = vst [vmem:[%s484 + $0x108] sm:$0xff] %v4912
        %v4915 = vld [vmem:[#allocation4 + $0x88] sm:$0xff]
        %v4916 = vld [vmem:[#allocation4 + $0x90] sm:$0xff]
        %v4917 = vld [vmem:[#allocation4 + $0x98] sm:$0xff]
        %4918 = vmatprep.subr.bf16.mxu0 0
        %4919 = vmatpush1.bf16.msra.mxu0 %v4915
        %4920 = vmatprep.subr.bf16.mxu0 0
        %4921 = vmatpush1.bf16.msra.mxu0 %v4916
        %4922 = vmatprep.subr.bf16.mxu0 0
        %4923 = vmatpush1.bf16.msra.mxu0 %v4917
        %4924 = vmatprep.subr.bf16.mxu0 0
        %4925 = vmatpush1.bf16.msra.mxu0 0
        %4926 = vmatprep.subr.bf16.mxu0 0
        %4927 = vmatpush1.bf16.msra.mxu0 0
        %4928 = vmatprep.subr.bf16.mxu0 0
        %4929 = vmatpush1.bf16.msra.mxu0 0
        %4930 = vmatprep.subr.bf16.mxu0 0
        %4931 = vmatpush1.bf16.msra.mxu0 0
        %4932 = vmatprep.subr.bf16.mxu0 0
        %4933 = vmatpush1.bf16.msra.mxu0 0
        %4934 = vmatprep.subr.bf16.mxu0 0
        %4935 = vmatpush1.bf16.msra.mxu0 0
        %4936 = vmatprep.subr.bf16.mxu0 0
        %4937 = vmatpush1.bf16.msra.mxu0 0
        %4938 = vmatprep.subr.bf16.mxu0 0
        %4939 = vmatpush1.bf16.msra.mxu0 0
        %4940 = vmatprep.subr.bf16.mxu0 0
        %4941 = vmatpush1.bf16.msra.mxu0 0
        %4942 = vmatprep.subr.bf16.mxu0 0
        %4943 = vmatpush1.bf16.msra.mxu0 0
        %4944 = vmatprep.subr.bf16.mxu0 0
        %4945 = vmatpush1.bf16.msra.mxu0 0
        %4946 = vmatprep.subr.bf16.mxu0 0
        %4947 = vmatpush1.bf16.msra.mxu0 0
        %4948 = vmatprep.subr.bf16.mxu0 0
        %4949 = vmatpush1.bf16.msra.mxu0 0
        %4950 = vmatprep.mubr.bf16.mxu0 0
        %4951 = vmatmul.mubr.bf16.gmra.mrb[0].mxu0 %v4100
        %v4952 = vpop.f32.mrb[0].mxu0
        %v4953 = vadd.f32 %v4086, %v4952
        %v4954 = vpop.f32.mrb[0].mxu0
        %v4955 = vpop.f32.mrb[0].mxu0
        %v4956 = vadd.f32 %v4091, %v4955
        %v4957 = vpop.f32.mrb[0].mxu0
        %4958 = vdwg.mxu0
        %v4959 = vmax.f32 %v4953, 0.0
        %v4960 = vmax.f32 %v4956, 0.0
        %4961 = vst [vmem:[%s484 + $0x110] sm:$0xff] %v4959
        %4962 = vst [vmem:[%s484 + $0x118] sm:$0xff] %v4960
        %v4963 = vld [vmem:[#allocation4 + $0x90] sm:$0xff]
        %v4964 = vld [vmem:[#allocation4 + $0x98] sm:$0xff]
        %v4965 = vld [vmem:[#allocation4 + $0xa0] sm:$0xff]
        %4966 = vmatprep.subr.bf16.mxu0 0
        %4967 = vmatpush1.bf16.msra.mxu0 %v4963
        %4968 = vmatprep.subr.bf16.mxu0 0
        %4969 = vmatpush1.bf16.msra.mxu0 %v4964
        %4970 = vmatprep.subr.bf16.mxu0 0
        %4971 = vmatpush1.bf16.msra.mxu0 %v4965
        %4972 = vmatprep.subr.bf16.mxu0 0
        %4973 = vmatpush1.bf16.msra.mxu0 0
        %4974 = vmatprep.subr.bf16.mxu0 0
        %4975 = vmatpush1.bf16.msra.mxu0 0
        %4976 = vmatprep.subr.bf16.mxu0 0
        %4977 = vmatpush1.bf16.msra.mxu0 0
        %4978 = vmatprep.subr.bf16.mxu0 0
        %4979 = vmatpush1.bf16.msra.mxu0 0
        %4980 = vmatprep.subr.bf16.mxu0 0
        %4981 = vmatpush1.bf16.msra.mxu0 0
        %4982 = vmatprep.subr.bf16.mxu0 0
        %4983 = vmatpush1.bf16.msra.mxu0 0
        %4984 = vmatprep.subr.bf16.mxu0 0
        %4985 = vmatpush1.bf16.msra.mxu0 0
        %4986 = vmatprep.subr.bf16.mxu0 0
        %4987 = vmatpush1.bf16.msra.mxu0 0
        %4988 = vmatprep.subr.bf16.mxu0 0
        %4989 = vmatpush1.bf16.msra.mxu0 0
        %4990 = vmatprep.subr.bf16.mxu0 0
        %4991 = vmatpush1.bf16.msra.mxu0 0
        %4992 = vmatprep.subr.bf16.mxu0 0
        %4993 = vmatpush1.bf16.msra.mxu0 0
        %4994 = vmatprep.subr.bf16.mxu0 0
        %4995 = vmatpush1.bf16.msra.mxu0 0
        %4996 = vmatprep.subr.bf16.mxu0 0
        %4997 = vmatpush1.bf16.msra.mxu0 0
        %4998 = vmatprep.mubr.bf16.mxu0 0
        %4999 = vmatmul.mubr.bf16.gmra.mrb[0].mxu0 %v4100
        %v5000 = vpop.f32.mrb[0].mxu0
        %v5001 = vadd.f32 %v4086, %v5000
        %v5002 = vpop.f32.mrb[0].mxu0
        %v5003 = vpop.f32.mrb[0].mxu0
        %v5004 = vadd.f32 %v4091, %v5003
        %v5005 = vpop.f32.mrb[0].mxu0
        %5006 = vdwg.mxu0
        %v5007 = vmax.f32 %v5001, 0.0
        %v5008 = vmax.f32 %v5004, 0.0
        %5009 = vst [vmem:[%s484 + $0x120] sm:$0xff] %v5007
        %5010 = vst [vmem:[%s484 + $0x128] sm:$0xff] %v5008
        %v5011 = vld [vmem:[#allocation4 + $0x98] sm:$0xff]
        %v5012 = vld [vmem:[#allocation4 + $0xa0] sm:$0xff]
        %v5013 = vld [vmem:[#allocation4 + $0xa8] sm:$0xff]
        %5014 = vmatprep.subr.bf16.mxu0 0
        %5015 = vmatpush1.bf16.msra.mxu0 %v5011
        %5016 = vmatprep.subr.bf16.mxu0 0
        %5017 = vmatpush1.bf16.msra.mxu0 %v5012
        %5018 = vmatprep.subr.bf16.mxu0 0
        %5019 = vmatpush1.bf16.msra.mxu0 %v5013
        %5020 = vmatprep.subr.bf16.mxu0 0
        %5021 = vmatpush1.bf16.msra.mxu0 0
        %5022 = vmatprep.subr.bf16.mxu0 0
        %5023 = vmatpush1.bf16.msra.mxu0 0
        %5024 = vmatprep.subr.bf16.mxu0 0
        %5025 = vmatpush1.bf16.msra.mxu0 0
        %5026 = vmatprep.subr.bf16.mxu0 0
        %5027 = vmatpush1.bf16.msra.mxu0 0
        %5028 = vmatprep.subr.bf16.mxu0 0
        %5029 = vmatpush1.bf16.msra.mxu0 0
        %5030 = vmatprep.subr.bf16.mxu0 0
        %5031 = vmatpush1.bf16.msra.mxu0 0
        %5032 = vmatprep.subr.bf16.mxu0 0
        %5033 = vmatpush1.bf16.msra.mxu0 0
        %5034 = vmatprep.subr.bf16.mxu0 0
        %5035 = vmatpush1.bf16.msra.mxu0 0
        %5036 = vmatprep.subr.bf16.mxu0 0
        %5037 = vmatpush1.bf16.msra.mxu0 0
        %5038 = vmatprep.subr.bf16.mxu0 0
        %5039 = vmatpush1.bf16.msra.mxu0 0
        %5040 = vmatprep.subr.bf16.mxu0 0
        %5041 = vmatpush1.bf16.msra.mxu0 0
        %5042 = vmatprep.subr.bf16.mxu0 0
        %5043 = vmatpush1.bf16.msra.mxu0 0
        %5044 = vmatprep.subr.bf16.mxu0 0
        %5045 = vmatpush1.bf16.msra.mxu0 0
        %5046 = vmatprep.mubr.bf16.mxu0 0
        %5047 = vmatmul.mubr.bf16.gmra.mrb[0].mxu0 %v4100
        %v5048 = vpop.f32.mrb[0].mxu0
        %v5049 = vadd.f32 %v4086, %v5048
        %v5050 = vpop.f32.mrb[0].mxu0
        %v5051 = vpop.f32.mrb[0].mxu0
        %v5052 = vadd.f32 %v4091, %v5051
        %v5053 = vpop.f32.mrb[0].mxu0
        %5054 = vdwg.mxu0
        %v5055 = vmax.f32 %v5049, 0.0
        %v5056 = vmax.f32 %v5052, 0.0
        %5057 = vst [vmem:[%s484 + $0x130] sm:$0xff] %v5055
        %5058 = vst [vmem:[%s484 + $0x138] sm:$0xff] %v5056
        %v5059 = vld [vmem:[#allocation4 + $0xa0] sm:$0xff]
        %v5060 = vld [vmem:[#allocation4 + $0xa8] sm:$0xff]
        %v5061 = vld [vmem:[#allocation4 + $0xb0] sm:$0xff]
        %5062 = vmatprep.subr.bf16.mxu0 0
        %5063 = vmatpush1.bf16.msra.mxu0 %v5059
        %5064 = vmatprep.subr.bf16.mxu0 0
        %5065 = vmatpush1.bf16.msra.mxu0 %v5060
        %5066 = vmatprep.subr.bf16.mxu0 0
        %5067 = vmatpush1.bf16.msra.mxu0 %v5061
        %5068 = vmatprep.subr.bf16.mxu0 0
        %5069 = vmatpush1.bf16.msra.mxu0 0
        %5070 = vmatprep.subr.bf16.mxu0 0
        %5071 = vmatpush1.bf16.msra.mxu0 0
        %5072 = vmatprep.subr.bf16.mxu0 0
        %5073 = vmatpush1.bf16.msra.mxu0 0
        %5074 = vmatprep.subr.bf16.mxu0 0
        %5075 = vmatpush1.bf16.msra.mxu0 0
        %5076 = vmatprep.subr.bf16.mxu0 0
        %5077 = vmatpush1.bf16.msra.mxu0 0
        %5078 = vmatprep.subr.bf16.mxu0 0
        %5079 = vmatpush1.bf16.msra.mxu0 0
        %5080 = vmatprep.subr.bf16.mxu0 0
        %5081 = vmatpush1.bf16.msra.mxu0 0
        %5082 = vmatprep.subr.bf16.mxu0 0
        %5083 = vmatpush1.bf16.msra.mxu0 0
        %5084 = vmatprep.subr.bf16.mxu0 0
        %5085 = vmatpush1.bf16.msra.mxu0 0
        %5086 = vmatprep.subr.bf16.mxu0 0
        %5087 = vmatpush1.bf16.msra.mxu0 0
        %5088 = vmatprep.subr.bf16.mxu0 0
        %5089 = vmatpush1.bf16.msra.mxu0 0
        %5090 = vmatprep.subr.bf16.mxu0 0
        %5091 = vmatpush1.bf16.msra.mxu0 0
        %5092 = vmatprep.subr.bf16.mxu0 0
        %5093 = vmatpush1.bf16.msra.mxu0 0
        %5094 = vmatprep.mubr.bf16.mxu0 0
        %5095 = vmatmul.mubr.bf16.gmra.mrb[0].mxu0 %v4100
        %v5096 = vpop.f32.mrb[0].mxu0
        %v5097 = vadd.f32 %v4086, %v5096
        %v5098 = vpop.f32.mrb[0].mxu0
        %v5099 = vpop.f32.mrb[0].mxu0
        %v5100 = vadd.f32 %v4091, %v5099
        %v5101 = vpop.f32.mrb[0].mxu0
        %5102 = vdwg.mxu0
        %v5103 = vmax.f32 %v5097, 0.0
        %v5104 = vmax.f32 %v5100, 0.0
        %5105 = vst [vmem:[%s484 + $0x140] sm:$0xff] %v5103
        %5106 = vst [vmem:[%s484 + $0x148] sm:$0xff] %v5104
        %v5107 = vld [vmem:[#allocation4 + $0xa8] sm:$0xff]
        %v5108 = vld [vmem:[#allocation4 + $0xb0] sm:$0xff]
        %v5109 = vld [vmem:[#allocation4 + $0xb8] sm:$0xff]
        %5110 = vmatprep.subr.bf16.mxu0 0
        %5111 = vmatpush1.bf16.msra.mxu0 %v5107
        %5112 = vmatprep.subr.bf16.mxu0 0
        %5113 = vmatpush1.bf16.msra.mxu0 %v5108
        %5114 = vmatprep.subr.bf16.mxu0 0
        %5115 = vmatpush1.bf16.msra.mxu0 %v5109
        %5116 = vmatprep.subr.bf16.mxu0 0
        %5117 = vmatpush1.bf16.msra.mxu0 0
        %5118 = vmatprep.subr.bf16.mxu0 0
        %5119 = vmatpush1.bf16.msra.mxu0 0
        %5120 = vmatprep.subr.bf16.mxu0 0
        %5121 = vmatpush1.bf16.msra.mxu0 0
        %5122 = vmatprep.subr.bf16.mxu0 0
        %5123 = vmatpush1.bf16.msra.mxu0 0
        %5124 = vmatprep.subr.bf16.mxu0 0
        %5125 = vmatpush1.bf16.msra.mxu0 0
        %5126 = vmatprep.subr.bf16.mxu0 0
        %5127 = vmatpush1.bf16.msra.mxu0 0
        %5128 = vmatprep.subr.bf16.mxu0 0
        %5129 = vmatpush1.bf16.msra.mxu0 0
        %5130 = vmatprep.subr.bf16.mxu0 0
        %5131 = vmatpush1.bf16.msra.mxu0 0
        %5132 = vmatprep.subr.bf16.mxu0 0
        %5133 = vmatpush1.bf16.msra.mxu0 0
        %5134 = vmatprep.subr.bf16.mxu0 0
        %5135 = vmatpush1.bf16.msra.mxu0 0
        %5136 = vmatprep.subr.bf16.mxu0 0
        %5137 = vmatpush1.bf16.msra.mxu0 0
        %5138 = vmatprep.subr.bf16.mxu0 0
        %5139 = vmatpush1.bf16.msra.mxu0 0
        %5140 = vmatprep.subr.bf16.mxu0 0
        %5141 = vmatpush1.bf16.msra.mxu0 0
        %5142 = vmatprep.mubr.bf16.mxu0 0
        %5143 = vmatmul.mubr.bf16.gmra.mrb[0].mxu0 %v4100
        %v5144 = vpop.f32.mrb[0].mxu0
        %v5145 = vadd.f32 %v4086, %v5144
        %v5146 = vpop.f32.mrb[0].mxu0
        %v5147 = vpop.f32.mrb[0].mxu0
        %v5148 = vadd.f32 %v4091, %v5147
        %v5149 = vpop.f32.mrb[0].mxu0
        %5150 = vdwg.mxu0
        %v5151 = vmax.f32 %v5145, 0.0
        %v5152 = vmax.f32 %v5148, 0.0
        %5153 = vst [vmem:[%s484 + $0x150] sm:$0xff] %v5151
        %5154 = vst [vmem:[%s484 + $0x158] sm:$0xff] %v5152
        %v5155 = vld [vmem:[#allocation4 + $0xb0] sm:$0xff]
        %v5156 = vld [vmem:[#allocation4 + $0xb8] sm:$0xff]
        %v5157 = vld [vmem:[#allocation4 + $0xc0] sm:$0xff]
        %5158 = vmatprep.subr.bf16.mxu0 0
        %5159 = vmatpush1.bf16.msra.mxu0 %v5155
        %5160 = vmatprep.subr.bf16.mxu0 0
        %5161 = vmatpush1.bf16.msra.mxu0 %v5156
        %5162 = vmatprep.subr.bf16.mxu0 0
        %5163 = vmatpush1.bf16.msra.mxu0 %v5157
        %5164 = vmatprep.subr.bf16.mxu0 0
        %5165 = vmatpush1.bf16.msra.mxu0 0
        %5166 = vmatprep.subr.bf16.mxu0 0
        %5167 = vmatpush1.bf16.msra.mxu0 0
        %5168 = vmatprep.subr.bf16.mxu0 0
        %5169 = vmatpush1.bf16.msra.mxu0 0
        %5170 = vmatprep.subr.bf16.mxu0 0
        %5171 = vmatpush1.bf16.msra.mxu0 0
        %5172 = vmatprep.subr.bf16.mxu0 0
        %5173 = vmatpush1.bf16.msra.mxu0 0
        %5174 = vmatprep.subr.bf16.mxu0 0
        %5175 = vmatpush1.bf16.msra.mxu0 0
        %5176 = vmatprep.subr.bf16.mxu0 0
        %5177 = vmatpush1.bf16.msra.mxu0 0
        %5178 = vmatprep.subr.bf16.mxu0 0
        %5179 = vmatpush1.bf16.msra.mxu0 0
        %5180 = vmatprep.subr.bf16.mxu0 0
        %5181 = vmatpush1.bf16.msra.mxu0 0
        %5182 = vmatprep.subr.bf16.mxu0 0
        %5183 = vmatpush1.bf16.msra.mxu0 0
        %5184 = vmatprep.subr.bf16.mxu0 0
        %5185 = vmatpush1.bf16.msra.mxu0 0
        %5186 = vmatprep.subr.bf16.mxu0 0
        %5187 = vmatpush1.bf16.msra.mxu0 0
        %5188 = vmatprep.subr.bf16.mxu0 0
        %5189 = vmatpush1.bf16.msra.mxu0 0
        %5190 = vmatprep.mubr.bf16.mxu0 0
        %5191 = vmatmul.mubr.bf16.gmra.mrb[0].mxu0 %v4100
        %v5192 = vpop.f32.mrb[0].mxu0
        %v5193 = vadd.f32 %v4086, %v5192
        %v5194 = vpop.f32.mrb[0].mxu0
        %v5195 = vpop.f32.mrb[0].mxu0
        %v5196 = vadd.f32 %v4091, %v5195
        %v5197 = vpop.f32.mrb[0].mxu0
        %5198 = vdwg.mxu0
        %v5199 = vmax.f32 %v5193, 0.0
        %v5200 = vmax.f32 %v5196, 0.0
        %5201 = vst [vmem:[%s484 + $0x160] sm:$0xff] %v5199
        %5202 = vst [vmem:[%s484 + $0x168] sm:$0xff] %v5200
        %v5203 = vld [vmem:[#allocation4 + $0xb8] sm:$0xff]
        %v5204 = vld [vmem:[#allocation4 + $0xc0] sm:$0xff]
        %v5205 = vld [vmem:[#allocation4 + $0xc8] sm:$0xff]
        %5206 = vmatprep.subr.bf16.mxu0 0
        %5207 = vmatpush1.bf16.msra.mxu0 %v5203
        %5208 = vmatprep.subr.bf16.mxu0 0
        %5209 = vmatpush1.bf16.msra.mxu0 %v5204
        %5210 = vmatprep.subr.bf16.mxu0 0
        %5211 = vmatpush1.bf16.msra.mxu0 %v5205
        %5212 = vmatprep.subr.bf16.mxu0 0
        %5213 = vmatpush1.bf16.msra.mxu0 0
        %5214 = vmatprep.subr.bf16.mxu0 0
        %5215 = vmatpush1.bf16.msra.mxu0 0
        %5216 = vmatprep.subr.bf16.mxu0 0
        %5217 = vmatpush1.bf16.msra.mxu0 0
        %5218 = vmatprep.subr.bf16.mxu0 0
        %5219 = vmatpush1.bf16.msra.mxu0 0
        %5220 = vmatprep.subr.bf16.mxu0 0
        %5221 = vmatpush1.bf16.msra.mxu0 0
        %5222 = vmatprep.subr.bf16.mxu0 0
        %5223 = vmatpush1.bf16.msra.mxu0 0
        %5224 = vmatprep.subr.bf16.mxu0 0
        %5225 = vmatpush1.bf16.msra.mxu0 0
        %5226 = vmatprep.subr.bf16.mxu0 0
        %5227 = vmatpush1.bf16.msra.mxu0 0
        %5228 = vmatprep.subr.bf16.mxu0 0
        %5229 = vmatpush1.bf16.msra.mxu0 0
        %5230 = vmatprep.subr.bf16.mxu0 0
        %5231 = vmatpush1.bf16.msra.mxu0 0
        %5232 = vmatprep.subr.bf16.mxu0 0
        %5233 = vmatpush1.bf16.msra.mxu0 0
        %5234 = vmatprep.subr.bf16.mxu0 0
        %5235 = vmatpush1.bf16.msra.mxu0 0
        %5236 = vmatprep.subr.bf16.mxu0 0
        %5237 = vmatpush1.bf16.msra.mxu0 0
        %5238 = vmatprep.mubr.bf16.mxu0 0
        %5239 = vmatmul.mubr.bf16.gmra.mrb[0].mxu0 %v4100
        %v5240 = vpop.f32.mrb[0].mxu0
        %v5241 = vadd.f32 %v4086, %v5240
        %v5242 = vpop.f32.mrb[0].mxu0
        %v5243 = vpop.f32.mrb[0].mxu0
        %v5244 = vadd.f32 %v4091, %v5243
        %v5245 = vpop.f32.mrb[0].mxu0
        %5246 = vdwg.mxu0
        %v5247 = vmax.f32 %v5241, 0.0
        %v5248 = vmax.f32 %v5244, 0.0
        %5249 = vst [vmem:[%s484 + $0x170] sm:$0xff] %v5247
        %5250 = vst [vmem:[%s484 + $0x178] sm:$0xff] %v5248
        %v5251 = vld [vmem:[#allocation4 + $0xc0] sm:$0xff]
        %v5252 = vld [vmem:[#allocation4 + $0xc8] sm:$0xff]
        %v5253 = vld [vmem:[#allocation4 + $0xd0] sm:$0xff]
        %5254 = vmatprep.subr.bf16.mxu0 0
        %5255 = vmatpush1.bf16.msra.mxu0 %v5251
        %5256 = vmatprep.subr.bf16.mxu0 0
        %5257 = vmatpush1.bf16.msra.mxu0 %v5252
        %5258 = vmatprep.subr.bf16.mxu0 0
        %5259 = vmatpush1.bf16.msra.mxu0 %v5253
        %5260 = vmatprep.subr.bf16.mxu0 0
        %5261 = vmatpush1.bf16.msra.mxu0 0
        %5262 = vmatprep.subr.bf16.mxu0 0
        %5263 = vmatpush1.bf16.msra.mxu0 0
        %5264 = vmatprep.subr.bf16.mxu0 0
        %5265 = vmatpush1.bf16.msra.mxu0 0
        %5266 = vmatprep.subr.bf16.mxu0 0
        %5267 = vmatpush1.bf16.msra.mxu0 0
        %5268 = vmatprep.subr.bf16.mxu0 0
        %5269 = vmatpush1.bf16.msra.mxu0 0
        %5270 = vmatprep.subr.bf16.mxu0 0
        %5271 = vmatpush1.bf16.msra.mxu0 0
        %5272 = vmatprep.subr.bf16.mxu0 0
        %5273 = vmatpush1.bf16.msra.mxu0 0
        %5274 = vmatprep.subr.bf16.mxu0 0
        %5275 = vmatpush1.bf16.msra.mxu0 0
        %5276 = vmatprep.subr.bf16.mxu0 0
        %5277 = vmatpush1.bf16.msra.mxu0 0
        %5278 = vmatprep.subr.bf16.mxu0 0
        %5279 = vmatpush1.bf16.msra.mxu0 0
        %5280 = vmatprep.subr.bf16.mxu0 0
        %5281 = vmatpush1.bf16.msra.mxu0 0
        %5282 = vmatprep.subr.bf16.mxu0 0
        %5283 = vmatpush1.bf16.msra.mxu0 0
        %5284 = vmatprep.subr.bf16.mxu0 0
        %5285 = vmatpush1.bf16.msra.mxu0 0
        %5286 = vmatprep.mubr.bf16.mxu0 0
        %5287 = vmatmul.mubr.bf16.gmra.mrb[0].mxu0 %v4100
        %v5288 = vpop.f32.mrb[0].mxu0
        %v5289 = vadd.f32 %v4086, %v5288
        %v5290 = vpop.f32.mrb[0].mxu0
        %v5291 = vpop.f32.mrb[0].mxu0
        %v5292 = vadd.f32 %v4091, %v5291
        %v5293 = vpop.f32.mrb[0].mxu0
        %5294 = vdwg.mxu0
        %v5295 = vmax.f32 %v5289, 0.0
        %v5296 = vmax.f32 %v5292, 0.0
        %5297 = vst [vmem:[%s484 + $0x180] sm:$0xff] %v5295
        %5298 = vst [vmem:[%s484 + $0x188] sm:$0xff] %v5296
        %v5299 = vld [vmem:[#allocation4 + $0xc8] sm:$0xff]
        %v5300 = vld [vmem:[#allocation4 + $0xd0] sm:$0xff]
        %v5301 = vld [vmem:[#allocation4 + $0xd8] sm:$0xff]
        %5302 = vmatprep.subr.bf16.mxu0 0
        %5303 = vmatpush1.bf16.msra.mxu0 %v5299
        %5304 = vmatprep.subr.bf16.mxu0 0
        %5305 = vmatpush1.bf16.msra.mxu0 %v5300
        %5306 = vmatprep.subr.bf16.mxu0 0
        %5307 = vmatpush1.bf16.msra.mxu0 %v5301
        %5308 = vmatprep.subr.bf16.mxu0 0
        %5309 = vmatpush1.bf16.msra.mxu0 0
        %5310 = vmatprep.subr.bf16.mxu0 0
        %5311 = vmatpush1.bf16.msra.mxu0 0
        %5312 = vmatprep.subr.bf16.mxu0 0
        %5313 = vmatpush1.bf16.msra.mxu0 0
        %5314 = vmatprep.subr.bf16.mxu0 0
        %5315 = vmatpush1.bf16.msra.mxu0 0
        %5316 = vmatprep.subr.bf16.mxu0 0
        %5317 = vmatpush1.bf16.msra.mxu0 0
        %5318 = vmatprep.subr.bf16.mxu0 0
        %5319 = vmatpush1.bf16.msra.mxu0 0
        %5320 = vmatprep.subr.bf16.mxu0 0
        %5321 = vmatpush1.bf16.msra.mxu0 0
        %5322 = vmatprep.subr.bf16.mxu0 0
        %5323 = vmatpush1.bf16.msra.mxu0 0
        %5324 = vmatprep.subr.bf16.mxu0 0
        %5325 = vmatpush1.bf16.msra.mxu0 0
        %5326 = vmatprep.subr.bf16.mxu0 0
        %5327 = vmatpush1.bf16.msra.mxu0 0
        %5328 = vmatprep.subr.bf16.mxu0 0
        %5329 = vmatpush1.bf16.msra.mxu0 0
        %5330 = vmatprep.subr.bf16.mxu0 0
        %5331 = vmatpush1.bf16.msra.mxu0 0
        %5332 = vmatprep.subr.bf16.mxu0 0
        %5333 = vmatpush1.bf16.msra.mxu0 0
        %5334 = vmatprep.mubr.bf16.mxu0 0
        %5335 = vmatmul.mubr.bf16.gmra.mrb[0].mxu0 %v4100
        %v5336 = vpop.f32.mrb[0].mxu0
        %v5337 = vadd.f32 %v4086, %v5336
        %v5338 = vpop.f32.mrb[0].mxu0
        %v5339 = vpop.f32.mrb[0].mxu0
        %v5340 = vadd.f32 %v4091, %v5339
        %v5341 = vpop.f32.mrb[0].mxu0
        %5342 = vdwg.mxu0
        %v5343 = vmax.f32 %v5337, 0.0
        %v5344 = vmax.f32 %v5340, 0.0
        %5345 = vst [vmem:[%s484 + $0x190] sm:$0xff] %v5343
        %5346 = vst [vmem:[%s484 + $0x198] sm:$0xff] %v5344
        %v5347 = vld [vmem:[#allocation4 + $0xd0] sm:$0xff]
        %v5348 = vld [vmem:[#allocation4 + $0xd8] sm:$0xff]
        %v5349 = vld [vmem:[#allocation4 + $0xe0] sm:$0xff]
        %5350 = vmatprep.subr.bf16.mxu0 0
        %5351 = vmatpush1.bf16.msra.mxu0 %v5347
        %5352 = vmatprep.subr.bf16.mxu0 0
        %5353 = vmatpush1.bf16.msra.mxu0 %v5348
        %5354 = vmatprep.subr.bf16.mxu0 0
        %5355 = vmatpush1.bf16.msra.mxu0 %v5349
        %5356 = vmatprep.subr.bf16.mxu0 0
        %5357 = vmatpush1.bf16.msra.mxu0 0
        %5358 = vmatprep.subr.bf16.mxu0 0
        %5359 = vmatpush1.bf16.msra.mxu0 0
        %5360 = vmatprep.subr.bf16.mxu0 0
        %5361 = vmatpush1.bf16.msra.mxu0 0
        %5362 = vmatprep.subr.bf16.mxu0 0
        %5363 = vmatpush1.bf16.msra.mxu0 0
        %5364 = vmatprep.subr.bf16.mxu0 0
        %5365 = vmatpush1.bf16.msra.mxu0 0
        %5366 = vmatprep.subr.bf16.mxu0 0
        %5367 = vmatpush1.bf16.msra.mxu0 0
        %5368 = vmatprep.subr.bf16.mxu0 0
        %5369 = vmatpush1.bf16.msra.mxu0 0
        %5370 = vmatprep.subr.bf16.mxu0 0
        %5371 = vmatpush1.bf16.msra.mxu0 0
        %5372 = vmatprep.subr.bf16.mxu0 0
        %5373 = vmatpush1.bf16.msra.mxu0 0
        %5374 = vmatprep.subr.bf16.mxu0 0
        %5375 = vmatpush1.bf16.msra.mxu0 0
        %5376 = vmatprep.subr.bf16.mxu0 0
        %5377 = vmatpush1.bf16.msra.mxu0 0
        %5378 = vmatprep.subr.bf16.mxu0 0
        %5379 = vmatpush1.bf16.msra.mxu0 0
        %5380 = vmatprep.subr.bf16.mxu0 0
        %5381 = vmatpush1.bf16.msra.mxu0 0
        %5382 = vmatprep.mubr.bf16.mxu0 0
        %5383 = vmatmul.mubr.bf16.gmra.mrb[0].mxu0 %v4100
        %v5384 = vpop.f32.mrb[0].mxu0
        %v5385 = vadd.f32 %v4086, %v5384
        %v5386 = vpop.f32.mrb[0].mxu0
        %v5387 = vpop.f32.mrb[0].mxu0
        %v5388 = vadd.f32 %v4091, %v5387
        %v5389 = vpop.f32.mrb[0].mxu0
        %5390 = vdwg.mxu0
        %v5391 = vmax.f32 %v5385, 0.0
        %v5392 = vmax.f32 %v5388, 0.0
        %5393 = vst [vmem:[%s484 + $0x1a0] sm:$0xff] %v5391
        %5394 = vst [vmem:[%s484 + $0x1a8] sm:$0xff] %v5392
        %v5395 = vld [vmem:[#allocation4 + $0xd8] sm:$0xff]
        %v5396 = vld [vmem:[#allocation4 + $0xe0] sm:$0xff]
        %v5397 = vld [vmem:[#allocation4 + $0xe8] sm:$0xff]
        %5398 = vmatprep.subr.bf16.mxu0 0
        %5399 = vmatpush1.bf16.msra.mxu0 %v5395
        %5400 = vmatprep.subr.bf16.mxu0 0
        %5401 = vmatpush1.bf16.msra.mxu0 %v5396
        %5402 = vmatprep.subr.bf16.mxu0 0
        %5403 = vmatpush1.bf16.msra.mxu0 %v5397
        %5404 = vmatprep.subr.bf16.mxu0 0
        %5405 = vmatpush1.bf16.msra.mxu0 0
        %5406 = vmatprep.subr.bf16.mxu0 0
        %5407 = vmatpush1.bf16.msra.mxu0 0
        %5408 = vmatprep.subr.bf16.mxu0 0
        %5409 = vmatpush1.bf16.msra.mxu0 0
        %5410 = vmatprep.subr.bf16.mxu0 0
        %5411 = vmatpush1.bf16.msra.mxu0 0
        %5412 = vmatprep.subr.bf16.mxu0 0
        %5413 = vmatpush1.bf16.msra.mxu0 0
        %5414 = vmatprep.subr.bf16.mxu0 0
        %5415 = vmatpush1.bf16.msra.mxu0 0
        %5416 = vmatprep.subr.bf16.mxu0 0
        %5417 = vmatpush1.bf16.msra.mxu0 0
        %5418 = vmatprep.subr.bf16.mxu0 0
        %5419 = vmatpush1.bf16.msra.mxu0 0
        %5420 = vmatprep.subr.bf16.mxu0 0
        %5421 = vmatpush1.bf16.msra.mxu0 0
        %5422 = vmatprep.subr.bf16.mxu0 0
        %5423 = vmatpush1.bf16.msra.mxu0 0
        %5424 = vmatprep.subr.bf16.mxu0 0
        %5425 = vmatpush1.bf16.msra.mxu0 0
        %5426 = vmatprep.subr.bf16.mxu0 0
        %5427 = vmatpush1.bf16.msra.mxu0 0
        %5428 = vmatprep.subr.bf16.mxu0 0
        %5429 = vmatpush1.bf16.msra.mxu0 0
        %5430 = vmatprep.mubr.bf16.mxu0 0
        %5431 = vmatmul.mubr.bf16.gmra.mrb[0].mxu0 %v4100
        %v5432 = vpop.f32.mrb[0].mxu0
        %v5433 = vadd.f32 %v4086, %v5432
        %v5434 = vpop.f32.mrb[0].mxu0
        %v5435 = vpop.f32.mrb[0].mxu0
        %v5436 = vadd.f32 %v4091, %v5435
        %v5437 = vpop.f32.mrb[0].mxu0
        %5438 = vdwg.mxu0
        %v5439 = vmax.f32 %v5433, 0.0
        %v5440 = vmax.f32 %v5436, 0.0
        %5441 = vst [vmem:[%s484 + $0x1b0] sm:$0xff] %v5439
        %5442 = vst [vmem:[%s484 + $0x1b8] sm:$0xff] %v5440
        %v5443 = vld [vmem:[#allocation4 + $0xe0] sm:$0xff]
        %v5444 = vld [vmem:[#allocation4 + $0xe8] sm:$0xff]
        %v5445 = vld [vmem:[#allocation4 + $0xf0] sm:$0xff]
        %5446 = vmatprep.subr.bf16.mxu0 0
        %5447 = vmatpush1.bf16.msra.mxu0 %v5443
        %5448 = vmatprep.subr.bf16.mxu0 0
        %5449 = vmatpush1.bf16.msra.mxu0 %v5444
        %5450 = vmatprep.subr.bf16.mxu0 0
        %5451 = vmatpush1.bf16.msra.mxu0 %v5445
        %5452 = vmatprep.subr.bf16.mxu0 0
        %5453 = vmatpush1.bf16.msra.mxu0 0
        %5454 = vmatprep.subr.bf16.mxu0 0
        %5455 = vmatpush1.bf16.msra.mxu0 0
        %5456 = vmatprep.subr.bf16.mxu0 0
        %5457 = vmatpush1.bf16.msra.mxu0 0
        %5458 = vmatprep.subr.bf16.mxu0 0
        %5459 = vmatpush1.bf16.msra.mxu0 0
        %5460 = vmatprep.subr.bf16.mxu0 0
        %5461 = vmatpush1.bf16.msra.mxu0 0
        %5462 = vmatprep.subr.bf16.mxu0 0
        %5463 = vmatpush1.bf16.msra.mxu0 0
        %5464 = vmatprep.subr.bf16.mxu0 0
        %5465 = vmatpush1.bf16.msra.mxu0 0
        %5466 = vmatprep.subr.bf16.mxu0 0
        %5467 = vmatpush1.bf16.msra.mxu0 0
        %5468 = vmatprep.subr.bf16.mxu0 0
        %5469 = vmatpush1.bf16.msra.mxu0 0
        %5470 = vmatprep.subr.bf16.mxu0 0
        %5471 = vmatpush1.bf16.msra.mxu0 0
        %5472 = vmatprep.subr.bf16.mxu0 0
        %5473 = vmatpush1.bf16.msra.mxu0 0
        %5474 = vmatprep.subr.bf16.mxu0 0
        %5475 = vmatpush1.bf16.msra.mxu0 0
        %5476 = vmatprep.subr.bf16.mxu0 0
        %5477 = vmatpush1.bf16.msra.mxu0 0
        %5478 = vmatprep.mubr.bf16.mxu0 0
        %5479 = vmatmul.mubr.bf16.gmra.mrb[0].mxu0 %v4100
        %v5480 = vpop.f32.mrb[0].mxu0
        %v5481 = vadd.f32 %v4086, %v5480
        %v5482 = vpop.f32.mrb[0].mxu0
        %v5483 = vpop.f32.mrb[0].mxu0
        %v5484 = vadd.f32 %v4091, %v5483
        %v5485 = vpop.f32.mrb[0].mxu0
        %5486 = vdwg.mxu0
        %v5487 = vmax.f32 %v5481, 0.0
        %v5488 = vmax.f32 %v5484, 0.0
        %5489 = vst [vmem:[%s484 + $0x1c0] sm:$0xff] %v5487
        %5490 = vst [vmem:[%s484 + $0x1c8] sm:$0xff] %v5488
        %v5491 = vld [vmem:[#allocation4 + $0xe8] sm:$0xff]
        %v5492 = vld [vmem:[#allocation4 + $0xf0] sm:$0xff]
        %v5493 = vld [vmem:[#allocation4 + $0xf8] sm:$0xff]
        %5494 = vmatprep.subr.bf16.mxu0 0
        %5495 = vmatpush1.bf16.msra.mxu0 %v5491
        %5496 = vmatprep.subr.bf16.mxu0 0
        %5497 = vmatpush1.bf16.msra.mxu0 %v5492
        %5498 = vmatprep.subr.bf16.mxu0 0
        %5499 = vmatpush1.bf16.msra.mxu0 %v5493
        %5500 = vmatprep.subr.bf16.mxu0 0
        %5501 = vmatpush1.bf16.msra.mxu0 0
        %5502 = vmatprep.subr.bf16.mxu0 0
        %5503 = vmatpush1.bf16.msra.mxu0 0
        %5504 = vmatprep.subr.bf16.mxu0 0
        %5505 = vmatpush1.bf16.msra.mxu0 0
        %5506 = vmatprep.subr.bf16.mxu0 0
        %5507 = vmatpush1.bf16.msra.mxu0 0
        %5508 = vmatprep.subr.bf16.mxu0 0
        %5509 = vmatpush1.bf16.msra.mxu0 0
        %5510 = vmatprep.subr.bf16.mxu0 0
        %5511 = vmatpush1.bf16.msra.mxu0 0
        %5512 = vmatprep.subr.bf16.mxu0 0
        %5513 = vmatpush1.bf16.msra.mxu0 0
        %5514 = vmatprep.subr.bf16.mxu0 0
        %5515 = vmatpush1.bf16.msra.mxu0 0
        %5516 = vmatprep.subr.bf16.mxu0 0
        %5517 = vmatpush1.bf16.msra.mxu0 0
        %5518 = vmatprep.subr.bf16.mxu0 0
        %5519 = vmatpush1.bf16.msra.mxu0 0
        %5520 = vmatprep.subr.bf16.mxu0 0
        %5521 = vmatpush1.bf16.msra.mxu0 0
        %5522 = vmatprep.subr.bf16.mxu0 0
        %5523 = vmatpush1.bf16.msra.mxu0 0
        %5524 = vmatprep.subr.bf16.mxu0 0
        %5525 = vmatpush1.bf16.msra.mxu0 0
        %5526 = vmatprep.mubr.bf16.mxu0 0
        %5527 = vmatmul.mubr.bf16.gmra.mrb[0].mxu0 %v4100
        %v5528 = vpop.f32.mrb[0].mxu0
        %v5529 = vadd.f32 %v4086, %v5528
        %v5530 = vpop.f32.mrb[0].mxu0
        %v5531 = vpop.f32.mrb[0].mxu0
        %v5532 = vadd.f32 %v4091, %v5531
        %v5533 = vpop.f32.mrb[0].mxu0
        %5534 = vdwg.mxu0
        %v5535 = vmax.f32 %v5529, 0.0
        %v5536 = vmax.f32 %v5532, 0.0
        %5537 = vst [vmem:[%s484 + $0x1d0] sm:$0xff] %v5535
        %5538 = vst [vmem:[%s484 + $0x1d8] sm:$0xff] %v5536
        %v5539 = vld [vmem:[#allocation4 + $0xf0] sm:$0xff]
        %v5540 = vld [vmem:[#allocation4 + $0xf8] sm:$0xff]
        %v5541 = vld [vmem:[#allocation4 + $0x100] sm:$0xff]
        %5542 = vmatprep.subr.bf16.mxu0 0
        %5543 = vmatpush1.bf16.msra.mxu0 %v5539
        %5544 = vmatprep.subr.bf16.mxu0 0
        %5545 = vmatpush1.bf16.msra.mxu0 %v5540
        %5546 = vmatprep.subr.bf16.mxu0 0
        %5547 = vmatpush1.bf16.msra.mxu0 %v5541
        %5548 = vmatprep.subr.bf16.mxu0 0
        %5549 = vmatpush1.bf16.msra.mxu0 0
        %5550 = vmatprep.subr.bf16.mxu0 0
        %5551 = vmatpush1.bf16.msra.mxu0 0
        %5552 = vmatprep.subr.bf16.mxu0 0
        %5553 = vmatpush1.bf16.msra.mxu0 0
        %5554 = vmatprep.subr.bf16.mxu0 0
        %5555 = vmatpush1.bf16.msra.mxu0 0
        %5556 = vmatprep.subr.bf16.mxu0 0
        %5557 = vmatpush1.bf16.msra.mxu0 0
        %5558 = vmatprep.subr.bf16.mxu0 0
        %5559 = vmatpush1.bf16.msra.mxu0 0
        %5560 = vmatprep.subr.bf16.mxu0 0
        %5561 = vmatpush1.bf16.msra.mxu0 0
        %5562 = vmatprep.subr.bf16.mxu0 0
        %5563 = vmatpush1.bf16.msra.mxu0 0
        %5564 = vmatprep.subr.bf16.mxu0 0
        %5565 = vmatpush1.bf16.msra.mxu0 0
        %5566 = vmatprep.subr.bf16.mxu0 0
        %5567 = vmatpush1.bf16.msra.mxu0 0
        %5568 = vmatprep.subr.bf16.mxu0 0
        %5569 = vmatpush1.bf16.msra.mxu0 0
        %5570 = vmatprep.subr.bf16.mxu0 0
        %5571 = vmatpush1.bf16.msra.mxu0 0
        %5572 = vmatprep.subr.bf16.mxu0 0
        %5573 = vmatpush1.bf16.msra.mxu0 0
        %5574 = vmatprep.mubr.bf16.mxu0 0
        %5575 = vmatmul.mubr.bf16.gmra.mrb[0].mxu0 %v4100
        %v5576 = vpop.f32.mrb[0].mxu0
        %v5577 = vadd.f32 %v4086, %v5576
        %v5578 = vpop.f32.mrb[0].mxu0
        %v5579 = vpop.f32.mrb[0].mxu0
        %v5580 = vadd.f32 %v4091, %v5579
        %v5581 = vpop.f32.mrb[0].mxu0
        %5582 = vdwg.mxu0
        %v5583 = vmax.f32 %v5577, 0.0
        %v5584 = vmax.f32 %v5580, 0.0
        %5585 = vst [vmem:[%s484 + $0x1e0] sm:$0xff] %v5583
        %5586 = vst [vmem:[%s484 + $0x1e8] sm:$0xff] %v5584
        %v5587 = vld [vmem:[#allocation4 + $0xf8] sm:$0xff]
        %v5588 = vld [vmem:[#allocation4 + $0x100] sm:$0xff]
        %v5589 = vld [vmem:[#allocation4 + $0x108] sm:$0xff]
        %5590 = vmatprep.subr.bf16.mxu0 0
        %5591 = vmatpush1.bf16.msra.mxu0 %v5587
        %5592 = vmatprep.subr.bf16.mxu0 0
        %5593 = vmatpush1.bf16.msra.mxu0 %v5588
        %5594 = vmatprep.subr.bf16.mxu0 0
        %5595 = vmatpush1.bf16.msra.mxu0 %v5589
        %5596 = vmatprep.subr.bf16.mxu0 0
        %5597 = vmatpush1.bf16.msra.mxu0 0
        %5598 = vmatprep.subr.bf16.mxu0 0
        %5599 = vmatpush1.bf16.msra.mxu0 0
        %5600 = vmatprep.subr.bf16.mxu0 0
        %5601 = vmatpush1.bf16.msra.mxu0 0
        %5602 = vmatprep.subr.bf16.mxu0 0
        %5603 = vmatpush1.bf16.msra.mxu0 0
        %5604 = vmatprep.subr.bf16.mxu0 0
        %5605 = vmatpush1.bf16.msra.mxu0 0
        %5606 = vmatprep.subr.bf16.mxu0 0
        %5607 = vmatpush1.bf16.msra.mxu0 0
        %5608 = vmatprep.subr.bf16.mxu0 0
        %5609 = vmatpush1.bf16.msra.mxu0 0
        %5610 = vmatprep.subr.bf16.mxu0 0
        %5611 = vmatpush1.bf16.msra.mxu0 0
        %5612 = vmatprep.subr.bf16.mxu0 0
        %5613 = vmatpush1.bf16.msra.mxu0 0
        %5614 = vmatprep.subr.bf16.mxu0 0
        %5615 = vmatpush1.bf16.msra.mxu0 0
        %5616 = vmatprep.subr.bf16.mxu0 0
        %5617 = vmatpush1.bf16.msra.mxu0 0
        %5618 = vmatprep.subr.bf16.mxu0 0
        %5619 = vmatpush1.bf16.msra.mxu0 0
        %5620 = vmatprep.subr.bf16.mxu0 0
        %5621 = vmatpush1.bf16.msra.mxu0 0
        %5622 = vmatprep.mubr.bf16.mxu0 0
        %5623 = vmatmul.mubr.bf16.gmra.mrb[0].mxu0 %v4100
        %v5624 = vpop.f32.mrb[0].mxu0
        %v5625 = vadd.f32 %v4086, %v5624
        %v5626 = vpop.f32.mrb[0].mxu0
        %v5627 = vpop.f32.mrb[0].mxu0
        %v5628 = vadd.f32 %v4091, %v5627
        %v5629 = vpop.f32.mrb[0].mxu0
        %5630 = vdwg.mxu0
        %v5631 = vmax.f32 %v5625, 0.0
        %v5632 = vmax.f32 %v5628, 0.0
        %5633 = vst [vmem:[%s484 + $0x1f0] sm:$0xff] %v5631
        %5634 = vst [vmem:[%s484 + $0x1f8] sm:$0xff] %v5632
        %s5635 = sand.u32 %s313, 1
        %s5636 = scalar_lea.sflag [#allocation7], %s5635
        %s5637 = sand.u32 %s313, 1
        %s5638 = smul.addr %s5637, 512
        %s5639 = scalar_lea.vmem [#allocation6], %s5638
        // Predicated region
        $region111: #{tpu_custom_call.1} parent=105 // pred_check
          %p5640 = pneg %p323
        $region112: #{tpu_custom_call.1} parent=105 // pred_check_branch
          %5642 = sbr.rel (%p5640) target = $region114
        $region113: #{tpu_custom_call.1} parent=105 // pred_region
          %s5644 = ssub.s32 8192, 8192
          %5645 = vsyncadd %s5636, %s5644
          %s5646 = smul.addr %s27, 128
          %s5647 = scalar_lea.hbm %s13, %s5646
          %s5648 = sshll.u32 %s5639, 4
          %s5649 = int_to_ptr.vmem [resolvable:$true] %s5648
          %5654 = dma.vmem_to_hbm [thread:$0]  %s5649, 8192, %s5647, %s5636, 128, 256, 8
        $region114: #{tpu_custom_call.1} parent=105 // pred_fallthru
          _
      $region106: #{tpu_custom_call.1} parent=5 // pred_fallthru
        _
      %p5655 = scmp.le.s32.totalorder 2, %s22
      // Predicated region
      $region115: #{tpu_custom_call.1} parent=5 // pred_check
        %p5656 = pneg %p5655
      $region116: #{tpu_custom_call.1} parent=5 // pred_check_branch
        %5658 = sbr.rel (%p5656) target = $region118
      $region117: #{tpu_custom_call.1} parent=5 // pred_region
        %s5659 = ssub.s32 %s22, 2
        // Predicated region
        $region119: #{tpu_custom_call.1} parent=117 // pred_check
          %p5660 = pneg %p329
        $region120: #{tpu_custom_call.1} parent=117 // pred_check_branch
          %5662 = sbr.rel (%p5660) target = $region122
        $region121: #{tpu_custom_call.1} parent=117 // pred_region
          %s5663 = sand.u32 %s314, 1
          %s5664 = scalar_lea.sflag [#allocation7], %s5663
          %s5665 = sand.u32 %s314, 1
          %s5666 = smul.addr %s5665, 512
          %s5667 = scalar_lea.vmem [#allocation6], %s5666
          %5668 = dma.done %s5664, 8192
        $region122: #{tpu_custom_call.1} parent=117 // pred_fallthru
          _
      $region118: #{tpu_custom_call.1} parent=5 // pred_fallthru
        _
    $region6: #{tpu_custom_call.1} parent=1 // loop_footer
      %s26 = sadd.s32 1, %s22
    $region7: #{tpu_custom_call.1} parent=1 // loop_footer_branch
      %21 = sbr.rel target = $region3
    $region8: #{tpu_custom_call.1} parent=1 // loop_exit
      _
    %5669 = vsyncpa [#allocation7], 1
    %s5670 = scalar_lea.sflag [#allocation7], 1
    %5671 = vsyncpa %s5670, 1

</llo_original>
